<compile_context>
chip_gen: v7x
topology: tpu7x:2x2x1
jax: 0.10.0
libtpu: 0.0.40
codegen_flags: <defaults>
</compile_context>

<pallas_src>
import math

import jax
import jax.numpy as jnp
from jax import lax
from jax.experimental import pallas as pl
from jax.experimental.pallas import tpu as pltpu


# ---------------------------------------------------------------------------
# Fused kernel: encoder (T steps) + decoder (T-1 steps, teacher forcing) + FC
# ---------------------------------------------------------------------------
def _make_seqwatch_kernel(num_layers, hidden_size, seq_len, batch):
    L, H, T, B = num_layers, hidden_size, seq_len, batch
    G = 4 * H
    NPD = 3 + 2 * (L - 1)   # refs per direction: layer0 (wih, whh, b) + (w_fused, b) per upper layer

    def kernel(tf_ref, xs_ref, *rest):
        # rest = (*enc_refs, *dec_refs, w_fc, b_fc, out_ref, gxe_scratch, gxd_scratch)
        gxd_ref, gxe_ref, out_ref = rest[-1], rest[-2], rest[-3]
        w_refs = rest[:-3]
        enc = w_refs[:NPD]
        dec = w_refs[NPD:2 * NPD]
        w_fc_ref, b_fc_ref = w_refs[2 * NPD], w_refs[2 * NPD + 1]

        # ---- constants for the single-sigmoid gate activation ----------------
        # gate order [i | f | g | o]; tanh(g) = 2*sigmoid(2g) - 1 -> one full-vreg
        # EUP sigmoid per cell instead of 3 partial sigmoids + 1 tanh.
        lane = lax.broadcasted_iota(jnp.int32, (1, G), 1)
        is_g = jnp.logical_and(lane >= 2 * H, lane < 3 * H)
        pre = jnp.where(is_g, 2.0, 1.0).astype(jnp.float32)     # scale g lanes by 2
        post_a = jnp.where(is_g, -1.0, 0.0).astype(jnp.float32)  # 2*s - 1 on g lanes

        def activate(gates):
            s = jax.nn.sigmoid(gates * pre)     # ONE 128-lane EUP pass
            return s * pre + post_a             # masked VPU fixup

        def combine(acts, c):
            # 32-lane slices lower to XLU lane moves (separate VLIW slot).
            i_g = acts[:, 0:H]
            f_g = acts[:, H:2 * H]
            g_g = acts[:, 2 * H:3 * H]
            o_g = acts[:, 3 * H:4 * H]
            c_new = f_g * c + i_g * g_g
            h_new = o_g * jnp.tanh(c_new)
            return h_new, c_new

        def layer0(gx, h, c, w):
            # layer-0 x-projection `gx` is precomputed (hoisted out of the recurrence)
            gates = (gx
                     + jnp.dot(h, w[1][...], preferred_element_type=jnp.float32)
                     + w[2][...])
            return combine(activate(gates), c)

        def stack(gx0, hs, cs, w):
            hs, cs = list(hs), list(cs)
            h_new, c_new = layer0(gx0, hs[0], cs[0], w)
            inp = h_new
            hs[0], cs[0] = h_new, c_new
            for l in range(1, L):
                wf_ref, b_ref = w[3 + 2 * (l - 1)], w[4 + 2 * (l - 1)]
                xh = jnp.concatenate([inp, hs[l]], axis=-1)          # fused [x|h] LHS
                gates = (jnp.dot(xh, wf_ref[...], preferred_element_type=jnp.float32)
                         + b_ref[...])
                h_new, c_new = combine(activate(gates), cs[l])
                hs[l], cs[l] = h_new, c_new
                inp = h_new                     # inter-layer dropout: identity (eval)
            return inp, tuple(hs), tuple(cs)

        # ---- hoisted layer-0 input projections (off the serial chain) --------
        xs = xs_ref[...]                                             # (T*B, Fp)
        gx_e = jnp.dot(xs, enc[0][...], preferred_element_type=jnp.float32)  # (T*B, 4H)
        gx_d = jnp.dot(xs, dec[0][...], preferred_element_type=jnp.float32)
        for t in range(T):                      # static prologue copies into scratch
            gxe_ref[t] = gx_e[t * B:(t + 1) * B, :]
            gxd_ref[t] = gx_d[t * B:(t + 1) * B, :]

        zero = jnp.zeros((B, H), jnp.float32)
        init = (tuple([zero] * L), tuple([zero] * L))

        # ------------------------------ encoder -------------------------------
        def enc_step(t, carry):
            hs, cs = carry
            _, hs, cs = stack(gxe_ref[t], hs, cs, enc)
            return hs, cs

        hs, cs = lax.fori_loop(0, T, enc_step, init, unroll=True)

        # ------------------------------ decoder -------------------------------
        out_ref[0] = xs_ref[0:B, :]             # outputs[0] = target[0]

        def dec_step(t, carry):
            hs, cs, gx_in = carry
            top, hs, cs = stack(gx_in, hs, cs, dec)
            pred = (jnp.dot(top, w_fc_ref[...], preferred_element_type=jnp.float32)
                    + b_fc_ref[...])
            out_ref[t] = pred.astype(out_ref.dtype)
            # teacher forcing: select the precomputed xs[t] projection vs. pred's projection
            gx_pred = jnp.dot(pred, dec[0][...], preferred_element_type=jnp.float32)
            gx_next = jnp.where(tf_ref[t] > 0, gxd_ref[t], gx_pred)
            return hs, cs, gx_next

        lax.fori_loop(1, T, dec_step, (hs, cs, gxd_ref[0]), unroll=True)

    return kernel


def _seqwatch_pallas(tf_mask, xs2d, params, seq_len, batch):
    """tf_mask: (T,) int32 (SMEM); xs2d: (T*B, Fp) padded; returns (T, B, Fp)."""
    T, B = seq_len, batch
    Fp = xs2d.shape[1]
    L = len(params["enc"])
    H = params["enc"][0]["whh"].shape[0]

    weights = []
    for d in ("enc", "dec"):
        layers = params[d]
        weights.extend((layers[0]["wih"], layers[0]["whh"], layers[0]["b"]))
        for l in range(1, L):
            weights.extend((layers[l]["w"], layers[l]["b"]))
    weights.extend((params["fc"]["w_t"], params["fc"]["b"]))

    vmem = pl.BlockSpec(memory_space=pltpu.MemorySpace.VMEM)
    smem = pl.BlockSpec(memory_space=pltpu.MemorySpace.SMEM)

    return pl.pallas_call(
        _make_seqwatch_kernel(L, H, T, B),
        out_shape=jax.ShapeDtypeStruct((T, B, Fp), jnp.float32),
        in_specs=[smem, vmem] + [vmem] * len(weights),
        out_specs=vmem,
        scratch_shapes=[pltpu.VMEM((T, B, 4 * H), jnp.float32),   # hoisted enc layer-0 proj
                        pltpu.VMEM((T, B, 4 * H), jnp.float32)],  # hoisted dec layer-0 proj
    )(tf_mask, xs2d, *weights)


# ---------------------------------------------------------------------------
# Parameter construction (PyTorch-style uniform(-1/sqrt(H), +1/sqrt(H)))
# Layer 0: wih (Fp,4H) transposed+padded, whh (H,4H), b (1,4H).
# Layers >=1: fused [wih; whh] -> (2H,4H), b (1,4H).   FC: (H,Fp), (1,Fp).
# ---------------------------------------------------------------------------
def _round_up(n, m):
    return ((n + m - 1) // m) * m


def _uniform(key, shape, bound):
    return jax.random.uniform(key, shape, jnp.float32, -bound, bound)


def init_lstm_params(key, input_size, hidden_size, num_layers, pad_input_to):
    bound = 1.0 / math.sqrt(hidden_size)
    layers = []
    for layer in range(num_layers):
        in_dim = input_size if layer == 0 else hidden_size
        key, k1, k2, k3, k4 = jax.random.split(key, 5)
        w_ih = _uniform(k1, (4 * hidden_size, in_dim), bound)       # PyTorch (4H, I)
        w_hh = _uniform(k2, (4 * hidden_size, hidden_size), bound)  # PyTorch (4H, H)
        b_ih = _uniform(k3, (4 * hidden_size,), bound)
        b_hh = _uniform(k4, (4 * hidden_size,), bound)
        wih_t = jnp.transpose(w_ih)                 # (I, 4H), gate order [i|f|g|o]
        whh_t = jnp.transpose(w_hh)                 # (H, 4H)
        b = (b_ih + b_hh).reshape(1, 4 * hidden_size)
        if layer == 0:
            wih_t = jnp.pad(wih_t, ((0, pad_input_to - in_dim), (0, 0)))
            layers.append({"wih": wih_t, "whh": whh_t, "b": b})
        else:
            layers.append({"w": jnp.concatenate([wih_t, whh_t], axis=0), "b": b})
    return layers, key


def init_seqwatch_params(seed, input_size, hidden_size, num_layers):
    f_pad = _round_up(input_size, 128)
    key = jax.random.PRNGKey(seed)
    enc, key = init_lstm_params(key, input_size, hidden_size, num_layers, f_pad)
    dec, key = init_lstm_params(key, input_size, hidden_size, num_layers, f_pad)
    bound = 1.0 / math.sqrt(hidden_size)
    key, k1, k2 = jax.random.split(key, 3)
    w_fc = _uniform(k1, (input_size, hidden_size), bound)           # PyTorch (out, in)
    b_fc = _uniform(k2, (input_size,), bound)
    w_t = jnp.pad(jnp.transpose(w_fc), ((0, 0), (0, f_pad - input_size)))  # (H, Fp)
    b = jnp.pad(b_fc, (0, f_pad - input_size)).reshape(1, f_pad)           # (1, Fp)
    return {"enc": enc, "dec": dec, "fc": {"w_t": w_t, "b": b}}


# ---------------------------------------------------------------------------
# SeqWatch forward (eval-mode dropout). Fully jit-able.
# ---------------------------------------------------------------------------
def seqwatch_forward(x, params, teacher_force_ratio=0.5, tf_key=None):
    """x: (B, 1, T, F) float32  ->  (B, 1, T, F) float32."""
    Fp = params["fc"]["w_t"].shape[1]

    xs = jnp.transpose(jnp.squeeze(x, axis=1), (1, 0, 2))   # (T, B, F)
    T, B, F = xs.shape
    xs_p = jnp.pad(xs, ((0, 0), (0, 0), (0, Fp - F)))       # lane-dense features
    xs2d = xs_p.reshape(T * B, Fp)                          # sublane-dense (T*B, Fp)

    if tf_key is None:
        tf_key = jax.random.PRNGKey(0)
    tf_draws = jax.random.uniform(tf_key, (T,))
    tf_mask = (tf_draws < teacher_force_ratio).astype(jnp.int32)

    out_p = _seqwatch_pallas(tf_mask, xs2d, params, T, B)   # (T, B, Fp)
    out = out_p[:, :, :F]
    return jnp.transpose(out, (1, 0, 2))[:, None]           # (B, 1, T, F)


# ---------------------------------------------------------------------------
# Pure-JAX reference (same weights / same mask) for the correctness check
# ---------------------------------------------------------------------------
def _reference_forward(x, params, tf_mask):
    L = len(params["enc"])
    H = params["enc"][0]["whh"].shape[0]
    Fp = params["fc"]["w_t"].shape[1]
    xs = jnp.transpose(jnp.squeeze(x, axis=1), (1, 0, 2))
    T, B, F = xs.shape
    xs_p = jnp.pad(xs, ((0, 0), (0, 0), (0, Fp - F)))

    def gates_act(g, c):
        i = jax.nn.sigmoid(g[:, :H])
        f = jax.nn.sigmoid(g[:, H:2 * H])
        gg = jnp.tanh(g[:, 2 * H:3 * H])
        o = jax.nn.sigmoid(g[:, 3 * H:])
        c_new = f * c + i * gg
        return o * jnp.tanh(c_new), c_new

    def stack(inp, hs, cs, ps):
        hs, cs = list(hs), list(cs)
        g0 = inp @ ps[0]["wih"] + hs[0] @ ps[0]["whh"] + ps[0]["b"]
        hs[0], cs[0] = gates_act(g0, cs[0])
        out = hs[0]
        for l in range(1, L):
            g = jnp.concatenate([out, hs[l]], axis=-1) @ ps[l]["w"] + ps[l]["b"]
            hs[l], cs[l] = gates_act(g, cs[l])
            out = hs[l]
        return out, hs, cs

    hs = [jnp.zeros((B, H), jnp.float32)] * L
    cs = [jnp.zeros((B, H), jnp.float32)] * L
    for t in range(T):
        _, hs, cs = stack(xs_p[t], hs, cs, params["enc"])

    outs = [xs_p[0]]
    inp = xs_p[0]
    for t in range(1, T):
        top, hs, cs = stack(inp, hs, cs, params["dec"])
        pred = top @ params["fc"]["w_t"] + params["fc"]["b"]
        outs.append(pred)
        inp = jnp.where(tf_mask[t] > 0, xs_p[t], pred)

    out = jnp.stack(outs, axis=0)[:, :, :F]
    return jnp.transpose(out, (1, 0, 2))[:, None]


# ---------------------------------------------------------------------------
if __name__ == "__main__":
    # shapes implied by the module: input_size=58, hidden=32, 2 layers
    BATCH, SEQ, INPUT_SIZE, HIDDEN, LAYERS = 2, 8, 58, 32, 2

    params = init_seqwatch_params(seed=0, input_size=INPUT_SIZE,
                                  hidden_size=HIDDEN, num_layers=LAYERS)

    x = jax.random.normal(jax.random.PRNGKey(0),
                          (BATCH, 1, SEQ, INPUT_SIZE), jnp.float32)
    tf_key = jax.random.PRNGKey(123)

    fwd = jax.jit(seqwatch_forward)
    y = jax.block_until_ready(fwd(x, params, 0.5, tf_key))

    assert y.shape == (BATCH, 1, SEQ, INPUT_SIZE), y.shape
    assert y.dtype == jnp.float32

    # correctness: compare against a pure-JAX reference using the same mask/weights
    tf_mask = (jax.random.uniform(tf_key, (SEQ,)) < 0.5).astype(jnp.int32)
    with jax.default_matmul_precision("highest"):
        y_ref = _reference_forward(x, params, tf_mask)
    max_err = float(jnp.max(jnp.abs(y - y_ref)))
    assert max_err < 2e-2, f"mismatch vs reference: {max_err}"

    print("KERNEL_OK")
</pallas_src>

<mosaic_0001>
module attributes {stable_mosaic.version = 11 : i64} {
  func.func @kernel(%arg0: memref<8xi32, #tpu.memory_space<smem>>, %arg1: memref<16x128xf32, #tpu.memory_space<vmem>>, %arg2: memref<128x128xf32, #tpu.memory_space<vmem>>, %arg3: memref<32x128xf32, #tpu.memory_space<vmem>>, %arg4: memref<1x128xf32, #tpu.memory_space<vmem>>, %arg5: memref<64x128xf32, #tpu.memory_space<vmem>>, %arg6: memref<1x128xf32, #tpu.memory_space<vmem>>, %arg7: memref<128x128xf32, #tpu.memory_space<vmem>>, %arg8: memref<32x128xf32, #tpu.memory_space<vmem>>, %arg9: memref<1x128xf32, #tpu.memory_space<vmem>>, %arg10: memref<64x128xf32, #tpu.memory_space<vmem>>, %arg11: memref<1x128xf32, #tpu.memory_space<vmem>>, %arg12: memref<32x128xf32, #tpu.memory_space<vmem>>, %arg13: memref<1x128xf32, #tpu.memory_space<vmem>>, %arg14: memref<8x2x128xf32, #tpu.memory_space<vmem>>, %arg15: memref<8x2x128xf32, #tpu.memory_space<vmem>>, %arg16: memref<8x2x128xf32, #tpu.memory_space<vmem>>) attributes {dimension_semantics = [], scalar_prefetch = 0 : i64, scratch_operands = 2 : i64, tpu.core_type = #tpu.core_type<tc>} {
    %0 = tpu.iota {dimensions = array<i32: 1>} : vector<1x128xi32>
    %c64_i32 = arith.constant 64 : i32
    %1 = vector.broadcast %c64_i32 : i32 to vector<1x128xi32>
    %2 = arith.cmpi sge, %0, %1 : vector<1x128xi32>
    %c96_i32 = arith.constant 96 : i32
    %3 = vector.broadcast %c96_i32 : i32 to vector<1x128xi32>
    %4 = arith.cmpi slt, %0, %3 : vector<1x128xi32>
    %5 = arith.andi %2, %4 : vector<1x128xi1>
    %cst = arith.constant 2.000000e+00 : f32
    %cst_0 = arith.constant 1.000000e+00 : f32
    %6 = vector.broadcast %cst : f32 to vector<1x128xf32>
    %7 = vector.broadcast %cst_0 : f32 to vector<1x128xf32>
    %8 = arith.select %5, %6, %7 : vector<1x128xi1>, vector<1x128xf32>
    %cst_1 = arith.constant -1.000000e+00 : f32
    %cst_2 = arith.constant 0.000000e+00 : f32
    %9 = vector.broadcast %cst_1 : f32 to vector<1x128xf32>
    %10 = vector.broadcast %cst_2 : f32 to vector<1x128xf32>
    %11 = arith.select %5, %9, %10 : vector<1x128xi1>, vector<1x128xf32>
    %c0 = arith.constant 0 : index
    %c0_3 = arith.constant 0 : index
    %12 = vector.load %arg1[%c0, %c0_3] : memref<16x128xf32, #tpu.memory_space<vmem>>, vector<16x128xf32>
    %c0_4 = arith.constant 0 : index
    %c0_5 = arith.constant 0 : index
    %13 = vector.load %arg2[%c0_4, %c0_5] : memref<128x128xf32, #tpu.memory_space<vmem>>, vector<128x128xf32>
    %cst_6 = arith.constant dense<0.000000e+00> : vector<16x128xf32>
    %14 = tpu.matmul %12, %13, %cst_6 {dimension_numbers = #tpu.dot_dimension_numbers<[1], [0], [0], [1], [0, 0, 1, 1], [], []>} : vector<16x128xf32>, vector<128x128xf32>, vector<16x128xf32> -> vector<16x128xf32>
    %c0_7 = arith.constant 0 : index
    %c0_8 = arith.constant 0 : index
    %15 = vector.load %arg7[%c0_7, %c0_8] : memref<128x128xf32, #tpu.memory_space<vmem>>, vector<128x128xf32>
    %cst_9 = arith.constant dense<0.000000e+00> : vector<16x128xf32>
    %16 = tpu.matmul %12, %15, %cst_9 {dimension_numbers = #tpu.dot_dimension_numbers<[1], [0], [0], [1], [0, 0, 1, 1], [], []>} : vector<16x128xf32>, vector<128x128xf32>, vector<16x128xf32> -> vector<16x128xf32>
    %17 = vector.extract_strided_slice %14 {offsets = [0, 0], sizes = [2, 128], strides = [1, 1]} : vector<16x128xf32> to vector<2x128xf32>
    %c0_10 = arith.constant 0 : index
    %c0_11 = arith.constant 0 : index
    %c0_12 = arith.constant 0 : index
    %18 = vector.load %arg15[%c0_10, %c0_11, %c0_12] : memref<8x2x128xf32, #tpu.memory_space<vmem>>, vector<1x2x128xf32>
    %19 = vector.shape_cast %18 : vector<1x2x128xf32> to vector<2x128xf32>
    %20 = vector.shape_cast %17 : vector<2x128xf32> to vector<1x2x128xf32>
    tpu.vector_store %arg15[%c0_10, %c0_11, %c0_12], %20 {strides = array<i32>} : memref<8x2x128xf32, #tpu.memory_space<vmem>>, vector<1x2x128xf32>,
    %21 = vector.extract_strided_slice %16 {offsets = [0, 0], sizes = [2, 128], strides = [1, 1]} : vector<16x128xf32> to vector<2x128xf32>
    %c0_13 = arith.constant 0 : index
    %c0_14 = arith.constant 0 : index
    %c0_15 = arith.constant 0 : index
    %22 = vector.load %arg16[%c0_13, %c0_14, %c0_15] : memref<8x2x128xf32, #tpu.memory_space<vmem>>, vector<1x2x128xf32>
    %23 = vector.shape_cast %22 : vector<1x2x128xf32> to vector<2x128xf32>
    %24 = vector.shape_cast %21 : vector<2x128xf32> to vector<1x2x128xf32>
    tpu.vector_store %arg16[%c0_13, %c0_14, %c0_15], %24 {strides = array<i32>} : memref<8x2x128xf32, #tpu.memory_space<vmem>>, vector<1x2x128xf32>,
    %25 = vector.extract_strided_slice %14 {offsets = [2, 0], sizes = [2, 128], strides = [1, 1]} : vector<16x128xf32> to vector<2x128xf32>
    %c1 = arith.constant 1 : index
    %c0_16 = arith.constant 0 : index
    %c0_17 = arith.constant 0 : index
    %26 = vector.load %arg15[%c1, %c0_16, %c0_17] : memref<8x2x128xf32, #tpu.memory_space<vmem>>, vector<1x2x128xf32>
    %27 = vector.shape_cast %26 : vector<1x2x128xf32> to vector<2x128xf32>
    %28 = vector.shape_cast %25 : vector<2x128xf32> to vector<1x2x128xf32>
    tpu.vector_store %arg15[%c1, %c0_16, %c0_17], %28 {strides = array<i32>} : memref<8x2x128xf32, #tpu.memory_space<vmem>>, vector<1x2x128xf32>,
    %29 = vector.extract_strided_slice %16 {offsets = [2, 0], sizes = [2, 128], strides = [1, 1]} : vector<16x128xf32> to vector<2x128xf32>
    %c1_18 = arith.constant 1 : index
    %c0_19 = arith.constant 0 : index
    %c0_20 = arith.constant 0 : index
    %30 = vector.load %arg16[%c1_18, %c0_19, %c0_20] : memref<8x2x128xf32, #tpu.memory_space<vmem>>, vector<1x2x128xf32>
    %31 = vector.shape_cast %30 : vector<1x2x128xf32> to vector<2x128xf32>
    %32 = vector.shape_cast %29 : vector<2x128xf32> to vector<1x2x128xf32>
    tpu.vector_store %arg16[%c1_18, %c0_19, %c0_20], %32 {strides = array<i32>} : memref<8x2x128xf32, #tpu.memory_space<vmem>>, vector<1x2x128xf32>,
    %33 = vector.extract_strided_slice %14 {offsets = [4, 0], sizes = [2, 128], strides = [1, 1]} : vector<16x128xf32> to vector<2x128xf32>
    %c2 = arith.constant 2 : index
    %c0_21 = arith.constant 0 : index
    %c0_22 = arith.constant 0 : index
    %34 = vector.load %arg15[%c2, %c0_21, %c0_22] : memref<8x2x128xf32, #tpu.memory_space<vmem>>, vector<1x2x128xf32>
    %35 = vector.shape_cast %34 : vector<1x2x128xf32> to vector<2x128xf32>
    %36 = vector.shape_cast %33 : vector<2x128xf32> to vector<1x2x128xf32>
    tpu.vector_store %arg15[%c2, %c0_21, %c0_22], %36 {strides = array<i32>} : memref<8x2x128xf32, #tpu.memory_space<vmem>>, vector<1x2x128xf32>,
    %37 = vector.extract_strided_slice %16 {offsets = [4, 0], sizes = [2, 128], strides = [1, 1]} : vector<16x128xf32> to vector<2x128xf32>
    %c2_23 = arith.constant 2 : index
    %c0_24 = arith.constant 0 : index
    %c0_25 = arith.constant 0 : index
    %38 = vector.load %arg16[%c2_23, %c0_24, %c0_25] : memref<8x2x128xf32, #tpu.memory_space<vmem>>, vector<1x2x128xf32>
    %39 = vector.shape_cast %38 : vector<1x2x128xf32> to vector<2x128xf32>
    %40 = vector.shape_cast %37 : vector<2x128xf32> to vector<1x2x128xf32>
    tpu.vector_store %arg16[%c2_23, %c0_24, %c0_25], %40 {strides = array<i32>} : memref<8x2x128xf32, #tpu.memory_space<vmem>>, vector<1x2x128xf32>,
    %41 = vector.extract_strided_slice %14 {offsets = [6, 0], sizes = [2, 128], strides = [1, 1]} : vector<16x128xf32> to vector<2x128xf32>
    %c3 = arith.constant 3 : index
    %c0_26 = arith.constant 0 : index
    %c0_27 = arith.constant 0 : index
    %42 = vector.load %arg15[%c3, %c0_26, %c0_27] : memref<8x2x128xf32, #tpu.memory_space<vmem>>, vector<1x2x128xf32>
    %43 = vector.shape_cast %42 : vector<1x2x128xf32> to vector<2x128xf32>
    %44 = vector.shape_cast %41 : vector<2x128xf32> to vector<1x2x128xf32>
    tpu.vector_store %arg15[%c3, %c0_26, %c0_27], %44 {strides = array<i32>} : memref<8x2x128xf32, #tpu.memory_space<vmem>>, vector<1x2x128xf32>,
    %45 = vector.extract_strided_slice %16 {offsets = [6, 0], sizes = [2, 128], strides = [1, 1]} : vector<16x128xf32> to vector<2x128xf32>
    %c3_28 = arith.constant 3 : index
    %c0_29 = arith.constant 0 : index
    %c0_30 = arith.constant 0 : index
    %46 = vector.load %arg16[%c3_28, %c0_29, %c0_30] : memref<8x2x128xf32, #tpu.memory_space<vmem>>, vector<1x2x128xf32>
    %47 = vector.shape_cast %46 : vector<1x2x128xf32> to vector<2x128xf32>
    %48 = vector.shape_cast %45 : vector<2x128xf32> to vector<1x2x128xf32>
    tpu.vector_store %arg16[%c3_28, %c0_29, %c0_30], %48 {strides = array<i32>} : memref<8x2x128xf32, #tpu.memory_space<vmem>>, vector<1x2x128xf32>,
    %49 = vector.extract_strided_slice %14 {offsets = [8, 0], sizes = [2, 128], strides = [1, 1]} : vector<16x128xf32> to vector<2x128xf32>
    %c4 = arith.constant 4 : index
    %c0_31 = arith.constant 0 : index
    %c0_32 = arith.constant 0 : index
    %50 = vector.load %arg15[%c4, %c0_31, %c0_32] : memref<8x2x128xf32, #tpu.memory_space<vmem>>, vector<1x2x128xf32>
    %51 = vector.shape_cast %50 : vector<1x2x128xf32> to vector<2x128xf32>
    %52 = vector.shape_cast %49 : vector<2x128xf32> to vector<1x2x128xf32>
    tpu.vector_store %arg15[%c4, %c0_31, %c0_32], %52 {strides = array<i32>} : memref<8x2x128xf32, #tpu.memory_space<vmem>>, vector<1x2x128xf32>,
    %53 = vector.extract_strided_slice %16 {offsets = [8, 0], sizes = [2, 128], strides = [1, 1]} : vector<16x128xf32> to vector<2x128xf32>
    %c4_33 = arith.constant 4 : index
    %c0_34 = arith.constant 0 : index
    %c0_35 = arith.constant 0 : index
    %54 = vector.load %arg16[%c4_33, %c0_34, %c0_35] : memref<8x2x128xf32, #tpu.memory_space<vmem>>, vector<1x2x128xf32>
    %55 = vector.shape_cast %54 : vector<1x2x128xf32> to vector<2x128xf32>
    %56 = vector.shape_cast %53 : vector<2x128xf32> to vector<1x2x128xf32>
    tpu.vector_store %arg16[%c4_33, %c0_34, %c0_35], %56 {strides = array<i32>} : memref<8x2x128xf32, #tpu.memory_space<vmem>>, vector<1x2x128xf32>,
    %57 = vector.extract_strided_slice %14 {offsets = [10, 0], sizes = [2, 128], strides = [1, 1]} : vector<16x128xf32> to vector<2x128xf32>
    %c5 = arith.constant 5 : index
    %c0_36 = arith.constant 0 : index
    %c0_37 = arith.constant 0 : index
    %58 = vector.load %arg15[%c5, %c0_36, %c0_37] : memref<8x2x128xf32, #tpu.memory_space<vmem>>, vector<1x2x128xf32>
    %59 = vector.shape_cast %58 : vector<1x2x128xf32> to vector<2x128xf32>
    %60 = vector.shape_cast %57 : vector<2x128xf32> to vector<1x2x128xf32>
    tpu.vector_store %arg15[%c5, %c0_36, %c0_37], %60 {strides = array<i32>} : memref<8x2x128xf32, #tpu.memory_space<vmem>>, vector<1x2x128xf32>,
    %61 = vector.extract_strided_slice %16 {offsets = [10, 0], sizes = [2, 128], strides = [1, 1]} : vector<16x128xf32> to vector<2x128xf32>
    %c5_38 = arith.constant 5 : index
    %c0_39 = arith.constant 0 : index
    %c0_40 = arith.constant 0 : index
    %62 = vector.load %arg16[%c5_38, %c0_39, %c0_40] : memref<8x2x128xf32, #tpu.memory_space<vmem>>, vector<1x2x128xf32>
    %63 = vector.shape_cast %62 : vector<1x2x128xf32> to vector<2x128xf32>
    %64 = vector.shape_cast %61 : vector<2x128xf32> to vector<1x2x128xf32>
    tpu.vector_store %arg16[%c5_38, %c0_39, %c0_40], %64 {strides = array<i32>} : memref<8x2x128xf32, #tpu.memory_space<vmem>>, vector<1x2x128xf32>,
    %65 = vector.extract_strided_slice %14 {offsets = [12, 0], sizes = [2, 128], strides = [1, 1]} : vector<16x128xf32> to vector<2x128xf32>
    %c6 = arith.constant 6 : index
    %c0_41 = arith.constant 0 : index
    %c0_42 = arith.constant 0 : index
    %66 = vector.load %arg15[%c6, %c0_41, %c0_42] : memref<8x2x128xf32, #tpu.memory_space<vmem>>, vector<1x2x128xf32>
    %67 = vector.shape_cast %66 : vector<1x2x128xf32> to vector<2x128xf32>
    %68 = vector.shape_cast %65 : vector<2x128xf32> to vector<1x2x128xf32>
    tpu.vector_store %arg15[%c6, %c0_41, %c0_42], %68 {strides = array<i32>} : memref<8x2x128xf32, #tpu.memory_space<vmem>>, vector<1x2x128xf32>,
    %69 = vector.extract_strided_slice %16 {offsets = [12, 0], sizes = [2, 128], strides = [1, 1]} : vector<16x128xf32> to vector<2x128xf32>
    %c6_43 = arith.constant 6 : index
    %c0_44 = arith.constant 0 : index
    %c0_45 = arith.constant 0 : index
    %70 = vector.load %arg16[%c6_43, %c0_44, %c0_45] : memref<8x2x128xf32, #tpu.memory_space<vmem>>, vector<1x2x128xf32>
    %71 = vector.shape_cast %70 : vector<1x2x128xf32> to vector<2x128xf32>
    %72 = vector.shape_cast %69 : vector<2x128xf32> to vector<1x2x128xf32>
    tpu.vector_store %arg16[%c6_43, %c0_44, %c0_45], %72 {strides = array<i32>} : memref<8x2x128xf32, #tpu.memory_space<vmem>>, vector<1x2x128xf32>,
    %73 = vector.extract_strided_slice %14 {offsets = [14, 0], sizes = [2, 128], strides = [1, 1]} : vector<16x128xf32> to vector<2x128xf32>
    %c7 = arith.constant 7 : index
    %c0_46 = arith.constant 0 : index
    %c0_47 = arith.constant 0 : index
    %74 = vector.load %arg15[%c7, %c0_46, %c0_47] : memref<8x2x128xf32, #tpu.memory_space<vmem>>, vector<1x2x128xf32>
    %75 = vector.shape_cast %74 : vector<1x2x128xf32> to vector<2x128xf32>
    %76 = vector.shape_cast %73 : vector<2x128xf32> to vector<1x2x128xf32>
    tpu.vector_store %arg15[%c7, %c0_46, %c0_47], %76 {strides = array<i32>} : memref<8x2x128xf32, #tpu.memory_space<vmem>>, vector<1x2x128xf32>,
    %77 = vector.extract_strided_slice %16 {offsets = [14, 0], sizes = [2, 128], strides = [1, 1]} : vector<16x128xf32> to vector<2x128xf32>
    %c7_48 = arith.constant 7 : index
    %c0_49 = arith.constant 0 : index
    %c0_50 = arith.constant 0 : index
    %78 = vector.load %arg16[%c7_48, %c0_49, %c0_50] : memref<8x2x128xf32, #tpu.memory_space<vmem>>, vector<1x2x128xf32>
    %79 = vector.shape_cast %78 : vector<1x2x128xf32> to vector<2x128xf32>
    %80 = vector.shape_cast %77 : vector<2x128xf32> to vector<1x2x128xf32>
    tpu.vector_store %arg16[%c7_48, %c0_49, %c0_50], %80 {strides = array<i32>} : memref<8x2x128xf32, #tpu.memory_space<vmem>>, vector<1x2x128xf32>,
    %cst_51 = arith.constant 0.000000e+00 : f32
    %81 = vector.broadcast %cst_51 : f32 to vector<2x32xf32>
    %c0_i32 = arith.constant 0 : i32
    %82 = arith.index_cast %c0_i32 : i32 to index
    %c0_52 = arith.constant 0 : index
    %c0_53 = arith.constant 0 : index
    %83 = vector.load %arg15[%82, %c0_52, %c0_53] : memref<8x2x128xf32, #tpu.memory_space<vmem>>, vector<1x2x128xf32>
    %84 = vector.shape_cast %83 : vector<1x2x128xf32> to vector<2x128xf32>
    %c0_54 = arith.constant 0 : index
    %c0_55 = arith.constant 0 : index
    %85 = vector.load %arg3[%c0_54, %c0_55] : memref<32x128xf32, #tpu.memory_space<vmem>>, vector<32x128xf32>
    %cst_56 = arith.constant dense<0.000000e+00> : vector<2x128xf32>
    %86 = tpu.matmul %81, %85, %cst_56 {dimension_numbers = #tpu.dot_dimension_numbers<[1], [0], [0], [1], [0, 0, 1, 1], [], []>} : vector<2x32xf32>, vector<32x128xf32>, vector<2x128xf32> -> vector<2x128xf32>
    %87 = arith.addf %84, %86 : vector<2x128xf32>
    %c0_57 = arith.constant 0 : index
    %c0_58 = arith.constant 0 : index
    %88 = vector.load %arg4[%c0_57, %c0_58] : memref<1x128xf32, #tpu.memory_space<vmem>>, vector<1x128xf32>
    %89 = vector.broadcast %88 : vector<1x128xf32> to vector<2x128xf32>
    %90 = arith.addf %87, %89 : vector<2x128xf32>
    %91 = vector.broadcast %8 : vector<1x128xf32> to vector<2x128xf32>
    %92 = arith.mulf %90, %91 : vector<2x128xf32>
    %93 = arith.negf %92 : vector<2x128xf32>
    %94 = math.exp %93 : vector<2x128xf32>
    %cst_59 = arith.constant 1.000000e+00 : f32
    %95 = vector.broadcast %cst_59 : f32 to vector<2x128xf32>
    %96 = arith.addf %95, %94 : vector<2x128xf32>
    %97 = arith.divf %95, %96 : vector<2x128xf32>
    %98 = vector.broadcast %8 : vector<1x128xf32> to vector<2x128xf32>
    %99 = arith.mulf %97, %98 : vector<2x128xf32>
    %100 = vector.broadcast %11 : vector<1x128xf32> to vector<2x128xf32>
    %101 = arith.addf %99, %100 : vector<2x128xf32>
    %102 = vector.extract_strided_slice %101 {offsets = [0, 0], sizes = [2, 32], strides = [1, 1]} : vector<2x128xf32> to vector<2x32xf32>
    %103 = vector.extract_strided_slice %101 {offsets = [0, 32], sizes = [2, 32], strides = [1, 1]} : vector<2x128xf32> to vector<2x32xf32>
    %104 = vector.extract_strided_slice %101 {offsets = [0, 64], sizes = [2, 32], strides = [1, 1]} : vector<2x128xf32> to vector<2x32xf32>
    %105 = vector.extract_strided_slice %101 {offsets = [0, 96], sizes = [2, 32], strides = [1, 1]} : vector<2x128xf32> to vector<2x32xf32>
    %106 = arith.mulf %103, %81 : vector<2x32xf32>
    %107 = arith.mulf %102, %104 : vector<2x32xf32>
    %108 = arith.addf %106, %107 : vector<2x32xf32>
    %109 = math.tanh %108 : vector<2x32xf32>
    %110 = arith.mulf %105, %109 : vector<2x32xf32>
    %111 = tpu.concatenate %110, %81 in 1 : vector<2x32xf32>, vector<2x32xf32> -> vector<2x64xf32>
    %c0_60 = arith.constant 0 : index
    %c0_61 = arith.constant 0 : index
    %112 = vector.load %arg5[%c0_60, %c0_61] : memref<64x128xf32, #tpu.memory_space<vmem>>, vector<64x128xf32>
    %cst_62 = arith.constant dense<0.000000e+00> : vector<2x128xf32>
    %113 = tpu.matmul %111, %112, %cst_62 {dimension_numbers = #tpu.dot_dimension_numbers<[1], [0], [0], [1], [0, 0, 1, 1], [], []>} : vector<2x64xf32>, vector<64x128xf32>, vector<2x128xf32> -> vector<2x128xf32>
    %c0_63 = arith.constant 0 : index
    %c0_64 = arith.constant 0 : index
    %114 = vector.load %arg6[%c0_63, %c0_64] : memref<1x128xf32, #tpu.memory_space<vmem>>, vector<1x128xf32>
    %115 = vector.broadcast %114 : vector<1x128xf32> to vector<2x128xf32>
    %116 = arith.addf %113, %115 : vector<2x128xf32>
    %117 = vector.broadcast %8 : vector<1x128xf32> to vector<2x128xf32>
    %118 = arith.mulf %116, %117 : vector<2x128xf32>
    %119 = arith.negf %118 : vector<2x128xf32>
    %120 = math.exp %119 : vector<2x128xf32>
    %cst_65 = arith.constant 1.000000e+00 : f32
    %121 = vector.broadcast %cst_65 : f32 to vector<2x128xf32>
    %122 = arith.addf %121, %120 : vector<2x128xf32>
    %123 = arith.divf %121, %122 : vector<2x128xf32>
    %124 = vector.broadcast %8 : vector<1x128xf32> to vector<2x128xf32>
    %125 = arith.mulf %123, %124 : vector<2x128xf32>
    %126 = vector.broadcast %11 : vector<1x128xf32> to vector<2x128xf32>
    %127 = arith.addf %125, %126 : vector<2x128xf32>
    %128 = vector.extract_strided_slice %127 {offsets = [0, 0], sizes = [2, 32], strides = [1, 1]} : vector<2x128xf32> to vector<2x32xf32>
    %129 = vector.extract_strided_slice %127 {offsets = [0, 32], sizes = [2, 32], strides = [1, 1]} : vector<2x128xf32> to vector<2x32xf32>
    %130 = vector.extract_strided_slice %127 {offsets = [0, 64], sizes = [2, 32], strides = [1, 1]} : vector<2x128xf32> to vector<2x32xf32>
    %131 = vector.extract_strided_slice %127 {offsets = [0, 96], sizes = [2, 32], strides = [1, 1]} : vector<2x128xf32> to vector<2x32xf32>
    %132 = arith.mulf %129, %81 : vector<2x32xf32>
    %133 = arith.mulf %128, %130 : vector<2x32xf32>
    %134 = arith.addf %132, %133 : vector<2x32xf32>
    %135 = math.tanh %134 : vector<2x32xf32>
    %136 = arith.mulf %131, %135 : vector<2x32xf32>
    %c1_i32 = arith.constant 1 : i32
    %137 = arith.index_cast %c1_i32 : i32 to index
    %c0_66 = arith.constant 0 : index
    %c0_67 = arith.constant 0 : index
    %138 = vector.load %arg15[%137, %c0_66, %c0_67] : memref<8x2x128xf32, #tpu.memory_space<vmem>>, vector<1x2x128xf32>
    %139 = vector.shape_cast %138 : vector<1x2x128xf32> to vector<2x128xf32>
    %c0_68 = arith.constant 0 : index
    %c0_69 = arith.constant 0 : index
    %140 = vector.load %arg3[%c0_68, %c0_69] : memref<32x128xf32, #tpu.memory_space<vmem>>, vector<32x128xf32>
    %cst_70 = arith.constant dense<0.000000e+00> : vector<2x128xf32>
    %141 = tpu.matmul %110, %140, %cst_70 {dimension_numbers = #tpu.dot_dimension_numbers<[1], [0], [0], [1], [0, 0, 1, 1], [], []>} : vector<2x32xf32>, vector<32x128xf32>, vector<2x128xf32> -> vector<2x128xf32>
    %142 = arith.addf %139, %141 : vector<2x128xf32>
    %c0_71 = arith.constant 0 : index
    %c0_72 = arith.constant 0 : index
    %143 = vector.load %arg4[%c0_71, %c0_72] : memref<1x128xf32, #tpu.memory_space<vmem>>, vector<1x128xf32>
    %144 = vector.broadcast %143 : vector<1x128xf32> to vector<2x128xf32>
    %145 = arith.addf %142, %144 : vector<2x128xf32>
    %146 = vector.broadcast %8 : vector<1x128xf32> to vector<2x128xf32>
    %147 = arith.mulf %145, %146 : vector<2x128xf32>
    %148 = arith.negf %147 : vector<2x128xf32>
    %149 = math.exp %148 : vector<2x128xf32>
    %cst_73 = arith.constant 1.000000e+00 : f32
    %150 = vector.broadcast %cst_73 : f32 to vector<2x128xf32>
    %151 = arith.addf %150, %149 : vector<2x128xf32>
    %152 = arith.divf %150, %151 : vector<2x128xf32>
    %153 = vector.broadcast %8 : vector<1x128xf32> to vector<2x128xf32>
    %154 = arith.mulf %152, %153 : vector<2x128xf32>
    %155 = vector.broadcast %11 : vector<1x128xf32> to vector<2x128xf32>
    %156 = arith.addf %154, %155 : vector<2x128xf32>
    %157 = vector.extract_strided_slice %156 {offsets = [0, 0], sizes = [2, 32], strides = [1, 1]} : vector<2x128xf32> to vector<2x32xf32>
    %158 = vector.extract_strided_slice %156 {offsets = [0, 32], sizes = [2, 32], strides = [1, 1]} : vector<2x128xf32> to vector<2x32xf32>
    %159 = vector.extract_strided_slice %156 {offsets = [0, 64], sizes = [2, 32], strides = [1, 1]} : vector<2x128xf32> to vector<2x32xf32>
    %160 = vector.extract_strided_slice %156 {offsets = [0, 96], sizes = [2, 32], strides = [1, 1]} : vector<2x128xf32> to vector<2x32xf32>
    %161 = arith.mulf %158, %108 : vector<2x32xf32>
    %162 = arith.mulf %157, %159 : vector<2x32xf32>
    %163 = arith.addf %161, %162 : vector<2x32xf32>
    %164 = math.tanh %163 : vector<2x32xf32>
    %165 = arith.mulf %160, %164 : vector<2x32xf32>
    %166 = tpu.concatenate %165, %136 in 1 : vector<2x32xf32>, vector<2x32xf32> -> vector<2x64xf32>
    %c0_74 = arith.constant 0 : index
    %c0_75 = arith.constant 0 : index
    %167 = vector.load %arg5[%c0_74, %c0_75] : memref<64x128xf32, #tpu.memory_space<vmem>>, vector<64x128xf32>
    %cst_76 = arith.constant dense<0.000000e+00> : vector<2x128xf32>
    %168 = tpu.matmul %166, %167, %cst_76 {dimension_numbers = #tpu.dot_dimension_numbers<[1], [0], [0], [1], [0, 0, 1, 1], [], []>} : vector<2x64xf32>, vector<64x128xf32>, vector<2x128xf32> -> vector<2x128xf32>
    %c0_77 = arith.constant 0 : index
    %c0_78 = arith.constant 0 : index
    %169 = vector.load %arg6[%c0_77, %c0_78] : memref<1x128xf32, #tpu.memory_space<vmem>>, vector<1x128xf32>
    %170 = vector.broadcast %169 : vector<1x128xf32> to vector<2x128xf32>
    %171 = arith.addf %168, %170 : vector<2x128xf32>
    %172 = vector.broadcast %8 : vector<1x128xf32> to vector<2x128xf32>
    %173 = arith.mulf %171, %172 : vector<2x128xf32>
    %174 = arith.negf %173 : vector<2x128xf32>
    %175 = math.exp %174 : vector<2x128xf32>
    %cst_79 = arith.constant 1.000000e+00 : f32
    %176 = vector.broadcast %cst_79 : f32 to vector<2x128xf32>
    %177 = arith.addf %176, %175 : vector<2x128xf32>
    %178 = arith.divf %176, %177 : vector<2x128xf32>
    %179 = vector.broadcast %8 : vector<1x128xf32> to vector<2x128xf32>
    %180 = arith.mulf %178, %179 : vector<2x128xf32>
    %181 = vector.broadcast %11 : vector<1x128xf32> to vector<2x128xf32>
    %182 = arith.addf %180, %181 : vector<2x128xf32>
    %183 = vector.extract_strided_slice %182 {offsets = [0, 0], sizes = [2, 32], strides = [1, 1]} : vector<2x128xf32> to vector<2x32xf32>
    %184 = vector.extract_strided_slice %182 {offsets = [0, 32], sizes = [2, 32], strides = [1, 1]} : vector<2x128xf32> to vector<2x32xf32>
    %185 = vector.extract_strided_slice %182 {offsets = [0, 64], sizes = [2, 32], strides = [1, 1]} : vector<2x128xf32> to vector<2x32xf32>
    %186 = vector.extract_strided_slice %182 {offsets = [0, 96], sizes = [2, 32], strides = [1, 1]} : vector<2x128xf32> to vector<2x32xf32>
    %187 = arith.mulf %184, %134 : vector<2x32xf32>
    %188 = arith.mulf %183, %185 : vector<2x32xf32>
    %189 = arith.addf %187, %188 : vector<2x32xf32>
    %190 = math.tanh %189 : vector<2x32xf32>
    %191 = arith.mulf %186, %190 : vector<2x32xf32>
    %c2_i32 = arith.constant 2 : i32
    %192 = arith.index_cast %c2_i32 : i32 to index
    %c0_80 = arith.constant 0 : index
    %c0_81 = arith.constant 0 : index
    %193 = vector.load %arg15[%192, %c0_80, %c0_81] : memref<8x2x128xf32, #tpu.memory_space<vmem>>, vector<1x2x128xf32>
    %194 = vector.shape_cast %193 : vector<1x2x128xf32> to vector<2x128xf32>
    %c0_82 = arith.constant 0 : index
    %c0_83 = arith.constant 0 : index
    %195 = vector.load %arg3[%c0_82, %c0_83] : memref<32x128xf32, #tpu.memory_space<vmem>>, vector<32x128xf32>
    %cst_84 = arith.constant dense<0.000000e+00> : vector<2x128xf32>
    %196 = tpu.matmul %165, %195, %cst_84 {dimension_numbers = #tpu.dot_dimension_numbers<[1], [0], [0], [1], [0, 0, 1, 1], [], []>} : vector<2x32xf32>, vector<32x128xf32>, vector<2x128xf32> -> vector<2x128xf32>
    %197 = arith.addf %194, %196 : vector<2x128xf32>
    %c0_85 = arith.constant 0 : index
    %c0_86 = arith.constant 0 : index
    %198 = vector.load %arg4[%c0_85, %c0_86] : memref<1x128xf32, #tpu.memory_space<vmem>>, vector<1x128xf32>
    %199 = vector.broadcast %198 : vector<1x128xf32> to vector<2x128xf32>
    %200 = arith.addf %197, %199 : vector<2x128xf32>
    %201 = vector.broadcast %8 : vector<1x128xf32> to vector<2x128xf32>
    %202 = arith.mulf %200, %201 : vector<2x128xf32>
    %203 = arith.negf %202 : vector<2x128xf32>
    %204 = math.exp %203 : vector<2x128xf32>
    %cst_87 = arith.constant 1.000000e+00 : f32
    %205 = vector.broadcast %cst_87 : f32 to vector<2x128xf32>
    %206 = arith.addf %205, %204 : vector<2x128xf32>
    %207 = arith.divf %205, %206 : vector<2x128xf32>
    %208 = vector.broadcast %8 : vector<1x128xf32> to vector<2x128xf32>
    %209 = arith.mulf %207, %208 : vector<2x128xf32>
    %210 = vector.broadcast %11 : vector<1x128xf32> to vector<2x128xf32>
    %211 = arith.addf %209, %210 : vector<2x128xf32>
    %212 = vector.extract_strided_slice %211 {offsets = [0, 0], sizes = [2, 32], strides = [1, 1]} : vector<2x128xf32> to vector<2x32xf32>
    %213 = vector.extract_strided_slice %211 {offsets = [0, 32], sizes = [2, 32], strides = [1, 1]} : vector<2x128xf32> to vector<2x32xf32>
    %214 = vector.extract_strided_slice %211 {offsets = [0, 64], sizes = [2, 32], strides = [1, 1]} : vector<2x128xf32> to vector<2x32xf32>
    %215 = vector.extract_strided_slice %211 {offsets = [0, 96], sizes = [2, 32], strides = [1, 1]} : vector<2x128xf32> to vector<2x32xf32>
    %216 = arith.mulf %213, %163 : vector<2x32xf32>
    %217 = arith.mulf %212, %214 : vector<2x32xf32>
    %218 = arith.addf %216, %217 : vector<2x32xf32>
    %219 = math.tanh %218 : vector<2x32xf32>
    %220 = arith.mulf %215, %219 : vector<2x32xf32>
    %221 = tpu.concatenate %220, %191 in 1 : vector<2x32xf32>, vector<2x32xf32> -> vector<2x64xf32>
    %c0_88 = arith.constant 0 : index
    %c0_89 = arith.constant 0 : index
    %222 = vector.load %arg5[%c0_88, %c0_89] : memref<64x128xf32, #tpu.memory_space<vmem>>, vector<64x128xf32>
    %cst_90 = arith.constant dense<0.000000e+00> : vector<2x128xf32>
    %223 = tpu.matmul %221, %222, %cst_90 {dimension_numbers = #tpu.dot_dimension_numbers<[1], [0], [0], [1], [0, 0, 1, 1], [], []>} : vector<2x64xf32>, vector<64x128xf32>, vector<2x128xf32> -> vector<2x128xf32>
    %c0_91 = arith.constant 0 : index
    %c0_92 = arith.constant 0 : index
    %224 = vector.load %arg6[%c0_91, %c0_92] : memref<1x128xf32, #tpu.memory_space<vmem>>, vector<1x128xf32>
    %225 = vector.broadcast %224 : vector<1x128xf32> to vector<2x128xf32>
    %226 = arith.addf %223, %225 : vector<2x128xf32>
    %227 = vector.broadcast %8 : vector<1x128xf32> to vector<2x128xf32>
    %228 = arith.mulf %226, %227 : vector<2x128xf32>
    %229 = arith.negf %228 : vector<2x128xf32>
    %230 = math.exp %229 : vector<2x128xf32>
    %cst_93 = arith.constant 1.000000e+00 : f32
    %231 = vector.broadcast %cst_93 : f32 to vector<2x128xf32>
    %232 = arith.addf %231, %230 : vector<2x128xf32>
    %233 = arith.divf %231, %232 : vector<2x128xf32>
    %234 = vector.broadcast %8 : vector<1x128xf32> to vector<2x128xf32>
    %235 = arith.mulf %233, %234 : vector<2x128xf32>
    %236 = vector.broadcast %11 : vector<1x128xf32> to vector<2x128xf32>
    %237 = arith.addf %235, %236 : vector<2x128xf32>
    %238 = vector.extract_strided_slice %237 {offsets = [0, 0], sizes = [2, 32], strides = [1, 1]} : vector<2x128xf32> to vector<2x32xf32>
    %239 = vector.extract_strided_slice %237 {offsets = [0, 32], sizes = [2, 32], strides = [1, 1]} : vector<2x128xf32> to vector<2x32xf32>
    %240 = vector.extract_strided_slice %237 {offsets = [0, 64], sizes = [2, 32], strides = [1, 1]} : vector<2x128xf32> to vector<2x32xf32>
    %241 = vector.extract_strided_slice %237 {offsets = [0, 96], sizes = [2, 32], strides = [1, 1]} : vector<2x128xf32> to vector<2x32xf32>
    %242 = arith.mulf %239, %189 : vector<2x32xf32>
    %243 = arith.mulf %238, %240 : vector<2x32xf32>
    %244 = arith.addf %242, %243 : vector<2x32xf32>
    %245 = math.tanh %244 : vector<2x32xf32>
    %246 = arith.mulf %241, %245 : vector<2x32xf32>
    %c3_i32 = arith.constant 3 : i32
    %247 = arith.index_cast %c3_i32 : i32 to index
    %c0_94 = arith.constant 0 : index
    %c0_95 = arith.constant 0 : index
    %248 = vector.load %arg15[%247, %c0_94, %c0_95] : memref<8x2x128xf32, #tpu.memory_space<vmem>>, vector<1x2x128xf32>
    %249 = vector.shape_cast %248 : vector<1x2x128xf32> to vector<2x128xf32>
    %c0_96 = arith.constant 0 : index
    %c0_97 = arith.constant 0 : index
    %250 = vector.load %arg3[%c0_96, %c0_97] : memref<32x128xf32, #tpu.memory_space<vmem>>, vector<32x128xf32>
    %cst_98 = arith.constant dense<0.000000e+00> : vector<2x128xf32>
    %251 = tpu.matmul %220, %250, %cst_98 {dimension_numbers = #tpu.dot_dimension_numbers<[1], [0], [0], [1], [0, 0, 1, 1], [], []>} : vector<2x32xf32>, vector<32x128xf32>, vector<2x128xf32> -> vector<2x128xf32>
    %252 = arith.addf %249, %251 : vector<2x128xf32>
    %c0_99 = arith.constant 0 : index
    %c0_100 = arith.constant 0 : index
    %253 = vector.load %arg4[%c0_99, %c0_100] : memref<1x128xf32, #tpu.memory_space<vmem>>, vector<1x128xf32>
    %254 = vector.broadcast %253 : vector<1x128xf32> to vector<2x128xf32>
    %255 = arith.addf %252, %254 : vector<2x128xf32>
    %256 = vector.broadcast %8 : vector<1x128xf32> to vector<2x128xf32>
    %257 = arith.mulf %255, %256 : vector<2x128xf32>
    %258 = arith.negf %257 : vector<2x128xf32>
    %259 = math.exp %258 : vector<2x128xf32>
    %cst_101 = arith.constant 1.000000e+00 : f32
    %260 = vector.broadcast %cst_101 : f32 to vector<2x128xf32>
    %261 = arith.addf %260, %259 : vector<2x128xf32>
    %262 = arith.divf %260, %261 : vector<2x128xf32>
    %263 = vector.broadcast %8 : vector<1x128xf32> to vector<2x128xf32>
    %264 = arith.mulf %262, %263 : vector<2x128xf32>
    %265 = vector.broadcast %11 : vector<1x128xf32> to vector<2x128xf32>
    %266 = arith.addf %264, %265 : vector<2x128xf32>
    %267 = vector.extract_strided_slice %266 {offsets = [0, 0], sizes = [2, 32], strides = [1, 1]} : vector<2x128xf32> to vector<2x32xf32>
    %268 = vector.extract_strided_slice %266 {offsets = [0, 32], sizes = [2, 32], strides = [1, 1]} : vector<2x128xf32> to vector<2x32xf32>
    %269 = vector.extract_strided_slice %266 {offsets = [0, 64], sizes = [2, 32], strides = [1, 1]} : vector<2x128xf32> to vector<2x32xf32>
    %270 = vector.extract_strided_slice %266 {offsets = [0, 96], sizes = [2, 32], strides = [1, 1]} : vector<2x128xf32> to vector<2x32xf32>
    %271 = arith.mulf %268, %218 : vector<2x32xf32>
    %272 = arith.mulf %267, %269 : vector<2x32xf32>
    %273 = arith.addf %271, %272 : vector<2x32xf32>
    %274 = math.tanh %273 : vector<2x32xf32>
    %275 = arith.mulf %270, %274 : vector<2x32xf32>
    %276 = tpu.concatenate %275, %246 in 1 : vector<2x32xf32>, vector<2x32xf32> -> vector<2x64xf32>
    %c0_102 = arith.constant 0 : index
    %c0_103 = arith.constant 0 : index
    %277 = vector.load %arg5[%c0_102, %c0_103] : memref<64x128xf32, #tpu.memory_space<vmem>>, vector<64x128xf32>
    %cst_104 = arith.constant dense<0.000000e+00> : vector<2x128xf32>
    %278 = tpu.matmul %276, %277, %cst_104 {dimension_numbers = #tpu.dot_dimension_numbers<[1], [0], [0], [1], [0, 0, 1, 1], [], []>} : vector<2x64xf32>, vector<64x128xf32>, vector<2x128xf32> -> vector<2x128xf32>
    %c0_105 = arith.constant 0 : index
    %c0_106 = arith.constant 0 : index
    %279 = vector.load %arg6[%c0_105, %c0_106] : memref<1x128xf32, #tpu.memory_space<vmem>>, vector<1x128xf32>
    %280 = vector.broadcast %279 : vector<1x128xf32> to vector<2x128xf32>
    %281 = arith.addf %278, %280 : vector<2x128xf32>
    %282 = vector.broadcast %8 : vector<1x128xf32> to vector<2x128xf32>
    %283 = arith.mulf %281, %282 : vector<2x128xf32>
    %284 = arith.negf %283 : vector<2x128xf32>
    %285 = math.exp %284 : vector<2x128xf32>
    %cst_107 = arith.constant 1.000000e+00 : f32
    %286 = vector.broadcast %cst_107 : f32 to vector<2x128xf32>
    %287 = arith.addf %286, %285 : vector<2x128xf32>
    %288 = arith.divf %286, %287 : vector<2x128xf32>
    %289 = vector.broadcast %8 : vector<1x128xf32> to vector<2x128xf32>
    %290 = arith.mulf %288, %289 : vector<2x128xf32>
    %291 = vector.broadcast %11 : vector<1x128xf32> to vector<2x128xf32>
    %292 = arith.addf %290, %291 : vector<2x128xf32>
    %293 = vector.extract_strided_slice %292 {offsets = [0, 0], sizes = [2, 32], strides = [1, 1]} : vector<2x128xf32> to vector<2x32xf32>
    %294 = vector.extract_strided_slice %292 {offsets = [0, 32], sizes = [2, 32], strides = [1, 1]} : vector<2x128xf32> to vector<2x32xf32>
    %295 = vector.extract_strided_slice %292 {offsets = [0, 64], sizes = [2, 32], strides = [1, 1]} : vector<2x128xf32> to vector<2x32xf32>
    %296 = vector.extract_strided_slice %292 {offsets = [0, 96], sizes = [2, 32], strides = [1, 1]} : vector<2x128xf32> to vector<2x32xf32>
    %297 = arith.mulf %294, %244 : vector<2x32xf32>
    %298 = arith.mulf %293, %295 : vector<2x32xf32>
    %299 = arith.addf %297, %298 : vector<2x32xf32>
    %300 = math.tanh %299 : vector<2x32xf32>
    %301 = arith.mulf %296, %300 : vector<2x32xf32>
    %c4_i32 = arith.constant 4 : i32
    %302 = arith.index_cast %c4_i32 : i32 to index
    %c0_108 = arith.constant 0 : index
    %c0_109 = arith.constant 0 : index
    %303 = vector.load %arg15[%302, %c0_108, %c0_109] : memref<8x2x128xf32, #tpu.memory_space<vmem>>, vector<1x2x128xf32>
    %304 = vector.shape_cast %303 : vector<1x2x128xf32> to vector<2x128xf32>
    %c0_110 = arith.constant 0 : index
    %c0_111 = arith.constant 0 : index
    %305 = vector.load %arg3[%c0_110, %c0_111] : memref<32x128xf32, #tpu.memory_space<vmem>>, vector<32x128xf32>
    %cst_112 = arith.constant dense<0.000000e+00> : vector<2x128xf32>
    %306 = tpu.matmul %275, %305, %cst_112 {dimension_numbers = #tpu.dot_dimension_numbers<[1], [0], [0], [1], [0, 0, 1, 1], [], []>} : vector<2x32xf32>, vector<32x128xf32>, vector<2x128xf32> -> vector<2x128xf32>
    %307 = arith.addf %304, %306 : vector<2x128xf32>
    %c0_113 = arith.constant 0 : index
    %c0_114 = arith.constant 0 : index
    %308 = vector.load %arg4[%c0_113, %c0_114] : memref<1x128xf32, #tpu.memory_space<vmem>>, vector<1x128xf32>
    %309 = vector.broadcast %308 : vector<1x128xf32> to vector<2x128xf32>
    %310 = arith.addf %307, %309 : vector<2x128xf32>
    %311 = vector.broadcast %8 : vector<1x128xf32> to vector<2x128xf32>
    %312 = arith.mulf %310, %311 : vector<2x128xf32>
    %313 = arith.negf %312 : vector<2x128xf32>
    %314 = math.exp %313 : vector<2x128xf32>
    %cst_115 = arith.constant 1.000000e+00 : f32
    %315 = vector.broadcast %cst_115 : f32 to vector<2x128xf32>
    %316 = arith.addf %315, %314 : vector<2x128xf32>
    %317 = arith.divf %315, %316 : vector<2x128xf32>
    %318 = vector.broadcast %8 : vector<1x128xf32> to vector<2x128xf32>
    %319 = arith.mulf %317, %318 : vector<2x128xf32>
    %320 = vector.broadcast %11 : vector<1x128xf32> to vector<2x128xf32>
    %321 = arith.addf %319, %320 : vector<2x128xf32>
    %322 = vector.extract_strided_slice %321 {offsets = [0, 0], sizes = [2, 32], strides = [1, 1]} : vector<2x128xf32> to vector<2x32xf32>
    %323 = vector.extract_strided_slice %321 {offsets = [0, 32], sizes = [2, 32], strides = [1, 1]} : vector<2x128xf32> to vector<2x32xf32>
    %324 = vector.extract_strided_slice %321 {offsets = [0, 64], sizes = [2, 32], strides = [1, 1]} : vector<2x128xf32> to vector<2x32xf32>
    %325 = vector.extract_strided_slice %321 {offsets = [0, 96], sizes = [2, 32], strides = [1, 1]} : vector<2x128xf32> to vector<2x32xf32>
    %326 = arith.mulf %323, %273 : vector<2x32xf32>
    %327 = arith.mulf %322, %324 : vector<2x32xf32>
    %328 = arith.addf %326, %327 : vector<2x32xf32>
    %329 = math.tanh %328 : vector<2x32xf32>
    %330 = arith.mulf %325, %329 : vector<2x32xf32>
    %331 = tpu.concatenate %330, %301 in 1 : vector<2x32xf32>, vector<2x32xf32> -> vector<2x64xf32>
    %c0_116 = arith.constant 0 : index
    %c0_117 = arith.constant 0 : index
    %332 = vector.load %arg5[%c0_116, %c0_117] : memref<64x128xf32, #tpu.memory_space<vmem>>, vector<64x128xf32>
    %cst_118 = arith.constant dense<0.000000e+00> : vector<2x128xf32>
    %333 = tpu.matmul %331, %332, %cst_118 {dimension_numbers = #tpu.dot_dimension_numbers<[1], [0], [0], [1], [0, 0, 1, 1], [], []>} : vector<2x64xf32>, vector<64x128xf32>, vector<2x128xf32> -> vector<2x128xf32>
    %c0_119 = arith.constant 0 : index
    %c0_120 = arith.constant 0 : index
    %334 = vector.load %arg6[%c0_119, %c0_120] : memref<1x128xf32, #tpu.memory_space<vmem>>, vector<1x128xf32>
    %335 = vector.broadcast %334 : vector<1x128xf32> to vector<2x128xf32>
    %336 = arith.addf %333, %335 : vector<2x128xf32>
    %337 = vector.broadcast %8 : vector<1x128xf32> to vector<2x128xf32>
    %338 = arith.mulf %336, %337 : vector<2x128xf32>
    %339 = arith.negf %338 : vector<2x128xf32>
    %340 = math.exp %339 : vector<2x128xf32>
    %cst_121 = arith.constant 1.000000e+00 : f32
    %341 = vector.broadcast %cst_121 : f32 to vector<2x128xf32>
    %342 = arith.addf %341, %340 : vector<2x128xf32>
    %343 = arith.divf %341, %342 : vector<2x128xf32>
    %344 = vector.broadcast %8 : vector<1x128xf32> to vector<2x128xf32>
    %345 = arith.mulf %343, %344 : vector<2x128xf32>
    %346 = vector.broadcast %11 : vector<1x128xf32> to vector<2x128xf32>
    %347 = arith.addf %345, %346 : vector<2x128xf32>
    %348 = vector.extract_strided_slice %347 {offsets = [0, 0], sizes = [2, 32], strides = [1, 1]} : vector<2x128xf32> to vector<2x32xf32>
    %349 = vector.extract_strided_slice %347 {offsets = [0, 32], sizes = [2, 32], strides = [1, 1]} : vector<2x128xf32> to vector<2x32xf32>
    %350 = vector.extract_strided_slice %347 {offsets = [0, 64], sizes = [2, 32], strides = [1, 1]} : vector<2x128xf32> to vector<2x32xf32>
    %351 = vector.extract_strided_slice %347 {offsets = [0, 96], sizes = [2, 32], strides = [1, 1]} : vector<2x128xf32> to vector<2x32xf32>
    %352 = arith.mulf %349, %299 : vector<2x32xf32>
    %353 = arith.mulf %348, %350 : vector<2x32xf32>
    %354 = arith.addf %352, %353 : vector<2x32xf32>
    %355 = math.tanh %354 : vector<2x32xf32>
    %356 = arith.mulf %351, %355 : vector<2x32xf32>
    %c5_i32 = arith.constant 5 : i32
    %357 = arith.index_cast %c5_i32 : i32 to index
    %c0_122 = arith.constant 0 : index
    %c0_123 = arith.constant 0 : index
    %358 = vector.load %arg15[%357, %c0_122, %c0_123] : memref<8x2x128xf32, #tpu.memory_space<vmem>>, vector<1x2x128xf32>
    %359 = vector.shape_cast %358 : vector<1x2x128xf32> to vector<2x128xf32>
    %c0_124 = arith.constant 0 : index
    %c0_125 = arith.constant 0 : index
    %360 = vector.load %arg3[%c0_124, %c0_125] : memref<32x128xf32, #tpu.memory_space<vmem>>, vector<32x128xf32>
    %cst_126 = arith.constant dense<0.000000e+00> : vector<2x128xf32>
    %361 = tpu.matmul %330, %360, %cst_126 {dimension_numbers = #tpu.dot_dimension_numbers<[1], [0], [0], [1], [0, 0, 1, 1], [], []>} : vector<2x32xf32>, vector<32x128xf32>, vector<2x128xf32> -> vector<2x128xf32>
    %362 = arith.addf %359, %361 : vector<2x128xf32>
    %c0_127 = arith.constant 0 : index
    %c0_128 = arith.constant 0 : index
    %363 = vector.load %arg4[%c0_127, %c0_128] : memref<1x128xf32, #tpu.memory_space<vmem>>, vector<1x128xf32>
    %364 = vector.broadcast %363 : vector<1x128xf32> to vector<2x128xf32>
    %365 = arith.addf %362, %364 : vector<2x128xf32>
    %366 = vector.broadcast %8 : vector<1x128xf32> to vector<2x128xf32>
    %367 = arith.mulf %365, %366 : vector<2x128xf32>
    %368 = arith.negf %367 : vector<2x128xf32>
    %369 = math.exp %368 : vector<2x128xf32>
    %cst_129 = arith.constant 1.000000e+00 : f32
    %370 = vector.broadcast %cst_129 : f32 to vector<2x128xf32>
    %371 = arith.addf %370, %369 : vector<2x128xf32>
    %372 = arith.divf %370, %371 : vector<2x128xf32>
    %373 = vector.broadcast %8 : vector<1x128xf32> to vector<2x128xf32>
    %374 = arith.mulf %372, %373 : vector<2x128xf32>
    %375 = vector.broadcast %11 : vector<1x128xf32> to vector<2x128xf32>
    %376 = arith.addf %374, %375 : vector<2x128xf32>
    %377 = vector.extract_strided_slice %376 {offsets = [0, 0], sizes = [2, 32], strides = [1, 1]} : vector<2x128xf32> to vector<2x32xf32>
    %378 = vector.extract_strided_slice %376 {offsets = [0, 32], sizes = [2, 32], strides = [1, 1]} : vector<2x128xf32> to vector<2x32xf32>
    %379 = vector.extract_strided_slice %376 {offsets = [0, 64], sizes = [2, 32], strides = [1, 1]} : vector<2x128xf32> to vector<2x32xf32>
    %380 = vector.extract_strided_slice %376 {offsets = [0, 96], sizes = [2, 32], strides = [1, 1]} : vector<2x128xf32> to vector<2x32xf32>
    %381 = arith.mulf %378, %328 : vector<2x32xf32>
    %382 = arith.mulf %377, %379 : vector<2x32xf32>
    %383 = arith.addf %381, %382 : vector<2x32xf32>
    %384 = math.tanh %383 : vector<2x32xf32>
    %385 = arith.mulf %380, %384 : vector<2x32xf32>
    %386 = tpu.concatenate %385, %356 in 1 : vector<2x32xf32>, vector<2x32xf32> -> vector<2x64xf32>
    %c0_130 = arith.constant 0 : index
    %c0_131 = arith.constant 0 : index
    %387 = vector.load %arg5[%c0_130, %c0_131] : memref<64x128xf32, #tpu.memory_space<vmem>>, vector<64x128xf32>
    %cst_132 = arith.constant dense<0.000000e+00> : vector<2x128xf32>
    %388 = tpu.matmul %386, %387, %cst_132 {dimension_numbers = #tpu.dot_dimension_numbers<[1], [0], [0], [1], [0, 0, 1, 1], [], []>} : vector<2x64xf32>, vector<64x128xf32>, vector<2x128xf32> -> vector<2x128xf32>
    %c0_133 = arith.constant 0 : index
    %c0_134 = arith.constant 0 : index
    %389 = vector.load %arg6[%c0_133, %c0_134] : memref<1x128xf32, #tpu.memory_space<vmem>>, vector<1x128xf32>
    %390 = vector.broadcast %389 : vector<1x128xf32> to vector<2x128xf32>
    %391 = arith.addf %388, %390 : vector<2x128xf32>
    %392 = vector.broadcast %8 : vector<1x128xf32> to vector<2x128xf32>
    %393 = arith.mulf %391, %392 : vector<2x128xf32>
    %394 = arith.negf %393 : vector<2x128xf32>
    %395 = math.exp %394 : vector<2x128xf32>
    %cst_135 = arith.constant 1.000000e+00 : f32
    %396 = vector.broadcast %cst_135 : f32 to vector<2x128xf32>
    %397 = arith.addf %396, %395 : vector<2x128xf32>
    %398 = arith.divf %396, %397 : vector<2x128xf32>
    %399 = vector.broadcast %8 : vector<1x128xf32> to vector<2x128xf32>
    %400 = arith.mulf %398, %399 : vector<2x128xf32>
    %401 = vector.broadcast %11 : vector<1x128xf32> to vector<2x128xf32>
    %402 = arith.addf %400, %401 : vector<2x128xf32>
    %403 = vector.extract_strided_slice %402 {offsets = [0, 0], sizes = [2, 32], strides = [1, 1]} : vector<2x128xf32> to vector<2x32xf32>
    %404 = vector.extract_strided_slice %402 {offsets = [0, 32], sizes = [2, 32], strides = [1, 1]} : vector<2x128xf32> to vector<2x32xf32>
    %405 = vector.extract_strided_slice %402 {offsets = [0, 64], sizes = [2, 32], strides = [1, 1]} : vector<2x128xf32> to vector<2x32xf32>
    %406 = vector.extract_strided_slice %402 {offsets = [0, 96], sizes = [2, 32], strides = [1, 1]} : vector<2x128xf32> to vector<2x32xf32>
    %407 = arith.mulf %404, %354 : vector<2x32xf32>
    %408 = arith.mulf %403, %405 : vector<2x32xf32>
    %409 = arith.addf %407, %408 : vector<2x32xf32>
    %410 = math.tanh %409 : vector<2x32xf32>
    %411 = arith.mulf %406, %410 : vector<2x32xf32>
    %c6_i32 = arith.constant 6 : i32
    %412 = arith.index_cast %c6_i32 : i32 to index
    %c0_136 = arith.constant 0 : index
    %c0_137 = arith.constant 0 : index
    %413 = vector.load %arg15[%412, %c0_136, %c0_137] : memref<8x2x128xf32, #tpu.memory_space<vmem>>, vector<1x2x128xf32>
    %414 = vector.shape_cast %413 : vector<1x2x128xf32> to vector<2x128xf32>
    %c0_138 = arith.constant 0 : index
    %c0_139 = arith.constant 0 : index
    %415 = vector.load %arg3[%c0_138, %c0_139] : memref<32x128xf32, #tpu.memory_space<vmem>>, vector<32x128xf32>
    %cst_140 = arith.constant dense<0.000000e+00> : vector<2x128xf32>
    %416 = tpu.matmul %385, %415, %cst_140 {dimension_numbers = #tpu.dot_dimension_numbers<[1], [0], [0], [1], [0, 0, 1, 1], [], []>} : vector<2x32xf32>, vector<32x128xf32>, vector<2x128xf32> -> vector<2x128xf32>
    %417 = arith.addf %414, %416 : vector<2x128xf32>
    %c0_141 = arith.constant 0 : index
    %c0_142 = arith.constant 0 : index
    %418 = vector.load %arg4[%c0_141, %c0_142] : memref<1x128xf32, #tpu.memory_space<vmem>>, vector<1x128xf32>
    %419 = vector.broadcast %418 : vector<1x128xf32> to vector<2x128xf32>
    %420 = arith.addf %417, %419 : vector<2x128xf32>
    %421 = vector.broadcast %8 : vector<1x128xf32> to vector<2x128xf32>
    %422 = arith.mulf %420, %421 : vector<2x128xf32>
    %423 = arith.negf %422 : vector<2x128xf32>
    %424 = math.exp %423 : vector<2x128xf32>
    %cst_143 = arith.constant 1.000000e+00 : f32
    %425 = vector.broadcast %cst_143 : f32 to vector<2x128xf32>
    %426 = arith.addf %425, %424 : vector<2x128xf32>
    %427 = arith.divf %425, %426 : vector<2x128xf32>
    %428 = vector.broadcast %8 : vector<1x128xf32> to vector<2x128xf32>
    %429 = arith.mulf %427, %428 : vector<2x128xf32>
    %430 = vector.broadcast %11 : vector<1x128xf32> to vector<2x128xf32>
    %431 = arith.addf %429, %430 : vector<2x128xf32>
    %432 = vector.extract_strided_slice %431 {offsets = [0, 0], sizes = [2, 32], strides = [1, 1]} : vector<2x128xf32> to vector<2x32xf32>
    %433 = vector.extract_strided_slice %431 {offsets = [0, 32], sizes = [2, 32], strides = [1, 1]} : vector<2x128xf32> to vector<2x32xf32>
    %434 = vector.extract_strided_slice %431 {offsets = [0, 64], sizes = [2, 32], strides = [1, 1]} : vector<2x128xf32> to vector<2x32xf32>
    %435 = vector.extract_strided_slice %431 {offsets = [0, 96], sizes = [2, 32], strides = [1, 1]} : vector<2x128xf32> to vector<2x32xf32>
    %436 = arith.mulf %433, %383 : vector<2x32xf32>
    %437 = arith.mulf %432, %434 : vector<2x32xf32>
    %438 = arith.addf %436, %437 : vector<2x32xf32>
    %439 = math.tanh %438 : vector<2x32xf32>
    %440 = arith.mulf %435, %439 : vector<2x32xf32>
    %441 = tpu.concatenate %440, %411 in 1 : vector<2x32xf32>, vector<2x32xf32> -> vector<2x64xf32>
    %c0_144 = arith.constant 0 : index
    %c0_145 = arith.constant 0 : index
    %442 = vector.load %arg5[%c0_144, %c0_145] : memref<64x128xf32, #tpu.memory_space<vmem>>, vector<64x128xf32>
    %cst_146 = arith.constant dense<0.000000e+00> : vector<2x128xf32>
    %443 = tpu.matmul %441, %442, %cst_146 {dimension_numbers = #tpu.dot_dimension_numbers<[1], [0], [0], [1], [0, 0, 1, 1], [], []>} : vector<2x64xf32>, vector<64x128xf32>, vector<2x128xf32> -> vector<2x128xf32>
    %c0_147 = arith.constant 0 : index
    %c0_148 = arith.constant 0 : index
    %444 = vector.load %arg6[%c0_147, %c0_148] : memref<1x128xf32, #tpu.memory_space<vmem>>, vector<1x128xf32>
    %445 = vector.broadcast %444 : vector<1x128xf32> to vector<2x128xf32>
    %446 = arith.addf %443, %445 : vector<2x128xf32>
    %447 = vector.broadcast %8 : vector<1x128xf32> to vector<2x128xf32>
    %448 = arith.mulf %446, %447 : vector<2x128xf32>
    %449 = arith.negf %448 : vector<2x128xf32>
    %450 = math.exp %449 : vector<2x128xf32>
    %cst_149 = arith.constant 1.000000e+00 : f32
    %451 = vector.broadcast %cst_149 : f32 to vector<2x128xf32>
    %452 = arith.addf %451, %450 : vector<2x128xf32>
    %453 = arith.divf %451, %452 : vector<2x128xf32>
    %454 = vector.broadcast %8 : vector<1x128xf32> to vector<2x128xf32>
    %455 = arith.mulf %453, %454 : vector<2x128xf32>
    %456 = vector.broadcast %11 : vector<1x128xf32> to vector<2x128xf32>
    %457 = arith.addf %455, %456 : vector<2x128xf32>
    %458 = vector.extract_strided_slice %457 {offsets = [0, 0], sizes = [2, 32], strides = [1, 1]} : vector<2x128xf32> to vector<2x32xf32>
    %459 = vector.extract_strided_slice %457 {offsets = [0, 32], sizes = [2, 32], strides = [1, 1]} : vector<2x128xf32> to vector<2x32xf32>
    %460 = vector.extract_strided_slice %457 {offsets = [0, 64], sizes = [2, 32], strides = [1, 1]} : vector<2x128xf32> to vector<2x32xf32>
    %461 = vector.extract_strided_slice %457 {offsets = [0, 96], sizes = [2, 32], strides = [1, 1]} : vector<2x128xf32> to vector<2x32xf32>
    %462 = arith.mulf %459, %409 : vector<2x32xf32>
    %463 = arith.mulf %458, %460 : vector<2x32xf32>
    %464 = arith.addf %462, %463 : vector<2x32xf32>
    %465 = math.tanh %464 : vector<2x32xf32>
    %466 = arith.mulf %461, %465 : vector<2x32xf32>
    %c7_i32 = arith.constant 7 : i32
    %467 = arith.index_cast %c7_i32 : i32 to index
    %c0_150 = arith.constant 0 : index
    %c0_151 = arith.constant 0 : index
    %468 = vector.load %arg15[%467, %c0_150, %c0_151] : memref<8x2x128xf32, #tpu.memory_space<vmem>>, vector<1x2x128xf32>
    %469 = vector.shape_cast %468 : vector<1x2x128xf32> to vector<2x128xf32>
    %c0_152 = arith.constant 0 : index
    %c0_153 = arith.constant 0 : index
    %470 = vector.load %arg3[%c0_152, %c0_153] : memref<32x128xf32, #tpu.memory_space<vmem>>, vector<32x128xf32>
    %cst_154 = arith.constant dense<0.000000e+00> : vector<2x128xf32>
    %471 = tpu.matmul %440, %470, %cst_154 {dimension_numbers = #tpu.dot_dimension_numbers<[1], [0], [0], [1], [0, 0, 1, 1], [], []>} : vector<2x32xf32>, vector<32x128xf32>, vector<2x128xf32> -> vector<2x128xf32>
    %472 = arith.addf %469, %471 : vector<2x128xf32>
    %c0_155 = arith.constant 0 : index
    %c0_156 = arith.constant 0 : index
    %473 = vector.load %arg4[%c0_155, %c0_156] : memref<1x128xf32, #tpu.memory_space<vmem>>, vector<1x128xf32>
    %474 = vector.broadcast %473 : vector<1x128xf32> to vector<2x128xf32>
    %475 = arith.addf %472, %474 : vector<2x128xf32>
    %476 = vector.broadcast %8 : vector<1x128xf32> to vector<2x128xf32>
    %477 = arith.mulf %475, %476 : vector<2x128xf32>
    %478 = arith.negf %477 : vector<2x128xf32>
    %479 = math.exp %478 : vector<2x128xf32>
    %cst_157 = arith.constant 1.000000e+00 : f32
    %480 = vector.broadcast %cst_157 : f32 to vector<2x128xf32>
    %481 = arith.addf %480, %479 : vector<2x128xf32>
    %482 = arith.divf %480, %481 : vector<2x128xf32>
    %483 = vector.broadcast %8 : vector<1x128xf32> to vector<2x128xf32>
    %484 = arith.mulf %482, %483 : vector<2x128xf32>
    %485 = vector.broadcast %11 : vector<1x128xf32> to vector<2x128xf32>
    %486 = arith.addf %484, %485 : vector<2x128xf32>
    %487 = vector.extract_strided_slice %486 {offsets = [0, 0], sizes = [2, 32], strides = [1, 1]} : vector<2x128xf32> to vector<2x32xf32>
    %488 = vector.extract_strided_slice %486 {offsets = [0, 32], sizes = [2, 32], strides = [1, 1]} : vector<2x128xf32> to vector<2x32xf32>
    %489 = vector.extract_strided_slice %486 {offsets = [0, 64], sizes = [2, 32], strides = [1, 1]} : vector<2x128xf32> to vector<2x32xf32>
    %490 = vector.extract_strided_slice %486 {offsets = [0, 96], sizes = [2, 32], strides = [1, 1]} : vector<2x128xf32> to vector<2x32xf32>
    %491 = arith.mulf %488, %438 : vector<2x32xf32>
    %492 = arith.mulf %487, %489 : vector<2x32xf32>
    %493 = arith.addf %491, %492 : vector<2x32xf32>
    %494 = math.tanh %493 : vector<2x32xf32>
    %495 = arith.mulf %490, %494 : vector<2x32xf32>
    %496 = tpu.concatenate %495, %466 in 1 : vector<2x32xf32>, vector<2x32xf32> -> vector<2x64xf32>
    %c0_158 = arith.constant 0 : index
    %c0_159 = arith.constant 0 : index
    %497 = vector.load %arg5[%c0_158, %c0_159] : memref<64x128xf32, #tpu.memory_space<vmem>>, vector<64x128xf32>
    %cst_160 = arith.constant dense<0.000000e+00> : vector<2x128xf32>
    %498 = tpu.matmul %496, %497, %cst_160 {dimension_numbers = #tpu.dot_dimension_numbers<[1], [0], [0], [1], [0, 0, 1, 1], [], []>} : vector<2x64xf32>, vector<64x128xf32>, vector<2x128xf32> -> vector<2x128xf32>
    %c0_161 = arith.constant 0 : index
    %c0_162 = arith.constant 0 : index
    %499 = vector.load %arg6[%c0_161, %c0_162] : memref<1x128xf32, #tpu.memory_space<vmem>>, vector<1x128xf32>
    %500 = vector.broadcast %499 : vector<1x128xf32> to vector<2x128xf32>
    %501 = arith.addf %498, %500 : vector<2x128xf32>
    %502 = vector.broadcast %8 : vector<1x128xf32> to vector<2x128xf32>
    %503 = arith.mulf %501, %502 : vector<2x128xf32>
    %504 = arith.negf %503 : vector<2x128xf32>
    %505 = math.exp %504 : vector<2x128xf32>
    %cst_163 = arith.constant 1.000000e+00 : f32
    %506 = vector.broadcast %cst_163 : f32 to vector<2x128xf32>
    %507 = arith.addf %506, %505 : vector<2x128xf32>
    %508 = arith.divf %506, %507 : vector<2x128xf32>
    %509 = vector.broadcast %8 : vector<1x128xf32> to vector<2x128xf32>
    %510 = arith.mulf %508, %509 : vector<2x128xf32>
    %511 = vector.broadcast %11 : vector<1x128xf32> to vector<2x128xf32>
    %512 = arith.addf %510, %511 : vector<2x128xf32>
    %513 = vector.extract_strided_slice %512 {offsets = [0, 0], sizes = [2, 32], strides = [1, 1]} : vector<2x128xf32> to vector<2x32xf32>
    %514 = vector.extract_strided_slice %512 {offsets = [0, 32], sizes = [2, 32], strides = [1, 1]} : vector<2x128xf32> to vector<2x32xf32>
    %515 = vector.extract_strided_slice %512 {offsets = [0, 64], sizes = [2, 32], strides = [1, 1]} : vector<2x128xf32> to vector<2x32xf32>
    %516 = vector.extract_strided_slice %512 {offsets = [0, 96], sizes = [2, 32], strides = [1, 1]} : vector<2x128xf32> to vector<2x32xf32>
    %517 = arith.mulf %514, %464 : vector<2x32xf32>
    %518 = arith.mulf %513, %515 : vector<2x32xf32>
    %519 = arith.addf %517, %518 : vector<2x32xf32>
    %520 = math.tanh %519 : vector<2x32xf32>
    %521 = arith.mulf %516, %520 : vector<2x32xf32>
    %c8_i32 = arith.constant 8 : i32
    %c0_164 = arith.constant 0 : index
    %c0_165 = arith.constant 0 : index
    %522 = vector.load %arg1[%c0_164, %c0_165] : memref<16x128xf32, #tpu.memory_space<vmem>>, vector<2x128xf32>
    %c0_166 = arith.constant 0 : index
    %c0_167 = arith.constant 0 : index
    %c0_168 = arith.constant 0 : index
    %523 = vector.load %arg14[%c0_166, %c0_167, %c0_168] : memref<8x2x128xf32, #tpu.memory_space<vmem>>, vector<1x2x128xf32>
    %524 = vector.shape_cast %523 : vector<1x2x128xf32> to vector<2x128xf32>
    %525 = vector.shape_cast %522 : vector<2x128xf32> to vector<1x2x128xf32>
    tpu.vector_store %arg14[%c0_166, %c0_167, %c0_168], %525 {strides = array<i32>} : memref<8x2x128xf32, #tpu.memory_space<vmem>>, vector<1x2x128xf32>,
    %c0_169 = arith.constant 0 : index
    %c0_170 = arith.constant 0 : index
    %c0_171 = arith.constant 0 : index
    %526 = vector.load %arg16[%c0_169, %c0_170, %c0_171] : memref<8x2x128xf32, #tpu.memory_space<vmem>>, vector<1x2x128xf32>
    %527 = vector.shape_cast %526 : vector<1x2x128xf32> to vector<2x128xf32>
    %c1_i32_172 = arith.constant 1 : i32
    %c0_173 = arith.constant 0 : index
    %c0_174 = arith.constant 0 : index
    %528 = vector.load %arg8[%c0_173, %c0_174] : memref<32x128xf32, #tpu.memory_space<vmem>>, vector<32x128xf32>
    %cst_175 = arith.constant dense<0.000000e+00> : vector<2x128xf32>
    %529 = tpu.matmul %495, %528, %cst_175 {dimension_numbers = #tpu.dot_dimension_numbers<[1], [0], [0], [1], [0, 0, 1, 1], [], []>} : vector<2x32xf32>, vector<32x128xf32>, vector<2x128xf32> -> vector<2x128xf32>
    %530 = arith.addf %527, %529 : vector<2x128xf32>
    %c0_176 = arith.constant 0 : index
    %c0_177 = arith.constant 0 : index
    %531 = vector.load %arg9[%c0_176, %c0_177] : memref<1x128xf32, #tpu.memory_space<vmem>>, vector<1x128xf32>
    %532 = vector.broadcast %531 : vector<1x128xf32> to vector<2x128xf32>
    %533 = arith.addf %530, %532 : vector<2x128xf32>
    %534 = vector.broadcast %8 : vector<1x128xf32> to vector<2x128xf32>
    %535 = arith.mulf %533, %534 : vector<2x128xf32>
    %536 = arith.negf %535 : vector<2x128xf32>
    %537 = math.exp %536 : vector<2x128xf32>
    %cst_178 = arith.constant 1.000000e+00 : f32
    %538 = vector.broadcast %cst_178 : f32 to vector<2x128xf32>
    %539 = arith.addf %538, %537 : vector<2x128xf32>
    %540 = arith.divf %538, %539 : vector<2x128xf32>
    %541 = vector.broadcast %8 : vector<1x128xf32> to vector<2x128xf32>
    %542 = arith.mulf %540, %541 : vector<2x128xf32>
    %543 = vector.broadcast %11 : vector<1x128xf32> to vector<2x128xf32>
    %544 = arith.addf %542, %543 : vector<2x128xf32>
    %545 = vector.extract_strided_slice %544 {offsets = [0, 0], sizes = [2, 32], strides = [1, 1]} : vector<2x128xf32> to vector<2x32xf32>
    %546 = vector.extract_strided_slice %544 {offsets = [0, 32], sizes = [2, 32], strides = [1, 1]} : vector<2x128xf32> to vector<2x32xf32>
    %547 = vector.extract_strided_slice %544 {offsets = [0, 64], sizes = [2, 32], strides = [1, 1]} : vector<2x128xf32> to vector<2x32xf32>
    %548 = vector.extract_strided_slice %544 {offsets = [0, 96], sizes = [2, 32], strides = [1, 1]} : vector<2x128xf32> to vector<2x32xf32>
    %549 = arith.mulf %546, %493 : vector<2x32xf32>
    %550 = arith.mulf %545, %547 : vector<2x32xf32>
    %551 = arith.addf %549, %550 : vector<2x32xf32>
    %552 = math.tanh %551 : vector<2x32xf32>
    %553 = arith.mulf %548, %552 : vector<2x32xf32>
    %554 = tpu.concatenate %553, %521 in 1 : vector<2x32xf32>, vector<2x32xf32> -> vector<2x64xf32>
    %c0_179 = arith.constant 0 : index
    %c0_180 = arith.constant 0 : index
    %555 = vector.load %arg10[%c0_179, %c0_180] : memref<64x128xf32, #tpu.memory_space<vmem>>, vector<64x128xf32>
    %cst_181 = arith.constant dense<0.000000e+00> : vector<2x128xf32>
    %556 = tpu.matmul %554, %555, %cst_181 {dimension_numbers = #tpu.dot_dimension_numbers<[1], [0], [0], [1], [0, 0, 1, 1], [], []>} : vector<2x64xf32>, vector<64x128xf32>, vector<2x128xf32> -> vector<2x128xf32>
    %c0_182 = arith.constant 0 : index
    %c0_183 = arith.constant 0 : index
    %557 = vector.load %arg11[%c0_182, %c0_183] : memref<1x128xf32, #tpu.memory_space<vmem>>, vector<1x128xf32>
    %558 = vector.broadcast %557 : vector<1x128xf32> to vector<2x128xf32>
    %559 = arith.addf %556, %558 : vector<2x128xf32>
    %560 = vector.broadcast %8 : vector<1x128xf32> to vector<2x128xf32>
    %561 = arith.mulf %559, %560 : vector<2x128xf32>
    %562 = arith.negf %561 : vector<2x128xf32>
    %563 = math.exp %562 : vector<2x128xf32>
    %cst_184 = arith.constant 1.000000e+00 : f32
    %564 = vector.broadcast %cst_184 : f32 to vector<2x128xf32>
    %565 = arith.addf %564, %563 : vector<2x128xf32>
    %566 = arith.divf %564, %565 : vector<2x128xf32>
    %567 = vector.broadcast %8 : vector<1x128xf32> to vector<2x128xf32>
    %568 = arith.mulf %566, %567 : vector<2x128xf32>
    %569 = vector.broadcast %11 : vector<1x128xf32> to vector<2x128xf32>
    %570 = arith.addf %568, %569 : vector<2x128xf32>
    %571 = vector.extract_strided_slice %570 {offsets = [0, 0], sizes = [2, 32], strides = [1, 1]} : vector<2x128xf32> to vector<2x32xf32>
    %572 = vector.extract_strided_slice %570 {offsets = [0, 32], sizes = [2, 32], strides = [1, 1]} : vector<2x128xf32> to vector<2x32xf32>
    %573 = vector.extract_strided_slice %570 {offsets = [0, 64], sizes = [2, 32], strides = [1, 1]} : vector<2x128xf32> to vector<2x32xf32>
    %574 = vector.extract_strided_slice %570 {offsets = [0, 96], sizes = [2, 32], strides = [1, 1]} : vector<2x128xf32> to vector<2x32xf32>
    %575 = arith.mulf %572, %519 : vector<2x32xf32>
    %576 = arith.mulf %571, %573 : vector<2x32xf32>
    %577 = arith.addf %575, %576 : vector<2x32xf32>
    %578 = math.tanh %577 : vector<2x32xf32>
    %579 = arith.mulf %574, %578 : vector<2x32xf32>
    %c0_185 = arith.constant 0 : index
    %c0_186 = arith.constant 0 : index
    %580 = vector.load %arg12[%c0_185, %c0_186] : memref<32x128xf32, #tpu.memory_space<vmem>>, vector<32x128xf32>
    %cst_187 = arith.constant dense<0.000000e+00> : vector<2x128xf32>
    %581 = tpu.matmul %579, %580, %cst_187 {dimension_numbers = #tpu.dot_dimension_numbers<[1], [0], [0], [1], [0, 0, 1, 1], [], []>} : vector<2x32xf32>, vector<32x128xf32>, vector<2x128xf32> -> vector<2x128xf32>
    %c0_188 = arith.constant 0 : index
    %c0_189 = arith.constant 0 : index
    %582 = vector.load %arg13[%c0_188, %c0_189] : memref<1x128xf32, #tpu.memory_space<vmem>>, vector<1x128xf32>
    %583 = vector.broadcast %582 : vector<1x128xf32> to vector<2x128xf32>
    %584 = arith.addf %581, %583 : vector<2x128xf32>
    %585 = arith.index_cast %c1_i32_172 : i32 to index
    %c0_190 = arith.constant 0 : index
    %c0_191 = arith.constant 0 : index
    %586 = vector.load %arg14[%585, %c0_190, %c0_191] : memref<8x2x128xf32, #tpu.memory_space<vmem>>, vector<1x2x128xf32>
    %587 = vector.shape_cast %586 : vector<1x2x128xf32> to vector<2x128xf32>
    %588 = vector.shape_cast %584 : vector<2x128xf32> to vector<1x2x128xf32>
    tpu.vector_store %arg14[%585, %c0_190, %c0_191], %588 {strides = array<i32>} : memref<8x2x128xf32, #tpu.memory_space<vmem>>, vector<1x2x128xf32>,
    %c0_192 = arith.constant 0 : index
    %c0_193 = arith.constant 0 : index
    %589 = vector.load %arg7[%c0_192, %c0_193] : memref<128x128xf32, #tpu.memory_space<vmem>>, vector<128x128xf32>
    %cst_194 = arith.constant dense<0.000000e+00> : vector<2x128xf32>
    %590 = tpu.matmul %584, %589, %cst_194 {dimension_numbers = #tpu.dot_dimension_numbers<[1], [0], [0], [1], [0, 0, 1, 1], [], []>} : vector<2x128xf32>, vector<128x128xf32>, vector<2x128xf32> -> vector<2x128xf32>
    %591 = arith.index_cast %c1_i32_172 : i32 to index
    %592 = memref.load %arg0[%591] : memref<8xi32, #tpu.memory_space<smem>>
    %c0_i32_195 = arith.constant 0 : i32
    %593 = arith.cmpi sgt, %592, %c0_i32_195 : i32
    %594 = arith.index_cast %c1_i32_172 : i32 to index
    %c0_196 = arith.constant 0 : index
    %c0_197 = arith.constant 0 : index
    %595 = vector.load %arg16[%594, %c0_196, %c0_197] : memref<8x2x128xf32, #tpu.memory_space<vmem>>, vector<1x2x128xf32>
    %596 = vector.shape_cast %595 : vector<1x2x128xf32> to vector<2x128xf32>
    %597 = arith.select %593, %596, %590 : vector<2x128xf32>
    %c2_i32_198 = arith.constant 2 : i32
    %c0_199 = arith.constant 0 : index
    %c0_200 = arith.constant 0 : index
    %598 = vector.load %arg8[%c0_199, %c0_200] : memref<32x128xf32, #tpu.memory_space<vmem>>, vector<32x128xf32>
    %cst_201 = arith.constant dense<0.000000e+00> : vector<2x128xf32>
    %599 = tpu.matmul %553, %598, %cst_201 {dimension_numbers = #tpu.dot_dimension_numbers<[1], [0], [0], [1], [0, 0, 1, 1], [], []>} : vector<2x32xf32>, vector<32x128xf32>, vector<2x128xf32> -> vector<2x128xf32>
    %600 = arith.addf %597, %599 : vector<2x128xf32>
    %c0_202 = arith.constant 0 : index
    %c0_203 = arith.constant 0 : index
    %601 = vector.load %arg9[%c0_202, %c0_203] : memref<1x128xf32, #tpu.memory_space<vmem>>, vector<1x128xf32>
    %602 = vector.broadcast %601 : vector<1x128xf32> to vector<2x128xf32>
    %603 = arith.addf %600, %602 : vector<2x128xf32>
    %604 = vector.broadcast %8 : vector<1x128xf32> to vector<2x128xf32>
    %605 = arith.mulf %603, %604 : vector<2x128xf32>
    %606 = arith.negf %605 : vector<2x128xf32>
    %607 = math.exp %606 : vector<2x128xf32>
    %cst_204 = arith.constant 1.000000e+00 : f32
    %608 = vector.broadcast %cst_204 : f32 to vector<2x128xf32>
    %609 = arith.addf %608, %607 : vector<2x128xf32>
    %610 = arith.divf %608, %609 : vector<2x128xf32>
    %611 = vector.broadcast %8 : vector<1x128xf32> to vector<2x128xf32>
    %612 = arith.mulf %610, %611 : vector<2x128xf32>
    %613 = vector.broadcast %11 : vector<1x128xf32> to vector<2x128xf32>
    %614 = arith.addf %612, %613 : vector<2x128xf32>
    %615 = vector.extract_strided_slice %614 {offsets = [0, 0], sizes = [2, 32], strides = [1, 1]} : vector<2x128xf32> to vector<2x32xf32>
    %616 = vector.extract_strided_slice %614 {offsets = [0, 32], sizes = [2, 32], strides = [1, 1]} : vector<2x128xf32> to vector<2x32xf32>
    %617 = vector.extract_strided_slice %614 {offsets = [0, 64], sizes = [2, 32], strides = [1, 1]} : vector<2x128xf32> to vector<2x32xf32>
    %618 = vector.extract_strided_slice %614 {offsets = [0, 96], sizes = [2, 32], strides = [1, 1]} : vector<2x128xf32> to vector<2x32xf32>
    %619 = arith.mulf %616, %551 : vector<2x32xf32>
    %620 = arith.mulf %615, %617 : vector<2x32xf32>
    %621 = arith.addf %619, %620 : vector<2x32xf32>
    %622 = math.tanh %621 : vector<2x32xf32>
    %623 = arith.mulf %618, %622 : vector<2x32xf32>
    %624 = tpu.concatenate %623, %579 in 1 : vector<2x32xf32>, vector<2x32xf32> -> vector<2x64xf32>
    %c0_205 = arith.constant 0 : index
    %c0_206 = arith.constant 0 : index
    %625 = vector.load %arg10[%c0_205, %c0_206] : memref<64x128xf32, #tpu.memory_space<vmem>>, vector<64x128xf32>
    %cst_207 = arith.constant dense<0.000000e+00> : vector<2x128xf32>
    %626 = tpu.matmul %624, %625, %cst_207 {dimension_numbers = #tpu.dot_dimension_numbers<[1], [0], [0], [1], [0, 0, 1, 1], [], []>} : vector<2x64xf32>, vector<64x128xf32>, vector<2x128xf32> -> vector<2x128xf32>
    %c0_208 = arith.constant 0 : index
    %c0_209 = arith.constant 0 : index
    %627 = vector.load %arg11[%c0_208, %c0_209] : memref<1x128xf32, #tpu.memory_space<vmem>>, vector<1x128xf32>
    %628 = vector.broadcast %627 : vector<1x128xf32> to vector<2x128xf32>
    %629 = arith.addf %626, %628 : vector<2x128xf32>
    %630 = vector.broadcast %8 : vector<1x128xf32> to vector<2x128xf32>
    %631 = arith.mulf %629, %630 : vector<2x128xf32>
    %632 = arith.negf %631 : vector<2x128xf32>
    %633 = math.exp %632 : vector<2x128xf32>
    %cst_210 = arith.constant 1.000000e+00 : f32
    %634 = vector.broadcast %cst_210 : f32 to vector<2x128xf32>
    %635 = arith.addf %634, %633 : vector<2x128xf32>
    %636 = arith.divf %634, %635 : vector<2x128xf32>
    %637 = vector.broadcast %8 : vector<1x128xf32> to vector<2x128xf32>
    %638 = arith.mulf %636, %637 : vector<2x128xf32>
    %639 = vector.broadcast %11 : vector<1x128xf32> to vector<2x128xf32>
    %640 = arith.addf %638, %639 : vector<2x128xf32>
    %641 = vector.extract_strided_slice %640 {offsets = [0, 0], sizes = [2, 32], strides = [1, 1]} : vector<2x128xf32> to vector<2x32xf32>
    %642 = vector.extract_strided_slice %640 {offsets = [0, 32], sizes = [2, 32], strides = [1, 1]} : vector<2x128xf32> to vector<2x32xf32>
    %643 = vector.extract_strided_slice %640 {offsets = [0, 64], sizes = [2, 32], strides = [1, 1]} : vector<2x128xf32> to vector<2x32xf32>
    %644 = vector.extract_strided_slice %640 {offsets = [0, 96], sizes = [2, 32], strides = [1, 1]} : vector<2x128xf32> to vector<2x32xf32>
    %645 = arith.mulf %642, %577 : vector<2x32xf32>
    %646 = arith.mulf %641, %643 : vector<2x32xf32>
    %647 = arith.addf %645, %646 : vector<2x32xf32>
    %648 = math.tanh %647 : vector<2x32xf32>
    %649 = arith.mulf %644, %648 : vector<2x32xf32>
    %c0_211 = arith.constant 0 : index
    %c0_212 = arith.constant 0 : index
    %650 = vector.load %arg12[%c0_211, %c0_212] : memref<32x128xf32, #tpu.memory_space<vmem>>, vector<32x128xf32>
    %cst_213 = arith.constant dense<0.000000e+00> : vector<2x128xf32>
    %651 = tpu.matmul %649, %650, %cst_213 {dimension_numbers = #tpu.dot_dimension_numbers<[1], [0], [0], [1], [0, 0, 1, 1], [], []>} : vector<2x32xf32>, vector<32x128xf32>, vector<2x128xf32> -> vector<2x128xf32>
    %c0_214 = arith.constant 0 : index
    %c0_215 = arith.constant 0 : index
    %652 = vector.load %arg13[%c0_214, %c0_215] : memref<1x128xf32, #tpu.memory_space<vmem>>, vector<1x128xf32>
    %653 = vector.broadcast %652 : vector<1x128xf32> to vector<2x128xf32>
    %654 = arith.addf %651, %653 : vector<2x128xf32>
    %655 = arith.index_cast %c2_i32_198 : i32 to index
    %c0_216 = arith.constant 0 : index
    %c0_217 = arith.constant 0 : index
    %656 = vector.load %arg14[%655, %c0_216, %c0_217] : memref<8x2x128xf32, #tpu.memory_space<vmem>>, vector<1x2x128xf32>
    %657 = vector.shape_cast %656 : vector<1x2x128xf32> to vector<2x128xf32>
    %658 = vector.shape_cast %654 : vector<2x128xf32> to vector<1x2x128xf32>
    tpu.vector_store %arg14[%655, %c0_216, %c0_217], %658 {strides = array<i32>} : memref<8x2x128xf32, #tpu.memory_space<vmem>>, vector<1x2x128xf32>,
    %c0_218 = arith.constant 0 : index
    %c0_219 = arith.constant 0 : index
    %659 = vector.load %arg7[%c0_218, %c0_219] : memref<128x128xf32, #tpu.memory_space<vmem>>, vector<128x128xf32>
    %cst_220 = arith.constant dense<0.000000e+00> : vector<2x128xf32>
    %660 = tpu.matmul %654, %659, %cst_220 {dimension_numbers = #tpu.dot_dimension_numbers<[1], [0], [0], [1], [0, 0, 1, 1], [], []>} : vector<2x128xf32>, vector<128x128xf32>, vector<2x128xf32> -> vector<2x128xf32>
    %661 = arith.index_cast %c2_i32_198 : i32 to index
    %662 = memref.load %arg0[%661] : memref<8xi32, #tpu.memory_space<smem>>
    %c0_i32_221 = arith.constant 0 : i32
    %663 = arith.cmpi sgt, %662, %c0_i32_221 : i32
    %664 = arith.index_cast %c2_i32_198 : i32 to index
    %c0_222 = arith.constant 0 : index
    %c0_223 = arith.constant 0 : index
    %665 = vector.load %arg16[%664, %c0_222, %c0_223] : memref<8x2x128xf32, #tpu.memory_space<vmem>>, vector<1x2x128xf32>
    %666 = vector.shape_cast %665 : vector<1x2x128xf32> to vector<2x128xf32>
    %667 = arith.select %663, %666, %660 : vector<2x128xf32>
    %c3_i32_224 = arith.constant 3 : i32
    %c0_225 = arith.constant 0 : index
    %c0_226 = arith.constant 0 : index
    %668 = vector.load %arg8[%c0_225, %c0_226] : memref<32x128xf32, #tpu.memory_space<vmem>>, vector<32x128xf32>
    %cst_227 = arith.constant dense<0.000000e+00> : vector<2x128xf32>
    %669 = tpu.matmul %623, %668, %cst_227 {dimension_numbers = #tpu.dot_dimension_numbers<[1], [0], [0], [1], [0, 0, 1, 1], [], []>} : vector<2x32xf32>, vector<32x128xf32>, vector<2x128xf32> -> vector<2x128xf32>
    %670 = arith.addf %667, %669 : vector<2x128xf32>
    %c0_228 = arith.constant 0 : index
    %c0_229 = arith.constant 0 : index
    %671 = vector.load %arg9[%c0_228, %c0_229] : memref<1x128xf32, #tpu.memory_space<vmem>>, vector<1x128xf32>
    %672 = vector.broadcast %671 : vector<1x128xf32> to vector<2x128xf32>
    %673 = arith.addf %670, %672 : vector<2x128xf32>
    %674 = vector.broadcast %8 : vector<1x128xf32> to vector<2x128xf32>
    %675 = arith.mulf %673, %674 : vector<2x128xf32>
    %676 = arith.negf %675 : vector<2x128xf32>
    %677 = math.exp %676 : vector<2x128xf32>
    %cst_230 = arith.constant 1.000000e+00 : f32
    %678 = vector.broadcast %cst_230 : f32 to vector<2x128xf32>
    %679 = arith.addf %678, %677 : vector<2x128xf32>
    %680 = arith.divf %678, %679 : vector<2x128xf32>
    %681 = vector.broadcast %8 : vector<1x128xf32> to vector<2x128xf32>
    %682 = arith.mulf %680, %681 : vector<2x128xf32>
    %683 = vector.broadcast %11 : vector<1x128xf32> to vector<2x128xf32>
    %684 = arith.addf %682, %683 : vector<2x128xf32>
    %685 = vector.extract_strided_slice %684 {offsets = [0, 0], sizes = [2, 32], strides = [1, 1]} : vector<2x128xf32> to vector<2x32xf32>
    %686 = vector.extract_strided_slice %684 {offsets = [0, 32], sizes = [2, 32], strides = [1, 1]} : vector<2x128xf32> to vector<2x32xf32>
    %687 = vector.extract_strided_slice %684 {offsets = [0, 64], sizes = [2, 32], strides = [1, 1]} : vector<2x128xf32> to vector<2x32xf32>
    %688 = vector.extract_strided_slice %684 {offsets = [0, 96], sizes = [2, 32], strides = [1, 1]} : vector<2x128xf32> to vector<2x32xf32>
    %689 = arith.mulf %686, %621 : vector<2x32xf32>
    %690 = arith.mulf %685, %687 : vector<2x32xf32>
    %691 = arith.addf %689, %690 : vector<2x32xf32>
    %692 = math.tanh %691 : vector<2x32xf32>
    %693 = arith.mulf %688, %692 : vector<2x32xf32>
    %694 = tpu.concatenate %693, %649 in 1 : vector<2x32xf32>, vector<2x32xf32> -> vector<2x64xf32>
    %c0_231 = arith.constant 0 : index
    %c0_232 = arith.constant 0 : index
    %695 = vector.load %arg10[%c0_231, %c0_232] : memref<64x128xf32, #tpu.memory_space<vmem>>, vector<64x128xf32>
    %cst_233 = arith.constant dense<0.000000e+00> : vector<2x128xf32>
    %696 = tpu.matmul %694, %695, %cst_233 {dimension_numbers = #tpu.dot_dimension_numbers<[1], [0], [0], [1], [0, 0, 1, 1], [], []>} : vector<2x64xf32>, vector<64x128xf32>, vector<2x128xf32> -> vector<2x128xf32>
    %c0_234 = arith.constant 0 : index
    %c0_235 = arith.constant 0 : index
    %697 = vector.load %arg11[%c0_234, %c0_235] : memref<1x128xf32, #tpu.memory_space<vmem>>, vector<1x128xf32>
    %698 = vector.broadcast %697 : vector<1x128xf32> to vector<2x128xf32>
    %699 = arith.addf %696, %698 : vector<2x128xf32>
    %700 = vector.broadcast %8 : vector<1x128xf32> to vector<2x128xf32>
    %701 = arith.mulf %699, %700 : vector<2x128xf32>
    %702 = arith.negf %701 : vector<2x128xf32>
    %703 = math.exp %702 : vector<2x128xf32>
    %cst_236 = arith.constant 1.000000e+00 : f32
    %704 = vector.broadcast %cst_236 : f32 to vector<2x128xf32>
    %705 = arith.addf %704, %703 : vector<2x128xf32>
    %706 = arith.divf %704, %705 : vector<2x128xf32>
    %707 = vector.broadcast %8 : vector<1x128xf32> to vector<2x128xf32>
    %708 = arith.mulf %706, %707 : vector<2x128xf32>
    %709 = vector.broadcast %11 : vector<1x128xf32> to vector<2x128xf32>
    %710 = arith.addf %708, %709 : vector<2x128xf32>
    %711 = vector.extract_strided_slice %710 {offsets = [0, 0], sizes = [2, 32], strides = [1, 1]} : vector<2x128xf32> to vector<2x32xf32>
    %712 = vector.extract_strided_slice %710 {offsets = [0, 32], sizes = [2, 32], strides = [1, 1]} : vector<2x128xf32> to vector<2x32xf32>
    %713 = vector.extract_strided_slice %710 {offsets = [0, 64], sizes = [2, 32], strides = [1, 1]} : vector<2x128xf32> to vector<2x32xf32>
    %714 = vector.extract_strided_slice %710 {offsets = [0, 96], sizes = [2, 32], strides = [1, 1]} : vector<2x128xf32> to vector<2x32xf32>
    %715 = arith.mulf %712, %647 : vector<2x32xf32>
    %716 = arith.mulf %711, %713 : vector<2x32xf32>
    %717 = arith.addf %715, %716 : vector<2x32xf32>
    %718 = math.tanh %717 : vector<2x32xf32>
    %719 = arith.mulf %714, %718 : vector<2x32xf32>
    %c0_237 = arith.constant 0 : index
    %c0_238 = arith.constant 0 : index
    %720 = vector.load %arg12[%c0_237, %c0_238] : memref<32x128xf32, #tpu.memory_space<vmem>>, vector<32x128xf32>
    %cst_239 = arith.constant dense<0.000000e+00> : vector<2x128xf32>
    %721 = tpu.matmul %719, %720, %cst_239 {dimension_numbers = #tpu.dot_dimension_numbers<[1], [0], [0], [1], [0, 0, 1, 1], [], []>} : vector<2x32xf32>, vector<32x128xf32>, vector<2x128xf32> -> vector<2x128xf32>
    %c0_240 = arith.constant 0 : index
    %c0_241 = arith.constant 0 : index
    %722 = vector.load %arg13[%c0_240, %c0_241] : memref<1x128xf32, #tpu.memory_space<vmem>>, vector<1x128xf32>
    %723 = vector.broadcast %722 : vector<1x128xf32> to vector<2x128xf32>
    %724 = arith.addf %721, %723 : vector<2x128xf32>
    %725 = arith.index_cast %c3_i32_224 : i32 to index
    %c0_242 = arith.constant 0 : index
    %c0_243 = arith.constant 0 : index
    %726 = vector.load %arg14[%725, %c0_242, %c0_243] : memref<8x2x128xf32, #tpu.memory_space<vmem>>, vector<1x2x128xf32>
    %727 = vector.shape_cast %726 : vector<1x2x128xf32> to vector<2x128xf32>
    %728 = vector.shape_cast %724 : vector<2x128xf32> to vector<1x2x128xf32>
    tpu.vector_store %arg14[%725, %c0_242, %c0_243], %728 {strides = array<i32>} : memref<8x2x128xf32, #tpu.memory_space<vmem>>, vector<1x2x128xf32>,
    %c0_244 = arith.constant 0 : index
    %c0_245 = arith.constant 0 : index
    %729 = vector.load %arg7[%c0_244, %c0_245] : memref<128x128xf32, #tpu.memory_space<vmem>>, vector<128x128xf32>
    %cst_246 = arith.constant dense<0.000000e+00> : vector<2x128xf32>
    %730 = tpu.matmul %724, %729, %cst_246 {dimension_numbers = #tpu.dot_dimension_numbers<[1], [0], [0], [1], [0, 0, 1, 1], [], []>} : vector<2x128xf32>, vector<128x128xf32>, vector<2x128xf32> -> vector<2x128xf32>
    %731 = arith.index_cast %c3_i32_224 : i32 to index
    %732 = memref.load %arg0[%731] : memref<8xi32, #tpu.memory_space<smem>>
    %c0_i32_247 = arith.constant 0 : i32
    %733 = arith.cmpi sgt, %732, %c0_i32_247 : i32
    %734 = arith.index_cast %c3_i32_224 : i32 to index
    %c0_248 = arith.constant 0 : index
    %c0_249 = arith.constant 0 : index
    %735 = vector.load %arg16[%734, %c0_248, %c0_249] : memref<8x2x128xf32, #tpu.memory_space<vmem>>, vector<1x2x128xf32>
    %736 = vector.shape_cast %735 : vector<1x2x128xf32> to vector<2x128xf32>
    %737 = arith.select %733, %736, %730 : vector<2x128xf32>
    %c4_i32_250 = arith.constant 4 : i32
    %c0_251 = arith.constant 0 : index
    %c0_252 = arith.constant 0 : index
    %738 = vector.load %arg8[%c0_251, %c0_252] : memref<32x128xf32, #tpu.memory_space<vmem>>, vector<32x128xf32>
    %cst_253 = arith.constant dense<0.000000e+00> : vector<2x128xf32>
    %739 = tpu.matmul %693, %738, %cst_253 {dimension_numbers = #tpu.dot_dimension_numbers<[1], [0], [0], [1], [0, 0, 1, 1], [], []>} : vector<2x32xf32>, vector<32x128xf32>, vector<2x128xf32> -> vector<2x128xf32>
    %740 = arith.addf %737, %739 : vector<2x128xf32>
    %c0_254 = arith.constant 0 : index
    %c0_255 = arith.constant 0 : index
    %741 = vector.load %arg9[%c0_254, %c0_255] : memref<1x128xf32, #tpu.memory_space<vmem>>, vector<1x128xf32>
    %742 = vector.broadcast %741 : vector<1x128xf32> to vector<2x128xf32>
    %743 = arith.addf %740, %742 : vector<2x128xf32>
    %744 = vector.broadcast %8 : vector<1x128xf32> to vector<2x128xf32>
    %745 = arith.mulf %743, %744 : vector<2x128xf32>
    %746 = arith.negf %745 : vector<2x128xf32>
    %747 = math.exp %746 : vector<2x128xf32>
    %cst_256 = arith.constant 1.000000e+00 : f32
    %748 = vector.broadcast %cst_256 : f32 to vector<2x128xf32>
    %749 = arith.addf %748, %747 : vector<2x128xf32>
    %750 = arith.divf %748, %749 : vector<2x128xf32>
    %751 = vector.broadcast %8 : vector<1x128xf32> to vector<2x128xf32>
    %752 = arith.mulf %750, %751 : vector<2x128xf32>
    %753 = vector.broadcast %11 : vector<1x128xf32> to vector<2x128xf32>
    %754 = arith.addf %752, %753 : vector<2x128xf32>
    %755 = vector.extract_strided_slice %754 {offsets = [0, 0], sizes = [2, 32], strides = [1, 1]} : vector<2x128xf32> to vector<2x32xf32>
    %756 = vector.extract_strided_slice %754 {offsets = [0, 32], sizes = [2, 32], strides = [1, 1]} : vector<2x128xf32> to vector<2x32xf32>
    %757 = vector.extract_strided_slice %754 {offsets = [0, 64], sizes = [2, 32], strides = [1, 1]} : vector<2x128xf32> to vector<2x32xf32>
    %758 = vector.extract_strided_slice %754 {offsets = [0, 96], sizes = [2, 32], strides = [1, 1]} : vector<2x128xf32> to vector<2x32xf32>
    %759 = arith.mulf %756, %691 : vector<2x32xf32>
    %760 = arith.mulf %755, %757 : vector<2x32xf32>
    %761 = arith.addf %759, %760 : vector<2x32xf32>
    %762 = math.tanh %761 : vector<2x32xf32>
    %763 = arith.mulf %758, %762 : vector<2x32xf32>
    %764 = tpu.concatenate %763, %719 in 1 : vector<2x32xf32>, vector<2x32xf32> -> vector<2x64xf32>
    %c0_257 = arith.constant 0 : index
    %c0_258 = arith.constant 0 : index
    %765 = vector.load %arg10[%c0_257, %c0_258] : memref<64x128xf32, #tpu.memory_space<vmem>>, vector<64x128xf32>
    %cst_259 = arith.constant dense<0.000000e+00> : vector<2x128xf32>
    %766 = tpu.matmul %764, %765, %cst_259 {dimension_numbers = #tpu.dot_dimension_numbers<[1], [0], [0], [1], [0, 0, 1, 1], [], []>} : vector<2x64xf32>, vector<64x128xf32>, vector<2x128xf32> -> vector<2x128xf32>
    %c0_260 = arith.constant 0 : index
    %c0_261 = arith.constant 0 : index
    %767 = vector.load %arg11[%c0_260, %c0_261] : memref<1x128xf32, #tpu.memory_space<vmem>>, vector<1x128xf32>
    %768 = vector.broadcast %767 : vector<1x128xf32> to vector<2x128xf32>
    %769 = arith.addf %766, %768 : vector<2x128xf32>
    %770 = vector.broadcast %8 : vector<1x128xf32> to vector<2x128xf32>
    %771 = arith.mulf %769, %770 : vector<2x128xf32>
    %772 = arith.negf %771 : vector<2x128xf32>
    %773 = math.exp %772 : vector<2x128xf32>
    %cst_262 = arith.constant 1.000000e+00 : f32
    %774 = vector.broadcast %cst_262 : f32 to vector<2x128xf32>
    %775 = arith.addf %774, %773 : vector<2x128xf32>
    %776 = arith.divf %774, %775 : vector<2x128xf32>
    %777 = vector.broadcast %8 : vector<1x128xf32> to vector<2x128xf32>
    %778 = arith.mulf %776, %777 : vector<2x128xf32>
    %779 = vector.broadcast %11 : vector<1x128xf32> to vector<2x128xf32>
    %780 = arith.addf %778, %779 : vector<2x128xf32>
    %781 = vector.extract_strided_slice %780 {offsets = [0, 0], sizes = [2, 32], strides = [1, 1]} : vector<2x128xf32> to vector<2x32xf32>
    %782 = vector.extract_strided_slice %780 {offsets = [0, 32], sizes = [2, 32], strides = [1, 1]} : vector<2x128xf32> to vector<2x32xf32>
    %783 = vector.extract_strided_slice %780 {offsets = [0, 64], sizes = [2, 32], strides = [1, 1]} : vector<2x128xf32> to vector<2x32xf32>
    %784 = vector.extract_strided_slice %780 {offsets = [0, 96], sizes = [2, 32], strides = [1, 1]} : vector<2x128xf32> to vector<2x32xf32>
    %785 = arith.mulf %782, %717 : vector<2x32xf32>
    %786 = arith.mulf %781, %783 : vector<2x32xf32>
    %787 = arith.addf %785, %786 : vector<2x32xf32>
    %788 = math.tanh %787 : vector<2x32xf32>
    %789 = arith.mulf %784, %788 : vector<2x32xf32>
    %c0_263 = arith.constant 0 : index
    %c0_264 = arith.constant 0 : index
    %790 = vector.load %arg12[%c0_263, %c0_264] : memref<32x128xf32, #tpu.memory_space<vmem>>, vector<32x128xf32>
    %cst_265 = arith.constant dense<0.000000e+00> : vector<2x128xf32>
    %791 = tpu.matmul %789, %790, %cst_265 {dimension_numbers = #tpu.dot_dimension_numbers<[1], [0], [0], [1], [0, 0, 1, 1], [], []>} : vector<2x32xf32>, vector<32x128xf32>, vector<2x128xf32> -> vector<2x128xf32>
    %c0_266 = arith.constant 0 : index
    %c0_267 = arith.constant 0 : index
    %792 = vector.load %arg13[%c0_266, %c0_267] : memref<1x128xf32, #tpu.memory_space<vmem>>, vector<1x128xf32>
    %793 = vector.broadcast %792 : vector<1x128xf32> to vector<2x128xf32>
    %794 = arith.addf %791, %793 : vector<2x128xf32>
    %795 = arith.index_cast %c4_i32_250 : i32 to index
    %c0_268 = arith.constant 0 : index
    %c0_269 = arith.constant 0 : index
    %796 = vector.load %arg14[%795, %c0_268, %c0_269] : memref<8x2x128xf32, #tpu.memory_space<vmem>>, vector<1x2x128xf32>
    %797 = vector.shape_cast %796 : vector<1x2x128xf32> to vector<2x128xf32>
    %798 = vector.shape_cast %794 : vector<2x128xf32> to vector<1x2x128xf32>
    tpu.vector_store %arg14[%795, %c0_268, %c0_269], %798 {strides = array<i32>} : memref<8x2x128xf32, #tpu.memory_space<vmem>>, vector<1x2x128xf32>,
    %c0_270 = arith.constant 0 : index
    %c0_271 = arith.constant 0 : index
    %799 = vector.load %arg7[%c0_270, %c0_271] : memref<128x128xf32, #tpu.memory_space<vmem>>, vector<128x128xf32>
    %cst_272 = arith.constant dense<0.000000e+00> : vector<2x128xf32>
    %800 = tpu.matmul %794, %799, %cst_272 {dimension_numbers = #tpu.dot_dimension_numbers<[1], [0], [0], [1], [0, 0, 1, 1], [], []>} : vector<2x128xf32>, vector<128x128xf32>, vector<2x128xf32> -> vector<2x128xf32>
    %801 = arith.index_cast %c4_i32_250 : i32 to index
    %802 = memref.load %arg0[%801] : memref<8xi32, #tpu.memory_space<smem>>
    %c0_i32_273 = arith.constant 0 : i32
    %803 = arith.cmpi sgt, %802, %c0_i32_273 : i32
    %804 = arith.index_cast %c4_i32_250 : i32 to index
    %c0_274 = arith.constant 0 : index
    %c0_275 = arith.constant 0 : index
    %805 = vector.load %arg16[%804, %c0_274, %c0_275] : memref<8x2x128xf32, #tpu.memory_space<vmem>>, vector<1x2x128xf32>
    %806 = vector.shape_cast %805 : vector<1x2x128xf32> to vector<2x128xf32>
    %807 = arith.select %803, %806, %800 : vector<2x128xf32>
    %c5_i32_276 = arith.constant 5 : i32
    %c0_277 = arith.constant 0 : index
    %c0_278 = arith.constant 0 : index
    %808 = vector.load %arg8[%c0_277, %c0_278] : memref<32x128xf32, #tpu.memory_space<vmem>>, vector<32x128xf32>
    %cst_279 = arith.constant dense<0.000000e+00> : vector<2x128xf32>
    %809 = tpu.matmul %763, %808, %cst_279 {dimension_numbers = #tpu.dot_dimension_numbers<[1], [0], [0], [1], [0, 0, 1, 1], [], []>} : vector<2x32xf32>, vector<32x128xf32>, vector<2x128xf32> -> vector<2x128xf32>
    %810 = arith.addf %807, %809 : vector<2x128xf32>
    %c0_280 = arith.constant 0 : index
    %c0_281 = arith.constant 0 : index
    %811 = vector.load %arg9[%c0_280, %c0_281] : memref<1x128xf32, #tpu.memory_space<vmem>>, vector<1x128xf32>
    %812 = vector.broadcast %811 : vector<1x128xf32> to vector<2x128xf32>
    %813 = arith.addf %810, %812 : vector<2x128xf32>
    %814 = vector.broadcast %8 : vector<1x128xf32> to vector<2x128xf32>
    %815 = arith.mulf %813, %814 : vector<2x128xf32>
    %816 = arith.negf %815 : vector<2x128xf32>
    %817 = math.exp %816 : vector<2x128xf32>
    %cst_282 = arith.constant 1.000000e+00 : f32
    %818 = vector.broadcast %cst_282 : f32 to vector<2x128xf32>
    %819 = arith.addf %818, %817 : vector<2x128xf32>
    %820 = arith.divf %818, %819 : vector<2x128xf32>
    %821 = vector.broadcast %8 : vector<1x128xf32> to vector<2x128xf32>
    %822 = arith.mulf %820, %821 : vector<2x128xf32>
    %823 = vector.broadcast %11 : vector<1x128xf32> to vector<2x128xf32>
    %824 = arith.addf %822, %823 : vector<2x128xf32>
    %825 = vector.extract_strided_slice %824 {offsets = [0, 0], sizes = [2, 32], strides = [1, 1]} : vector<2x128xf32> to vector<2x32xf32>
    %826 = vector.extract_strided_slice %824 {offsets = [0, 32], sizes = [2, 32], strides = [1, 1]} : vector<2x128xf32> to vector<2x32xf32>
    %827 = vector.extract_strided_slice %824 {offsets = [0, 64], sizes = [2, 32], strides = [1, 1]} : vector<2x128xf32> to vector<2x32xf32>
    %828 = vector.extract_strided_slice %824 {offsets = [0, 96], sizes = [2, 32], strides = [1, 1]} : vector<2x128xf32> to vector<2x32xf32>
    %829 = arith.mulf %826, %761 : vector<2x32xf32>
    %830 = arith.mulf %825, %827 : vector<2x32xf32>
    %831 = arith.addf %829, %830 : vector<2x32xf32>
    %832 = math.tanh %831 : vector<2x32xf32>
    %833 = arith.mulf %828, %832 : vector<2x32xf32>
    %834 = tpu.concatenate %833, %789 in 1 : vector<2x32xf32>, vector<2x32xf32> -> vector<2x64xf32>
    %c0_283 = arith.constant 0 : index
    %c0_284 = arith.constant 0 : index
    %835 = vector.load %arg10[%c0_283, %c0_284] : memref<64x128xf32, #tpu.memory_space<vmem>>, vector<64x128xf32>
    %cst_285 = arith.constant dense<0.000000e+00> : vector<2x128xf32>
    %836 = tpu.matmul %834, %835, %cst_285 {dimension_numbers = #tpu.dot_dimension_numbers<[1], [0], [0], [1], [0, 0, 1, 1], [], []>} : vector<2x64xf32>, vector<64x128xf32>, vector<2x128xf32> -> vector<2x128xf32>
    %c0_286 = arith.constant 0 : index
    %c0_287 = arith.constant 0 : index
    %837 = vector.load %arg11[%c0_286, %c0_287] : memref<1x128xf32, #tpu.memory_space<vmem>>, vector<1x128xf32>
    %838 = vector.broadcast %837 : vector<1x128xf32> to vector<2x128xf32>
    %839 = arith.addf %836, %838 : vector<2x128xf32>
    %840 = vector.broadcast %8 : vector<1x128xf32> to vector<2x128xf32>
    %841 = arith.mulf %839, %840 : vector<2x128xf32>
    %842 = arith.negf %841 : vector<2x128xf32>
    %843 = math.exp %842 : vector<2x128xf32>
    %cst_288 = arith.constant 1.000000e+00 : f32
    %844 = vector.broadcast %cst_288 : f32 to vector<2x128xf32>
    %845 = arith.addf %844, %843 : vector<2x128xf32>
    %846 = arith.divf %844, %845 : vector<2x128xf32>
    %847 = vector.broadcast %8 : vector<1x128xf32> to vector<2x128xf32>
    %848 = arith.mulf %846, %847 : vector<2x128xf32>
    %849 = vector.broadcast %11 : vector<1x128xf32> to vector<2x128xf32>
    %850 = arith.addf %848, %849 : vector<2x128xf32>
    %851 = vector.extract_strided_slice %850 {offsets = [0, 0], sizes = [2, 32], strides = [1, 1]} : vector<2x128xf32> to vector<2x32xf32>
    %852 = vector.extract_strided_slice %850 {offsets = [0, 32], sizes = [2, 32], strides = [1, 1]} : vector<2x128xf32> to vector<2x32xf32>
    %853 = vector.extract_strided_slice %850 {offsets = [0, 64], sizes = [2, 32], strides = [1, 1]} : vector<2x128xf32> to vector<2x32xf32>
    %854 = vector.extract_strided_slice %850 {offsets = [0, 96], sizes = [2, 32], strides = [1, 1]} : vector<2x128xf32> to vector<2x32xf32>
    %855 = arith.mulf %852, %787 : vector<2x32xf32>
    %856 = arith.mulf %851, %853 : vector<2x32xf32>
    %857 = arith.addf %855, %856 : vector<2x32xf32>
    %858 = math.tanh %857 : vector<2x32xf32>
    %859 = arith.mulf %854, %858 : vector<2x32xf32>
    %c0_289 = arith.constant 0 : index
    %c0_290 = arith.constant 0 : index
    %860 = vector.load %arg12[%c0_289, %c0_290] : memref<32x128xf32, #tpu.memory_space<vmem>>, vector<32x128xf32>
    %cst_291 = arith.constant dense<0.000000e+00> : vector<2x128xf32>
    %861 = tpu.matmul %859, %860, %cst_291 {dimension_numbers = #tpu.dot_dimension_numbers<[1], [0], [0], [1], [0, 0, 1, 1], [], []>} : vector<2x32xf32>, vector<32x128xf32>, vector<2x128xf32> -> vector<2x128xf32>
    %c0_292 = arith.constant 0 : index
    %c0_293 = arith.constant 0 : index
    %862 = vector.load %arg13[%c0_292, %c0_293] : memref<1x128xf32, #tpu.memory_space<vmem>>, vector<1x128xf32>
    %863 = vector.broadcast %862 : vector<1x128xf32> to vector<2x128xf32>
    %864 = arith.addf %861, %863 : vector<2x128xf32>
    %865 = arith.index_cast %c5_i32_276 : i32 to index
    %c0_294 = arith.constant 0 : index
    %c0_295 = arith.constant 0 : index
    %866 = vector.load %arg14[%865, %c0_294, %c0_295] : memref<8x2x128xf32, #tpu.memory_space<vmem>>, vector<1x2x128xf32>
    %867 = vector.shape_cast %866 : vector<1x2x128xf32> to vector<2x128xf32>
    %868 = vector.shape_cast %864 : vector<2x128xf32> to vector<1x2x128xf32>
    tpu.vector_store %arg14[%865, %c0_294, %c0_295], %868 {strides = array<i32>} : memref<8x2x128xf32, #tpu.memory_space<vmem>>, vector<1x2x128xf32>,
    %c0_296 = arith.constant 0 : index
    %c0_297 = arith.constant 0 : index
    %869 = vector.load %arg7[%c0_296, %c0_297] : memref<128x128xf32, #tpu.memory_space<vmem>>, vector<128x128xf32>
    %cst_298 = arith.constant dense<0.000000e+00> : vector<2x128xf32>
    %870 = tpu.matmul %864, %869, %cst_298 {dimension_numbers = #tpu.dot_dimension_numbers<[1], [0], [0], [1], [0, 0, 1, 1], [], []>} : vector<2x128xf32>, vector<128x128xf32>, vector<2x128xf32> -> vector<2x128xf32>
    %871 = arith.index_cast %c5_i32_276 : i32 to index
    %872 = memref.load %arg0[%871] : memref<8xi32, #tpu.memory_space<smem>>
    %c0_i32_299 = arith.constant 0 : i32
    %873 = arith.cmpi sgt, %872, %c0_i32_299 : i32
    %874 = arith.index_cast %c5_i32_276 : i32 to index
    %c0_300 = arith.constant 0 : index
    %c0_301 = arith.constant 0 : index
    %875 = vector.load %arg16[%874, %c0_300, %c0_301] : memref<8x2x128xf32, #tpu.memory_space<vmem>>, vector<1x2x128xf32>
    %876 = vector.shape_cast %875 : vector<1x2x128xf32> to vector<2x128xf32>
    %877 = arith.select %873, %876, %870 : vector<2x128xf32>
    %c6_i32_302 = arith.constant 6 : i32
    %c0_303 = arith.constant 0 : index
    %c0_304 = arith.constant 0 : index
    %878 = vector.load %arg8[%c0_303, %c0_304] : memref<32x128xf32, #tpu.memory_space<vmem>>, vector<32x128xf32>
    %cst_305 = arith.constant dense<0.000000e+00> : vector<2x128xf32>
    %879 = tpu.matmul %833, %878, %cst_305 {dimension_numbers = #tpu.dot_dimension_numbers<[1], [0], [0], [1], [0, 0, 1, 1], [], []>} : vector<2x32xf32>, vector<32x128xf32>, vector<2x128xf32> -> vector<2x128xf32>
    %880 = arith.addf %877, %879 : vector<2x128xf32>
    %c0_306 = arith.constant 0 : index
    %c0_307 = arith.constant 0 : index
    %881 = vector.load %arg9[%c0_306, %c0_307] : memref<1x128xf32, #tpu.memory_space<vmem>>, vector<1x128xf32>
    %882 = vector.broadcast %881 : vector<1x128xf32> to vector<2x128xf32>
    %883 = arith.addf %880, %882 : vector<2x128xf32>
    %884 = vector.broadcast %8 : vector<1x128xf32> to vector<2x128xf32>
    %885 = arith.mulf %883, %884 : vector<2x128xf32>
    %886 = arith.negf %885 : vector<2x128xf32>
    %887 = math.exp %886 : vector<2x128xf32>
    %cst_308 = arith.constant 1.000000e+00 : f32
    %888 = vector.broadcast %cst_308 : f32 to vector<2x128xf32>
    %889 = arith.addf %888, %887 : vector<2x128xf32>
    %890 = arith.divf %888, %889 : vector<2x128xf32>
    %891 = vector.broadcast %8 : vector<1x128xf32> to vector<2x128xf32>
    %892 = arith.mulf %890, %891 : vector<2x128xf32>
    %893 = vector.broadcast %11 : vector<1x128xf32> to vector<2x128xf32>
    %894 = arith.addf %892, %893 : vector<2x128xf32>
    %895 = vector.extract_strided_slice %894 {offsets = [0, 0], sizes = [2, 32], strides = [1, 1]} : vector<2x128xf32> to vector<2x32xf32>
    %896 = vector.extract_strided_slice %894 {offsets = [0, 32], sizes = [2, 32], strides = [1, 1]} : vector<2x128xf32> to vector<2x32xf32>
    %897 = vector.extract_strided_slice %894 {offsets = [0, 64], sizes = [2, 32], strides = [1, 1]} : vector<2x128xf32> to vector<2x32xf32>
    %898 = vector.extract_strided_slice %894 {offsets = [0, 96], sizes = [2, 32], strides = [1, 1]} : vector<2x128xf32> to vector<2x32xf32>
    %899 = arith.mulf %896, %831 : vector<2x32xf32>
    %900 = arith.mulf %895, %897 : vector<2x32xf32>
    %901 = arith.addf %899, %900 : vector<2x32xf32>
    %902 = math.tanh %901 : vector<2x32xf32>
    %903 = arith.mulf %898, %902 : vector<2x32xf32>
    %904 = tpu.concatenate %903, %859 in 1 : vector<2x32xf32>, vector<2x32xf32> -> vector<2x64xf32>
    %c0_309 = arith.constant 0 : index
    %c0_310 = arith.constant 0 : index
    %905 = vector.load %arg10[%c0_309, %c0_310] : memref<64x128xf32, #tpu.memory_space<vmem>>, vector<64x128xf32>
    %cst_311 = arith.constant dense<0.000000e+00> : vector<2x128xf32>
    %906 = tpu.matmul %904, %905, %cst_311 {dimension_numbers = #tpu.dot_dimension_numbers<[1], [0], [0], [1], [0, 0, 1, 1], [], []>} : vector<2x64xf32>, vector<64x128xf32>, vector<2x128xf32> -> vector<2x128xf32>
    %c0_312 = arith.constant 0 : index
    %c0_313 = arith.constant 0 : index
    %907 = vector.load %arg11[%c0_312, %c0_313] : memref<1x128xf32, #tpu.memory_space<vmem>>, vector<1x128xf32>
    %908 = vector.broadcast %907 : vector<1x128xf32> to vector<2x128xf32>
    %909 = arith.addf %906, %908 : vector<2x128xf32>
    %910 = vector.broadcast %8 : vector<1x128xf32> to vector<2x128xf32>
    %911 = arith.mulf %909, %910 : vector<2x128xf32>
    %912 = arith.negf %911 : vector<2x128xf32>
    %913 = math.exp %912 : vector<2x128xf32>
    %cst_314 = arith.constant 1.000000e+00 : f32
    %914 = vector.broadcast %cst_314 : f32 to vector<2x128xf32>
    %915 = arith.addf %914, %913 : vector<2x128xf32>
    %916 = arith.divf %914, %915 : vector<2x128xf32>
    %917 = vector.broadcast %8 : vector<1x128xf32> to vector<2x128xf32>
    %918 = arith.mulf %916, %917 : vector<2x128xf32>
    %919 = vector.broadcast %11 : vector<1x128xf32> to vector<2x128xf32>
    %920 = arith.addf %918, %919 : vector<2x128xf32>
    %921 = vector.extract_strided_slice %920 {offsets = [0, 0], sizes = [2, 32], strides = [1, 1]} : vector<2x128xf32> to vector<2x32xf32>
    %922 = vector.extract_strided_slice %920 {offsets = [0, 32], sizes = [2, 32], strides = [1, 1]} : vector<2x128xf32> to vector<2x32xf32>
    %923 = vector.extract_strided_slice %920 {offsets = [0, 64], sizes = [2, 32], strides = [1, 1]} : vector<2x128xf32> to vector<2x32xf32>
    %924 = vector.extract_strided_slice %920 {offsets = [0, 96], sizes = [2, 32], strides = [1, 1]} : vector<2x128xf32> to vector<2x32xf32>
    %925 = arith.mulf %922, %857 : vector<2x32xf32>
    %926 = arith.mulf %921, %923 : vector<2x32xf32>
    %927 = arith.addf %925, %926 : vector<2x32xf32>
    %928 = math.tanh %927 : vector<2x32xf32>
    %929 = arith.mulf %924, %928 : vector<2x32xf32>
    %c0_315 = arith.constant 0 : index
    %c0_316 = arith.constant 0 : index
    %930 = vector.load %arg12[%c0_315, %c0_316] : memref<32x128xf32, #tpu.memory_space<vmem>>, vector<32x128xf32>
    %cst_317 = arith.constant dense<0.000000e+00> : vector<2x128xf32>
    %931 = tpu.matmul %929, %930, %cst_317 {dimension_numbers = #tpu.dot_dimension_numbers<[1], [0], [0], [1], [0, 0, 1, 1], [], []>} : vector<2x32xf32>, vector<32x128xf32>, vector<2x128xf32> -> vector<2x128xf32>
    %c0_318 = arith.constant 0 : index
    %c0_319 = arith.constant 0 : index
    %932 = vector.load %arg13[%c0_318, %c0_319] : memref<1x128xf32, #tpu.memory_space<vmem>>, vector<1x128xf32>
    %933 = vector.broadcast %932 : vector<1x128xf32> to vector<2x128xf32>
    %934 = arith.addf %931, %933 : vector<2x128xf32>
    %935 = arith.index_cast %c6_i32_302 : i32 to index
    %c0_320 = arith.constant 0 : index
    %c0_321 = arith.constant 0 : index
    %936 = vector.load %arg14[%935, %c0_320, %c0_321] : memref<8x2x128xf32, #tpu.memory_space<vmem>>, vector<1x2x128xf32>
    %937 = vector.shape_cast %936 : vector<1x2x128xf32> to vector<2x128xf32>
    %938 = vector.shape_cast %934 : vector<2x128xf32> to vector<1x2x128xf32>
    tpu.vector_store %arg14[%935, %c0_320, %c0_321], %938 {strides = array<i32>} : memref<8x2x128xf32, #tpu.memory_space<vmem>>, vector<1x2x128xf32>,
    %c0_322 = arith.constant 0 : index
    %c0_323 = arith.constant 0 : index
    %939 = vector.load %arg7[%c0_322, %c0_323] : memref<128x128xf32, #tpu.memory_space<vmem>>, vector<128x128xf32>
    %cst_324 = arith.constant dense<0.000000e+00> : vector<2x128xf32>
    %940 = tpu.matmul %934, %939, %cst_324 {dimension_numbers = #tpu.dot_dimension_numbers<[1], [0], [0], [1], [0, 0, 1, 1], [], []>} : vector<2x128xf32>, vector<128x128xf32>, vector<2x128xf32> -> vector<2x128xf32>
    %941 = arith.index_cast %c6_i32_302 : i32 to index
    %942 = memref.load %arg0[%941] : memref<8xi32, #tpu.memory_space<smem>>
    %c0_i32_325 = arith.constant 0 : i32
    %943 = arith.cmpi sgt, %942, %c0_i32_325 : i32
    %944 = arith.index_cast %c6_i32_302 : i32 to index
    %c0_326 = arith.constant 0 : index
    %c0_327 = arith.constant 0 : index
    %945 = vector.load %arg16[%944, %c0_326, %c0_327] : memref<8x2x128xf32, #tpu.memory_space<vmem>>, vector<1x2x128xf32>
    %946 = vector.shape_cast %945 : vector<1x2x128xf32> to vector<2x128xf32>
    %947 = arith.select %943, %946, %940 : vector<2x128xf32>
    %c7_i32_328 = arith.constant 7 : i32
    %c0_329 = arith.constant 0 : index
    %c0_330 = arith.constant 0 : index
    %948 = vector.load %arg8[%c0_329, %c0_330] : memref<32x128xf32, #tpu.memory_space<vmem>>, vector<32x128xf32>
    %cst_331 = arith.constant dense<0.000000e+00> : vector<2x128xf32>
    %949 = tpu.matmul %903, %948, %cst_331 {dimension_numbers = #tpu.dot_dimension_numbers<[1], [0], [0], [1], [0, 0, 1, 1], [], []>} : vector<2x32xf32>, vector<32x128xf32>, vector<2x128xf32> -> vector<2x128xf32>
    %950 = arith.addf %947, %949 : vector<2x128xf32>
    %c0_332 = arith.constant 0 : index
    %c0_333 = arith.constant 0 : index
    %951 = vector.load %arg9[%c0_332, %c0_333] : memref<1x128xf32, #tpu.memory_space<vmem>>, vector<1x128xf32>
    %952 = vector.broadcast %951 : vector<1x128xf32> to vector<2x128xf32>
    %953 = arith.addf %950, %952 : vector<2x128xf32>
    %954 = vector.broadcast %8 : vector<1x128xf32> to vector<2x128xf32>
    %955 = arith.mulf %953, %954 : vector<2x128xf32>
    %956 = arith.negf %955 : vector<2x128xf32>
    %957 = math.exp %956 : vector<2x128xf32>
    %cst_334 = arith.constant 1.000000e+00 : f32
    %958 = vector.broadcast %cst_334 : f32 to vector<2x128xf32>
    %959 = arith.addf %958, %957 : vector<2x128xf32>
    %960 = arith.divf %958, %959 : vector<2x128xf32>
    %961 = vector.broadcast %8 : vector<1x128xf32> to vector<2x128xf32>
    %962 = arith.mulf %960, %961 : vector<2x128xf32>
    %963 = vector.broadcast %11 : vector<1x128xf32> to vector<2x128xf32>
    %964 = arith.addf %962, %963 : vector<2x128xf32>
    %965 = vector.extract_strided_slice %964 {offsets = [0, 0], sizes = [2, 32], strides = [1, 1]} : vector<2x128xf32> to vector<2x32xf32>
    %966 = vector.extract_strided_slice %964 {offsets = [0, 32], sizes = [2, 32], strides = [1, 1]} : vector<2x128xf32> to vector<2x32xf32>
    %967 = vector.extract_strided_slice %964 {offsets = [0, 64], sizes = [2, 32], strides = [1, 1]} : vector<2x128xf32> to vector<2x32xf32>
    %968 = vector.extract_strided_slice %964 {offsets = [0, 96], sizes = [2, 32], strides = [1, 1]} : vector<2x128xf32> to vector<2x32xf32>
    %969 = arith.mulf %966, %901 : vector<2x32xf32>
    %970 = arith.mulf %965, %967 : vector<2x32xf32>
    %971 = arith.addf %969, %970 : vector<2x32xf32>
    %972 = math.tanh %971 : vector<2x32xf32>
    %973 = arith.mulf %968, %972 : vector<2x32xf32>
    %974 = tpu.concatenate %973, %929 in 1 : vector<2x32xf32>, vector<2x32xf32> -> vector<2x64xf32>
    %c0_335 = arith.constant 0 : index
    %c0_336 = arith.constant 0 : index
    %975 = vector.load %arg10[%c0_335, %c0_336] : memref<64x128xf32, #tpu.memory_space<vmem>>, vector<64x128xf32>
    %cst_337 = arith.constant dense<0.000000e+00> : vector<2x128xf32>
    %976 = tpu.matmul %974, %975, %cst_337 {dimension_numbers = #tpu.dot_dimension_numbers<[1], [0], [0], [1], [0, 0, 1, 1], [], []>} : vector<2x64xf32>, vector<64x128xf32>, vector<2x128xf32> -> vector<2x128xf32>
    %c0_338 = arith.constant 0 : index
    %c0_339 = arith.constant 0 : index
    %977 = vector.load %arg11[%c0_338, %c0_339] : memref<1x128xf32, #tpu.memory_space<vmem>>, vector<1x128xf32>
    %978 = vector.broadcast %977 : vector<1x128xf32> to vector<2x128xf32>
    %979 = arith.addf %976, %978 : vector<2x128xf32>
    %980 = vector.broadcast %8 : vector<1x128xf32> to vector<2x128xf32>
    %981 = arith.mulf %979, %980 : vector<2x128xf32>
    %982 = arith.negf %981 : vector<2x128xf32>
    %983 = math.exp %982 : vector<2x128xf32>
    %cst_340 = arith.constant 1.000000e+00 : f32
    %984 = vector.broadcast %cst_340 : f32 to vector<2x128xf32>
    %985 = arith.addf %984, %983 : vector<2x128xf32>
    %986 = arith.divf %984, %985 : vector<2x128xf32>
    %987 = vector.broadcast %8 : vector<1x128xf32> to vector<2x128xf32>
    %988 = arith.mulf %986, %987 : vector<2x128xf32>
    %989 = vector.broadcast %11 : vector<1x128xf32> to vector<2x128xf32>
    %990 = arith.addf %988, %989 : vector<2x128xf32>
    %991 = vector.extract_strided_slice %990 {offsets = [0, 0], sizes = [2, 32], strides = [1, 1]} : vector<2x128xf32> to vector<2x32xf32>
    %992 = vector.extract_strided_slice %990 {offsets = [0, 32], sizes = [2, 32], strides = [1, 1]} : vector<2x128xf32> to vector<2x32xf32>
    %993 = vector.extract_strided_slice %990 {offsets = [0, 64], sizes = [2, 32], strides = [1, 1]} : vector<2x128xf32> to vector<2x32xf32>
    %994 = vector.extract_strided_slice %990 {offsets = [0, 96], sizes = [2, 32], strides = [1, 1]} : vector<2x128xf32> to vector<2x32xf32>
    %995 = arith.mulf %992, %927 : vector<2x32xf32>
    %996 = arith.mulf %991, %993 : vector<2x32xf32>
    %997 = arith.addf %995, %996 : vector<2x32xf32>
    %998 = math.tanh %997 : vector<2x32xf32>
    %999 = arith.mulf %994, %998 : vector<2x32xf32>
    %c0_341 = arith.constant 0 : index
    %c0_342 = arith.constant 0 : index
    %1000 = vector.load %arg12[%c0_341, %c0_342] : memref<32x128xf32, #tpu.memory_space<vmem>>, vector<32x128xf32>
    %cst_343 = arith.constant dense<0.000000e+00> : vector<2x128xf32>
    %1001 = tpu.matmul %999, %1000, %cst_343 {dimension_numbers = #tpu.dot_dimension_numbers<[1], [0], [0], [1], [0, 0, 1, 1], [], []>} : vector<2x32xf32>, vector<32x128xf32>, vector<2x128xf32> -> vector<2x128xf32>
    %c0_344 = arith.constant 0 : index
    %c0_345 = arith.constant 0 : index
    %1002 = vector.load %arg13[%c0_344, %c0_345] : memref<1x128xf32, #tpu.memory_space<vmem>>, vector<1x128xf32>
    %1003 = vector.broadcast %1002 : vector<1x128xf32> to vector<2x128xf32>
    %1004 = arith.addf %1001, %1003 : vector<2x128xf32>
    %1005 = arith.index_cast %c7_i32_328 : i32 to index
    %c0_346 = arith.constant 0 : index
    %c0_347 = arith.constant 0 : index
    %1006 = vector.load %arg14[%1005, %c0_346, %c0_347] : memref<8x2x128xf32, #tpu.memory_space<vmem>>, vector<1x2x128xf32>
    %1007 = vector.shape_cast %1006 : vector<1x2x128xf32> to vector<2x128xf32>
    %1008 = vector.shape_cast %1004 : vector<2x128xf32> to vector<1x2x128xf32>
    tpu.vector_store %arg14[%1005, %c0_346, %c0_347], %1008 {strides = array<i32>} : memref<8x2x128xf32, #tpu.memory_space<vmem>>, vector<1x2x128xf32>,
    %c0_348 = arith.constant 0 : index
    %c0_349 = arith.constant 0 : index
    %1009 = vector.load %arg7[%c0_348, %c0_349] : memref<128x128xf32, #tpu.memory_space<vmem>>, vector<128x128xf32>
    %cst_350 = arith.constant dense<0.000000e+00> : vector<2x128xf32>
    %1010 = tpu.matmul %1004, %1009, %cst_350 {dimension_numbers = #tpu.dot_dimension_numbers<[1], [0], [0], [1], [0, 0, 1, 1], [], []>} : vector<2x128xf32>, vector<128x128xf32>, vector<2x128xf32> -> vector<2x128xf32>
    %1011 = arith.index_cast %c7_i32_328 : i32 to index
    %1012 = memref.load %arg0[%1011] : memref<8xi32, #tpu.memory_space<smem>>
    %c0_i32_351 = arith.constant 0 : i32
    %1013 = arith.cmpi sgt, %1012, %c0_i32_351 : i32
    %1014 = arith.index_cast %c7_i32_328 : i32 to index
    %c0_352 = arith.constant 0 : index
    %c0_353 = arith.constant 0 : index
    %1015 = vector.load %arg16[%1014, %c0_352, %c0_353] : memref<8x2x128xf32, #tpu.memory_space<vmem>>, vector<1x2x128xf32>
    %1016 = vector.shape_cast %1015 : vector<1x2x128xf32> to vector<2x128xf32>
    %1017 = arith.select %1013, %1016, %1010 : vector<2x128xf32>
    %c7_i32_354 = arith.constant 7 : i32
    return
  }
}

</mosaic_0001>

<llo_original>
// kernel: seqwatch_forward.1
$region0: #{seqwatch_forward.1}
  #allocation0 [shape = 'u32[]', space=smem, size = 0x4, offset = 0x4, fixed_abs, tag = 'smem constant byte address 0x4 - core index']
  #allocation1 [shape = 'u32[144,128]{1,0:T(1,128)}', space=vmem, size = 0x12000, scoped, tag = 'internal scratch']
  #allocation2 [shape = 'f32[8,2,128]{2,1,0:T(2,128)}', space=vmem, size = 0x2000, scoped, tag = 'scratch operand']
  #allocation3 [shape = 'f32[8,2,128]{2,1,0:T(2,128)}', space=vmem, size = 0x2000, scoped, tag = 'scratch operand']
  %s0 = inlined_call_operand.vmem [shape: s32[8], index: 0, kind: input, shape index: {}]
  %s1 = inlined_call_operand.vmem [shape: f32[16,128], index: 1, kind: input, shape index: {}]
  %s2 = inlined_call_operand.hbm [shape: f32[128,128], index: 2, kind: input, shape index: {}]
  %s3 = inlined_call_operand.hbm [shape: f32[32,128], index: 3, kind: input, shape index: {}]
  %s4 = inlined_call_operand.vmem [shape: f32[1,128], index: 4, kind: input, shape index: {}]
  %s5 = inlined_call_operand.hbm [shape: f32[64,128], index: 5, kind: input, shape index: {}]
  %s6 = inlined_call_operand.vmem [shape: f32[1,128], index: 6, kind: input, shape index: {}]
  %s7 = inlined_call_operand.vmem [shape: f32[128,128], index: 7, kind: input, shape index: {}]
  %s8 = inlined_call_operand.hbm [shape: f32[32,128], index: 8, kind: input, shape index: {}]
  %s9 = inlined_call_operand.vmem [shape: f32[1,128], index: 9, kind: input, shape index: {}]
  %s10 = inlined_call_operand.hbm [shape: f32[64,128], index: 10, kind: input, shape index: {}]
  %s11 = inlined_call_operand.vmem [shape: f32[1,128], index: 11, kind: input, shape index: {}]
  %s12 = inlined_call_operand.hbm [shape: f32[32,128], index: 12, kind: input, shape index: {}]
  %s13 = inlined_call_operand.vmem [shape: f32[1,128], index: 13, kind: input, shape index: {}]
  %s14 = inlined_call_operand.vmem [shape: f32[8,2,128], index: 14, kind: output, shape index: {}]
  %s15 = sld [smem:[#allocation0]]
  $region94: #{seqwatch_forward.1} parent=0
    _
  %s17 = ssub.s32 1, %s15
  %s18 = scalar_select 0, %s17, %s15
  $region1: #{seqwatch_forward.1} parent=0
    #allocation4 [shape = 'u8[512]{0}', space=smem, size = 0x200, scoped, tag = 'input window, operand 0, single buffered']
    #allocation5 [shape = 's32[1]{0}', space=sflag, size = 0x4, scoped, tag = 'scoped memory for seqwatch_forward.1']
    #allocation6 [shape = 's32[1]{0}', space=sflag, size = 0x4, scoped, tag = 'scoped memory for seqwatch_forward.1']
    #allocation7 [shape = 'u8[65536]{0}', space=vmem, size = 0x10000, scoped, tag = 'input window, operand 2, single buffered']
    #allocation8 [shape = 'u8[16384]{0}', space=vmem, size = 0x4000, scoped, tag = 'input window, operand 3, single buffered']
    #allocation9 [shape = 's32[1]{0}', space=sflag, size = 0x4, scoped, tag = 'scoped memory for seqwatch_forward.1']
    #allocation10 [shape = 'u8[32768]{0}', space=vmem, size = 0x8000, scoped, tag = 'input window, operand 5, single buffered']
    #allocation11 [shape = 'u8[16384]{0}', space=vmem, size = 0x4000, scoped, tag = 'input window, operand 8, single buffered']
    #allocation12 [shape = 's32[1]{0}', space=sflag, size = 0x4, scoped, tag = 'scoped memory for seqwatch_forward.1']
    #allocation13 [shape = 'u8[32768]{0}', space=vmem, size = 0x8000, scoped, tag = 'input window, operand 10, single buffered']
    #allocation14 [shape = 'u8[16384]{0}', space=vmem, size = 0x4000, scoped, tag = 'input window, operand 12, single buffered']
    #allocation15 [shape = 's32[1]{0}', space=sflag, size = 0x4, scoped, tag = 'scoped memory for seqwatch_forward.1']
    %19 = vsyncpa [#allocation6], 0
    %20 = vsyncpa [#allocation5], 0
    %21 = vsyncpa [#allocation9], 0
    %22 = vsyncpa [#allocation12], 0
    %23 = vsyncpa [#allocation15], 0
    // Predicated region
    $region2: #{seqwatch_forward.1} parent=1 // pred_check
      _
    $region3: #{seqwatch_forward.1} parent=1 // pred_check_branch
      %25 = sbr.rel (0) target = $region5
    $region4: #{seqwatch_forward.1} parent=1 // pred_region
      %s27 = ssub.s32 16, 16
      %28 = vsyncadd [#allocation6], %s27
      %s30 = sshll.u32 %s0, 4
      %s31 = int_to_ptr.vmem [resolvable:$true] %s30
      %33 = dma.vmem_to_smem %s31, 16, [#allocation4], [#allocation6]
    $region5: #{seqwatch_forward.1} parent=1 // pred_fallthru
      _
    // Predicated region
    $region6: #{seqwatch_forward.1} parent=1 // pred_check
      _
    $region7: #{seqwatch_forward.1} parent=1 // pred_check_branch
      %35 = sbr.rel (0) target = $region9
    $region8: #{seqwatch_forward.1} parent=1 // pred_region
      _
    $region9: #{seqwatch_forward.1} parent=1 // pred_fallthru
      _
    // Predicated region
    $region10: #{seqwatch_forward.1} parent=1 // pred_check
      _
    $region11: #{seqwatch_forward.1} parent=1 // pred_check_branch
      %37 = sbr.rel (0) target = $region13
    $region12: #{seqwatch_forward.1} parent=1 // pred_region
      %s39 = ssub.s32 2048, 2048
      %40 = vsyncadd [#allocation5], %s39
      %s41 = sshll.u32 [#allocation7], 4
      %s42 = int_to_ptr.vmem [resolvable:$true] %s41
      %47 = dma.hbm_to_vmem [thread:$0]  %s2, 2048, %s42, [#allocation5], 128, 128, 8
    $region13: #{seqwatch_forward.1} parent=1 // pred_fallthru
      _
    // Predicated region
    $region14: #{seqwatch_forward.1} parent=1 // pred_check
      _
    $region15: #{seqwatch_forward.1} parent=1 // pred_check_branch
      %49 = sbr.rel (0) target = $region17
    $region16: #{seqwatch_forward.1} parent=1 // pred_region
      %s51 = ssub.s32 512, 512
      %52 = vsyncadd [#allocation9], %s51
      %s53 = sshll.u32 [#allocation8], 4
      %s54 = int_to_ptr.vmem [resolvable:$true] %s53
      %59 = dma.hbm_to_vmem [thread:$0]  %s3, 512, %s54, [#allocation9], 128, 128, 8
    $region17: #{seqwatch_forward.1} parent=1 // pred_fallthru
      _
    // Predicated region
    $region18: #{seqwatch_forward.1} parent=1 // pred_check
      _
    $region19: #{seqwatch_forward.1} parent=1 // pred_check_branch
      %61 = sbr.rel (0) target = $region21
    $region20: #{seqwatch_forward.1} parent=1 // pred_region
      _
    $region21: #{seqwatch_forward.1} parent=1 // pred_fallthru
      _
    // Predicated region
    $region22: #{seqwatch_forward.1} parent=1 // pred_check
      _
    $region23: #{seqwatch_forward.1} parent=1 // pred_check_branch
      %63 = sbr.rel (0) target = $region25
    $region24: #{seqwatch_forward.1} parent=1 // pred_region
      %s65 = ssub.s32 1024, 1024
      %66 = vsyncadd [#allocation9], %s65
      %s67 = sshll.u32 [#allocation10], 4
      %s68 = int_to_ptr.vmem [resolvable:$true] %s67
      %73 = dma.hbm_to_vmem [thread:$0]  %s5, 1024, %s68, [#allocation9], 128, 128, 8
    $region25: #{seqwatch_forward.1} parent=1 // pred_fallthru
      _
    // Predicated region
    $region26: #{seqwatch_forward.1} parent=1 // pred_check
      _
    $region27: #{seqwatch_forward.1} parent=1 // pred_check_branch
      %75 = sbr.rel (0) target = $region29
    $region28: #{seqwatch_forward.1} parent=1 // pred_region
      _
    $region29: #{seqwatch_forward.1} parent=1 // pred_fallthru
      _
    // Predicated region
    $region30: #{seqwatch_forward.1} parent=1 // pred_check
      _
    $region31: #{seqwatch_forward.1} parent=1 // pred_check_branch
      %77 = sbr.rel (0) target = $region33
    $region32: #{seqwatch_forward.1} parent=1 // pred_region
      _
    $region33: #{seqwatch_forward.1} parent=1 // pred_fallthru
      _
    // Predicated region
    $region34: #{seqwatch_forward.1} parent=1 // pred_check
      _
    $region35: #{seqwatch_forward.1} parent=1 // pred_check_branch
      %79 = sbr.rel (0) target = $region37
    $region36: #{seqwatch_forward.1} parent=1 // pred_region
      %s81 = ssub.s32 512, 512
      %82 = vsyncadd [#allocation12], %s81
      %s83 = sshll.u32 [#allocation11], 4
      %s84 = int_to_ptr.vmem [resolvable:$true] %s83
      %89 = dma.hbm_to_vmem [thread:$0]  %s8, 512, %s84, [#allocation12], 128, 128, 8
    $region37: #{seqwatch_forward.1} parent=1 // pred_fallthru
      _
    // Predicated region
    $region38: #{seqwatch_forward.1} parent=1 // pred_check
      _
    $region39: #{seqwatch_forward.1} parent=1 // pred_check_branch
      %91 = sbr.rel (0) target = $region41
    $region40: #{seqwatch_forward.1} parent=1 // pred_region
      _
    $region41: #{seqwatch_forward.1} parent=1 // pred_fallthru
      _
    // Predicated region
    $region42: #{seqwatch_forward.1} parent=1 // pred_check
      _
    $region43: #{seqwatch_forward.1} parent=1 // pred_check_branch
      %93 = sbr.rel (0) target = $region45
    $region44: #{seqwatch_forward.1} parent=1 // pred_region
      %s95 = ssub.s32 1024, 1024
      %96 = vsyncadd [#allocation12], %s95
      %s97 = sshll.u32 [#allocation13], 4
      %s98 = int_to_ptr.vmem [resolvable:$true] %s97
      %103 = dma.hbm_to_vmem [thread:$0]  %s10, 1024, %s98, [#allocation12], 128, 128, 8
    $region45: #{seqwatch_forward.1} parent=1 // pred_fallthru
      _
    // Predicated region
    $region46: #{seqwatch_forward.1} parent=1 // pred_check
      _
    $region47: #{seqwatch_forward.1} parent=1 // pred_check_branch
      %105 = sbr.rel (0) target = $region49
    $region48: #{seqwatch_forward.1} parent=1 // pred_region
      _
    $region49: #{seqwatch_forward.1} parent=1 // pred_fallthru
      _
    // Predicated region
    $region50: #{seqwatch_forward.1} parent=1 // pred_check
      _
    $region51: #{seqwatch_forward.1} parent=1 // pred_check_branch
      %107 = sbr.rel (0) target = $region53
    $region52: #{seqwatch_forward.1} parent=1 // pred_region
      %s109 = ssub.s32 512, 512
      %110 = vsyncadd [#allocation15], %s109
      %s111 = sshll.u32 [#allocation14], 4
      %s112 = int_to_ptr.vmem [resolvable:$true] %s111
      %117 = dma.hbm_to_vmem [thread:$0]  %s12, 512, %s112, [#allocation15], 128, 128, 8
    $region53: #{seqwatch_forward.1} parent=1 // pred_fallthru
      _
    // Predicated region
    $region54: #{seqwatch_forward.1} parent=1 // pred_check
      _
    $region55: #{seqwatch_forward.1} parent=1 // pred_check_branch
      %119 = sbr.rel (0) target = $region57
    $region56: #{seqwatch_forward.1} parent=1 // pred_region
      _
    $region57: #{seqwatch_forward.1} parent=1 // pred_fallthru
      _
    // Predicated region
    $region58: #{seqwatch_forward.1} parent=1 // pred_check
      _
    $region59: #{seqwatch_forward.1} parent=1 // pred_check_branch
      %121 = sbr.rel (0) target = $region61
    $region60: #{seqwatch_forward.1} parent=1 // pred_region
      %122 = dma.done [#allocation6], 16
    $region61: #{seqwatch_forward.1} parent=1 // pred_fallthru
      _
    // Predicated region
    $region62: #{seqwatch_forward.1} parent=1 // pred_check
      _
    $region63: #{seqwatch_forward.1} parent=1 // pred_check_branch
      %124 = sbr.rel (0) target = $region65
    $region64: #{seqwatch_forward.1} parent=1 // pred_region
      %125 = dma.done [#allocation5], 2048
    $region65: #{seqwatch_forward.1} parent=1 // pred_fallthru
      _
    // Predicated region
    $region66: #{seqwatch_forward.1} parent=1 // pred_check
      _
    $region67: #{seqwatch_forward.1} parent=1 // pred_check_branch
      %127 = sbr.rel (0) target = $region69
    $region68: #{seqwatch_forward.1} parent=1 // pred_region
      %128 = dma.done [#allocation9], 512
    $region69: #{seqwatch_forward.1} parent=1 // pred_fallthru
      _
    // Predicated region
    $region70: #{seqwatch_forward.1} parent=1 // pred_check
      _
    $region71: #{seqwatch_forward.1} parent=1 // pred_check_branch
      %130 = sbr.rel (0) target = $region73
    $region72: #{seqwatch_forward.1} parent=1 // pred_region
      %131 = dma.done [#allocation9], 1024
    $region73: #{seqwatch_forward.1} parent=1 // pred_fallthru
      _
    // Predicated region
    $region74: #{seqwatch_forward.1} parent=1 // pred_check
      _
    $region75: #{seqwatch_forward.1} parent=1 // pred_check_branch
      %133 = sbr.rel (0) target = $region77
    $region76: #{seqwatch_forward.1} parent=1 // pred_region
      %134 = dma.done [#allocation12], 512
    $region77: #{seqwatch_forward.1} parent=1 // pred_fallthru
      _
    // Predicated region
    $region78: #{seqwatch_forward.1} parent=1 // pred_check
      _
    $region79: #{seqwatch_forward.1} parent=1 // pred_check_branch
      %136 = sbr.rel (0) target = $region81
    $region80: #{seqwatch_forward.1} parent=1 // pred_region
      %137 = dma.done [#allocation12], 1024
    $region81: #{seqwatch_forward.1} parent=1 // pred_fallthru
      _
    // Predicated region
    $region82: #{seqwatch_forward.1} parent=1 // pred_check
      _
    $region83: #{seqwatch_forward.1} parent=1 // pred_check_branch
      %139 = sbr.rel (0) target = $region85
    $region84: #{seqwatch_forward.1} parent=1 // pred_region
      %140 = dma.done [#allocation15], 512
    $region85: #{seqwatch_forward.1} parent=1 // pred_fallthru
      _
    %141 = sfence
    %v142 = vlaneseq
    %v143 = vand.u32 %v142, 127
    %vm144 = vcmp.ge.s32.totalorder %v143, 64
    %vm145 = vcmp.lt.s32.totalorder %v143, 96
    %vm146 = vmand %vm144, %vm145
    %v147 = vsel %vm146, 2.0, 1.0
    %v148 = vsel %vm146, -1.0, 0.0
    %v149 = vld [vmem:[%s1] sm:$0xff]
    %v150 = vld [vmem:[%s1 + $0x8] sm:$0xff]
    %v151 = vld [vmem:[#allocation7] sm:$0xff]
    %v152 = vld [vmem:[#allocation7 + $0x8] sm:$0xff]
    %v153 = vld [vmem:[#allocation7 + $0x10] sm:$0xff]
    %v154 = vld [vmem:[#allocation7 + $0x18] sm:$0xff]
    %v155 = vld [vmem:[#allocation7 + $0x20] sm:$0xff]
    %v156 = vld [vmem:[#allocation7 + $0x28] sm:$0xff]
    %v157 = vld [vmem:[#allocation7 + $0x30] sm:$0xff]
    %v158 = vld [vmem:[#allocation7 + $0x38] sm:$0xff]
    %v159 = vld [vmem:[#allocation7 + $0x40] sm:$0xff]
    %v160 = vld [vmem:[#allocation7 + $0x48] sm:$0xff]
    %v161 = vld [vmem:[#allocation7 + $0x50] sm:$0xff]
    %v162 = vld [vmem:[#allocation7 + $0x58] sm:$0xff]
    %v163 = vld [vmem:[#allocation7 + $0x60] sm:$0xff]
    %v164 = vld [vmem:[#allocation7 + $0x68] sm:$0xff]
    %v165 = vld [vmem:[#allocation7 + $0x70] sm:$0xff]
    %v166 = vld [vmem:[#allocation7 + $0x78] sm:$0xff]
    %167 = vmatprep.subr.mxu0 0.0
    %168 = vmatpush1.msra.mxu0 %v151
    %169 = vmatprep.subr.mxu0 0.0
    %170 = vmatpush1.msra.mxu0 %v152
    %171 = vmatprep.subr.mxu0 0.0
    %172 = vmatpush1.msra.mxu0 %v153
    %173 = vmatprep.subr.mxu0 0.0
    %174 = vmatpush1.msra.mxu0 %v154
    %175 = vmatprep.subr.mxu0 0.0
    %176 = vmatpush1.msra.mxu0 %v155
    %177 = vmatprep.subr.mxu0 0.0
    %178 = vmatpush1.msra.mxu0 %v156
    %179 = vmatprep.subr.mxu0 0.0
    %180 = vmatpush1.msra.mxu0 %v157
    %181 = vmatprep.subr.mxu0 0.0
    %182 = vmatpush1.msra.mxu0 %v158
    %183 = vmatprep.subr.mxu0 0.0
    %184 = vmatpush1.msra.mxu0 %v159
    %185 = vmatprep.subr.mxu0 0.0
    %186 = vmatpush1.msra.mxu0 %v160
    %187 = vmatprep.subr.mxu0 0.0
    %188 = vmatpush1.msra.mxu0 %v161
    %189 = vmatprep.subr.mxu0 0.0
    %190 = vmatpush1.msra.mxu0 %v162
    %191 = vmatprep.subr.mxu0 0.0
    %192 = vmatpush1.msra.mxu0 %v163
    %193 = vmatprep.subr.mxu0 0.0
    %194 = vmatpush1.msra.mxu0 %v164
    %195 = vmatprep.subr.mxu0 0.0
    %196 = vmatpush1.msra.mxu0 %v165
    %197 = vmatprep.subr.mxu0 0.0
    %198 = vmatpush1.msra.mxu0 %v166
    %199 = vmatprep.subr.mxu0 0.0
    %200 = vmatpush1.msra.mxu0 0.0
    %201 = vmatprep.subr.mxu0 0.0
    %202 = vmatpush1.msra.mxu0 0.0
    %203 = vmatprep.subr.mxu0 0.0
    %204 = vmatpush1.msra.mxu0 0.0
    %205 = vmatprep.subr.mxu0 0.0
    %206 = vmatpush1.msra.mxu0 0.0
    %207 = vmatprep.subr.mxu0 0.0
    %208 = vmatpush1.msra.mxu0 0.0
    %209 = vmatprep.subr.mxu0 0.0
    %210 = vmatpush1.msra.mxu0 0.0
    %211 = vmatprep.subr.mxu0 0.0
    %212 = vmatpush1.msra.mxu0 0.0
    %213 = vmatprep.subr.mxu0 0.0
    %214 = vmatpush1.msra.mxu0 0.0
    %215 = vmatprep.subr.mxu0 0.0
    %216 = vmatpush1.msra.mxu0 0.0
    %217 = vmatprep.subr.mxu0 0.0
    %218 = vmatpush1.msra.mxu0 0.0
    %219 = vmatprep.subr.mxu0 0.0
    %220 = vmatpush1.msra.mxu0 0.0
    %221 = vmatprep.subr.mxu0 0.0
    %222 = vmatpush1.msra.mxu0 0.0
    %223 = vmatprep.subr.mxu0 0.0
    %224 = vmatpush1.msra.mxu0 0.0
    %225 = vmatprep.subr.mxu0 0.0
    %226 = vmatpush1.msra.mxu0 0.0
    %227 = vmatprep.subr.mxu0 0.0
    %228 = vmatpush1.msra.mxu0 0.0
    %229 = vmatprep.subr.mxu0 0.0
    %230 = vmatpush1.msra.mxu0 0.0
    %231 = vmatprep.mubr.f32.mxu0 0.0
    %232 = vmatmul.mubr.f32.gmra.mrb[0].mxu0 %v149
    %v233 = vpop.f32.mrb[0].mxu0
    %v234 = vadd.f32 0.0, %v233
    %v235 = vpop.f32.mrb[0].mxu0
    %236 = vmatprep.mubr.f32.mxu0 0.0
    %237 = vmatmul.mubr.f32.gmra.mrb[0].mxu0 %v150
    %v238 = vpop.f32.mrb[0].mxu0
    %v239 = vadd.f32 0.0, %v238
    %v240 = vpop.f32.mrb[0].mxu0
    %241 = vdwg.mxu0
    %v242 = vld [vmem:[%s7] sm:$0xff]
    %v243 = vld [vmem:[%s7 + $0x8] sm:$0xff]
    %v244 = vld [vmem:[%s7 + $0x10] sm:$0xff]
    %v245 = vld [vmem:[%s7 + $0x18] sm:$0xff]
    %v246 = vld [vmem:[%s7 + $0x20] sm:$0xff]
    %v247 = vld [vmem:[%s7 + $0x28] sm:$0xff]
    %v248 = vld [vmem:[%s7 + $0x30] sm:$0xff]
    %v249 = vld [vmem:[%s7 + $0x38] sm:$0xff]
    %v250 = vld [vmem:[%s7 + $0x40] sm:$0xff]
    %v251 = vld [vmem:[%s7 + $0x48] sm:$0xff]
    %v252 = vld [vmem:[%s7 + $0x50] sm:$0xff]
    %v253 = vld [vmem:[%s7 + $0x58] sm:$0xff]
    %v254 = vld [vmem:[%s7 + $0x60] sm:$0xff]
    %v255 = vld [vmem:[%s7 + $0x68] sm:$0xff]
    %v256 = vld [vmem:[%s7 + $0x70] sm:$0xff]
    %v257 = vld [vmem:[%s7 + $0x78] sm:$0xff]
    %258 = vmatprep.subr.mxu0 0.0
    %259 = vmatpush1.msra.mxu0 %v242
    %260 = vmatprep.subr.mxu0 0.0
    %261 = vmatpush1.msra.mxu0 %v243
    %262 = vmatprep.subr.mxu0 0.0
    %263 = vmatpush1.msra.mxu0 %v244
    %264 = vmatprep.subr.mxu0 0.0
    %265 = vmatpush1.msra.mxu0 %v245
    %266 = vmatprep.subr.mxu0 0.0
    %267 = vmatpush1.msra.mxu0 %v246
    %268 = vmatprep.subr.mxu0 0.0
    %269 = vmatpush1.msra.mxu0 %v247
    %270 = vmatprep.subr.mxu0 0.0
    %271 = vmatpush1.msra.mxu0 %v248
    %272 = vmatprep.subr.mxu0 0.0
    %273 = vmatpush1.msra.mxu0 %v249
    %274 = vmatprep.subr.mxu0 0.0
    %275 = vmatpush1.msra.mxu0 %v250
    %276 = vmatprep.subr.mxu0 0.0
    %277 = vmatpush1.msra.mxu0 %v251
    %278 = vmatprep.subr.mxu0 0.0
    %279 = vmatpush1.msra.mxu0 %v252
    %280 = vmatprep.subr.mxu0 0.0
    %281 = vmatpush1.msra.mxu0 %v253
    %282 = vmatprep.subr.mxu0 0.0
    %283 = vmatpush1.msra.mxu0 %v254
    %284 = vmatprep.subr.mxu0 0.0
    %285 = vmatpush1.msra.mxu0 %v255
    %286 = vmatprep.subr.mxu0 0.0
    %287 = vmatpush1.msra.mxu0 %v256
    %288 = vmatprep.subr.mxu0 0.0
    %289 = vmatpush1.msra.mxu0 %v257
    %290 = vmatprep.subr.mxu0 0.0
    %291 = vmatpush1.msra.mxu0 0.0
    %292 = vmatprep.subr.mxu0 0.0
    %293 = vmatpush1.msra.mxu0 0.0
    %294 = vmatprep.subr.mxu0 0.0
    %295 = vmatpush1.msra.mxu0 0.0
    %296 = vmatprep.subr.mxu0 0.0
    %297 = vmatpush1.msra.mxu0 0.0
    %298 = vmatprep.subr.mxu0 0.0
    %299 = vmatpush1.msra.mxu0 0.0
    %300 = vmatprep.subr.mxu0 0.0
    %301 = vmatpush1.msra.mxu0 0.0
    %302 = vmatprep.subr.mxu0 0.0
    %303 = vmatpush1.msra.mxu0 0.0
    %304 = vmatprep.subr.mxu0 0.0
    %305 = vmatpush1.msra.mxu0 0.0
    %306 = vmatprep.subr.mxu0 0.0
    %307 = vmatpush1.msra.mxu0 0.0
    %308 = vmatprep.subr.mxu0 0.0
    %309 = vmatpush1.msra.mxu0 0.0
    %310 = vmatprep.subr.mxu0 0.0
    %311 = vmatpush1.msra.mxu0 0.0
    %312 = vmatprep.subr.mxu0 0.0
    %313 = vmatpush1.msra.mxu0 0.0
    %314 = vmatprep.subr.mxu0 0.0
    %315 = vmatpush1.msra.mxu0 0.0
    %316 = vmatprep.subr.mxu0 0.0
    %317 = vmatpush1.msra.mxu0 0.0
    %318 = vmatprep.subr.mxu0 0.0
    %319 = vmatpush1.msra.mxu0 0.0
    %320 = vmatprep.subr.mxu0 0.0
    %321 = vmatpush1.msra.mxu0 0.0
    %322 = vmatprep.mubr.f32.mxu0 0.0
    %323 = vmatmul.mubr.f32.gmra.mrb[0].mxu0 %v149
    %v324 = vpop.f32.mrb[0].mxu0
    %v325 = vadd.f32 0.0, %v324
    %v326 = vpop.f32.mrb[0].mxu0
    %327 = vmatprep.mubr.f32.mxu0 0.0
    %328 = vmatmul.mubr.f32.gmra.mrb[0].mxu0 %v150
    %v329 = vpop.f32.mrb[0].mxu0
    %v330 = vadd.f32 0.0, %v329
    %v331 = vpop.f32.mrb[0].mxu0
    %332 = vdwg.mxu0
    %333 = vst [vmem:[#allocation2] sm:$0x3] %v234
    %334 = vst [vmem:[#allocation3] sm:$0x3] %v325
    %s335 = scalar_lea.vmem [#allocation2], 2
    %336 = vst [vmem:[%s335 - $0x2] sm:$0xc] %v234
    %s337 = scalar_lea.vmem [#allocation3], 2
    %338 = vst [vmem:[%s337 - $0x2] sm:$0xc] %v325
    %s339 = scalar_lea.vmem [#allocation2], 4
    %340 = vst [vmem:[%s339 - $0x4] sm:$0x30] %v234
    %s341 = scalar_lea.vmem [#allocation3], 4
    %342 = vst [vmem:[%s341 - $0x4] sm:$0x30] %v325
    %s343 = scalar_lea.vmem [#allocation2], 6
    %344 = vst [vmem:[%s343 - $0x6] sm:$0xc0] %v234
    %s345 = scalar_lea.vmem [#allocation3], 6
    %346 = vst [vmem:[%s345 - $0x6] sm:$0xc0] %v325
    %s347 = scalar_lea.vmem [#allocation2], 8
    %348 = vst [vmem:[%s347] sm:$0x3] %v239
    %s349 = scalar_lea.vmem [#allocation3], 8
    %350 = vst [vmem:[%s349] sm:$0x3] %v330
    %s351 = scalar_lea.vmem [#allocation2], 10
    %352 = vst [vmem:[%s351 - $0x2] sm:$0xc] %v239
    %s353 = scalar_lea.vmem [#allocation3], 10
    %354 = vst [vmem:[%s353 - $0x2] sm:$0xc] %v330
    %s355 = scalar_lea.vmem [#allocation2], 12
    %356 = vst [vmem:[%s355 - $0x4] sm:$0x30] %v239
    %s357 = scalar_lea.vmem [#allocation3], 12
    %358 = vst [vmem:[%s357 - $0x4] sm:$0x30] %v330
    %s359 = scalar_lea.vmem [#allocation2], 14
    %360 = vst [vmem:[%s359 - $0x6] sm:$0xc0] %v239
    %s361 = scalar_lea.vmem [#allocation3], 14
    %362 = vst [vmem:[%s361 - $0x6] sm:$0xc0] %v330
    %v363 = vld [vmem:[#allocation2] sm:$0x3]
    %v364 = vld [vmem:[#allocation8] sm:$0xff]
    %v365 = vld [vmem:[#allocation8 + $0x8] sm:$0xff]
    %v366 = vld [vmem:[#allocation8 + $0x10] sm:$0xff]
    %v367 = vld [vmem:[#allocation8 + $0x18] sm:$0xff]
    %vm368 = vcmask 261120
    %v370 = vsel %vm368, 0.0, 0
    %372 = vmatprep.subr.mxu0 0.0
    %373 = vmatpush1.msra.mxu0 %v364
    %374 = vmatprep.subr.mxu0 0.0
    %375 = vmatpush1.msra.mxu0 %v365
    %376 = vmatprep.subr.mxu0 0.0
    %377 = vmatpush1.msra.mxu0 %v366
    %378 = vmatprep.subr.mxu0 0.0
    %379 = vmatpush1.msra.mxu0 %v367
    %380 = vmatprep.subr.mxu0 0.0
    %381 = vmatpush1.msra.mxu0 0.0
    %382 = vmatprep.subr.mxu0 0.0
    %383 = vmatpush1.msra.mxu0 0.0
    %384 = vmatprep.subr.mxu0 0.0
    %385 = vmatpush1.msra.mxu0 0.0
    %386 = vmatprep.subr.mxu0 0.0
    %387 = vmatpush1.msra.mxu0 0.0
    %388 = vmatprep.subr.mxu0 0.0
    %389 = vmatpush1.msra.mxu0 0.0
    %390 = vmatprep.subr.mxu0 0.0
    %391 = vmatpush1.msra.mxu0 0.0
    %392 = vmatprep.subr.mxu0 0.0
    %393 = vmatpush1.msra.mxu0 0.0
    %394 = vmatprep.subr.mxu0 0.0
    %395 = vmatpush1.msra.mxu0 0.0
    %396 = vmatprep.subr.mxu0 0.0
    %397 = vmatpush1.msra.mxu0 0.0
    %398 = vmatprep.subr.mxu0 0.0
    %399 = vmatpush1.msra.mxu0 0.0
    %400 = vmatprep.subr.mxu0 0.0
    %401 = vmatpush1.msra.mxu0 0.0
    %402 = vmatprep.subr.mxu0 0.0
    %403 = vmatpush1.msra.mxu0 0.0
    %404 = vmatprep.subr.mxu0 0.0
    %405 = vmatpush1.msra.mxu0 0.0
    %406 = vmatprep.subr.mxu0 0.0
    %407 = vmatpush1.msra.mxu0 0.0
    %408 = vmatprep.subr.mxu0 0.0
    %409 = vmatpush1.msra.mxu0 0.0
    %410 = vmatprep.subr.mxu0 0.0
    %411 = vmatpush1.msra.mxu0 0.0
    %412 = vmatprep.subr.mxu0 0.0
    %413 = vmatpush1.msra.mxu0 0.0
    %414 = vmatprep.subr.mxu0 0.0
    %415 = vmatpush1.msra.mxu0 0.0
    %416 = vmatprep.subr.mxu0 0.0
    %417 = vmatpush1.msra.mxu0 0.0
    %418 = vmatprep.subr.mxu0 0.0
    %419 = vmatpush1.msra.mxu0 0.0
    %420 = vmatprep.subr.mxu0 0.0
    %421 = vmatpush1.msra.mxu0 0.0
    %422 = vmatprep.subr.mxu0 0.0
    %423 = vmatpush1.msra.mxu0 0.0
    %424 = vmatprep.subr.mxu0 0.0
    %425 = vmatpush1.msra.mxu0 0.0
    %426 = vmatprep.subr.mxu0 0.0
    %427 = vmatpush1.msra.mxu0 0.0
    %428 = vmatprep.subr.mxu0 0.0
    %429 = vmatpush1.msra.mxu0 0.0
    %430 = vmatprep.subr.mxu0 0.0
    %431 = vmatpush1.msra.mxu0 0.0
    %432 = vmatprep.subr.mxu0 0.0
    %433 = vmatpush1.msra.mxu0 0.0
    %434 = vmatprep.subr.mxu0 0.0
    %435 = vmatpush1.msra.mxu0 0.0
    %436 = vmatprep.mubr.f32.mxu0 0.0
    %437 = vmatmul.mubr.f32.gmra.mrb[0].mxu0 %v370
    %v438 = vpop.f32.mrb[0].mxu0
    %v439 = vadd.f32 0.0, %v438
    %v440 = vpop.f32.mrb[0].mxu0
    %441 = vdwg.mxu0
    %v442 = vadd.f32 %v363, %v439
    %v443 = vld [vmem:[%s4] sm:$0x1]
    %v445 = vlaneseq
    %v446 = vshrl.u32 %v445, 7
    %v447 = vsub.s32 0, %v446
    %v448 = vrot.slane %v443, %v447
    %v450 = vadd.f32 %v442, %v448
    %v451 = vmul.f32 %v450, %v147
    %v452 = vxor.u32 %v451, 2147483648
    %v453 = vmul.f32 %v452, 1.442695
    %v454 = vpow.pop %v453
    %v455 = vadd.f32 %v454, 1.0
    %v456 = vrcp.pop %v455
    %v457 = vmul.f32 1.0, %v456
    %v458 = vmul.f32 %v457, %v147
    %v459 = vadd.f32 %v458, %v148
    %v460 = vmul.f32 %v459, 0.0
    %462 = vrot.lane.b32.xlu0 %v459, 64
    %v463 = vpop.permute.xlu0 %462
    %v465 = vmul.f32 %v459, %v463
    %467 = vrot.lane.b32.xlu0 %v465, 32
    %v468 = vpop.permute.xlu0 %467
    %v470 = vadd.f32 %v460, %v468
    %v471 = vtanh.pop %v470
    %473 = vrot.lane.b32.xlu0 %v471, 64
    %v474 = vpop.permute.xlu0 %473
    %v476 = vmul.f32 %v459, %v474
    %478 = vrot.lane.b32.xlu0 %v476, 32
    %v479 = vpop.permute.xlu0 %478
    %v481 = vsel %vm368, %v479, 0.0
    %v482 = vld [vmem:[#allocation10] sm:$0xff]
    %v483 = vld [vmem:[#allocation10 + $0x8] sm:$0xff]
    %v484 = vld [vmem:[#allocation10 + $0x10] sm:$0xff]
    %v485 = vld [vmem:[#allocation10 + $0x18] sm:$0xff]
    %v486 = vld [vmem:[#allocation10 + $0x20] sm:$0xff]
    %v487 = vld [vmem:[#allocation10 + $0x28] sm:$0xff]
    %v488 = vld [vmem:[#allocation10 + $0x30] sm:$0xff]
    %v489 = vld [vmem:[#allocation10 + $0x38] sm:$0xff]
    %v490 = vld [vmem:[%s6] sm:$0x1]
    %v492 = vlaneseq
    %v493 = vshrl.u32 %v492, 7
    %v494 = vsub.s32 0, %v493
    %v495 = vrot.slane %v490, %v494
    %vm497 = vcmask 523264
    %v499 = vsel %vm497, %v481, 0
    %501 = vmatprep.subr.mxu0 0.0
    %502 = vmatpush1.msra.mxu0 %v482
    %503 = vmatprep.subr.mxu0 0.0
    %504 = vmatpush1.msra.mxu0 %v483
    %505 = vmatprep.subr.mxu0 0.0
    %506 = vmatpush1.msra.mxu0 %v484
    %507 = vmatprep.subr.mxu0 0.0
    %508 = vmatpush1.msra.mxu0 %v485
    %509 = vmatprep.subr.mxu0 0.0
    %510 = vmatpush1.msra.mxu0 %v486
    %511 = vmatprep.subr.mxu0 0.0
    %512 = vmatpush1.msra.mxu0 %v487
    %513 = vmatprep.subr.mxu0 0.0
    %514 = vmatpush1.msra.mxu0 %v488
    %515 = vmatprep.subr.mxu0 0.0
    %516 = vmatpush1.msra.mxu0 %v489
    %517 = vmatprep.subr.mxu0 0.0
    %518 = vmatpush1.msra.mxu0 0.0
    %519 = vmatprep.subr.mxu0 0.0
    %520 = vmatpush1.msra.mxu0 0.0
    %521 = vmatprep.subr.mxu0 0.0
    %522 = vmatpush1.msra.mxu0 0.0
    %523 = vmatprep.subr.mxu0 0.0
    %524 = vmatpush1.msra.mxu0 0.0
    %525 = vmatprep.subr.mxu0 0.0
    %526 = vmatpush1.msra.mxu0 0.0
    %527 = vmatprep.subr.mxu0 0.0
    %528 = vmatpush1.msra.mxu0 0.0
    %529 = vmatprep.subr.mxu0 0.0
    %530 = vmatpush1.msra.mxu0 0.0
    %531 = vmatprep.subr.mxu0 0.0
    %532 = vmatpush1.msra.mxu0 0.0
    %533 = vmatprep.subr.mxu0 0.0
    %534 = vmatpush1.msra.mxu0 0.0
    %535 = vmatprep.subr.mxu0 0.0
    %536 = vmatpush1.msra.mxu0 0.0
    %537 = vmatprep.subr.mxu0 0.0
    %538 = vmatpush1.msra.mxu0 0.0
    %539 = vmatprep.subr.mxu0 0.0
    %540 = vmatpush1.msra.mxu0 0.0
    %541 = vmatprep.subr.mxu0 0.0
    %542 = vmatpush1.msra.mxu0 0.0
    %543 = vmatprep.subr.mxu0 0.0
    %544 = vmatpush1.msra.mxu0 0.0
    %545 = vmatprep.subr.mxu0 0.0
    %546 = vmatpush1.msra.mxu0 0.0
    %547 = vmatprep.subr.mxu0 0.0
    %548 = vmatpush1.msra.mxu0 0.0
    %549 = vmatprep.subr.mxu0 0.0
    %550 = vmatpush1.msra.mxu0 0.0
    %551 = vmatprep.subr.mxu0 0.0
    %552 = vmatpush1.msra.mxu0 0.0
    %553 = vmatprep.subr.mxu0 0.0
    %554 = vmatpush1.msra.mxu0 0.0
    %555 = vmatprep.subr.mxu0 0.0
    %556 = vmatpush1.msra.mxu0 0.0
    %557 = vmatprep.subr.mxu0 0.0
    %558 = vmatpush1.msra.mxu0 0.0
    %559 = vmatprep.subr.mxu0 0.0
    %560 = vmatpush1.msra.mxu0 0.0
    %561 = vmatprep.subr.mxu0 0.0
    %562 = vmatpush1.msra.mxu0 0.0
    %563 = vmatprep.subr.mxu0 0.0
    %564 = vmatpush1.msra.mxu0 0.0
    %565 = vmatprep.mubr.f32.mxu0 0.0
    %566 = vmatmul.mubr.f32.gmra.mrb[0].mxu0 %v499
    %v567 = vpop.f32.mrb[0].mxu0
    %v568 = vadd.f32 %v495, %v567
    %v569 = vpop.f32.mrb[0].mxu0
    %570 = vdwg.mxu0
    %v571 = vmul.f32 %v568, %v147
    %v572 = vxor.u32 %v571, 2147483648
    %v573 = vmul.f32 %v572, 1.442695
    %v574 = vpow.pop %v573
    %v575 = vadd.f32 %v574, 1.0
    %v576 = vrcp.pop %v575
    %v577 = vmul.f32 1.0, %v576
    %v578 = vmul.f32 %v577, %v147
    %v579 = vadd.f32 %v578, %v148
    %v580 = vmul.f32 %v579, 0.0
    %582 = vrot.lane.b32.xlu0 %v579, 64
    %v583 = vpop.permute.xlu0 %582
    %v585 = vmul.f32 %v579, %v583
    %587 = vrot.lane.b32.xlu0 %v585, 32
    %v588 = vpop.permute.xlu0 %587
    %v590 = vadd.f32 %v580, %v588
    %v591 = vtanh.pop %v590
    %593 = vrot.lane.b32.xlu0 %v591, 64
    %v594 = vpop.permute.xlu0 %593
    %v596 = vmul.f32 %v579, %v594
    %v597 = vld [vmem:[%s335] sm:$0x3]
    %v598 = vsel %vm368, %v479, 0
    %600 = vmatprep.subr.mxu0 0.0
    %601 = vmatpush1.msra.mxu0 %v364
    %602 = vmatprep.subr.mxu0 0.0
    %603 = vmatpush1.msra.mxu0 %v365
    %604 = vmatprep.subr.mxu0 0.0
    %605 = vmatpush1.msra.mxu0 %v366
    %606 = vmatprep.subr.mxu0 0.0
    %607 = vmatpush1.msra.mxu0 %v367
    %608 = vmatprep.subr.mxu0 0.0
    %609 = vmatpush1.msra.mxu0 0.0
    %610 = vmatprep.subr.mxu0 0.0
    %611 = vmatpush1.msra.mxu0 0.0
    %612 = vmatprep.subr.mxu0 0.0
    %613 = vmatpush1.msra.mxu0 0.0
    %614 = vmatprep.subr.mxu0 0.0
    %615 = vmatpush1.msra.mxu0 0.0
    %616 = vmatprep.subr.mxu0 0.0
    %617 = vmatpush1.msra.mxu0 0.0
    %618 = vmatprep.subr.mxu0 0.0
    %619 = vmatpush1.msra.mxu0 0.0
    %620 = vmatprep.subr.mxu0 0.0
    %621 = vmatpush1.msra.mxu0 0.0
    %622 = vmatprep.subr.mxu0 0.0
    %623 = vmatpush1.msra.mxu0 0.0
    %624 = vmatprep.subr.mxu0 0.0
    %625 = vmatpush1.msra.mxu0 0.0
    %626 = vmatprep.subr.mxu0 0.0
    %627 = vmatpush1.msra.mxu0 0.0
    %628 = vmatprep.subr.mxu0 0.0
    %629 = vmatpush1.msra.mxu0 0.0
    %630 = vmatprep.subr.mxu0 0.0
    %631 = vmatpush1.msra.mxu0 0.0
    %632 = vmatprep.subr.mxu0 0.0
    %633 = vmatpush1.msra.mxu0 0.0
    %634 = vmatprep.subr.mxu0 0.0
    %635 = vmatpush1.msra.mxu0 0.0
    %636 = vmatprep.subr.mxu0 0.0
    %637 = vmatpush1.msra.mxu0 0.0
    %638 = vmatprep.subr.mxu0 0.0
    %639 = vmatpush1.msra.mxu0 0.0
    %640 = vmatprep.subr.mxu0 0.0
    %641 = vmatpush1.msra.mxu0 0.0
    %642 = vmatprep.subr.mxu0 0.0
    %643 = vmatpush1.msra.mxu0 0.0
    %644 = vmatprep.subr.mxu0 0.0
    %645 = vmatpush1.msra.mxu0 0.0
    %646 = vmatprep.subr.mxu0 0.0
    %647 = vmatpush1.msra.mxu0 0.0
    %648 = vmatprep.subr.mxu0 0.0
    %649 = vmatpush1.msra.mxu0 0.0
    %650 = vmatprep.subr.mxu0 0.0
    %651 = vmatpush1.msra.mxu0 0.0
    %652 = vmatprep.subr.mxu0 0.0
    %653 = vmatpush1.msra.mxu0 0.0
    %654 = vmatprep.subr.mxu0 0.0
    %655 = vmatpush1.msra.mxu0 0.0
    %656 = vmatprep.subr.mxu0 0.0
    %657 = vmatpush1.msra.mxu0 0.0
    %658 = vmatprep.subr.mxu0 0.0
    %659 = vmatpush1.msra.mxu0 0.0
    %660 = vmatprep.subr.mxu0 0.0
    %661 = vmatpush1.msra.mxu0 0.0
    %662 = vmatprep.subr.mxu0 0.0
    %663 = vmatpush1.msra.mxu0 0.0
    %664 = vmatprep.mubr.f32.mxu0 0.0
    %665 = vmatmul.mubr.f32.gmra.mrb[0].mxu0 %v598
    %v666 = vpop.f32.mrb[0].mxu0
    %v667 = vadd.f32 0.0, %v666
    %v668 = vpop.f32.mrb[0].mxu0
    %669 = vdwg.mxu0
    %v670 = vadd.f32 %v597, %v667
    %v671 = vadd.f32 %v670, %v448
    %v672 = vmul.f32 %v671, %v147
    %v673 = vxor.u32 %v672, 2147483648
    %v674 = vmul.f32 %v673, 1.442695
    %v675 = vpow.pop %v674
    %v676 = vadd.f32 %v675, 1.0
    %v677 = vrcp.pop %v676
    %v678 = vmul.f32 1.0, %v677
    %v679 = vmul.f32 %v678, %v147
    %v680 = vadd.f32 %v679, %v148
    %v681 = vmul.f32 %v680, %v470
    %683 = vrot.lane.b32.xlu0 %v680, 64
    %v684 = vpop.permute.xlu0 %683
    %v686 = vmul.f32 %v680, %v684
    %688 = vrot.lane.b32.xlu0 %v686, 32
    %v689 = vpop.permute.xlu0 %688
    %v691 = vadd.f32 %v681, %v689
    %v692 = vtanh.pop %v691
    %694 = vrot.lane.b32.xlu0 %v692, 64
    %v695 = vpop.permute.xlu0 %694
    %v697 = vmul.f32 %v680, %v695
    %699 = vrot.lane.b32.xlu0 %v697, 32
    %v700 = vpop.permute.xlu0 %699
    %703 = vrot.lane.b32.xlu0 %v596, 64
    %v704 = vpop.permute.xlu0 %703
    %v706 = vsel %vm368, %v700, %v704
    %v708 = vsel %vm497, %v706, 0
    %710 = vmatprep.subr.mxu0 0.0
    %711 = vmatpush1.msra.mxu0 %v482
    %712 = vmatprep.subr.mxu0 0.0
    %713 = vmatpush1.msra.mxu0 %v483
    %714 = vmatprep.subr.mxu0 0.0
    %715 = vmatpush1.msra.mxu0 %v484
    %716 = vmatprep.subr.mxu0 0.0
    %717 = vmatpush1.msra.mxu0 %v485
    %718 = vmatprep.subr.mxu0 0.0
    %719 = vmatpush1.msra.mxu0 %v486
    %720 = vmatprep.subr.mxu0 0.0
    %721 = vmatpush1.msra.mxu0 %v487
    %722 = vmatprep.subr.mxu0 0.0
    %723 = vmatpush1.msra.mxu0 %v488
    %724 = vmatprep.subr.mxu0 0.0
    %725 = vmatpush1.msra.mxu0 %v489
    %726 = vmatprep.subr.mxu0 0.0
    %727 = vmatpush1.msra.mxu0 0.0
    %728 = vmatprep.subr.mxu0 0.0
    %729 = vmatpush1.msra.mxu0 0.0
    %730 = vmatprep.subr.mxu0 0.0
    %731 = vmatpush1.msra.mxu0 0.0
    %732 = vmatprep.subr.mxu0 0.0
    %733 = vmatpush1.msra.mxu0 0.0
    %734 = vmatprep.subr.mxu0 0.0
    %735 = vmatpush1.msra.mxu0 0.0
    %736 = vmatprep.subr.mxu0 0.0
    %737 = vmatpush1.msra.mxu0 0.0
    %738 = vmatprep.subr.mxu0 0.0
    %739 = vmatpush1.msra.mxu0 0.0
    %740 = vmatprep.subr.mxu0 0.0
    %741 = vmatpush1.msra.mxu0 0.0
    %742 = vmatprep.subr.mxu0 0.0
    %743 = vmatpush1.msra.mxu0 0.0
    %744 = vmatprep.subr.mxu0 0.0
    %745 = vmatpush1.msra.mxu0 0.0
    %746 = vmatprep.subr.mxu0 0.0
    %747 = vmatpush1.msra.mxu0 0.0
    %748 = vmatprep.subr.mxu0 0.0
    %749 = vmatpush1.msra.mxu0 0.0
    %750 = vmatprep.subr.mxu0 0.0
    %751 = vmatpush1.msra.mxu0 0.0
    %752 = vmatprep.subr.mxu0 0.0
    %753 = vmatpush1.msra.mxu0 0.0
    %754 = vmatprep.subr.mxu0 0.0
    %755 = vmatpush1.msra.mxu0 0.0
    %756 = vmatprep.subr.mxu0 0.0
    %757 = vmatpush1.msra.mxu0 0.0
    %758 = vmatprep.subr.mxu0 0.0
    %759 = vmatpush1.msra.mxu0 0.0
    %760 = vmatprep.subr.mxu0 0.0
    %761 = vmatpush1.msra.mxu0 0.0
    %762 = vmatprep.subr.mxu0 0.0
    %763 = vmatpush1.msra.mxu0 0.0
    %764 = vmatprep.subr.mxu0 0.0
    %765 = vmatpush1.msra.mxu0 0.0
    %766 = vmatprep.subr.mxu0 0.0
    %767 = vmatpush1.msra.mxu0 0.0
    %768 = vmatprep.subr.mxu0 0.0
    %769 = vmatpush1.msra.mxu0 0.0
    %770 = vmatprep.subr.mxu0 0.0
    %771 = vmatpush1.msra.mxu0 0.0
    %772 = vmatprep.subr.mxu0 0.0
    %773 = vmatpush1.msra.mxu0 0.0
    %774 = vmatprep.mubr.f32.mxu0 0.0
    %775 = vmatmul.mubr.f32.gmra.mrb[0].mxu0 %v708
    %v776 = vpop.f32.mrb[0].mxu0
    %v777 = vadd.f32 %v495, %v776
    %v778 = vpop.f32.mrb[0].mxu0
    %779 = vdwg.mxu0
    %v780 = vmul.f32 %v777, %v147
    %v781 = vxor.u32 %v780, 2147483648
    %v782 = vmul.f32 %v781, 1.442695
    %v783 = vpow.pop %v782
    %v784 = vadd.f32 %v783, 1.0
    %v785 = vrcp.pop %v784
    %v786 = vmul.f32 1.0, %v785
    %v787 = vmul.f32 %v786, %v147
    %v788 = vadd.f32 %v787, %v148
    %v789 = vmul.f32 %v788, %v590
    %791 = vrot.lane.b32.xlu0 %v788, 64
    %v792 = vpop.permute.xlu0 %791
    %v794 = vmul.f32 %v788, %v792
    %796 = vrot.lane.b32.xlu0 %v794, 32
    %v797 = vpop.permute.xlu0 %796
    %v799 = vadd.f32 %v789, %v797
    %v800 = vtanh.pop %v799
    %802 = vrot.lane.b32.xlu0 %v800, 64
    %v803 = vpop.permute.xlu0 %802
    %v805 = vmul.f32 %v788, %v803
    %v806 = vld [vmem:[%s339] sm:$0x3]
    %v807 = vsel %vm368, %v700, 0
    %809 = vmatprep.subr.mxu0 0.0
    %810 = vmatpush1.msra.mxu0 %v364
    %811 = vmatprep.subr.mxu0 0.0
    %812 = vmatpush1.msra.mxu0 %v365
    %813 = vmatprep.subr.mxu0 0.0
    %814 = vmatpush1.msra.mxu0 %v366
    %815 = vmatprep.subr.mxu0 0.0
    %816 = vmatpush1.msra.mxu0 %v367
    %817 = vmatprep.subr.mxu0 0.0
    %818 = vmatpush1.msra.mxu0 0.0
    %819 = vmatprep.subr.mxu0 0.0
    %820 = vmatpush1.msra.mxu0 0.0
    %821 = vmatprep.subr.mxu0 0.0
    %822 = vmatpush1.msra.mxu0 0.0
    %823 = vmatprep.subr.mxu0 0.0
    %824 = vmatpush1.msra.mxu0 0.0
    %825 = vmatprep.subr.mxu0 0.0
    %826 = vmatpush1.msra.mxu0 0.0
    %827 = vmatprep.subr.mxu0 0.0
    %828 = vmatpush1.msra.mxu0 0.0
    %829 = vmatprep.subr.mxu0 0.0
    %830 = vmatpush1.msra.mxu0 0.0
    %831 = vmatprep.subr.mxu0 0.0
    %832 = vmatpush1.msra.mxu0 0.0
    %833 = vmatprep.subr.mxu0 0.0
    %834 = vmatpush1.msra.mxu0 0.0
    %835 = vmatprep.subr.mxu0 0.0
    %836 = vmatpush1.msra.mxu0 0.0
    %837 = vmatprep.subr.mxu0 0.0
    %838 = vmatpush1.msra.mxu0 0.0
    %839 = vmatprep.subr.mxu0 0.0
    %840 = vmatpush1.msra.mxu0 0.0
    %841 = vmatprep.subr.mxu0 0.0
    %842 = vmatpush1.msra.mxu0 0.0
    %843 = vmatprep.subr.mxu0 0.0
    %844 = vmatpush1.msra.mxu0 0.0
    %845 = vmatprep.subr.mxu0 0.0
    %846 = vmatpush1.msra.mxu0 0.0
    %847 = vmatprep.subr.mxu0 0.0
    %848 = vmatpush1.msra.mxu0 0.0
    %849 = vmatprep.subr.mxu0 0.0
    %850 = vmatpush1.msra.mxu0 0.0
    %851 = vmatprep.subr.mxu0 0.0
    %852 = vmatpush1.msra.mxu0 0.0
    %853 = vmatprep.subr.mxu0 0.0
    %854 = vmatpush1.msra.mxu0 0.0
    %855 = vmatprep.subr.mxu0 0.0
    %856 = vmatpush1.msra.mxu0 0.0
    %857 = vmatprep.subr.mxu0 0.0
    %858 = vmatpush1.msra.mxu0 0.0
    %859 = vmatprep.subr.mxu0 0.0
    %860 = vmatpush1.msra.mxu0 0.0
    %861 = vmatprep.subr.mxu0 0.0
    %862 = vmatpush1.msra.mxu0 0.0
    %863 = vmatprep.subr.mxu0 0.0
    %864 = vmatpush1.msra.mxu0 0.0
    %865 = vmatprep.subr.mxu0 0.0
    %866 = vmatpush1.msra.mxu0 0.0
    %867 = vmatprep.subr.mxu0 0.0
    %868 = vmatpush1.msra.mxu0 0.0
    %869 = vmatprep.subr.mxu0 0.0
    %870 = vmatpush1.msra.mxu0 0.0
    %871 = vmatprep.subr.mxu0 0.0
    %872 = vmatpush1.msra.mxu0 0.0
    %873 = vmatprep.mubr.f32.mxu0 0.0
    %874 = vmatmul.mubr.f32.gmra.mrb[0].mxu0 %v807
    %v875 = vpop.f32.mrb[0].mxu0
    %v876 = vadd.f32 0.0, %v875
    %v877 = vpop.f32.mrb[0].mxu0
    %878 = vdwg.mxu0
    %v879 = vadd.f32 %v806, %v876
    %v880 = vadd.f32 %v879, %v448
    %v881 = vmul.f32 %v880, %v147
    %v882 = vxor.u32 %v881, 2147483648
    %v883 = vmul.f32 %v882, 1.442695
    %v884 = vpow.pop %v883
    %v885 = vadd.f32 %v884, 1.0
    %v886 = vrcp.pop %v885
    %v887 = vmul.f32 1.0, %v886
    %v888 = vmul.f32 %v887, %v147
    %v889 = vadd.f32 %v888, %v148
    %v890 = vmul.f32 %v889, %v691
    %892 = vrot.lane.b32.xlu0 %v889, 64
    %v893 = vpop.permute.xlu0 %892
    %v895 = vmul.f32 %v889, %v893
    %897 = vrot.lane.b32.xlu0 %v895, 32
    %v898 = vpop.permute.xlu0 %897
    %v900 = vadd.f32 %v890, %v898
    %v901 = vtanh.pop %v900
    %903 = vrot.lane.b32.xlu0 %v901, 64
    %v904 = vpop.permute.xlu0 %903
    %v906 = vmul.f32 %v889, %v904
    %908 = vrot.lane.b32.xlu0 %v906, 32
    %v909 = vpop.permute.xlu0 %908
    %912 = vrot.lane.b32.xlu0 %v805, 64
    %v913 = vpop.permute.xlu0 %912
    %v915 = vsel %vm368, %v909, %v913
    %v917 = vsel %vm497, %v915, 0
    %919 = vmatprep.subr.mxu0 0.0
    %920 = vmatpush1.msra.mxu0 %v482
    %921 = vmatprep.subr.mxu0 0.0
    %922 = vmatpush1.msra.mxu0 %v483
    %923 = vmatprep.subr.mxu0 0.0
    %924 = vmatpush1.msra.mxu0 %v484
    %925 = vmatprep.subr.mxu0 0.0
    %926 = vmatpush1.msra.mxu0 %v485
    %927 = vmatprep.subr.mxu0 0.0
    %928 = vmatpush1.msra.mxu0 %v486
    %929 = vmatprep.subr.mxu0 0.0
    %930 = vmatpush1.msra.mxu0 %v487
    %931 = vmatprep.subr.mxu0 0.0
    %932 = vmatpush1.msra.mxu0 %v488
    %933 = vmatprep.subr.mxu0 0.0
    %934 = vmatpush1.msra.mxu0 %v489
    %935 = vmatprep.subr.mxu0 0.0
    %936 = vmatpush1.msra.mxu0 0.0
    %937 = vmatprep.subr.mxu0 0.0
    %938 = vmatpush1.msra.mxu0 0.0
    %939 = vmatprep.subr.mxu0 0.0
    %940 = vmatpush1.msra.mxu0 0.0
    %941 = vmatprep.subr.mxu0 0.0
    %942 = vmatpush1.msra.mxu0 0.0
    %943 = vmatprep.subr.mxu0 0.0
    %944 = vmatpush1.msra.mxu0 0.0
    %945 = vmatprep.subr.mxu0 0.0
    %946 = vmatpush1.msra.mxu0 0.0
    %947 = vmatprep.subr.mxu0 0.0
    %948 = vmatpush1.msra.mxu0 0.0
    %949 = vmatprep.subr.mxu0 0.0
    %950 = vmatpush1.msra.mxu0 0.0
    %951 = vmatprep.subr.mxu0 0.0
    %952 = vmatpush1.msra.mxu0 0.0
    %953 = vmatprep.subr.mxu0 0.0
    %954 = vmatpush1.msra.mxu0 0.0
    %955 = vmatprep.subr.mxu0 0.0
    %956 = vmatpush1.msra.mxu0 0.0
    %957 = vmatprep.subr.mxu0 0.0
    %958 = vmatpush1.msra.mxu0 0.0
    %959 = vmatprep.subr.mxu0 0.0
    %960 = vmatpush1.msra.mxu0 0.0
    %961 = vmatprep.subr.mxu0 0.0
    %962 = vmatpush1.msra.mxu0 0.0
    %963 = vmatprep.subr.mxu0 0.0
    %964 = vmatpush1.msra.mxu0 0.0
    %965 = vmatprep.subr.mxu0 0.0
    %966 = vmatpush1.msra.mxu0 0.0
    %967 = vmatprep.subr.mxu0 0.0
    %968 = vmatpush1.msra.mxu0 0.0
    %969 = vmatprep.subr.mxu0 0.0
    %970 = vmatpush1.msra.mxu0 0.0
    %971 = vmatprep.subr.mxu0 0.0
    %972 = vmatpush1.msra.mxu0 0.0
    %973 = vmatprep.subr.mxu0 0.0
    %974 = vmatpush1.msra.mxu0 0.0
    %975 = vmatprep.subr.mxu0 0.0
    %976 = vmatpush1.msra.mxu0 0.0
    %977 = vmatprep.subr.mxu0 0.0
    %978 = vmatpush1.msra.mxu0 0.0
    %979 = vmatprep.subr.mxu0 0.0
    %980 = vmatpush1.msra.mxu0 0.0
    %981 = vmatprep.subr.mxu0 0.0
    %982 = vmatpush1.msra.mxu0 0.0
    %983 = vmatprep.mubr.f32.mxu0 0.0
    %984 = vmatmul.mubr.f32.gmra.mrb[0].mxu0 %v917
    %v985 = vpop.f32.mrb[0].mxu0
    %v986 = vadd.f32 %v495, %v985
    %v987 = vpop.f32.mrb[0].mxu0
    %988 = vdwg.mxu0
    %v989 = vmul.f32 %v986, %v147
    %v990 = vxor.u32 %v989, 2147483648
    %v991 = vmul.f32 %v990, 1.442695
    %v992 = vpow.pop %v991
    %v993 = vadd.f32 %v992, 1.0
    %v994 = vrcp.pop %v993
    %v995 = vmul.f32 1.0, %v994
    %v996 = vmul.f32 %v995, %v147
    %v997 = vadd.f32 %v996, %v148
    %v998 = vmul.f32 %v997, %v799
    %1000 = vrot.lane.b32.xlu0 %v997, 64
    %v1001 = vpop.permute.xlu0 %1000
    %v1003 = vmul.f32 %v997, %v1001
    %1005 = vrot.lane.b32.xlu0 %v1003, 32
    %v1006 = vpop.permute.xlu0 %1005
    %v1008 = vadd.f32 %v998, %v1006
    %v1009 = vtanh.pop %v1008
    %1011 = vrot.lane.b32.xlu0 %v1009, 64
    %v1012 = vpop.permute.xlu0 %1011
    %v1014 = vmul.f32 %v997, %v1012
    %v1015 = vld [vmem:[%s343] sm:$0x3]
    %v1016 = vsel %vm368, %v909, 0
    %1018 = vmatprep.subr.mxu0 0.0
    %1019 = vmatpush1.msra.mxu0 %v364
    %1020 = vmatprep.subr.mxu0 0.0
    %1021 = vmatpush1.msra.mxu0 %v365
    %1022 = vmatprep.subr.mxu0 0.0
    %1023 = vmatpush1.msra.mxu0 %v366
    %1024 = vmatprep.subr.mxu0 0.0
    %1025 = vmatpush1.msra.mxu0 %v367
    %1026 = vmatprep.subr.mxu0 0.0
    %1027 = vmatpush1.msra.mxu0 0.0
    %1028 = vmatprep.subr.mxu0 0.0
    %1029 = vmatpush1.msra.mxu0 0.0
    %1030 = vmatprep.subr.mxu0 0.0
    %1031 = vmatpush1.msra.mxu0 0.0
    %1032 = vmatprep.subr.mxu0 0.0
    %1033 = vmatpush1.msra.mxu0 0.0
    %1034 = vmatprep.subr.mxu0 0.0
    %1035 = vmatpush1.msra.mxu0 0.0
    %1036 = vmatprep.subr.mxu0 0.0
    %1037 = vmatpush1.msra.mxu0 0.0
    %1038 = vmatprep.subr.mxu0 0.0
    %1039 = vmatpush1.msra.mxu0 0.0
    %1040 = vmatprep.subr.mxu0 0.0
    %1041 = vmatpush1.msra.mxu0 0.0
    %1042 = vmatprep.subr.mxu0 0.0
    %1043 = vmatpush1.msra.mxu0 0.0
    %1044 = vmatprep.subr.mxu0 0.0
    %1045 = vmatpush1.msra.mxu0 0.0
    %1046 = vmatprep.subr.mxu0 0.0
    %1047 = vmatpush1.msra.mxu0 0.0
    %1048 = vmatprep.subr.mxu0 0.0
    %1049 = vmatpush1.msra.mxu0 0.0
    %1050 = vmatprep.subr.mxu0 0.0
    %1051 = vmatpush1.msra.mxu0 0.0
    %1052 = vmatprep.subr.mxu0 0.0
    %1053 = vmatpush1.msra.mxu0 0.0
    %1054 = vmatprep.subr.mxu0 0.0
    %1055 = vmatpush1.msra.mxu0 0.0
    %1056 = vmatprep.subr.mxu0 0.0
    %1057 = vmatpush1.msra.mxu0 0.0
    %1058 = vmatprep.subr.mxu0 0.0
    %1059 = vmatpush1.msra.mxu0 0.0
    %1060 = vmatprep.subr.mxu0 0.0
    %1061 = vmatpush1.msra.mxu0 0.0
    %1062 = vmatprep.subr.mxu0 0.0
    %1063 = vmatpush1.msra.mxu0 0.0
    %1064 = vmatprep.subr.mxu0 0.0
    %1065 = vmatpush1.msra.mxu0 0.0
    %1066 = vmatprep.subr.mxu0 0.0
    %1067 = vmatpush1.msra.mxu0 0.0
    %1068 = vmatprep.subr.mxu0 0.0
    %1069 = vmatpush1.msra.mxu0 0.0
    %1070 = vmatprep.subr.mxu0 0.0
    %1071 = vmatpush1.msra.mxu0 0.0
    %1072 = vmatprep.subr.mxu0 0.0
    %1073 = vmatpush1.msra.mxu0 0.0
    %1074 = vmatprep.subr.mxu0 0.0
    %1075 = vmatpush1.msra.mxu0 0.0
    %1076 = vmatprep.subr.mxu0 0.0
    %1077 = vmatpush1.msra.mxu0 0.0
    %1078 = vmatprep.subr.mxu0 0.0
    %1079 = vmatpush1.msra.mxu0 0.0
    %1080 = vmatprep.subr.mxu0 0.0
    %1081 = vmatpush1.msra.mxu0 0.0
    %1082 = vmatprep.mubr.f32.mxu0 0.0
    %1083 = vmatmul.mubr.f32.gmra.mrb[0].mxu0 %v1016
    %v1084 = vpop.f32.mrb[0].mxu0
    %v1085 = vadd.f32 0.0, %v1084
    %v1086 = vpop.f32.mrb[0].mxu0
    %1087 = vdwg.mxu0
    %v1088 = vadd.f32 %v1015, %v1085
    %v1089 = vadd.f32 %v1088, %v448
    %v1090 = vmul.f32 %v1089, %v147
    %v1091 = vxor.u32 %v1090, 2147483648
    %v1092 = vmul.f32 %v1091, 1.442695
    %v1093 = vpow.pop %v1092
    %v1094 = vadd.f32 %v1093, 1.0
    %v1095 = vrcp.pop %v1094
    %v1096 = vmul.f32 1.0, %v1095
    %v1097 = vmul.f32 %v1096, %v147
    %v1098 = vadd.f32 %v1097, %v148
    %v1099 = vmul.f32 %v1098, %v900
    %1101 = vrot.lane.b32.xlu0 %v1098, 64
    %v1102 = vpop.permute.xlu0 %1101
    %v1104 = vmul.f32 %v1098, %v1102
    %1106 = vrot.lane.b32.xlu0 %v1104, 32
    %v1107 = vpop.permute.xlu0 %1106
    %v1109 = vadd.f32 %v1099, %v1107
    %v1110 = vtanh.pop %v1109
    %1112 = vrot.lane.b32.xlu0 %v1110, 64
    %v1113 = vpop.permute.xlu0 %1112
    %v1115 = vmul.f32 %v1098, %v1113
    %1117 = vrot.lane.b32.xlu0 %v1115, 32
    %v1118 = vpop.permute.xlu0 %1117
    %1121 = vrot.lane.b32.xlu0 %v1014, 64
    %v1122 = vpop.permute.xlu0 %1121
    %v1124 = vsel %vm368, %v1118, %v1122
    %v1126 = vsel %vm497, %v1124, 0
    %1128 = vmatprep.subr.mxu0 0.0
    %1129 = vmatpush1.msra.mxu0 %v482
    %1130 = vmatprep.subr.mxu0 0.0
    %1131 = vmatpush1.msra.mxu0 %v483
    %1132 = vmatprep.subr.mxu0 0.0
    %1133 = vmatpush1.msra.mxu0 %v484
    %1134 = vmatprep.subr.mxu0 0.0
    %1135 = vmatpush1.msra.mxu0 %v485
    %1136 = vmatprep.subr.mxu0 0.0
    %1137 = vmatpush1.msra.mxu0 %v486
    %1138 = vmatprep.subr.mxu0 0.0
    %1139 = vmatpush1.msra.mxu0 %v487
    %1140 = vmatprep.subr.mxu0 0.0
    %1141 = vmatpush1.msra.mxu0 %v488
    %1142 = vmatprep.subr.mxu0 0.0
    %1143 = vmatpush1.msra.mxu0 %v489
    %1144 = vmatprep.subr.mxu0 0.0
    %1145 = vmatpush1.msra.mxu0 0.0
    %1146 = vmatprep.subr.mxu0 0.0
    %1147 = vmatpush1.msra.mxu0 0.0
    %1148 = vmatprep.subr.mxu0 0.0
    %1149 = vmatpush1.msra.mxu0 0.0
    %1150 = vmatprep.subr.mxu0 0.0
    %1151 = vmatpush1.msra.mxu0 0.0
    %1152 = vmatprep.subr.mxu0 0.0
    %1153 = vmatpush1.msra.mxu0 0.0
    %1154 = vmatprep.subr.mxu0 0.0
    %1155 = vmatpush1.msra.mxu0 0.0
    %1156 = vmatprep.subr.mxu0 0.0
    %1157 = vmatpush1.msra.mxu0 0.0
    %1158 = vmatprep.subr.mxu0 0.0
    %1159 = vmatpush1.msra.mxu0 0.0
    %1160 = vmatprep.subr.mxu0 0.0
    %1161 = vmatpush1.msra.mxu0 0.0
    %1162 = vmatprep.subr.mxu0 0.0
    %1163 = vmatpush1.msra.mxu0 0.0
    %1164 = vmatprep.subr.mxu0 0.0
    %1165 = vmatpush1.msra.mxu0 0.0
    %1166 = vmatprep.subr.mxu0 0.0
    %1167 = vmatpush1.msra.mxu0 0.0
    %1168 = vmatprep.subr.mxu0 0.0
    %1169 = vmatpush1.msra.mxu0 0.0
    %1170 = vmatprep.subr.mxu0 0.0
    %1171 = vmatpush1.msra.mxu0 0.0
    %1172 = vmatprep.subr.mxu0 0.0
    %1173 = vmatpush1.msra.mxu0 0.0
    %1174 = vmatprep.subr.mxu0 0.0
    %1175 = vmatpush1.msra.mxu0 0.0
    %1176 = vmatprep.subr.mxu0 0.0
    %1177 = vmatpush1.msra.mxu0 0.0
    %1178 = vmatprep.subr.mxu0 0.0
    %1179 = vmatpush1.msra.mxu0 0.0
    %1180 = vmatprep.subr.mxu0 0.0
    %1181 = vmatpush1.msra.mxu0 0.0
    %1182 = vmatprep.subr.mxu0 0.0
    %1183 = vmatpush1.msra.mxu0 0.0
    %1184 = vmatprep.subr.mxu0 0.0
    %1185 = vmatpush1.msra.mxu0 0.0
    %1186 = vmatprep.subr.mxu0 0.0
    %1187 = vmatpush1.msra.mxu0 0.0
    %1188 = vmatprep.subr.mxu0 0.0
    %1189 = vmatpush1.msra.mxu0 0.0
    %1190 = vmatprep.subr.mxu0 0.0
    %1191 = vmatpush1.msra.mxu0 0.0
    %1192 = vmatprep.mubr.f32.mxu0 0.0
    %1193 = vmatmul.mubr.f32.gmra.mrb[0].mxu0 %v1126
    %v1194 = vpop.f32.mrb[0].mxu0
    %v1195 = vadd.f32 %v495, %v1194
    %v1196 = vpop.f32.mrb[0].mxu0
    %1197 = vdwg.mxu0
    %v1198 = vmul.f32 %v1195, %v147
    %v1199 = vxor.u32 %v1198, 2147483648
    %v1200 = vmul.f32 %v1199, 1.442695
    %v1201 = vpow.pop %v1200
    %v1202 = vadd.f32 %v1201, 1.0
    %v1203 = vrcp.pop %v1202
    %v1204 = vmul.f32 1.0, %v1203
    %v1205 = vmul.f32 %v1204, %v147
    %v1206 = vadd.f32 %v1205, %v148
    %v1207 = vmul.f32 %v1206, %v1008
    %1209 = vrot.lane.b32.xlu0 %v1206, 64
    %v1210 = vpop.permute.xlu0 %1209
    %v1212 = vmul.f32 %v1206, %v1210
    %1214 = vrot.lane.b32.xlu0 %v1212, 32
    %v1215 = vpop.permute.xlu0 %1214
    %v1217 = vadd.f32 %v1207, %v1215
    %v1218 = vtanh.pop %v1217
    %1220 = vrot.lane.b32.xlu0 %v1218, 64
    %v1221 = vpop.permute.xlu0 %1220
    %v1223 = vmul.f32 %v1206, %v1221
    %v1224 = vld [vmem:[%s347] sm:$0x3]
    %v1225 = vsel %vm368, %v1118, 0
    %1227 = vmatprep.subr.mxu0 0.0
    %1228 = vmatpush1.msra.mxu0 %v364
    %1229 = vmatprep.subr.mxu0 0.0
    %1230 = vmatpush1.msra.mxu0 %v365
    %1231 = vmatprep.subr.mxu0 0.0
    %1232 = vmatpush1.msra.mxu0 %v366
    %1233 = vmatprep.subr.mxu0 0.0
    %1234 = vmatpush1.msra.mxu0 %v367
    %1235 = vmatprep.subr.mxu0 0.0
    %1236 = vmatpush1.msra.mxu0 0.0
    %1237 = vmatprep.subr.mxu0 0.0
    %1238 = vmatpush1.msra.mxu0 0.0
    %1239 = vmatprep.subr.mxu0 0.0
    %1240 = vmatpush1.msra.mxu0 0.0
    %1241 = vmatprep.subr.mxu0 0.0
    %1242 = vmatpush1.msra.mxu0 0.0
    %1243 = vmatprep.subr.mxu0 0.0
    %1244 = vmatpush1.msra.mxu0 0.0
    %1245 = vmatprep.subr.mxu0 0.0
    %1246 = vmatpush1.msra.mxu0 0.0
    %1247 = vmatprep.subr.mxu0 0.0
    %1248 = vmatpush1.msra.mxu0 0.0
    %1249 = vmatprep.subr.mxu0 0.0
    %1250 = vmatpush1.msra.mxu0 0.0
    %1251 = vmatprep.subr.mxu0 0.0
    %1252 = vmatpush1.msra.mxu0 0.0
    %1253 = vmatprep.subr.mxu0 0.0
    %1254 = vmatpush1.msra.mxu0 0.0
    %1255 = vmatprep.subr.mxu0 0.0
    %1256 = vmatpush1.msra.mxu0 0.0
    %1257 = vmatprep.subr.mxu0 0.0
    %1258 = vmatpush1.msra.mxu0 0.0
    %1259 = vmatprep.subr.mxu0 0.0
    %1260 = vmatpush1.msra.mxu0 0.0
    %1261 = vmatprep.subr.mxu0 0.0
    %1262 = vmatpush1.msra.mxu0 0.0
    %1263 = vmatprep.subr.mxu0 0.0
    %1264 = vmatpush1.msra.mxu0 0.0
    %1265 = vmatprep.subr.mxu0 0.0
    %1266 = vmatpush1.msra.mxu0 0.0
    %1267 = vmatprep.subr.mxu0 0.0
    %1268 = vmatpush1.msra.mxu0 0.0
    %1269 = vmatprep.subr.mxu0 0.0
    %1270 = vmatpush1.msra.mxu0 0.0
    %1271 = vmatprep.subr.mxu0 0.0
    %1272 = vmatpush1.msra.mxu0 0.0
    %1273 = vmatprep.subr.mxu0 0.0
    %1274 = vmatpush1.msra.mxu0 0.0
    %1275 = vmatprep.subr.mxu0 0.0
    %1276 = vmatpush1.msra.mxu0 0.0
    %1277 = vmatprep.subr.mxu0 0.0
    %1278 = vmatpush1.msra.mxu0 0.0
    %1279 = vmatprep.subr.mxu0 0.0
    %1280 = vmatpush1.msra.mxu0 0.0
    %1281 = vmatprep.subr.mxu0 0.0
    %1282 = vmatpush1.msra.mxu0 0.0
    %1283 = vmatprep.subr.mxu0 0.0
    %1284 = vmatpush1.msra.mxu0 0.0
    %1285 = vmatprep.subr.mxu0 0.0
    %1286 = vmatpush1.msra.mxu0 0.0
    %1287 = vmatprep.subr.mxu0 0.0
    %1288 = vmatpush1.msra.mxu0 0.0
    %1289 = vmatprep.subr.mxu0 0.0
    %1290 = vmatpush1.msra.mxu0 0.0
    %1291 = vmatprep.mubr.f32.mxu0 0.0
    %1292 = vmatmul.mubr.f32.gmra.mrb[0].mxu0 %v1225
    %v1293 = vpop.f32.mrb[0].mxu0
    %v1294 = vadd.f32 0.0, %v1293
    %v1295 = vpop.f32.mrb[0].mxu0
    %1296 = vdwg.mxu0
    %v1297 = vadd.f32 %v1224, %v1294
    %v1298 = vadd.f32 %v1297, %v448
    %v1299 = vmul.f32 %v1298, %v147
    %v1300 = vxor.u32 %v1299, 2147483648
    %v1301 = vmul.f32 %v1300, 1.442695
    %v1302 = vpow.pop %v1301
    %v1303 = vadd.f32 %v1302, 1.0
    %v1304 = vrcp.pop %v1303
    %v1305 = vmul.f32 1.0, %v1304
    %v1306 = vmul.f32 %v1305, %v147
    %v1307 = vadd.f32 %v1306, %v148
    %v1308 = vmul.f32 %v1307, %v1109
    %1310 = vrot.lane.b32.xlu0 %v1307, 64
    %v1311 = vpop.permute.xlu0 %1310
    %v1313 = vmul.f32 %v1307, %v1311
    %1315 = vrot.lane.b32.xlu0 %v1313, 32
    %v1316 = vpop.permute.xlu0 %1315
    %v1318 = vadd.f32 %v1308, %v1316
    %v1319 = vtanh.pop %v1318
    %1321 = vrot.lane.b32.xlu0 %v1319, 64
    %v1322 = vpop.permute.xlu0 %1321
    %v1324 = vmul.f32 %v1307, %v1322
    %1326 = vrot.lane.b32.xlu0 %v1324, 32
    %v1327 = vpop.permute.xlu0 %1326
    %1330 = vrot.lane.b32.xlu0 %v1223, 64
    %v1331 = vpop.permute.xlu0 %1330
    %v1333 = vsel %vm368, %v1327, %v1331
    %v1335 = vsel %vm497, %v1333, 0
    %1337 = vmatprep.subr.mxu0 0.0
    %1338 = vmatpush1.msra.mxu0 %v482
    %1339 = vmatprep.subr.mxu0 0.0
    %1340 = vmatpush1.msra.mxu0 %v483
    %1341 = vmatprep.subr.mxu0 0.0
    %1342 = vmatpush1.msra.mxu0 %v484
    %1343 = vmatprep.subr.mxu0 0.0
    %1344 = vmatpush1.msra.mxu0 %v485
    %1345 = vmatprep.subr.mxu0 0.0
    %1346 = vmatpush1.msra.mxu0 %v486
    %1347 = vmatprep.subr.mxu0 0.0
    %1348 = vmatpush1.msra.mxu0 %v487
    %1349 = vmatprep.subr.mxu0 0.0
    %1350 = vmatpush1.msra.mxu0 %v488
    %1351 = vmatprep.subr.mxu0 0.0
    %1352 = vmatpush1.msra.mxu0 %v489
    %1353 = vmatprep.subr.mxu0 0.0
    %1354 = vmatpush1.msra.mxu0 0.0
    %1355 = vmatprep.subr.mxu0 0.0
    %1356 = vmatpush1.msra.mxu0 0.0
    %1357 = vmatprep.subr.mxu0 0.0
    %1358 = vmatpush1.msra.mxu0 0.0
    %1359 = vmatprep.subr.mxu0 0.0
    %1360 = vmatpush1.msra.mxu0 0.0
    %1361 = vmatprep.subr.mxu0 0.0
    %1362 = vmatpush1.msra.mxu0 0.0
    %1363 = vmatprep.subr.mxu0 0.0
    %1364 = vmatpush1.msra.mxu0 0.0
    %1365 = vmatprep.subr.mxu0 0.0
    %1366 = vmatpush1.msra.mxu0 0.0
    %1367 = vmatprep.subr.mxu0 0.0
    %1368 = vmatpush1.msra.mxu0 0.0
    %1369 = vmatprep.subr.mxu0 0.0
    %1370 = vmatpush1.msra.mxu0 0.0
    %1371 = vmatprep.subr.mxu0 0.0
    %1372 = vmatpush1.msra.mxu0 0.0
    %1373 = vmatprep.subr.mxu0 0.0
    %1374 = vmatpush1.msra.mxu0 0.0
    %1375 = vmatprep.subr.mxu0 0.0
    %1376 = vmatpush1.msra.mxu0 0.0
    %1377 = vmatprep.subr.mxu0 0.0
    %1378 = vmatpush1.msra.mxu0 0.0
    %1379 = vmatprep.subr.mxu0 0.0
    %1380 = vmatpush1.msra.mxu0 0.0
    %1381 = vmatprep.subr.mxu0 0.0
    %1382 = vmatpush1.msra.mxu0 0.0
    %1383 = vmatprep.subr.mxu0 0.0
    %1384 = vmatpush1.msra.mxu0 0.0
    %1385 = vmatprep.subr.mxu0 0.0
    %1386 = vmatpush1.msra.mxu0 0.0
    %1387 = vmatprep.subr.mxu0 0.0
    %1388 = vmatpush1.msra.mxu0 0.0
    %1389 = vmatprep.subr.mxu0 0.0
    %1390 = vmatpush1.msra.mxu0 0.0
    %1391 = vmatprep.subr.mxu0 0.0
    %1392 = vmatpush1.msra.mxu0 0.0
    %1393 = vmatprep.subr.mxu0 0.0
    %1394 = vmatpush1.msra.mxu0 0.0
    %1395 = vmatprep.subr.mxu0 0.0
    %1396 = vmatpush1.msra.mxu0 0.0
    %1397 = vmatprep.subr.mxu0 0.0
    %1398 = vmatpush1.msra.mxu0 0.0
    %1399 = vmatprep.subr.mxu0 0.0
    %1400 = vmatpush1.msra.mxu0 0.0
    %1401 = vmatprep.mubr.f32.mxu0 0.0
    %1402 = vmatmul.mubr.f32.gmra.mrb[0].mxu0 %v1335
    %v1403 = vpop.f32.mrb[0].mxu0
    %v1404 = vadd.f32 %v495, %v1403
    %v1405 = vpop.f32.mrb[0].mxu0
    %1406 = vdwg.mxu0
    %v1407 = vmul.f32 %v1404, %v147
    %v1408 = vxor.u32 %v1407, 2147483648
    %v1409 = vmul.f32 %v1408, 1.442695
    %v1410 = vpow.pop %v1409
    %v1411 = vadd.f32 %v1410, 1.0
    %v1412 = vrcp.pop %v1411
    %v1413 = vmul.f32 1.0, %v1412
    %v1414 = vmul.f32 %v1413, %v147
    %v1415 = vadd.f32 %v1414, %v148
    %v1416 = vmul.f32 %v1415, %v1217
    %1418 = vrot.lane.b32.xlu0 %v1415, 64
    %v1419 = vpop.permute.xlu0 %1418
    %v1421 = vmul.f32 %v1415, %v1419
    %1423 = vrot.lane.b32.xlu0 %v1421, 32
    %v1424 = vpop.permute.xlu0 %1423
    %v1426 = vadd.f32 %v1416, %v1424
    %v1427 = vtanh.pop %v1426
    %1429 = vrot.lane.b32.xlu0 %v1427, 64
    %v1430 = vpop.permute.xlu0 %1429
    %v1432 = vmul.f32 %v1415, %v1430
    %v1433 = vld [vmem:[%s351] sm:$0x3]
    %v1434 = vsel %vm368, %v1327, 0
    %1436 = vmatprep.subr.mxu0 0.0
    %1437 = vmatpush1.msra.mxu0 %v364
    %1438 = vmatprep.subr.mxu0 0.0
    %1439 = vmatpush1.msra.mxu0 %v365
    %1440 = vmatprep.subr.mxu0 0.0
    %1441 = vmatpush1.msra.mxu0 %v366
    %1442 = vmatprep.subr.mxu0 0.0
    %1443 = vmatpush1.msra.mxu0 %v367
    %1444 = vmatprep.subr.mxu0 0.0
    %1445 = vmatpush1.msra.mxu0 0.0
    %1446 = vmatprep.subr.mxu0 0.0
    %1447 = vmatpush1.msra.mxu0 0.0
    %1448 = vmatprep.subr.mxu0 0.0
    %1449 = vmatpush1.msra.mxu0 0.0
    %1450 = vmatprep.subr.mxu0 0.0
    %1451 = vmatpush1.msra.mxu0 0.0
    %1452 = vmatprep.subr.mxu0 0.0
    %1453 = vmatpush1.msra.mxu0 0.0
    %1454 = vmatprep.subr.mxu0 0.0
    %1455 = vmatpush1.msra.mxu0 0.0
    %1456 = vmatprep.subr.mxu0 0.0
    %1457 = vmatpush1.msra.mxu0 0.0
    %1458 = vmatprep.subr.mxu0 0.0
    %1459 = vmatpush1.msra.mxu0 0.0
    %1460 = vmatprep.subr.mxu0 0.0
    %1461 = vmatpush1.msra.mxu0 0.0
    %1462 = vmatprep.subr.mxu0 0.0
    %1463 = vmatpush1.msra.mxu0 0.0
    %1464 = vmatprep.subr.mxu0 0.0
    %1465 = vmatpush1.msra.mxu0 0.0
    %1466 = vmatprep.subr.mxu0 0.0
    %1467 = vmatpush1.msra.mxu0 0.0
    %1468 = vmatprep.subr.mxu0 0.0
    %1469 = vmatpush1.msra.mxu0 0.0
    %1470 = vmatprep.subr.mxu0 0.0
    %1471 = vmatpush1.msra.mxu0 0.0
    %1472 = vmatprep.subr.mxu0 0.0
    %1473 = vmatpush1.msra.mxu0 0.0
    %1474 = vmatprep.subr.mxu0 0.0
    %1475 = vmatpush1.msra.mxu0 0.0
    %1476 = vmatprep.subr.mxu0 0.0
    %1477 = vmatpush1.msra.mxu0 0.0
    %1478 = vmatprep.subr.mxu0 0.0
    %1479 = vmatpush1.msra.mxu0 0.0
    %1480 = vmatprep.subr.mxu0 0.0
    %1481 = vmatpush1.msra.mxu0 0.0
    %1482 = vmatprep.subr.mxu0 0.0
    %1483 = vmatpush1.msra.mxu0 0.0
    %1484 = vmatprep.subr.mxu0 0.0
    %1485 = vmatpush1.msra.mxu0 0.0
    %1486 = vmatprep.subr.mxu0 0.0
    %1487 = vmatpush1.msra.mxu0 0.0
    %1488 = vmatprep.subr.mxu0 0.0
    %1489 = vmatpush1.msra.mxu0 0.0
    %1490 = vmatprep.subr.mxu0 0.0
    %1491 = vmatpush1.msra.mxu0 0.0
    %1492 = vmatprep.subr.mxu0 0.0
    %1493 = vmatpush1.msra.mxu0 0.0
    %1494 = vmatprep.subr.mxu0 0.0
    %1495 = vmatpush1.msra.mxu0 0.0
    %1496 = vmatprep.subr.mxu0 0.0
    %1497 = vmatpush1.msra.mxu0 0.0
    %1498 = vmatprep.subr.mxu0 0.0
    %1499 = vmatpush1.msra.mxu0 0.0
    %1500 = vmatprep.mubr.f32.mxu0 0.0
    %1501 = vmatmul.mubr.f32.gmra.mrb[0].mxu0 %v1434
    %v1502 = vpop.f32.mrb[0].mxu0
    %v1503 = vadd.f32 0.0, %v1502
    %v1504 = vpop.f32.mrb[0].mxu0
    %1505 = vdwg.mxu0
    %v1506 = vadd.f32 %v1433, %v1503
    %v1507 = vadd.f32 %v1506, %v448
    %v1508 = vmul.f32 %v1507, %v147
    %v1509 = vxor.u32 %v1508, 2147483648
    %v1510 = vmul.f32 %v1509, 1.442695
    %v1511 = vpow.pop %v1510
    %v1512 = vadd.f32 %v1511, 1.0
    %v1513 = vrcp.pop %v1512
    %v1514 = vmul.f32 1.0, %v1513
    %v1515 = vmul.f32 %v1514, %v147
    %v1516 = vadd.f32 %v1515, %v148
    %v1517 = vmul.f32 %v1516, %v1318
    %1519 = vrot.lane.b32.xlu0 %v1516, 64
    %v1520 = vpop.permute.xlu0 %1519
    %v1522 = vmul.f32 %v1516, %v1520
    %1524 = vrot.lane.b32.xlu0 %v1522, 32
    %v1525 = vpop.permute.xlu0 %1524
    %v1527 = vadd.f32 %v1517, %v1525
    %v1528 = vtanh.pop %v1527
    %1530 = vrot.lane.b32.xlu0 %v1528, 64
    %v1531 = vpop.permute.xlu0 %1530
    %v1533 = vmul.f32 %v1516, %v1531
    %1535 = vrot.lane.b32.xlu0 %v1533, 32
    %v1536 = vpop.permute.xlu0 %1535
    %1539 = vrot.lane.b32.xlu0 %v1432, 64
    %v1540 = vpop.permute.xlu0 %1539
    %v1542 = vsel %vm368, %v1536, %v1540
    %v1544 = vsel %vm497, %v1542, 0
    %1546 = vmatprep.subr.mxu0 0.0
    %1547 = vmatpush1.msra.mxu0 %v482
    %1548 = vmatprep.subr.mxu0 0.0
    %1549 = vmatpush1.msra.mxu0 %v483
    %1550 = vmatprep.subr.mxu0 0.0
    %1551 = vmatpush1.msra.mxu0 %v484
    %1552 = vmatprep.subr.mxu0 0.0
    %1553 = vmatpush1.msra.mxu0 %v485
    %1554 = vmatprep.subr.mxu0 0.0
    %1555 = vmatpush1.msra.mxu0 %v486
    %1556 = vmatprep.subr.mxu0 0.0
    %1557 = vmatpush1.msra.mxu0 %v487
    %1558 = vmatprep.subr.mxu0 0.0
    %1559 = vmatpush1.msra.mxu0 %v488
    %1560 = vmatprep.subr.mxu0 0.0
    %1561 = vmatpush1.msra.mxu0 %v489
    %1562 = vmatprep.subr.mxu0 0.0
    %1563 = vmatpush1.msra.mxu0 0.0
    %1564 = vmatprep.subr.mxu0 0.0
    %1565 = vmatpush1.msra.mxu0 0.0
    %1566 = vmatprep.subr.mxu0 0.0
    %1567 = vmatpush1.msra.mxu0 0.0
    %1568 = vmatprep.subr.mxu0 0.0
    %1569 = vmatpush1.msra.mxu0 0.0
    %1570 = vmatprep.subr.mxu0 0.0
    %1571 = vmatpush1.msra.mxu0 0.0
    %1572 = vmatprep.subr.mxu0 0.0
    %1573 = vmatpush1.msra.mxu0 0.0
    %1574 = vmatprep.subr.mxu0 0.0
    %1575 = vmatpush1.msra.mxu0 0.0
    %1576 = vmatprep.subr.mxu0 0.0
    %1577 = vmatpush1.msra.mxu0 0.0
    %1578 = vmatprep.subr.mxu0 0.0
    %1579 = vmatpush1.msra.mxu0 0.0
    %1580 = vmatprep.subr.mxu0 0.0
    %1581 = vmatpush1.msra.mxu0 0.0
    %1582 = vmatprep.subr.mxu0 0.0
    %1583 = vmatpush1.msra.mxu0 0.0
    %1584 = vmatprep.subr.mxu0 0.0
    %1585 = vmatpush1.msra.mxu0 0.0
    %1586 = vmatprep.subr.mxu0 0.0
    %1587 = vmatpush1.msra.mxu0 0.0
    %1588 = vmatprep.subr.mxu0 0.0
    %1589 = vmatpush1.msra.mxu0 0.0
    %1590 = vmatprep.subr.mxu0 0.0
    %1591 = vmatpush1.msra.mxu0 0.0
    %1592 = vmatprep.subr.mxu0 0.0
    %1593 = vmatpush1.msra.mxu0 0.0
    %1594 = vmatprep.subr.mxu0 0.0
    %1595 = vmatpush1.msra.mxu0 0.0
    %1596 = vmatprep.subr.mxu0 0.0
    %1597 = vmatpush1.msra.mxu0 0.0
    %1598 = vmatprep.subr.mxu0 0.0
    %1599 = vmatpush1.msra.mxu0 0.0
    %1600 = vmatprep.subr.mxu0 0.0
    %1601 = vmatpush1.msra.mxu0 0.0
    %1602 = vmatprep.subr.mxu0 0.0
    %1603 = vmatpush1.msra.mxu0 0.0
    %1604 = vmatprep.subr.mxu0 0.0
    %1605 = vmatpush1.msra.mxu0 0.0
    %1606 = vmatprep.subr.mxu0 0.0
    %1607 = vmatpush1.msra.mxu0 0.0
    %1608 = vmatprep.subr.mxu0 0.0
    %1609 = vmatpush1.msra.mxu0 0.0
    %1610 = vmatprep.mubr.f32.mxu0 0.0
    %1611 = vmatmul.mubr.f32.gmra.mrb[0].mxu0 %v1544
    %v1612 = vpop.f32.mrb[0].mxu0
    %v1613 = vadd.f32 %v495, %v1612
    %v1614 = vpop.f32.mrb[0].mxu0
    %1615 = vdwg.mxu0
    %v1616 = vmul.f32 %v1613, %v147
    %v1617 = vxor.u32 %v1616, 2147483648
    %v1618 = vmul.f32 %v1617, 1.442695
    %v1619 = vpow.pop %v1618
    %v1620 = vadd.f32 %v1619, 1.0
    %v1621 = vrcp.pop %v1620
    %v1622 = vmul.f32 1.0, %v1621
    %v1623 = vmul.f32 %v1622, %v147
    %v1624 = vadd.f32 %v1623, %v148
    %v1625 = vmul.f32 %v1624, %v1426
    %1627 = vrot.lane.b32.xlu0 %v1624, 64
    %v1628 = vpop.permute.xlu0 %1627
    %v1630 = vmul.f32 %v1624, %v1628
    %1632 = vrot.lane.b32.xlu0 %v1630, 32
    %v1633 = vpop.permute.xlu0 %1632
    %v1635 = vadd.f32 %v1625, %v1633
    %v1636 = vtanh.pop %v1635
    %1638 = vrot.lane.b32.xlu0 %v1636, 64
    %v1639 = vpop.permute.xlu0 %1638
    %v1641 = vmul.f32 %v1624, %v1639
    %v1642 = vld [vmem:[%s355] sm:$0x3]
    %v1643 = vsel %vm368, %v1536, 0
    %1645 = vmatprep.subr.mxu0 0.0
    %1646 = vmatpush1.msra.mxu0 %v364
    %1647 = vmatprep.subr.mxu0 0.0
    %1648 = vmatpush1.msra.mxu0 %v365
    %1649 = vmatprep.subr.mxu0 0.0
    %1650 = vmatpush1.msra.mxu0 %v366
    %1651 = vmatprep.subr.mxu0 0.0
    %1652 = vmatpush1.msra.mxu0 %v367
    %1653 = vmatprep.subr.mxu0 0.0
    %1654 = vmatpush1.msra.mxu0 0.0
    %1655 = vmatprep.subr.mxu0 0.0
    %1656 = vmatpush1.msra.mxu0 0.0
    %1657 = vmatprep.subr.mxu0 0.0
    %1658 = vmatpush1.msra.mxu0 0.0
    %1659 = vmatprep.subr.mxu0 0.0
    %1660 = vmatpush1.msra.mxu0 0.0
    %1661 = vmatprep.subr.mxu0 0.0
    %1662 = vmatpush1.msra.mxu0 0.0
    %1663 = vmatprep.subr.mxu0 0.0
    %1664 = vmatpush1.msra.mxu0 0.0
    %1665 = vmatprep.subr.mxu0 0.0
    %1666 = vmatpush1.msra.mxu0 0.0
    %1667 = vmatprep.subr.mxu0 0.0
    %1668 = vmatpush1.msra.mxu0 0.0
    %1669 = vmatprep.subr.mxu0 0.0
    %1670 = vmatpush1.msra.mxu0 0.0
    %1671 = vmatprep.subr.mxu0 0.0
    %1672 = vmatpush1.msra.mxu0 0.0
    %1673 = vmatprep.subr.mxu0 0.0
    %1674 = vmatpush1.msra.mxu0 0.0
    %1675 = vmatprep.subr.mxu0 0.0
    %1676 = vmatpush1.msra.mxu0 0.0
    %1677 = vmatprep.subr.mxu0 0.0
    %1678 = vmatpush1.msra.mxu0 0.0
    %1679 = vmatprep.subr.mxu0 0.0
    %1680 = vmatpush1.msra.mxu0 0.0
    %1681 = vmatprep.subr.mxu0 0.0
    %1682 = vmatpush1.msra.mxu0 0.0
    %1683 = vmatprep.subr.mxu0 0.0
    %1684 = vmatpush1.msra.mxu0 0.0
    %1685 = vmatprep.subr.mxu0 0.0
    %1686 = vmatpush1.msra.mxu0 0.0
    %1687 = vmatprep.subr.mxu0 0.0
    %1688 = vmatpush1.msra.mxu0 0.0
    %1689 = vmatprep.subr.mxu0 0.0
    %1690 = vmatpush1.msra.mxu0 0.0
    %1691 = vmatprep.subr.mxu0 0.0
    %1692 = vmatpush1.msra.mxu0 0.0
    %1693 = vmatprep.subr.mxu0 0.0
    %1694 = vmatpush1.msra.mxu0 0.0
    %1695 = vmatprep.subr.mxu0 0.0
    %1696 = vmatpush1.msra.mxu0 0.0
    %1697 = vmatprep.subr.mxu0 0.0
    %1698 = vmatpush1.msra.mxu0 0.0
    %1699 = vmatprep.subr.mxu0 0.0
    %1700 = vmatpush1.msra.mxu0 0.0
    %1701 = vmatprep.subr.mxu0 0.0
    %1702 = vmatpush1.msra.mxu0 0.0
    %1703 = vmatprep.subr.mxu0 0.0
    %1704 = vmatpush1.msra.mxu0 0.0
    %1705 = vmatprep.subr.mxu0 0.0
    %1706 = vmatpush1.msra.mxu0 0.0
    %1707 = vmatprep.subr.mxu0 0.0
    %1708 = vmatpush1.msra.mxu0 0.0
    %1709 = vmatprep.mubr.f32.mxu0 0.0
    %1710 = vmatmul.mubr.f32.gmra.mrb[0].mxu0 %v1643
    %v1711 = vpop.f32.mrb[0].mxu0
    %v1712 = vadd.f32 0.0, %v1711
    %v1713 = vpop.f32.mrb[0].mxu0
    %1714 = vdwg.mxu0
    %v1715 = vadd.f32 %v1642, %v1712
    %v1716 = vadd.f32 %v1715, %v448
    %v1717 = vmul.f32 %v1716, %v147
    %v1718 = vxor.u32 %v1717, 2147483648
    %v1719 = vmul.f32 %v1718, 1.442695
    %v1720 = vpow.pop %v1719
    %v1721 = vadd.f32 %v1720, 1.0
    %v1722 = vrcp.pop %v1721
    %v1723 = vmul.f32 1.0, %v1722
    %v1724 = vmul.f32 %v1723, %v147
    %v1725 = vadd.f32 %v1724, %v148
    %v1726 = vmul.f32 %v1725, %v1527
    %1728 = vrot.lane.b32.xlu0 %v1725, 64
    %v1729 = vpop.permute.xlu0 %1728
    %v1731 = vmul.f32 %v1725, %v1729
    %1733 = vrot.lane.b32.xlu0 %v1731, 32
    %v1734 = vpop.permute.xlu0 %1733
    %v1736 = vadd.f32 %v1726, %v1734
    %v1737 = vtanh.pop %v1736
    %1739 = vrot.lane.b32.xlu0 %v1737, 64
    %v1740 = vpop.permute.xlu0 %1739
    %v1742 = vmul.f32 %v1725, %v1740
    %1744 = vrot.lane.b32.xlu0 %v1742, 32
    %v1745 = vpop.permute.xlu0 %1744
    %1748 = vrot.lane.b32.xlu0 %v1641, 64
    %v1749 = vpop.permute.xlu0 %1748
    %v1751 = vsel %vm368, %v1745, %v1749
    %v1753 = vsel %vm497, %v1751, 0
    %1755 = vmatprep.subr.mxu0 0.0
    %1756 = vmatpush1.msra.mxu0 %v482
    %1757 = vmatprep.subr.mxu0 0.0
    %1758 = vmatpush1.msra.mxu0 %v483
    %1759 = vmatprep.subr.mxu0 0.0
    %1760 = vmatpush1.msra.mxu0 %v484
    %1761 = vmatprep.subr.mxu0 0.0
    %1762 = vmatpush1.msra.mxu0 %v485
    %1763 = vmatprep.subr.mxu0 0.0
    %1764 = vmatpush1.msra.mxu0 %v486
    %1765 = vmatprep.subr.mxu0 0.0
    %1766 = vmatpush1.msra.mxu0 %v487
    %1767 = vmatprep.subr.mxu0 0.0
    %1768 = vmatpush1.msra.mxu0 %v488
    %1769 = vmatprep.subr.mxu0 0.0
    %1770 = vmatpush1.msra.mxu0 %v489
    %1771 = vmatprep.subr.mxu0 0.0
    %1772 = vmatpush1.msra.mxu0 0.0
    %1773 = vmatprep.subr.mxu0 0.0
    %1774 = vmatpush1.msra.mxu0 0.0
    %1775 = vmatprep.subr.mxu0 0.0
    %1776 = vmatpush1.msra.mxu0 0.0
    %1777 = vmatprep.subr.mxu0 0.0
    %1778 = vmatpush1.msra.mxu0 0.0
    %1779 = vmatprep.subr.mxu0 0.0
    %1780 = vmatpush1.msra.mxu0 0.0
    %1781 = vmatprep.subr.mxu0 0.0
    %1782 = vmatpush1.msra.mxu0 0.0
    %1783 = vmatprep.subr.mxu0 0.0
    %1784 = vmatpush1.msra.mxu0 0.0
    %1785 = vmatprep.subr.mxu0 0.0
    %1786 = vmatpush1.msra.mxu0 0.0
    %1787 = vmatprep.subr.mxu0 0.0
    %1788 = vmatpush1.msra.mxu0 0.0
    %1789 = vmatprep.subr.mxu0 0.0
    %1790 = vmatpush1.msra.mxu0 0.0
    %1791 = vmatprep.subr.mxu0 0.0
    %1792 = vmatpush1.msra.mxu0 0.0
    %1793 = vmatprep.subr.mxu0 0.0
    %1794 = vmatpush1.msra.mxu0 0.0
    %1795 = vmatprep.subr.mxu0 0.0
    %1796 = vmatpush1.msra.mxu0 0.0
    %1797 = vmatprep.subr.mxu0 0.0
    %1798 = vmatpush1.msra.mxu0 0.0
    %1799 = vmatprep.subr.mxu0 0.0
    %1800 = vmatpush1.msra.mxu0 0.0
    %1801 = vmatprep.subr.mxu0 0.0
    %1802 = vmatpush1.msra.mxu0 0.0
    %1803 = vmatprep.subr.mxu0 0.0
    %1804 = vmatpush1.msra.mxu0 0.0
    %1805 = vmatprep.subr.mxu0 0.0
    %1806 = vmatpush1.msra.mxu0 0.0
    %1807 = vmatprep.subr.mxu0 0.0
    %1808 = vmatpush1.msra.mxu0 0.0
    %1809 = vmatprep.subr.mxu0 0.0
    %1810 = vmatpush1.msra.mxu0 0.0
    %1811 = vmatprep.subr.mxu0 0.0
    %1812 = vmatpush1.msra.mxu0 0.0
    %1813 = vmatprep.subr.mxu0 0.0
    %1814 = vmatpush1.msra.mxu0 0.0
    %1815 = vmatprep.subr.mxu0 0.0
    %1816 = vmatpush1.msra.mxu0 0.0
    %1817 = vmatprep.subr.mxu0 0.0
    %1818 = vmatpush1.msra.mxu0 0.0
    %1819 = vmatprep.mubr.f32.mxu0 0.0
    %1820 = vmatmul.mubr.f32.gmra.mrb[0].mxu0 %v1753
    %v1821 = vpop.f32.mrb[0].mxu0
    %v1822 = vadd.f32 %v495, %v1821
    %v1823 = vpop.f32.mrb[0].mxu0
    %1824 = vdwg.mxu0
    %v1825 = vmul.f32 %v1822, %v147
    %v1826 = vxor.u32 %v1825, 2147483648
    %v1827 = vmul.f32 %v1826, 1.442695
    %v1828 = vpow.pop %v1827
    %v1829 = vadd.f32 %v1828, 1.0
    %v1830 = vrcp.pop %v1829
    %v1831 = vmul.f32 1.0, %v1830
    %v1832 = vmul.f32 %v1831, %v147
    %v1833 = vadd.f32 %v1832, %v148
    %v1834 = vmul.f32 %v1833, %v1635
    %1836 = vrot.lane.b32.xlu0 %v1833, 64
    %v1837 = vpop.permute.xlu0 %1836
    %v1839 = vmul.f32 %v1833, %v1837
    %1841 = vrot.lane.b32.xlu0 %v1839, 32
    %v1842 = vpop.permute.xlu0 %1841
    %v1844 = vadd.f32 %v1834, %v1842
    %v1845 = vtanh.pop %v1844
    %1847 = vrot.lane.b32.xlu0 %v1845, 64
    %v1848 = vpop.permute.xlu0 %1847
    %v1850 = vmul.f32 %v1833, %v1848
    %v1851 = vld [vmem:[%s359] sm:$0x3]
    %v1852 = vsel %vm368, %v1745, 0
    %1854 = vmatprep.subr.mxu0 0.0
    %1855 = vmatpush1.msra.mxu0 %v364
    %1856 = vmatprep.subr.mxu0 0.0
    %1857 = vmatpush1.msra.mxu0 %v365
    %1858 = vmatprep.subr.mxu0 0.0
    %1859 = vmatpush1.msra.mxu0 %v366
    %1860 = vmatprep.subr.mxu0 0.0
    %1861 = vmatpush1.msra.mxu0 %v367
    %1862 = vmatprep.subr.mxu0 0.0
    %1863 = vmatpush1.msra.mxu0 0.0
    %1864 = vmatprep.subr.mxu0 0.0
    %1865 = vmatpush1.msra.mxu0 0.0
    %1866 = vmatprep.subr.mxu0 0.0
    %1867 = vmatpush1.msra.mxu0 0.0
    %1868 = vmatprep.subr.mxu0 0.0
    %1869 = vmatpush1.msra.mxu0 0.0
    %1870 = vmatprep.subr.mxu0 0.0
    %1871 = vmatpush1.msra.mxu0 0.0
    %1872 = vmatprep.subr.mxu0 0.0
    %1873 = vmatpush1.msra.mxu0 0.0
    %1874 = vmatprep.subr.mxu0 0.0
    %1875 = vmatpush1.msra.mxu0 0.0
    %1876 = vmatprep.subr.mxu0 0.0
    %1877 = vmatpush1.msra.mxu0 0.0
    %1878 = vmatprep.subr.mxu0 0.0
    %1879 = vmatpush1.msra.mxu0 0.0
    %1880 = vmatprep.subr.mxu0 0.0
    %1881 = vmatpush1.msra.mxu0 0.0
    %1882 = vmatprep.subr.mxu0 0.0
    %1883 = vmatpush1.msra.mxu0 0.0
    %1884 = vmatprep.subr.mxu0 0.0
    %1885 = vmatpush1.msra.mxu0 0.0
    %1886 = vmatprep.subr.mxu0 0.0
    %1887 = vmatpush1.msra.mxu0 0.0
    %1888 = vmatprep.subr.mxu0 0.0
    %1889 = vmatpush1.msra.mxu0 0.0
    %1890 = vmatprep.subr.mxu0 0.0
    %1891 = vmatpush1.msra.mxu0 0.0
    %1892 = vmatprep.subr.mxu0 0.0
    %1893 = vmatpush1.msra.mxu0 0.0
    %1894 = vmatprep.subr.mxu0 0.0
    %1895 = vmatpush1.msra.mxu0 0.0
    %1896 = vmatprep.subr.mxu0 0.0
    %1897 = vmatpush1.msra.mxu0 0.0
    %1898 = vmatprep.subr.mxu0 0.0
    %1899 = vmatpush1.msra.mxu0 0.0
    %1900 = vmatprep.subr.mxu0 0.0
    %1901 = vmatpush1.msra.mxu0 0.0
    %1902 = vmatprep.subr.mxu0 0.0
    %1903 = vmatpush1.msra.mxu0 0.0
    %1904 = vmatprep.subr.mxu0 0.0
    %1905 = vmatpush1.msra.mxu0 0.0
    %1906 = vmatprep.subr.mxu0 0.0
    %1907 = vmatpush1.msra.mxu0 0.0
    %1908 = vmatprep.subr.mxu0 0.0
    %1909 = vmatpush1.msra.mxu0 0.0
    %1910 = vmatprep.subr.mxu0 0.0
    %1911 = vmatpush1.msra.mxu0 0.0
    %1912 = vmatprep.subr.mxu0 0.0
    %1913 = vmatpush1.msra.mxu0 0.0
    %1914 = vmatprep.subr.mxu0 0.0
    %1915 = vmatpush1.msra.mxu0 0.0
    %1916 = vmatprep.subr.mxu0 0.0
    %1917 = vmatpush1.msra.mxu0 0.0
    %1918 = vmatprep.mubr.f32.mxu0 0.0
    %1919 = vmatmul.mubr.f32.gmra.mrb[0].mxu0 %v1852
    %v1920 = vpop.f32.mrb[0].mxu0
    %v1921 = vadd.f32 0.0, %v1920
    %v1922 = vpop.f32.mrb[0].mxu0
    %1923 = vdwg.mxu0
    %v1924 = vadd.f32 %v1851, %v1921
    %v1925 = vadd.f32 %v1924, %v448
    %v1926 = vmul.f32 %v1925, %v147
    %v1927 = vxor.u32 %v1926, 2147483648
    %v1928 = vmul.f32 %v1927, 1.442695
    %v1929 = vpow.pop %v1928
    %v1930 = vadd.f32 %v1929, 1.0
    %v1931 = vrcp.pop %v1930
    %v1932 = vmul.f32 1.0, %v1931
    %v1933 = vmul.f32 %v1932, %v147
    %v1934 = vadd.f32 %v1933, %v148
    %v1935 = vmul.f32 %v1934, %v1736
    %1937 = vrot.lane.b32.xlu0 %v1934, 64
    %v1938 = vpop.permute.xlu0 %1937
    %v1940 = vmul.f32 %v1934, %v1938
    %1942 = vrot.lane.b32.xlu0 %v1940, 32
    %v1943 = vpop.permute.xlu0 %1942
    %v1945 = vadd.f32 %v1935, %v1943
    %v1946 = vtanh.pop %v1945
    %1948 = vrot.lane.b32.xlu0 %v1946, 64
    %v1949 = vpop.permute.xlu0 %1948
    %v1951 = vmul.f32 %v1934, %v1949
    %1953 = vrot.lane.b32.xlu0 %v1951, 32
    %v1954 = vpop.permute.xlu0 %1953
    %1957 = vrot.lane.b32.xlu0 %v1850, 64
    %v1958 = vpop.permute.xlu0 %1957
    %v1960 = vsel %vm368, %v1954, %v1958
    %v1962 = vsel %vm497, %v1960, 0
    %1964 = vmatprep.subr.mxu0 0.0
    %1965 = vmatpush1.msra.mxu0 %v482
    %1966 = vmatprep.subr.mxu0 0.0
    %1967 = vmatpush1.msra.mxu0 %v483
    %1968 = vmatprep.subr.mxu0 0.0
    %1969 = vmatpush1.msra.mxu0 %v484
    %1970 = vmatprep.subr.mxu0 0.0
    %1971 = vmatpush1.msra.mxu0 %v485
    %1972 = vmatprep.subr.mxu0 0.0
    %1973 = vmatpush1.msra.mxu0 %v486
    %1974 = vmatprep.subr.mxu0 0.0
    %1975 = vmatpush1.msra.mxu0 %v487
    %1976 = vmatprep.subr.mxu0 0.0
    %1977 = vmatpush1.msra.mxu0 %v488
    %1978 = vmatprep.subr.mxu0 0.0
    %1979 = vmatpush1.msra.mxu0 %v489
    %1980 = vmatprep.subr.mxu0 0.0
    %1981 = vmatpush1.msra.mxu0 0.0
    %1982 = vmatprep.subr.mxu0 0.0
    %1983 = vmatpush1.msra.mxu0 0.0
    %1984 = vmatprep.subr.mxu0 0.0
    %1985 = vmatpush1.msra.mxu0 0.0
    %1986 = vmatprep.subr.mxu0 0.0
    %1987 = vmatpush1.msra.mxu0 0.0
    %1988 = vmatprep.subr.mxu0 0.0
    %1989 = vmatpush1.msra.mxu0 0.0
    %1990 = vmatprep.subr.mxu0 0.0
    %1991 = vmatpush1.msra.mxu0 0.0
    %1992 = vmatprep.subr.mxu0 0.0
    %1993 = vmatpush1.msra.mxu0 0.0
    %1994 = vmatprep.subr.mxu0 0.0
    %1995 = vmatpush1.msra.mxu0 0.0
    %1996 = vmatprep.subr.mxu0 0.0
    %1997 = vmatpush1.msra.mxu0 0.0
    %1998 = vmatprep.subr.mxu0 0.0
    %1999 = vmatpush1.msra.mxu0 0.0
    %2000 = vmatprep.subr.mxu0 0.0
    %2001 = vmatpush1.msra.mxu0 0.0
    %2002 = vmatprep.subr.mxu0 0.0
    %2003 = vmatpush1.msra.mxu0 0.0
    %2004 = vmatprep.subr.mxu0 0.0
    %2005 = vmatpush1.msra.mxu0 0.0
    %2006 = vmatprep.subr.mxu0 0.0
    %2007 = vmatpush1.msra.mxu0 0.0
    %2008 = vmatprep.subr.mxu0 0.0
    %2009 = vmatpush1.msra.mxu0 0.0
    %2010 = vmatprep.subr.mxu0 0.0
    %2011 = vmatpush1.msra.mxu0 0.0
    %2012 = vmatprep.subr.mxu0 0.0
    %2013 = vmatpush1.msra.mxu0 0.0
    %2014 = vmatprep.subr.mxu0 0.0
    %2015 = vmatpush1.msra.mxu0 0.0
    %2016 = vmatprep.subr.mxu0 0.0
    %2017 = vmatpush1.msra.mxu0 0.0
    %2018 = vmatprep.subr.mxu0 0.0
    %2019 = vmatpush1.msra.mxu0 0.0
    %2020 = vmatprep.subr.mxu0 0.0
    %2021 = vmatpush1.msra.mxu0 0.0
    %2022 = vmatprep.subr.mxu0 0.0
    %2023 = vmatpush1.msra.mxu0 0.0
    %2024 = vmatprep.subr.mxu0 0.0
    %2025 = vmatpush1.msra.mxu0 0.0
    %2026 = vmatprep.subr.mxu0 0.0
    %2027 = vmatpush1.msra.mxu0 0.0
    %2028 = vmatprep.mubr.f32.mxu0 0.0
    %2029 = vmatmul.mubr.f32.gmra.mrb[0].mxu0 %v1962
    %v2030 = vpop.f32.mrb[0].mxu0
    %v2031 = vadd.f32 %v495, %v2030
    %v2032 = vpop.f32.mrb[0].mxu0
    %2033 = vdwg.mxu0
    %v2034 = vmul.f32 %v2031, %v147
    %v2035 = vxor.u32 %v2034, 2147483648
    %v2036 = vmul.f32 %v2035, 1.442695
    %v2037 = vpow.pop %v2036
    %v2038 = vadd.f32 %v2037, 1.0
    %v2039 = vrcp.pop %v2038
    %v2040 = vmul.f32 1.0, %v2039
    %v2041 = vmul.f32 %v2040, %v147
    %v2042 = vadd.f32 %v2041, %v148
    %v2043 = vmul.f32 %v2042, %v1844
    %2045 = vrot.lane.b32.xlu0 %v2042, 64
    %v2046 = vpop.permute.xlu0 %2045
    %v2048 = vmul.f32 %v2042, %v2046
    %2050 = vrot.lane.b32.xlu0 %v2048, 32
    %v2051 = vpop.permute.xlu0 %2050
    %v2053 = vadd.f32 %v2043, %v2051
    %v2054 = vtanh.pop %v2053
    %2056 = vrot.lane.b32.xlu0 %v2054, 64
    %v2057 = vpop.permute.xlu0 %2056
    %v2059 = vmul.f32 %v2042, %v2057
    %v2060 = vld [vmem:[%s1] sm:$0x3]
    %2061 = vst [vmem:[%s14] sm:$0x3] %v2060
    %v2062 = vld [vmem:[#allocation3] sm:$0x3]
    %v2063 = vld [vmem:[#allocation11] sm:$0xff]
    %v2064 = vld [vmem:[#allocation11 + $0x8] sm:$0xff]
    %v2065 = vld [vmem:[#allocation11 + $0x10] sm:$0xff]
    %v2066 = vld [vmem:[#allocation11 + $0x18] sm:$0xff]
    %v2067 = vsel %vm368, %v1954, 0
    %2069 = vmatprep.subr.mxu0 0.0
    %2070 = vmatpush1.msra.mxu0 %v2063
    %2071 = vmatprep.subr.mxu0 0.0
    %2072 = vmatpush1.msra.mxu0 %v2064
    %2073 = vmatprep.subr.mxu0 0.0
    %2074 = vmatpush1.msra.mxu0 %v2065
    %2075 = vmatprep.subr.mxu0 0.0
    %2076 = vmatpush1.msra.mxu0 %v2066
    %2077 = vmatprep.subr.mxu0 0.0
    %2078 = vmatpush1.msra.mxu0 0.0
    %2079 = vmatprep.subr.mxu0 0.0
    %2080 = vmatpush1.msra.mxu0 0.0
    %2081 = vmatprep.subr.mxu0 0.0
    %2082 = vmatpush1.msra.mxu0 0.0
    %2083 = vmatprep.subr.mxu0 0.0
    %2084 = vmatpush1.msra.mxu0 0.0
    %2085 = vmatprep.subr.mxu0 0.0
    %2086 = vmatpush1.msra.mxu0 0.0
    %2087 = vmatprep.subr.mxu0 0.0
    %2088 = vmatpush1.msra.mxu0 0.0
    %2089 = vmatprep.subr.mxu0 0.0
    %2090 = vmatpush1.msra.mxu0 0.0
    %2091 = vmatprep.subr.mxu0 0.0
    %2092 = vmatpush1.msra.mxu0 0.0
    %2093 = vmatprep.subr.mxu0 0.0
    %2094 = vmatpush1.msra.mxu0 0.0
    %2095 = vmatprep.subr.mxu0 0.0
    %2096 = vmatpush1.msra.mxu0 0.0
    %2097 = vmatprep.subr.mxu0 0.0
    %2098 = vmatpush1.msra.mxu0 0.0
    %2099 = vmatprep.subr.mxu0 0.0
    %2100 = vmatpush1.msra.mxu0 0.0
    %2101 = vmatprep.subr.mxu0 0.0
    %2102 = vmatpush1.msra.mxu0 0.0
    %2103 = vmatprep.subr.mxu0 0.0
    %2104 = vmatpush1.msra.mxu0 0.0
    %2105 = vmatprep.subr.mxu0 0.0
    %2106 = vmatpush1.msra.mxu0 0.0
    %2107 = vmatprep.subr.mxu0 0.0
    %2108 = vmatpush1.msra.mxu0 0.0
    %2109 = vmatprep.subr.mxu0 0.0
    %2110 = vmatpush1.msra.mxu0 0.0
    %2111 = vmatprep.subr.mxu0 0.0
    %2112 = vmatpush1.msra.mxu0 0.0
    %2113 = vmatprep.subr.mxu0 0.0
    %2114 = vmatpush1.msra.mxu0 0.0
    %2115 = vmatprep.subr.mxu0 0.0
    %2116 = vmatpush1.msra.mxu0 0.0
    %2117 = vmatprep.subr.mxu0 0.0
    %2118 = vmatpush1.msra.mxu0 0.0
    %2119 = vmatprep.subr.mxu0 0.0
    %2120 = vmatpush1.msra.mxu0 0.0
    %2121 = vmatprep.subr.mxu0 0.0
    %2122 = vmatpush1.msra.mxu0 0.0
    %2123 = vmatprep.subr.mxu0 0.0
    %2124 = vmatpush1.msra.mxu0 0.0
    %2125 = vmatprep.subr.mxu0 0.0
    %2126 = vmatpush1.msra.mxu0 0.0
    %2127 = vmatprep.subr.mxu0 0.0
    %2128 = vmatpush1.msra.mxu0 0.0
    %2129 = vmatprep.subr.mxu0 0.0
    %2130 = vmatpush1.msra.mxu0 0.0
    %2131 = vmatprep.subr.mxu0 0.0
    %2132 = vmatpush1.msra.mxu0 0.0
    %2133 = vmatprep.mubr.f32.mxu0 0.0
    %2134 = vmatmul.mubr.f32.gmra.mrb[0].mxu0 %v2067
    %v2135 = vpop.f32.mrb[0].mxu0
    %v2136 = vadd.f32 0.0, %v2135
    %v2137 = vpop.f32.mrb[0].mxu0
    %2138 = vdwg.mxu0
    %v2139 = vadd.f32 %v2062, %v2136
    %v2140 = vld [vmem:[%s9] sm:$0x1]
    %v2142 = vlaneseq
    %v2143 = vshrl.u32 %v2142, 7
    %v2144 = vsub.s32 0, %v2143
    %v2145 = vrot.slane %v2140, %v2144
    %v2147 = vadd.f32 %v2139, %v2145
    %v2148 = vmul.f32 %v2147, %v147
    %v2149 = vxor.u32 %v2148, 2147483648
    %v2150 = vmul.f32 %v2149, 1.442695
    %v2151 = vpow.pop %v2150
    %v2152 = vadd.f32 %v2151, 1.0
    %v2153 = vrcp.pop %v2152
    %v2154 = vmul.f32 1.0, %v2153
    %v2155 = vmul.f32 %v2154, %v147
    %v2156 = vadd.f32 %v2155, %v148
    %v2157 = vmul.f32 %v2156, %v1945
    %2159 = vrot.lane.b32.xlu0 %v2156, 64
    %v2160 = vpop.permute.xlu0 %2159
    %v2162 = vmul.f32 %v2156, %v2160
    %2164 = vrot.lane.b32.xlu0 %v2162, 32
    %v2165 = vpop.permute.xlu0 %2164
    %v2167 = vadd.f32 %v2157, %v2165
    %v2168 = vtanh.pop %v2167
    %2170 = vrot.lane.b32.xlu0 %v2168, 64
    %v2171 = vpop.permute.xlu0 %2170
    %v2173 = vmul.f32 %v2156, %v2171
    %2175 = vrot.lane.b32.xlu0 %v2173, 32
    %v2176 = vpop.permute.xlu0 %2175
    %2179 = vrot.lane.b32.xlu0 %v2059, 64
    %v2180 = vpop.permute.xlu0 %2179
    %v2182 = vsel %vm368, %v2176, %v2180
    %v2183 = vld [vmem:[#allocation13] sm:$0xff]
    %v2184 = vld [vmem:[#allocation13 + $0x8] sm:$0xff]
    %v2185 = vld [vmem:[#allocation13 + $0x10] sm:$0xff]
    %v2186 = vld [vmem:[#allocation13 + $0x18] sm:$0xff]
    %v2187 = vld [vmem:[#allocation13 + $0x20] sm:$0xff]
    %v2188 = vld [vmem:[#allocation13 + $0x28] sm:$0xff]
    %v2189 = vld [vmem:[#allocation13 + $0x30] sm:$0xff]
    %v2190 = vld [vmem:[#allocation13 + $0x38] sm:$0xff]
    %v2191 = vld [vmem:[%s11] sm:$0x1]
    %v2193 = vlaneseq
    %v2194 = vshrl.u32 %v2193, 7
    %v2195 = vsub.s32 0, %v2194
    %v2196 = vrot.slane %v2191, %v2195
    %v2199 = vsel %vm497, %v2182, 0
    %2201 = vmatprep.subr.mxu0 0.0
    %2202 = vmatpush1.msra.mxu0 %v2183
    %2203 = vmatprep.subr.mxu0 0.0
    %2204 = vmatpush1.msra.mxu0 %v2184
    %2205 = vmatprep.subr.mxu0 0.0
    %2206 = vmatpush1.msra.mxu0 %v2185
    %2207 = vmatprep.subr.mxu0 0.0
    %2208 = vmatpush1.msra.mxu0 %v2186
    %2209 = vmatprep.subr.mxu0 0.0
    %2210 = vmatpush1.msra.mxu0 %v2187
    %2211 = vmatprep.subr.mxu0 0.0
    %2212 = vmatpush1.msra.mxu0 %v2188
    %2213 = vmatprep.subr.mxu0 0.0
    %2214 = vmatpush1.msra.mxu0 %v2189
    %2215 = vmatprep.subr.mxu0 0.0
    %2216 = vmatpush1.msra.mxu0 %v2190
    %2217 = vmatprep.subr.mxu0 0.0
    %2218 = vmatpush1.msra.mxu0 0.0
    %2219 = vmatprep.subr.mxu0 0.0
    %2220 = vmatpush1.msra.mxu0 0.0
    %2221 = vmatprep.subr.mxu0 0.0
    %2222 = vmatpush1.msra.mxu0 0.0
    %2223 = vmatprep.subr.mxu0 0.0
    %2224 = vmatpush1.msra.mxu0 0.0
    %2225 = vmatprep.subr.mxu0 0.0
    %2226 = vmatpush1.msra.mxu0 0.0
    %2227 = vmatprep.subr.mxu0 0.0
    %2228 = vmatpush1.msra.mxu0 0.0
    %2229 = vmatprep.subr.mxu0 0.0
    %2230 = vmatpush1.msra.mxu0 0.0
    %2231 = vmatprep.subr.mxu0 0.0
    %2232 = vmatpush1.msra.mxu0 0.0
    %2233 = vmatprep.subr.mxu0 0.0
    %2234 = vmatpush1.msra.mxu0 0.0
    %2235 = vmatprep.subr.mxu0 0.0
    %2236 = vmatpush1.msra.mxu0 0.0
    %2237 = vmatprep.subr.mxu0 0.0
    %2238 = vmatpush1.msra.mxu0 0.0
    %2239 = vmatprep.subr.mxu0 0.0
    %2240 = vmatpush1.msra.mxu0 0.0
    %2241 = vmatprep.subr.mxu0 0.0
    %2242 = vmatpush1.msra.mxu0 0.0
    %2243 = vmatprep.subr.mxu0 0.0
    %2244 = vmatpush1.msra.mxu0 0.0
    %2245 = vmatprep.subr.mxu0 0.0
    %2246 = vmatpush1.msra.mxu0 0.0
    %2247 = vmatprep.subr.mxu0 0.0
    %2248 = vmatpush1.msra.mxu0 0.0
    %2249 = vmatprep.subr.mxu0 0.0
    %2250 = vmatpush1.msra.mxu0 0.0
    %2251 = vmatprep.subr.mxu0 0.0
    %2252 = vmatpush1.msra.mxu0 0.0
    %2253 = vmatprep.subr.mxu0 0.0
    %2254 = vmatpush1.msra.mxu0 0.0
    %2255 = vmatprep.subr.mxu0 0.0
    %2256 = vmatpush1.msra.mxu0 0.0
    %2257 = vmatprep.subr.mxu0 0.0
    %2258 = vmatpush1.msra.mxu0 0.0
    %2259 = vmatprep.subr.mxu0 0.0
    %2260 = vmatpush1.msra.mxu0 0.0
    %2261 = vmatprep.subr.mxu0 0.0
    %2262 = vmatpush1.msra.mxu0 0.0
    %2263 = vmatprep.subr.mxu0 0.0
    %2264 = vmatpush1.msra.mxu0 0.0
    %2265 = vmatprep.mubr.f32.mxu0 0.0
    %2266 = vmatmul.mubr.f32.gmra.mrb[0].mxu0 %v2199
    %v2267 = vpop.f32.mrb[0].mxu0
    %v2268 = vadd.f32 %v2196, %v2267
    %v2269 = vpop.f32.mrb[0].mxu0
    %2270 = vdwg.mxu0
    %v2271 = vmul.f32 %v2268, %v147
    %v2272 = vxor.u32 %v2271, 2147483648
    %v2273 = vmul.f32 %v2272, 1.442695
    %v2274 = vpow.pop %v2273
    %v2275 = vadd.f32 %v2274, 1.0
    %v2276 = vrcp.pop %v2275
    %v2277 = vmul.f32 1.0, %v2276
    %v2278 = vmul.f32 %v2277, %v147
    %v2279 = vadd.f32 %v2278, %v148
    %v2280 = vmul.f32 %v2279, %v2053
    %2282 = vrot.lane.b32.xlu0 %v2279, 64
    %v2283 = vpop.permute.xlu0 %2282
    %v2285 = vmul.f32 %v2279, %v2283
    %2287 = vrot.lane.b32.xlu0 %v2285, 32
    %v2288 = vpop.permute.xlu0 %2287
    %v2290 = vadd.f32 %v2280, %v2288
    %v2291 = vtanh.pop %v2290
    %2293 = vrot.lane.b32.xlu0 %v2291, 64
    %v2294 = vpop.permute.xlu0 %2293
    %v2296 = vmul.f32 %v2279, %v2294
    %v2297 = vld [vmem:[#allocation14] sm:$0xff]
    %v2298 = vld [vmem:[#allocation14 + $0x8] sm:$0xff]
    %v2299 = vld [vmem:[#allocation14 + $0x10] sm:$0xff]
    %v2300 = vld [vmem:[#allocation14 + $0x18] sm:$0xff]
    %v2301 = vld [vmem:[%s13] sm:$0x1]
    %v2303 = vlaneseq
    %v2304 = vshrl.u32 %v2303, 7
    %v2305 = vsub.s32 0, %v2304
    %v2306 = vrot.slane %v2301, %v2305
    %2309 = vrot.lane.b32.xlu0 %v2296, 32
    %v2310 = vpop.permute.xlu0 %2309
    %v2311 = vsel %vm368, %v2310, 0
    %2313 = vmatprep.subr.mxu0 0.0
    %2314 = vmatpush1.msra.mxu0 %v2297
    %2315 = vmatprep.subr.mxu0 0.0
    %2316 = vmatpush1.msra.mxu0 %v2298
    %2317 = vmatprep.subr.mxu0 0.0
    %2318 = vmatpush1.msra.mxu0 %v2299
    %2319 = vmatprep.subr.mxu0 0.0
    %2320 = vmatpush1.msra.mxu0 %v2300
    %2321 = vmatprep.subr.mxu0 0.0
    %2322 = vmatpush1.msra.mxu0 0.0
    %2323 = vmatprep.subr.mxu0 0.0
    %2324 = vmatpush1.msra.mxu0 0.0
    %2325 = vmatprep.subr.mxu0 0.0
    %2326 = vmatpush1.msra.mxu0 0.0
    %2327 = vmatprep.subr.mxu0 0.0
    %2328 = vmatpush1.msra.mxu0 0.0
    %2329 = vmatprep.subr.mxu0 0.0
    %2330 = vmatpush1.msra.mxu0 0.0
    %2331 = vmatprep.subr.mxu0 0.0
    %2332 = vmatpush1.msra.mxu0 0.0
    %2333 = vmatprep.subr.mxu0 0.0
    %2334 = vmatpush1.msra.mxu0 0.0
    %2335 = vmatprep.subr.mxu0 0.0
    %2336 = vmatpush1.msra.mxu0 0.0
    %2337 = vmatprep.subr.mxu0 0.0
    %2338 = vmatpush1.msra.mxu0 0.0
    %2339 = vmatprep.subr.mxu0 0.0
    %2340 = vmatpush1.msra.mxu0 0.0
    %2341 = vmatprep.subr.mxu0 0.0
    %2342 = vmatpush1.msra.mxu0 0.0
    %2343 = vmatprep.subr.mxu0 0.0
    %2344 = vmatpush1.msra.mxu0 0.0
    %2345 = vmatprep.subr.mxu0 0.0
    %2346 = vmatpush1.msra.mxu0 0.0
    %2347 = vmatprep.subr.mxu0 0.0
    %2348 = vmatpush1.msra.mxu0 0.0
    %2349 = vmatprep.subr.mxu0 0.0
    %2350 = vmatpush1.msra.mxu0 0.0
    %2351 = vmatprep.subr.mxu0 0.0
    %2352 = vmatpush1.msra.mxu0 0.0
    %2353 = vmatprep.subr.mxu0 0.0
    %2354 = vmatpush1.msra.mxu0 0.0
    %2355 = vmatprep.subr.mxu0 0.0
    %2356 = vmatpush1.msra.mxu0 0.0
    %2357 = vmatprep.subr.mxu0 0.0
    %2358 = vmatpush1.msra.mxu0 0.0
    %2359 = vmatprep.subr.mxu0 0.0
    %2360 = vmatpush1.msra.mxu0 0.0
    %2361 = vmatprep.subr.mxu0 0.0
    %2362 = vmatpush1.msra.mxu0 0.0
    %2363 = vmatprep.subr.mxu0 0.0
    %2364 = vmatpush1.msra.mxu0 0.0
    %2365 = vmatprep.subr.mxu0 0.0
    %2366 = vmatpush1.msra.mxu0 0.0
    %2367 = vmatprep.subr.mxu0 0.0
    %2368 = vmatpush1.msra.mxu0 0.0
    %2369 = vmatprep.subr.mxu0 0.0
    %2370 = vmatpush1.msra.mxu0 0.0
    %2371 = vmatprep.subr.mxu0 0.0
    %2372 = vmatpush1.msra.mxu0 0.0
    %2373 = vmatprep.subr.mxu0 0.0
    %2374 = vmatpush1.msra.mxu0 0.0
    %2375 = vmatprep.subr.mxu0 0.0
    %2376 = vmatpush1.msra.mxu0 0.0
    %2377 = vmatprep.mubr.f32.mxu0 0.0
    %2378 = vmatmul.mubr.f32.gmra.mrb[0].mxu0 %v2311
    %v2379 = vpop.f32.mrb[0].mxu0
    %v2380 = vadd.f32 %v2306, %v2379
    %v2381 = vpop.f32.mrb[0].mxu0
    %2382 = vdwg.mxu0
    %s2383 = scalar_lea.vmem %s14, 2
    %2384 = vst [vmem:[%s2383] sm:$0x3] %v2380
    %v2385 = vld [vmem:[%s7] sm:$0xff]
    %v2386 = vld [vmem:[%s7 + $0x8] sm:$0xff]
    %v2387 = vld [vmem:[%s7 + $0x10] sm:$0xff]
    %v2388 = vld [vmem:[%s7 + $0x18] sm:$0xff]
    %v2389 = vld [vmem:[%s7 + $0x20] sm:$0xff]
    %v2390 = vld [vmem:[%s7 + $0x28] sm:$0xff]
    %v2391 = vld [vmem:[%s7 + $0x30] sm:$0xff]
    %v2392 = vld [vmem:[%s7 + $0x38] sm:$0xff]
    %v2393 = vld [vmem:[%s7 + $0x40] sm:$0xff]
    %v2394 = vld [vmem:[%s7 + $0x48] sm:$0xff]
    %v2395 = vld [vmem:[%s7 + $0x50] sm:$0xff]
    %v2396 = vld [vmem:[%s7 + $0x58] sm:$0xff]
    %v2397 = vld [vmem:[%s7 + $0x60] sm:$0xff]
    %v2398 = vld [vmem:[%s7 + $0x68] sm:$0xff]
    %v2399 = vld [vmem:[%s7 + $0x70] sm:$0xff]
    %v2400 = vld [vmem:[%s7 + $0x78] sm:$0xff]
    %2401 = vmatprep.subr.mxu0 0.0
    %2402 = vmatpush1.msra.mxu0 %v2385
    %2403 = vmatprep.subr.mxu0 0.0
    %2404 = vmatpush1.msra.mxu0 %v2386
    %2405 = vmatprep.subr.mxu0 0.0
    %2406 = vmatpush1.msra.mxu0 %v2387
    %2407 = vmatprep.subr.mxu0 0.0
    %2408 = vmatpush1.msra.mxu0 %v2388
    %2409 = vmatprep.subr.mxu0 0.0
    %2410 = vmatpush1.msra.mxu0 %v2389
    %2411 = vmatprep.subr.mxu0 0.0
    %2412 = vmatpush1.msra.mxu0 %v2390
    %2413 = vmatprep.subr.mxu0 0.0
    %2414 = vmatpush1.msra.mxu0 %v2391
    %2415 = vmatprep.subr.mxu0 0.0
    %2416 = vmatpush1.msra.mxu0 %v2392
    %2417 = vmatprep.subr.mxu0 0.0
    %2418 = vmatpush1.msra.mxu0 %v2393
    %2419 = vmatprep.subr.mxu0 0.0
    %2420 = vmatpush1.msra.mxu0 %v2394
    %2421 = vmatprep.subr.mxu0 0.0
    %2422 = vmatpush1.msra.mxu0 %v2395
    %2423 = vmatprep.subr.mxu0 0.0
    %2424 = vmatpush1.msra.mxu0 %v2396
    %2425 = vmatprep.subr.mxu0 0.0
    %2426 = vmatpush1.msra.mxu0 %v2397
    %2427 = vmatprep.subr.mxu0 0.0
    %2428 = vmatpush1.msra.mxu0 %v2398
    %2429 = vmatprep.subr.mxu0 0.0
    %2430 = vmatpush1.msra.mxu0 %v2399
    %2431 = vmatprep.subr.mxu0 0.0
    %2432 = vmatpush1.msra.mxu0 %v2400
    %2433 = vmatprep.subr.mxu0 0.0
    %2434 = vmatpush1.msra.mxu0 0.0
    %2435 = vmatprep.subr.mxu0 0.0
    %2436 = vmatpush1.msra.mxu0 0.0
    %2437 = vmatprep.subr.mxu0 0.0
    %2438 = vmatpush1.msra.mxu0 0.0
    %2439 = vmatprep.subr.mxu0 0.0
    %2440 = vmatpush1.msra.mxu0 0.0
    %2441 = vmatprep.subr.mxu0 0.0
    %2442 = vmatpush1.msra.mxu0 0.0
    %2443 = vmatprep.subr.mxu0 0.0
    %2444 = vmatpush1.msra.mxu0 0.0
    %2445 = vmatprep.subr.mxu0 0.0
    %2446 = vmatpush1.msra.mxu0 0.0
    %2447 = vmatprep.subr.mxu0 0.0
    %2448 = vmatpush1.msra.mxu0 0.0
    %2449 = vmatprep.subr.mxu0 0.0
    %2450 = vmatpush1.msra.mxu0 0.0
    %2451 = vmatprep.subr.mxu0 0.0
    %2452 = vmatpush1.msra.mxu0 0.0
    %2453 = vmatprep.subr.mxu0 0.0
    %2454 = vmatpush1.msra.mxu0 0.0
    %2455 = vmatprep.subr.mxu0 0.0
    %2456 = vmatpush1.msra.mxu0 0.0
    %2457 = vmatprep.subr.mxu0 0.0
    %2458 = vmatpush1.msra.mxu0 0.0
    %2459 = vmatprep.subr.mxu0 0.0
    %2460 = vmatpush1.msra.mxu0 0.0
    %2461 = vmatprep.subr.mxu0 0.0
    %2462 = vmatpush1.msra.mxu0 0.0
    %2463 = vmatprep.subr.mxu0 0.0
    %2464 = vmatpush1.msra.mxu0 0.0
    %2465 = vmatprep.mubr.f32.mxu0 0.0
    %2466 = vmatmul.mubr.f32.gmra.mrb[0].mxu0 %v2380
    %v2467 = vpop.f32.mrb[0].mxu0
    %v2468 = vadd.f32 0.0, %v2467
    %v2469 = vpop.f32.mrb[0].mxu0
    %2470 = vdwg.mxu0
    %s2471 = sld [smem:[#allocation4 + $0x1]]
    %p2472 = scmp.gt.s32.totalorder %s2471, 0
    %v2473 = vld [vmem:[%s337] sm:$0x3]
    %s2474 = scalar_select %p2472, 1, 0
    %v2475 = vstv %s2474
    %vm2476 = vcmp.eq.s32.totalorder %v2475, 1
    %v2477 = vsel %vm2476, %v2473, %v2468
    %v2478 = vld [vmem:[#allocation11] sm:$0xff]
    %v2479 = vld [vmem:[#allocation11 + $0x8] sm:$0xff]
    %v2480 = vld [vmem:[#allocation11 + $0x10] sm:$0xff]
    %v2481 = vld [vmem:[#allocation11 + $0x18] sm:$0xff]
    %v2482 = vsel %vm368, %v2176, 0
    %2484 = vmatprep.subr.mxu0 0.0
    %2485 = vmatpush1.msra.mxu0 %v2478
    %2486 = vmatprep.subr.mxu0 0.0
    %2487 = vmatpush1.msra.mxu0 %v2479
    %2488 = vmatprep.subr.mxu0 0.0
    %2489 = vmatpush1.msra.mxu0 %v2480
    %2490 = vmatprep.subr.mxu0 0.0
    %2491 = vmatpush1.msra.mxu0 %v2481
    %2492 = vmatprep.subr.mxu0 0.0
    %2493 = vmatpush1.msra.mxu0 0.0
    %2494 = vmatprep.subr.mxu0 0.0
    %2495 = vmatpush1.msra.mxu0 0.0
    %2496 = vmatprep.subr.mxu0 0.0
    %2497 = vmatpush1.msra.mxu0 0.0
    %2498 = vmatprep.subr.mxu0 0.0
    %2499 = vmatpush1.msra.mxu0 0.0
    %2500 = vmatprep.subr.mxu0 0.0
    %2501 = vmatpush1.msra.mxu0 0.0
    %2502 = vmatprep.subr.mxu0 0.0
    %2503 = vmatpush1.msra.mxu0 0.0
    %2504 = vmatprep.subr.mxu0 0.0
    %2505 = vmatpush1.msra.mxu0 0.0
    %2506 = vmatprep.subr.mxu0 0.0
    %2507 = vmatpush1.msra.mxu0 0.0
    %2508 = vmatprep.subr.mxu0 0.0
    %2509 = vmatpush1.msra.mxu0 0.0
    %2510 = vmatprep.subr.mxu0 0.0
    %2511 = vmatpush1.msra.mxu0 0.0
    %2512 = vmatprep.subr.mxu0 0.0
    %2513 = vmatpush1.msra.mxu0 0.0
    %2514 = vmatprep.subr.mxu0 0.0
    %2515 = vmatpush1.msra.mxu0 0.0
    %2516 = vmatprep.subr.mxu0 0.0
    %2517 = vmatpush1.msra.mxu0 0.0
    %2518 = vmatprep.subr.mxu0 0.0
    %2519 = vmatpush1.msra.mxu0 0.0
    %2520 = vmatprep.subr.mxu0 0.0
    %2521 = vmatpush1.msra.mxu0 0.0
    %2522 = vmatprep.subr.mxu0 0.0
    %2523 = vmatpush1.msra.mxu0 0.0
    %2524 = vmatprep.subr.mxu0 0.0
    %2525 = vmatpush1.msra.mxu0 0.0
    %2526 = vmatprep.subr.mxu0 0.0
    %2527 = vmatpush1.msra.mxu0 0.0
    %2528 = vmatprep.subr.mxu0 0.0
    %2529 = vmatpush1.msra.mxu0 0.0
    %2530 = vmatprep.subr.mxu0 0.0
    %2531 = vmatpush1.msra.mxu0 0.0
    %2532 = vmatprep.subr.mxu0 0.0
    %2533 = vmatpush1.msra.mxu0 0.0
    %2534 = vmatprep.subr.mxu0 0.0
    %2535 = vmatpush1.msra.mxu0 0.0
    %2536 = vmatprep.subr.mxu0 0.0
    %2537 = vmatpush1.msra.mxu0 0.0
    %2538 = vmatprep.subr.mxu0 0.0
    %2539 = vmatpush1.msra.mxu0 0.0
    %2540 = vmatprep.subr.mxu0 0.0
    %2541 = vmatpush1.msra.mxu0 0.0
    %2542 = vmatprep.subr.mxu0 0.0
    %2543 = vmatpush1.msra.mxu0 0.0
    %2544 = vmatprep.subr.mxu0 0.0
    %2545 = vmatpush1.msra.mxu0 0.0
    %2546 = vmatprep.subr.mxu0 0.0
    %2547 = vmatpush1.msra.mxu0 0.0
    %2548 = vmatprep.mubr.f32.mxu0 0.0
    %2549 = vmatmul.mubr.f32.gmra.mrb[0].mxu0 %v2482
    %v2550 = vpop.f32.mrb[0].mxu0
    %v2551 = vadd.f32 0.0, %v2550
    %v2552 = vpop.f32.mrb[0].mxu0
    %2553 = vdwg.mxu0
    %v2554 = vadd.f32 %v2477, %v2551
    %v2555 = vld [vmem:[%s9] sm:$0x1]
    %v2557 = vlaneseq
    %v2558 = vshrl.u32 %v2557, 7
    %v2559 = vsub.s32 0, %v2558
    %v2560 = vrot.slane %v2555, %v2559
    %v2562 = vadd.f32 %v2554, %v2560
    %v2563 = vmul.f32 %v2562, %v147
    %v2564 = vxor.u32 %v2563, 2147483648
    %v2565 = vmul.f32 %v2564, 1.442695
    %v2566 = vpow.pop %v2565
    %v2567 = vadd.f32 %v2566, 1.0
    %v2568 = vrcp.pop %v2567
    %v2569 = vmul.f32 1.0, %v2568
    %v2570 = vmul.f32 %v2569, %v147
    %v2571 = vadd.f32 %v2570, %v148
    %v2572 = vmul.f32 %v2571, %v2167
    %2574 = vrot.lane.b32.xlu0 %v2571, 64
    %v2575 = vpop.permute.xlu0 %2574
    %v2577 = vmul.f32 %v2571, %v2575
    %2579 = vrot.lane.b32.xlu0 %v2577, 32
    %v2580 = vpop.permute.xlu0 %2579
    %v2582 = vadd.f32 %v2572, %v2580
    %v2583 = vtanh.pop %v2582
    %2585 = vrot.lane.b32.xlu0 %v2583, 64
    %v2586 = vpop.permute.xlu0 %2585
    %v2588 = vmul.f32 %v2571, %v2586
    %2590 = vrot.lane.b32.xlu0 %v2588, 32
    %v2591 = vpop.permute.xlu0 %2590
    %2593 = vrot.lane.b32.xlu0 %v2296, 64
    %v2594 = vpop.permute.xlu0 %2593
    %v2596 = vsel %vm368, %v2591, %v2594
    %v2597 = vld [vmem:[#allocation13] sm:$0xff]
    %v2598 = vld [vmem:[#allocation13 + $0x8] sm:$0xff]
    %v2599 = vld [vmem:[#allocation13 + $0x10] sm:$0xff]
    %v2600 = vld [vmem:[#allocation13 + $0x18] sm:$0xff]
    %v2601 = vld [vmem:[#allocation13 + $0x20] sm:$0xff]
    %v2602 = vld [vmem:[#allocation13 + $0x28] sm:$0xff]
    %v2603 = vld [vmem:[#allocation13 + $0x30] sm:$0xff]
    %v2604 = vld [vmem:[#allocation13 + $0x38] sm:$0xff]
    %v2605 = vld [vmem:[%s11] sm:$0x1]
    %v2607 = vlaneseq
    %v2608 = vshrl.u32 %v2607, 7
    %v2609 = vsub.s32 0, %v2608
    %v2610 = vrot.slane %v2605, %v2609
    %v2613 = vsel %vm497, %v2596, 0
    %2615 = vmatprep.subr.mxu0 0.0
    %2616 = vmatpush1.msra.mxu0 %v2597
    %2617 = vmatprep.subr.mxu0 0.0
    %2618 = vmatpush1.msra.mxu0 %v2598
    %2619 = vmatprep.subr.mxu0 0.0
    %2620 = vmatpush1.msra.mxu0 %v2599
    %2621 = vmatprep.subr.mxu0 0.0
    %2622 = vmatpush1.msra.mxu0 %v2600
    %2623 = vmatprep.subr.mxu0 0.0
    %2624 = vmatpush1.msra.mxu0 %v2601
    %2625 = vmatprep.subr.mxu0 0.0
    %2626 = vmatpush1.msra.mxu0 %v2602
    %2627 = vmatprep.subr.mxu0 0.0
    %2628 = vmatpush1.msra.mxu0 %v2603
    %2629 = vmatprep.subr.mxu0 0.0
    %2630 = vmatpush1.msra.mxu0 %v2604
    %2631 = vmatprep.subr.mxu0 0.0
    %2632 = vmatpush1.msra.mxu0 0.0
    %2633 = vmatprep.subr.mxu0 0.0
    %2634 = vmatpush1.msra.mxu0 0.0
    %2635 = vmatprep.subr.mxu0 0.0
    %2636 = vmatpush1.msra.mxu0 0.0
    %2637 = vmatprep.subr.mxu0 0.0
    %2638 = vmatpush1.msra.mxu0 0.0
    %2639 = vmatprep.subr.mxu0 0.0
    %2640 = vmatpush1.msra.mxu0 0.0
    %2641 = vmatprep.subr.mxu0 0.0
    %2642 = vmatpush1.msra.mxu0 0.0
    %2643 = vmatprep.subr.mxu0 0.0
    %2644 = vmatpush1.msra.mxu0 0.0
    %2645 = vmatprep.subr.mxu0 0.0
    %2646 = vmatpush1.msra.mxu0 0.0
    %2647 = vmatprep.subr.mxu0 0.0
    %2648 = vmatpush1.msra.mxu0 0.0
    %2649 = vmatprep.subr.mxu0 0.0
    %2650 = vmatpush1.msra.mxu0 0.0
    %2651 = vmatprep.subr.mxu0 0.0
    %2652 = vmatpush1.msra.mxu0 0.0
    %2653 = vmatprep.subr.mxu0 0.0
    %2654 = vmatpush1.msra.mxu0 0.0
    %2655 = vmatprep.subr.mxu0 0.0
    %2656 = vmatpush1.msra.mxu0 0.0
    %2657 = vmatprep.subr.mxu0 0.0
    %2658 = vmatpush1.msra.mxu0 0.0
    %2659 = vmatprep.subr.mxu0 0.0
    %2660 = vmatpush1.msra.mxu0 0.0
    %2661 = vmatprep.subr.mxu0 0.0
    %2662 = vmatpush1.msra.mxu0 0.0
    %2663 = vmatprep.subr.mxu0 0.0
    %2664 = vmatpush1.msra.mxu0 0.0
    %2665 = vmatprep.subr.mxu0 0.0
    %2666 = vmatpush1.msra.mxu0 0.0
    %2667 = vmatprep.subr.mxu0 0.0
    %2668 = vmatpush1.msra.mxu0 0.0
    %2669 = vmatprep.subr.mxu0 0.0
    %2670 = vmatpush1.msra.mxu0 0.0
    %2671 = vmatprep.subr.mxu0 0.0
    %2672 = vmatpush1.msra.mxu0 0.0
    %2673 = vmatprep.subr.mxu0 0.0
    %2674 = vmatpush1.msra.mxu0 0.0
    %2675 = vmatprep.subr.mxu0 0.0
    %2676 = vmatpush1.msra.mxu0 0.0
    %2677 = vmatprep.subr.mxu0 0.0
    %2678 = vmatpush1.msra.mxu0 0.0
    %2679 = vmatprep.mubr.f32.mxu0 0.0
    %2680 = vmatmul.mubr.f32.gmra.mrb[0].mxu0 %v2613
    %v2681 = vpop.f32.mrb[0].mxu0
    %v2682 = vadd.f32 %v2610, %v2681
    %v2683 = vpop.f32.mrb[0].mxu0
    %2684 = vdwg.mxu0
    %v2685 = vmul.f32 %v2682, %v147
    %v2686 = vxor.u32 %v2685, 2147483648
    %v2687 = vmul.f32 %v2686, 1.442695
    %v2688 = vpow.pop %v2687
    %v2689 = vadd.f32 %v2688, 1.0
    %v2690 = vrcp.pop %v2689
    %v2691 = vmul.f32 1.0, %v2690
    %v2692 = vmul.f32 %v2691, %v147
    %v2693 = vadd.f32 %v2692, %v148
    %v2694 = vmul.f32 %v2693, %v2290
    %2696 = vrot.lane.b32.xlu0 %v2693, 64
    %v2697 = vpop.permute.xlu0 %2696
    %v2699 = vmul.f32 %v2693, %v2697
    %2701 = vrot.lane.b32.xlu0 %v2699, 32
    %v2702 = vpop.permute.xlu0 %2701
    %v2704 = vadd.f32 %v2694, %v2702
    %v2705 = vtanh.pop %v2704
    %2707 = vrot.lane.b32.xlu0 %v2705, 64
    %v2708 = vpop.permute.xlu0 %2707
    %v2710 = vmul.f32 %v2693, %v2708
    %v2711 = vld [vmem:[#allocation14] sm:$0xff]
    %v2712 = vld [vmem:[#allocation14 + $0x8] sm:$0xff]
    %v2713 = vld [vmem:[#allocation14 + $0x10] sm:$0xff]
    %v2714 = vld [vmem:[#allocation14 + $0x18] sm:$0xff]
    %v2715 = vld [vmem:[%s13] sm:$0x1]
    %v2717 = vlaneseq
    %v2718 = vshrl.u32 %v2717, 7
    %v2719 = vsub.s32 0, %v2718
    %v2720 = vrot.slane %v2715, %v2719
    %2723 = vrot.lane.b32.xlu0 %v2710, 32
    %v2724 = vpop.permute.xlu0 %2723
    %v2725 = vsel %vm368, %v2724, 0
    %2727 = vmatprep.subr.mxu0 0.0
    %2728 = vmatpush1.msra.mxu0 %v2711
    %2729 = vmatprep.subr.mxu0 0.0
    %2730 = vmatpush1.msra.mxu0 %v2712
    %2731 = vmatprep.subr.mxu0 0.0
    %2732 = vmatpush1.msra.mxu0 %v2713
    %2733 = vmatprep.subr.mxu0 0.0
    %2734 = vmatpush1.msra.mxu0 %v2714
    %2735 = vmatprep.subr.mxu0 0.0
    %2736 = vmatpush1.msra.mxu0 0.0
    %2737 = vmatprep.subr.mxu0 0.0
    %2738 = vmatpush1.msra.mxu0 0.0
    %2739 = vmatprep.subr.mxu0 0.0
    %2740 = vmatpush1.msra.mxu0 0.0
    %2741 = vmatprep.subr.mxu0 0.0
    %2742 = vmatpush1.msra.mxu0 0.0
    %2743 = vmatprep.subr.mxu0 0.0
    %2744 = vmatpush1.msra.mxu0 0.0
    %2745 = vmatprep.subr.mxu0 0.0
    %2746 = vmatpush1.msra.mxu0 0.0
    %2747 = vmatprep.subr.mxu0 0.0
    %2748 = vmatpush1.msra.mxu0 0.0
    %2749 = vmatprep.subr.mxu0 0.0
    %2750 = vmatpush1.msra.mxu0 0.0
    %2751 = vmatprep.subr.mxu0 0.0
    %2752 = vmatpush1.msra.mxu0 0.0
    %2753 = vmatprep.subr.mxu0 0.0
    %2754 = vmatpush1.msra.mxu0 0.0
    %2755 = vmatprep.subr.mxu0 0.0
    %2756 = vmatpush1.msra.mxu0 0.0
    %2757 = vmatprep.subr.mxu0 0.0
    %2758 = vmatpush1.msra.mxu0 0.0
    %2759 = vmatprep.subr.mxu0 0.0
    %2760 = vmatpush1.msra.mxu0 0.0
    %2761 = vmatprep.subr.mxu0 0.0
    %2762 = vmatpush1.msra.mxu0 0.0
    %2763 = vmatprep.subr.mxu0 0.0
    %2764 = vmatpush1.msra.mxu0 0.0
    %2765 = vmatprep.subr.mxu0 0.0
    %2766 = vmatpush1.msra.mxu0 0.0
    %2767 = vmatprep.subr.mxu0 0.0
    %2768 = vmatpush1.msra.mxu0 0.0
    %2769 = vmatprep.subr.mxu0 0.0
    %2770 = vmatpush1.msra.mxu0 0.0
    %2771 = vmatprep.subr.mxu0 0.0
    %2772 = vmatpush1.msra.mxu0 0.0
    %2773 = vmatprep.subr.mxu0 0.0
    %2774 = vmatpush1.msra.mxu0 0.0
    %2775 = vmatprep.subr.mxu0 0.0
    %2776 = vmatpush1.msra.mxu0 0.0
    %2777 = vmatprep.subr.mxu0 0.0
    %2778 = vmatpush1.msra.mxu0 0.0
    %2779 = vmatprep.subr.mxu0 0.0
    %2780 = vmatpush1.msra.mxu0 0.0
    %2781 = vmatprep.subr.mxu0 0.0
    %2782 = vmatpush1.msra.mxu0 0.0
    %2783 = vmatprep.subr.mxu0 0.0
    %2784 = vmatpush1.msra.mxu0 0.0
    %2785 = vmatprep.subr.mxu0 0.0
    %2786 = vmatpush1.msra.mxu0 0.0
    %2787 = vmatprep.subr.mxu0 0.0
    %2788 = vmatpush1.msra.mxu0 0.0
    %2789 = vmatprep.subr.mxu0 0.0
    %2790 = vmatpush1.msra.mxu0 0.0
    %2791 = vmatprep.mubr.f32.mxu0 0.0
    %2792 = vmatmul.mubr.f32.gmra.mrb[0].mxu0 %v2725
    %v2793 = vpop.f32.mrb[0].mxu0
    %v2794 = vadd.f32 %v2720, %v2793
    %v2795 = vpop.f32.mrb[0].mxu0
    %2796 = vdwg.mxu0
    %s2797 = scalar_lea.vmem %s14, 4
    %2798 = vst [vmem:[%s2797] sm:$0x3] %v2794
    %v2799 = vld [vmem:[%s7] sm:$0xff]
    %v2800 = vld [vmem:[%s7 + $0x8] sm:$0xff]
    %v2801 = vld [vmem:[%s7 + $0x10] sm:$0xff]
    %v2802 = vld [vmem:[%s7 + $0x18] sm:$0xff]
    %v2803 = vld [vmem:[%s7 + $0x20] sm:$0xff]
    %v2804 = vld [vmem:[%s7 + $0x28] sm:$0xff]
    %v2805 = vld [vmem:[%s7 + $0x30] sm:$0xff]
    %v2806 = vld [vmem:[%s7 + $0x38] sm:$0xff]
    %v2807 = vld [vmem:[%s7 + $0x40] sm:$0xff]
    %v2808 = vld [vmem:[%s7 + $0x48] sm:$0xff]
    %v2809 = vld [vmem:[%s7 + $0x50] sm:$0xff]
    %v2810 = vld [vmem:[%s7 + $0x58] sm:$0xff]
    %v2811 = vld [vmem:[%s7 + $0x60] sm:$0xff]
    %v2812 = vld [vmem:[%s7 + $0x68] sm:$0xff]
    %v2813 = vld [vmem:[%s7 + $0x70] sm:$0xff]
    %v2814 = vld [vmem:[%s7 + $0x78] sm:$0xff]
    %2815 = vmatprep.subr.mxu0 0.0
    %2816 = vmatpush1.msra.mxu0 %v2799
    %2817 = vmatprep.subr.mxu0 0.0
    %2818 = vmatpush1.msra.mxu0 %v2800
    %2819 = vmatprep.subr.mxu0 0.0
    %2820 = vmatpush1.msra.mxu0 %v2801
    %2821 = vmatprep.subr.mxu0 0.0
    %2822 = vmatpush1.msra.mxu0 %v2802
    %2823 = vmatprep.subr.mxu0 0.0
    %2824 = vmatpush1.msra.mxu0 %v2803
    %2825 = vmatprep.subr.mxu0 0.0
    %2826 = vmatpush1.msra.mxu0 %v2804
    %2827 = vmatprep.subr.mxu0 0.0
    %2828 = vmatpush1.msra.mxu0 %v2805
    %2829 = vmatprep.subr.mxu0 0.0
    %2830 = vmatpush1.msra.mxu0 %v2806
    %2831 = vmatprep.subr.mxu0 0.0
    %2832 = vmatpush1.msra.mxu0 %v2807
    %2833 = vmatprep.subr.mxu0 0.0
    %2834 = vmatpush1.msra.mxu0 %v2808
    %2835 = vmatprep.subr.mxu0 0.0
    %2836 = vmatpush1.msra.mxu0 %v2809
    %2837 = vmatprep.subr.mxu0 0.0
    %2838 = vmatpush1.msra.mxu0 %v2810
    %2839 = vmatprep.subr.mxu0 0.0
    %2840 = vmatpush1.msra.mxu0 %v2811
    %2841 = vmatprep.subr.mxu0 0.0
    %2842 = vmatpush1.msra.mxu0 %v2812
    %2843 = vmatprep.subr.mxu0 0.0
    %2844 = vmatpush1.msra.mxu0 %v2813
    %2845 = vmatprep.subr.mxu0 0.0
    %2846 = vmatpush1.msra.mxu0 %v2814
    %2847 = vmatprep.subr.mxu0 0.0
    %2848 = vmatpush1.msra.mxu0 0.0
    %2849 = vmatprep.subr.mxu0 0.0
    %2850 = vmatpush1.msra.mxu0 0.0
    %2851 = vmatprep.subr.mxu0 0.0
    %2852 = vmatpush1.msra.mxu0 0.0
    %2853 = vmatprep.subr.mxu0 0.0
    %2854 = vmatpush1.msra.mxu0 0.0
    %2855 = vmatprep.subr.mxu0 0.0
    %2856 = vmatpush1.msra.mxu0 0.0
    %2857 = vmatprep.subr.mxu0 0.0
    %2858 = vmatpush1.msra.mxu0 0.0
    %2859 = vmatprep.subr.mxu0 0.0
    %2860 = vmatpush1.msra.mxu0 0.0
    %2861 = vmatprep.subr.mxu0 0.0
    %2862 = vmatpush1.msra.mxu0 0.0
    %2863 = vmatprep.subr.mxu0 0.0
    %2864 = vmatpush1.msra.mxu0 0.0
    %2865 = vmatprep.subr.mxu0 0.0
    %2866 = vmatpush1.msra.mxu0 0.0
    %2867 = vmatprep.subr.mxu0 0.0
    %2868 = vmatpush1.msra.mxu0 0.0
    %2869 = vmatprep.subr.mxu0 0.0
    %2870 = vmatpush1.msra.mxu0 0.0
    %2871 = vmatprep.subr.mxu0 0.0
    %2872 = vmatpush1.msra.mxu0 0.0
    %2873 = vmatprep.subr.mxu0 0.0
    %2874 = vmatpush1.msra.mxu0 0.0
    %2875 = vmatprep.subr.mxu0 0.0
    %2876 = vmatpush1.msra.mxu0 0.0
    %2877 = vmatprep.subr.mxu0 0.0
    %2878 = vmatpush1.msra.mxu0 0.0
    %2879 = vmatprep.mubr.f32.mxu0 0.0
    %2880 = vmatmul.mubr.f32.gmra.mrb[0].mxu0 %v2794
    %v2881 = vpop.f32.mrb[0].mxu0
    %v2882 = vadd.f32 0.0, %v2881
    %v2883 = vpop.f32.mrb[0].mxu0
    %2884 = vdwg.mxu0
    %s2885 = sld [smem:[#allocation4 + $0x2]]
    %p2886 = scmp.gt.s32.totalorder %s2885, 0
    %v2887 = vld [vmem:[%s341] sm:$0x3]
    %s2888 = scalar_select %p2886, 1, 0
    %v2889 = vstv %s2888
    %vm2890 = vcmp.eq.s32.totalorder %v2889, 1
    %v2891 = vsel %vm2890, %v2887, %v2882
    %v2892 = vld [vmem:[#allocation11] sm:$0xff]
    %v2893 = vld [vmem:[#allocation11 + $0x8] sm:$0xff]
    %v2894 = vld [vmem:[#allocation11 + $0x10] sm:$0xff]
    %v2895 = vld [vmem:[#allocation11 + $0x18] sm:$0xff]
    %v2896 = vsel %vm368, %v2591, 0
    %2898 = vmatprep.subr.mxu0 0.0
    %2899 = vmatpush1.msra.mxu0 %v2892
    %2900 = vmatprep.subr.mxu0 0.0
    %2901 = vmatpush1.msra.mxu0 %v2893
    %2902 = vmatprep.subr.mxu0 0.0
    %2903 = vmatpush1.msra.mxu0 %v2894
    %2904 = vmatprep.subr.mxu0 0.0
    %2905 = vmatpush1.msra.mxu0 %v2895
    %2906 = vmatprep.subr.mxu0 0.0
    %2907 = vmatpush1.msra.mxu0 0.0
    %2908 = vmatprep.subr.mxu0 0.0
    %2909 = vmatpush1.msra.mxu0 0.0
    %2910 = vmatprep.subr.mxu0 0.0
    %2911 = vmatpush1.msra.mxu0 0.0
    %2912 = vmatprep.subr.mxu0 0.0
    %2913 = vmatpush1.msra.mxu0 0.0
    %2914 = vmatprep.subr.mxu0 0.0
    %2915 = vmatpush1.msra.mxu0 0.0
    %2916 = vmatprep.subr.mxu0 0.0
    %2917 = vmatpush1.msra.mxu0 0.0
    %2918 = vmatprep.subr.mxu0 0.0
    %2919 = vmatpush1.msra.mxu0 0.0
    %2920 = vmatprep.subr.mxu0 0.0
    %2921 = vmatpush1.msra.mxu0 0.0
    %2922 = vmatprep.subr.mxu0 0.0
    %2923 = vmatpush1.msra.mxu0 0.0
    %2924 = vmatprep.subr.mxu0 0.0
    %2925 = vmatpush1.msra.mxu0 0.0
    %2926 = vmatprep.subr.mxu0 0.0
    %2927 = vmatpush1.msra.mxu0 0.0
    %2928 = vmatprep.subr.mxu0 0.0
    %2929 = vmatpush1.msra.mxu0 0.0
    %2930 = vmatprep.subr.mxu0 0.0
    %2931 = vmatpush1.msra.mxu0 0.0
    %2932 = vmatprep.subr.mxu0 0.0
    %2933 = vmatpush1.msra.mxu0 0.0
    %2934 = vmatprep.subr.mxu0 0.0
    %2935 = vmatpush1.msra.mxu0 0.0
    %2936 = vmatprep.subr.mxu0 0.0
    %2937 = vmatpush1.msra.mxu0 0.0
    %2938 = vmatprep.subr.mxu0 0.0
    %2939 = vmatpush1.msra.mxu0 0.0
    %2940 = vmatprep.subr.mxu0 0.0
    %2941 = vmatpush1.msra.mxu0 0.0
    %2942 = vmatprep.subr.mxu0 0.0
    %2943 = vmatpush1.msra.mxu0 0.0
    %2944 = vmatprep.subr.mxu0 0.0
    %2945 = vmatpush1.msra.mxu0 0.0
    %2946 = vmatprep.subr.mxu0 0.0
    %2947 = vmatpush1.msra.mxu0 0.0
    %2948 = vmatprep.subr.mxu0 0.0
    %2949 = vmatpush1.msra.mxu0 0.0
    %2950 = vmatprep.subr.mxu0 0.0
    %2951 = vmatpush1.msra.mxu0 0.0
    %2952 = vmatprep.subr.mxu0 0.0
    %2953 = vmatpush1.msra.mxu0 0.0
    %2954 = vmatprep.subr.mxu0 0.0
    %2955 = vmatpush1.msra.mxu0 0.0
    %2956 = vmatprep.subr.mxu0 0.0
    %2957 = vmatpush1.msra.mxu0 0.0
    %2958 = vmatprep.subr.mxu0 0.0
    %2959 = vmatpush1.msra.mxu0 0.0
    %2960 = vmatprep.subr.mxu0 0.0
    %2961 = vmatpush1.msra.mxu0 0.0
    %2962 = vmatprep.mubr.f32.mxu0 0.0
    %2963 = vmatmul.mubr.f32.gmra.mrb[0].mxu0 %v2896
    %v2964 = vpop.f32.mrb[0].mxu0
    %v2965 = vadd.f32 0.0, %v2964
    %v2966 = vpop.f32.mrb[0].mxu0
    %2967 = vdwg.mxu0
    %v2968 = vadd.f32 %v2891, %v2965
    %v2969 = vld [vmem:[%s9] sm:$0x1]
    %v2971 = vlaneseq
    %v2972 = vshrl.u32 %v2971, 7
    %v2973 = vsub.s32 0, %v2972
    %v2974 = vrot.slane %v2969, %v2973
    %v2976 = vadd.f32 %v2968, %v2974
    %v2977 = vmul.f32 %v2976, %v147
    %v2978 = vxor.u32 %v2977, 2147483648
    %v2979 = vmul.f32 %v2978, 1.442695
    %v2980 = vpow.pop %v2979
    %v2981 = vadd.f32 %v2980, 1.0
    %v2982 = vrcp.pop %v2981
    %v2983 = vmul.f32 1.0, %v2982
    %v2984 = vmul.f32 %v2983, %v147
    %v2985 = vadd.f32 %v2984, %v148
    %v2986 = vmul.f32 %v2985, %v2582
    %2988 = vrot.lane.b32.xlu0 %v2985, 64
    %v2989 = vpop.permute.xlu0 %2988
    %v2991 = vmul.f32 %v2985, %v2989
    %2993 = vrot.lane.b32.xlu0 %v2991, 32
    %v2994 = vpop.permute.xlu0 %2993
    %v2996 = vadd.f32 %v2986, %v2994
    %v2997 = vtanh.pop %v2996
    %2999 = vrot.lane.b32.xlu0 %v2997, 64
    %v3000 = vpop.permute.xlu0 %2999
    %v3002 = vmul.f32 %v2985, %v3000
    %3004 = vrot.lane.b32.xlu0 %v3002, 32
    %v3005 = vpop.permute.xlu0 %3004
    %3007 = vrot.lane.b32.xlu0 %v2710, 64
    %v3008 = vpop.permute.xlu0 %3007
    %v3010 = vsel %vm368, %v3005, %v3008
    %v3011 = vld [vmem:[#allocation13] sm:$0xff]
    %v3012 = vld [vmem:[#allocation13 + $0x8] sm:$0xff]
    %v3013 = vld [vmem:[#allocation13 + $0x10] sm:$0xff]
    %v3014 = vld [vmem:[#allocation13 + $0x18] sm:$0xff]
    %v3015 = vld [vmem:[#allocation13 + $0x20] sm:$0xff]
    %v3016 = vld [vmem:[#allocation13 + $0x28] sm:$0xff]
    %v3017 = vld [vmem:[#allocation13 + $0x30] sm:$0xff]
    %v3018 = vld [vmem:[#allocation13 + $0x38] sm:$0xff]
    %v3019 = vld [vmem:[%s11] sm:$0x1]
    %v3021 = vlaneseq
    %v3022 = vshrl.u32 %v3021, 7
    %v3023 = vsub.s32 0, %v3022
    %v3024 = vrot.slane %v3019, %v3023
    %v3027 = vsel %vm497, %v3010, 0
    %3029 = vmatprep.subr.mxu0 0.0
    %3030 = vmatpush1.msra.mxu0 %v3011
    %3031 = vmatprep.subr.mxu0 0.0
    %3032 = vmatpush1.msra.mxu0 %v3012
    %3033 = vmatprep.subr.mxu0 0.0
    %3034 = vmatpush1.msra.mxu0 %v3013
    %3035 = vmatprep.subr.mxu0 0.0
    %3036 = vmatpush1.msra.mxu0 %v3014
    %3037 = vmatprep.subr.mxu0 0.0
    %3038 = vmatpush1.msra.mxu0 %v3015
    %3039 = vmatprep.subr.mxu0 0.0
    %3040 = vmatpush1.msra.mxu0 %v3016
    %3041 = vmatprep.subr.mxu0 0.0
    %3042 = vmatpush1.msra.mxu0 %v3017
    %3043 = vmatprep.subr.mxu0 0.0
    %3044 = vmatpush1.msra.mxu0 %v3018
    %3045 = vmatprep.subr.mxu0 0.0
    %3046 = vmatpush1.msra.mxu0 0.0
    %3047 = vmatprep.subr.mxu0 0.0
    %3048 = vmatpush1.msra.mxu0 0.0
    %3049 = vmatprep.subr.mxu0 0.0
    %3050 = vmatpush1.msra.mxu0 0.0
    %3051 = vmatprep.subr.mxu0 0.0
    %3052 = vmatpush1.msra.mxu0 0.0
    %3053 = vmatprep.subr.mxu0 0.0
    %3054 = vmatpush1.msra.mxu0 0.0
    %3055 = vmatprep.subr.mxu0 0.0
    %3056 = vmatpush1.msra.mxu0 0.0
    %3057 = vmatprep.subr.mxu0 0.0
    %3058 = vmatpush1.msra.mxu0 0.0
    %3059 = vmatprep.subr.mxu0 0.0
    %3060 = vmatpush1.msra.mxu0 0.0
    %3061 = vmatprep.subr.mxu0 0.0
    %3062 = vmatpush1.msra.mxu0 0.0
    %3063 = vmatprep.subr.mxu0 0.0
    %3064 = vmatpush1.msra.mxu0 0.0
    %3065 = vmatprep.subr.mxu0 0.0
    %3066 = vmatpush1.msra.mxu0 0.0
    %3067 = vmatprep.subr.mxu0 0.0
    %3068 = vmatpush1.msra.mxu0 0.0
    %3069 = vmatprep.subr.mxu0 0.0
    %3070 = vmatpush1.msra.mxu0 0.0
    %3071 = vmatprep.subr.mxu0 0.0
    %3072 = vmatpush1.msra.mxu0 0.0
    %3073 = vmatprep.subr.mxu0 0.0
    %3074 = vmatpush1.msra.mxu0 0.0
    %3075 = vmatprep.subr.mxu0 0.0
    %3076 = vmatpush1.msra.mxu0 0.0
    %3077 = vmatprep.subr.mxu0 0.0
    %3078 = vmatpush1.msra.mxu0 0.0
    %3079 = vmatprep.subr.mxu0 0.0
    %3080 = vmatpush1.msra.mxu0 0.0
    %3081 = vmatprep.subr.mxu0 0.0
    %3082 = vmatpush1.msra.mxu0 0.0
    %3083 = vmatprep.subr.mxu0 0.0
    %3084 = vmatpush1.msra.mxu0 0.0
    %3085 = vmatprep.subr.mxu0 0.0
    %3086 = vmatpush1.msra.mxu0 0.0
    %3087 = vmatprep.subr.mxu0 0.0
    %3088 = vmatpush1.msra.mxu0 0.0
    %3089 = vmatprep.subr.mxu0 0.0
    %3090 = vmatpush1.msra.mxu0 0.0
    %3091 = vmatprep.subr.mxu0 0.0
    %3092 = vmatpush1.msra.mxu0 0.0
    %3093 = vmatprep.mubr.f32.mxu0 0.0
    %3094 = vmatmul.mubr.f32.gmra.mrb[0].mxu0 %v3027
    %v3095 = vpop.f32.mrb[0].mxu0
    %v3096 = vadd.f32 %v3024, %v3095
    %v3097 = vpop.f32.mrb[0].mxu0
    %3098 = vdwg.mxu0
    %v3099 = vmul.f32 %v3096, %v147
    %v3100 = vxor.u32 %v3099, 2147483648
    %v3101 = vmul.f32 %v3100, 1.442695
    %v3102 = vpow.pop %v3101
    %v3103 = vadd.f32 %v3102, 1.0
    %v3104 = vrcp.pop %v3103
    %v3105 = vmul.f32 1.0, %v3104
    %v3106 = vmul.f32 %v3105, %v147
    %v3107 = vadd.f32 %v3106, %v148
    %v3108 = vmul.f32 %v3107, %v2704
    %3110 = vrot.lane.b32.xlu0 %v3107, 64
    %v3111 = vpop.permute.xlu0 %3110
    %v3113 = vmul.f32 %v3107, %v3111
    %3115 = vrot.lane.b32.xlu0 %v3113, 32
    %v3116 = vpop.permute.xlu0 %3115
    %v3118 = vadd.f32 %v3108, %v3116
    %v3119 = vtanh.pop %v3118
    %3121 = vrot.lane.b32.xlu0 %v3119, 64
    %v3122 = vpop.permute.xlu0 %3121
    %v3124 = vmul.f32 %v3107, %v3122
    %v3125 = vld [vmem:[#allocation14] sm:$0xff]
    %v3126 = vld [vmem:[#allocation14 + $0x8] sm:$0xff]
    %v3127 = vld [vmem:[#allocation14 + $0x10] sm:$0xff]
    %v3128 = vld [vmem:[#allocation14 + $0x18] sm:$0xff]
    %v3129 = vld [vmem:[%s13] sm:$0x1]
    %v3131 = vlaneseq
    %v3132 = vshrl.u32 %v3131, 7
    %v3133 = vsub.s32 0, %v3132
    %v3134 = vrot.slane %v3129, %v3133
    %3137 = vrot.lane.b32.xlu0 %v3124, 32
    %v3138 = vpop.permute.xlu0 %3137
    %v3139 = vsel %vm368, %v3138, 0
    %3141 = vmatprep.subr.mxu0 0.0
    %3142 = vmatpush1.msra.mxu0 %v3125
    %3143 = vmatprep.subr.mxu0 0.0
    %3144 = vmatpush1.msra.mxu0 %v3126
    %3145 = vmatprep.subr.mxu0 0.0
    %3146 = vmatpush1.msra.mxu0 %v3127
    %3147 = vmatprep.subr.mxu0 0.0
    %3148 = vmatpush1.msra.mxu0 %v3128
    %3149 = vmatprep.subr.mxu0 0.0
    %3150 = vmatpush1.msra.mxu0 0.0
    %3151 = vmatprep.subr.mxu0 0.0
    %3152 = vmatpush1.msra.mxu0 0.0
    %3153 = vmatprep.subr.mxu0 0.0
    %3154 = vmatpush1.msra.mxu0 0.0
    %3155 = vmatprep.subr.mxu0 0.0
    %3156 = vmatpush1.msra.mxu0 0.0
    %3157 = vmatprep.subr.mxu0 0.0
    %3158 = vmatpush1.msra.mxu0 0.0
    %3159 = vmatprep.subr.mxu0 0.0
    %3160 = vmatpush1.msra.mxu0 0.0
    %3161 = vmatprep.subr.mxu0 0.0
    %3162 = vmatpush1.msra.mxu0 0.0
    %3163 = vmatprep.subr.mxu0 0.0
    %3164 = vmatpush1.msra.mxu0 0.0
    %3165 = vmatprep.subr.mxu0 0.0
    %3166 = vmatpush1.msra.mxu0 0.0
    %3167 = vmatprep.subr.mxu0 0.0
    %3168 = vmatpush1.msra.mxu0 0.0
    %3169 = vmatprep.subr.mxu0 0.0
    %3170 = vmatpush1.msra.mxu0 0.0
    %3171 = vmatprep.subr.mxu0 0.0
    %3172 = vmatpush1.msra.mxu0 0.0
    %3173 = vmatprep.subr.mxu0 0.0
    %3174 = vmatpush1.msra.mxu0 0.0
    %3175 = vmatprep.subr.mxu0 0.0
    %3176 = vmatpush1.msra.mxu0 0.0
    %3177 = vmatprep.subr.mxu0 0.0
    %3178 = vmatpush1.msra.mxu0 0.0
    %3179 = vmatprep.subr.mxu0 0.0
    %3180 = vmatpush1.msra.mxu0 0.0
    %3181 = vmatprep.subr.mxu0 0.0
    %3182 = vmatpush1.msra.mxu0 0.0
    %3183 = vmatprep.subr.mxu0 0.0
    %3184 = vmatpush1.msra.mxu0 0.0
    %3185 = vmatprep.subr.mxu0 0.0
    %3186 = vmatpush1.msra.mxu0 0.0
    %3187 = vmatprep.subr.mxu0 0.0
    %3188 = vmatpush1.msra.mxu0 0.0
    %3189 = vmatprep.subr.mxu0 0.0
    %3190 = vmatpush1.msra.mxu0 0.0
    %3191 = vmatprep.subr.mxu0 0.0
    %3192 = vmatpush1.msra.mxu0 0.0
    %3193 = vmatprep.subr.mxu0 0.0
    %3194 = vmatpush1.msra.mxu0 0.0
    %3195 = vmatprep.subr.mxu0 0.0
    %3196 = vmatpush1.msra.mxu0 0.0
    %3197 = vmatprep.subr.mxu0 0.0
    %3198 = vmatpush1.msra.mxu0 0.0
    %3199 = vmatprep.subr.mxu0 0.0
    %3200 = vmatpush1.msra.mxu0 0.0
    %3201 = vmatprep.subr.mxu0 0.0
    %3202 = vmatpush1.msra.mxu0 0.0
    %3203 = vmatprep.subr.mxu0 0.0
    %3204 = vmatpush1.msra.mxu0 0.0
    %3205 = vmatprep.mubr.f32.mxu0 0.0
    %3206 = vmatmul.mubr.f32.gmra.mrb[0].mxu0 %v3139
    %v3207 = vpop.f32.mrb[0].mxu0
    %v3208 = vadd.f32 %v3134, %v3207
    %v3209 = vpop.f32.mrb[0].mxu0
    %3210 = vdwg.mxu0
    %s3211 = scalar_lea.vmem %s14, 6
    %3212 = vst [vmem:[%s3211] sm:$0x3] %v3208
    %v3213 = vld [vmem:[%s7] sm:$0xff]
    %v3214 = vld [vmem:[%s7 + $0x8] sm:$0xff]
    %v3215 = vld [vmem:[%s7 + $0x10] sm:$0xff]
    %v3216 = vld [vmem:[%s7 + $0x18] sm:$0xff]
    %v3217 = vld [vmem:[%s7 + $0x20] sm:$0xff]
    %v3218 = vld [vmem:[%s7 + $0x28] sm:$0xff]
    %v3219 = vld [vmem:[%s7 + $0x30] sm:$0xff]
    %v3220 = vld [vmem:[%s7 + $0x38] sm:$0xff]
    %v3221 = vld [vmem:[%s7 + $0x40] sm:$0xff]
    %v3222 = vld [vmem:[%s7 + $0x48] sm:$0xff]
    %v3223 = vld [vmem:[%s7 + $0x50] sm:$0xff]
    %v3224 = vld [vmem:[%s7 + $0x58] sm:$0xff]
    %v3225 = vld [vmem:[%s7 + $0x60] sm:$0xff]
    %v3226 = vld [vmem:[%s7 + $0x68] sm:$0xff]
    %v3227 = vld [vmem:[%s7 + $0x70] sm:$0xff]
    %v3228 = vld [vmem:[%s7 + $0x78] sm:$0xff]
    %3229 = vmatprep.subr.mxu0 0.0
    %3230 = vmatpush1.msra.mxu0 %v3213
    %3231 = vmatprep.subr.mxu0 0.0
    %3232 = vmatpush1.msra.mxu0 %v3214
    %3233 = vmatprep.subr.mxu0 0.0
    %3234 = vmatpush1.msra.mxu0 %v3215
    %3235 = vmatprep.subr.mxu0 0.0
    %3236 = vmatpush1.msra.mxu0 %v3216
    %3237 = vmatprep.subr.mxu0 0.0
    %3238 = vmatpush1.msra.mxu0 %v3217
    %3239 = vmatprep.subr.mxu0 0.0
    %3240 = vmatpush1.msra.mxu0 %v3218
    %3241 = vmatprep.subr.mxu0 0.0
    %3242 = vmatpush1.msra.mxu0 %v3219
    %3243 = vmatprep.subr.mxu0 0.0
    %3244 = vmatpush1.msra.mxu0 %v3220
    %3245 = vmatprep.subr.mxu0 0.0
    %3246 = vmatpush1.msra.mxu0 %v3221
    %3247 = vmatprep.subr.mxu0 0.0
    %3248 = vmatpush1.msra.mxu0 %v3222
    %3249 = vmatprep.subr.mxu0 0.0
    %3250 = vmatpush1.msra.mxu0 %v3223
    %3251 = vmatprep.subr.mxu0 0.0
    %3252 = vmatpush1.msra.mxu0 %v3224
    %3253 = vmatprep.subr.mxu0 0.0
    %3254 = vmatpush1.msra.mxu0 %v3225
    %3255 = vmatprep.subr.mxu0 0.0
    %3256 = vmatpush1.msra.mxu0 %v3226
    %3257 = vmatprep.subr.mxu0 0.0
    %3258 = vmatpush1.msra.mxu0 %v3227
    %3259 = vmatprep.subr.mxu0 0.0
    %3260 = vmatpush1.msra.mxu0 %v3228
    %3261 = vmatprep.subr.mxu0 0.0
    %3262 = vmatpush1.msra.mxu0 0.0
    %3263 = vmatprep.subr.mxu0 0.0
    %3264 = vmatpush1.msra.mxu0 0.0
    %3265 = vmatprep.subr.mxu0 0.0
    %3266 = vmatpush1.msra.mxu0 0.0
    %3267 = vmatprep.subr.mxu0 0.0
    %3268 = vmatpush1.msra.mxu0 0.0
    %3269 = vmatprep.subr.mxu0 0.0
    %3270 = vmatpush1.msra.mxu0 0.0
    %3271 = vmatprep.subr.mxu0 0.0
    %3272 = vmatpush1.msra.mxu0 0.0
    %3273 = vmatprep.subr.mxu0 0.0
    %3274 = vmatpush1.msra.mxu0 0.0
    %3275 = vmatprep.subr.mxu0 0.0
    %3276 = vmatpush1.msra.mxu0 0.0
    %3277 = vmatprep.subr.mxu0 0.0
    %3278 = vmatpush1.msra.mxu0 0.0
    %3279 = vmatprep.subr.mxu0 0.0
    %3280 = vmatpush1.msra.mxu0 0.0
    %3281 = vmatprep.subr.mxu0 0.0
    %3282 = vmatpush1.msra.mxu0 0.0
    %3283 = vmatprep.subr.mxu0 0.0
    %3284 = vmatpush1.msra.mxu0 0.0
    %3285 = vmatprep.subr.mxu0 0.0
    %3286 = vmatpush1.msra.mxu0 0.0
    %3287 = vmatprep.subr.mxu0 0.0
    %3288 = vmatpush1.msra.mxu0 0.0
    %3289 = vmatprep.subr.mxu0 0.0
    %3290 = vmatpush1.msra.mxu0 0.0
    %3291 = vmatprep.subr.mxu0 0.0
    %3292 = vmatpush1.msra.mxu0 0.0
    %3293 = vmatprep.mubr.f32.mxu0 0.0
    %3294 = vmatmul.mubr.f32.gmra.mrb[0].mxu0 %v3208
    %v3295 = vpop.f32.mrb[0].mxu0
    %v3296 = vadd.f32 0.0, %v3295
    %v3297 = vpop.f32.mrb[0].mxu0
    %3298 = vdwg.mxu0
    %s3299 = sld [smem:[#allocation4 + $0x3]]
    %p3300 = scmp.gt.s32.totalorder %s3299, 0
    %v3301 = vld [vmem:[%s345] sm:$0x3]
    %s3302 = scalar_select %p3300, 1, 0
    %v3303 = vstv %s3302
    %vm3304 = vcmp.eq.s32.totalorder %v3303, 1
    %v3305 = vsel %vm3304, %v3301, %v3296
    %v3306 = vld [vmem:[#allocation11] sm:$0xff]
    %v3307 = vld [vmem:[#allocation11 + $0x8] sm:$0xff]
    %v3308 = vld [vmem:[#allocation11 + $0x10] sm:$0xff]
    %v3309 = vld [vmem:[#allocation11 + $0x18] sm:$0xff]
    %v3310 = vsel %vm368, %v3005, 0
    %3312 = vmatprep.subr.mxu0 0.0
    %3313 = vmatpush1.msra.mxu0 %v3306
    %3314 = vmatprep.subr.mxu0 0.0
    %3315 = vmatpush1.msra.mxu0 %v3307
    %3316 = vmatprep.subr.mxu0 0.0
    %3317 = vmatpush1.msra.mxu0 %v3308
    %3318 = vmatprep.subr.mxu0 0.0
    %3319 = vmatpush1.msra.mxu0 %v3309
    %3320 = vmatprep.subr.mxu0 0.0
    %3321 = vmatpush1.msra.mxu0 0.0
    %3322 = vmatprep.subr.mxu0 0.0
    %3323 = vmatpush1.msra.mxu0 0.0
    %3324 = vmatprep.subr.mxu0 0.0
    %3325 = vmatpush1.msra.mxu0 0.0
    %3326 = vmatprep.subr.mxu0 0.0
    %3327 = vmatpush1.msra.mxu0 0.0
    %3328 = vmatprep.subr.mxu0 0.0
    %3329 = vmatpush1.msra.mxu0 0.0
    %3330 = vmatprep.subr.mxu0 0.0
    %3331 = vmatpush1.msra.mxu0 0.0
    %3332 = vmatprep.subr.mxu0 0.0
    %3333 = vmatpush1.msra.mxu0 0.0
    %3334 = vmatprep.subr.mxu0 0.0
    %3335 = vmatpush1.msra.mxu0 0.0
    %3336 = vmatprep.subr.mxu0 0.0
    %3337 = vmatpush1.msra.mxu0 0.0
    %3338 = vmatprep.subr.mxu0 0.0
    %3339 = vmatpush1.msra.mxu0 0.0
    %3340 = vmatprep.subr.mxu0 0.0
    %3341 = vmatpush1.msra.mxu0 0.0
    %3342 = vmatprep.subr.mxu0 0.0
    %3343 = vmatpush1.msra.mxu0 0.0
    %3344 = vmatprep.subr.mxu0 0.0
    %3345 = vmatpush1.msra.mxu0 0.0
    %3346 = vmatprep.subr.mxu0 0.0
    %3347 = vmatpush1.msra.mxu0 0.0
    %3348 = vmatprep.subr.mxu0 0.0
    %3349 = vmatpush1.msra.mxu0 0.0
    %3350 = vmatprep.subr.mxu0 0.0
    %3351 = vmatpush1.msra.mxu0 0.0
    %3352 = vmatprep.subr.mxu0 0.0
    %3353 = vmatpush1.msra.mxu0 0.0
    %3354 = vmatprep.subr.mxu0 0.0
    %3355 = vmatpush1.msra.mxu0 0.0
    %3356 = vmatprep.subr.mxu0 0.0
    %3357 = vmatpush1.msra.mxu0 0.0
    %3358 = vmatprep.subr.mxu0 0.0
    %3359 = vmatpush1.msra.mxu0 0.0
    %3360 = vmatprep.subr.mxu0 0.0
    %3361 = vmatpush1.msra.mxu0 0.0
    %3362 = vmatprep.subr.mxu0 0.0
    %3363 = vmatpush1.msra.mxu0 0.0
    %3364 = vmatprep.subr.mxu0 0.0
    %3365 = vmatpush1.msra.mxu0 0.0
    %3366 = vmatprep.subr.mxu0 0.0
    %3367 = vmatpush1.msra.mxu0 0.0
    %3368 = vmatprep.subr.mxu0 0.0
    %3369 = vmatpush1.msra.mxu0 0.0
    %3370 = vmatprep.subr.mxu0 0.0
    %3371 = vmatpush1.msra.mxu0 0.0
    %3372 = vmatprep.subr.mxu0 0.0
    %3373 = vmatpush1.msra.mxu0 0.0
    %3374 = vmatprep.subr.mxu0 0.0
    %3375 = vmatpush1.msra.mxu0 0.0
    %3376 = vmatprep.mubr.f32.mxu0 0.0
    %3377 = vmatmul.mubr.f32.gmra.mrb[0].mxu0 %v3310
    %v3378 = vpop.f32.mrb[0].mxu0
    %v3379 = vadd.f32 0.0, %v3378
    %v3380 = vpop.f32.mrb[0].mxu0
    %3381 = vdwg.mxu0
    %v3382 = vadd.f32 %v3305, %v3379
    %v3383 = vld [vmem:[%s9] sm:$0x1]
    %v3385 = vlaneseq
    %v3386 = vshrl.u32 %v3385, 7
    %v3387 = vsub.s32 0, %v3386
    %v3388 = vrot.slane %v3383, %v3387
    %v3390 = vadd.f32 %v3382, %v3388
    %v3391 = vmul.f32 %v3390, %v147
    %v3392 = vxor.u32 %v3391, 2147483648
    %v3393 = vmul.f32 %v3392, 1.442695
    %v3394 = vpow.pop %v3393
    %v3395 = vadd.f32 %v3394, 1.0
    %v3396 = vrcp.pop %v3395
    %v3397 = vmul.f32 1.0, %v3396
    %v3398 = vmul.f32 %v3397, %v147
    %v3399 = vadd.f32 %v3398, %v148
    %v3400 = vmul.f32 %v3399, %v2996
    %3402 = vrot.lane.b32.xlu0 %v3399, 64
    %v3403 = vpop.permute.xlu0 %3402
    %v3405 = vmul.f32 %v3399, %v3403
    %3407 = vrot.lane.b32.xlu0 %v3405, 32
    %v3408 = vpop.permute.xlu0 %3407
    %v3410 = vadd.f32 %v3400, %v3408
    %v3411 = vtanh.pop %v3410
    %3413 = vrot.lane.b32.xlu0 %v3411, 64
    %v3414 = vpop.permute.xlu0 %3413
    %v3416 = vmul.f32 %v3399, %v3414
    %3418 = vrot.lane.b32.xlu0 %v3416, 32
    %v3419 = vpop.permute.xlu0 %3418
    %3421 = vrot.lane.b32.xlu0 %v3124, 64
    %v3422 = vpop.permute.xlu0 %3421
    %v3424 = vsel %vm368, %v3419, %v3422
    %v3425 = vld [vmem:[#allocation13] sm:$0xff]
    %v3426 = vld [vmem:[#allocation13 + $0x8] sm:$0xff]
    %v3427 = vld [vmem:[#allocation13 + $0x10] sm:$0xff]
    %v3428 = vld [vmem:[#allocation13 + $0x18] sm:$0xff]
    %v3429 = vld [vmem:[#allocation13 + $0x20] sm:$0xff]
    %v3430 = vld [vmem:[#allocation13 + $0x28] sm:$0xff]
    %v3431 = vld [vmem:[#allocation13 + $0x30] sm:$0xff]
    %v3432 = vld [vmem:[#allocation13 + $0x38] sm:$0xff]
    %v3433 = vld [vmem:[%s11] sm:$0x1]
    %v3435 = vlaneseq
    %v3436 = vshrl.u32 %v3435, 7
    %v3437 = vsub.s32 0, %v3436
    %v3438 = vrot.slane %v3433, %v3437
    %v3441 = vsel %vm497, %v3424, 0
    %3443 = vmatprep.subr.mxu0 0.0
    %3444 = vmatpush1.msra.mxu0 %v3425
    %3445 = vmatprep.subr.mxu0 0.0
    %3446 = vmatpush1.msra.mxu0 %v3426
    %3447 = vmatprep.subr.mxu0 0.0
    %3448 = vmatpush1.msra.mxu0 %v3427
    %3449 = vmatprep.subr.mxu0 0.0
    %3450 = vmatpush1.msra.mxu0 %v3428
    %3451 = vmatprep.subr.mxu0 0.0
    %3452 = vmatpush1.msra.mxu0 %v3429
    %3453 = vmatprep.subr.mxu0 0.0
    %3454 = vmatpush1.msra.mxu0 %v3430
    %3455 = vmatprep.subr.mxu0 0.0
    %3456 = vmatpush1.msra.mxu0 %v3431
    %3457 = vmatprep.subr.mxu0 0.0
    %3458 = vmatpush1.msra.mxu0 %v3432
    %3459 = vmatprep.subr.mxu0 0.0
    %3460 = vmatpush1.msra.mxu0 0.0
    %3461 = vmatprep.subr.mxu0 0.0
    %3462 = vmatpush1.msra.mxu0 0.0
    %3463 = vmatprep.subr.mxu0 0.0
    %3464 = vmatpush1.msra.mxu0 0.0
    %3465 = vmatprep.subr.mxu0 0.0
    %3466 = vmatpush1.msra.mxu0 0.0
    %3467 = vmatprep.subr.mxu0 0.0
    %3468 = vmatpush1.msra.mxu0 0.0
    %3469 = vmatprep.subr.mxu0 0.0
    %3470 = vmatpush1.msra.mxu0 0.0
    %3471 = vmatprep.subr.mxu0 0.0
    %3472 = vmatpush1.msra.mxu0 0.0
    %3473 = vmatprep.subr.mxu0 0.0
    %3474 = vmatpush1.msra.mxu0 0.0
    %3475 = vmatprep.subr.mxu0 0.0
    %3476 = vmatpush1.msra.mxu0 0.0
    %3477 = vmatprep.subr.mxu0 0.0
    %3478 = vmatpush1.msra.mxu0 0.0
    %3479 = vmatprep.subr.mxu0 0.0
    %3480 = vmatpush1.msra.mxu0 0.0
    %3481 = vmatprep.subr.mxu0 0.0
    %3482 = vmatpush1.msra.mxu0 0.0
    %3483 = vmatprep.subr.mxu0 0.0
    %3484 = vmatpush1.msra.mxu0 0.0
    %3485 = vmatprep.subr.mxu0 0.0
    %3486 = vmatpush1.msra.mxu0 0.0
    %3487 = vmatprep.subr.mxu0 0.0
    %3488 = vmatpush1.msra.mxu0 0.0
    %3489 = vmatprep.subr.mxu0 0.0
    %3490 = vmatpush1.msra.mxu0 0.0
    %3491 = vmatprep.subr.mxu0 0.0
    %3492 = vmatpush1.msra.mxu0 0.0
    %3493 = vmatprep.subr.mxu0 0.0
    %3494 = vmatpush1.msra.mxu0 0.0
    %3495 = vmatprep.subr.mxu0 0.0
    %3496 = vmatpush1.msra.mxu0 0.0
    %3497 = vmatprep.subr.mxu0 0.0
    %3498 = vmatpush1.msra.mxu0 0.0
    %3499 = vmatprep.subr.mxu0 0.0
    %3500 = vmatpush1.msra.mxu0 0.0
    %3501 = vmatprep.subr.mxu0 0.0
    %3502 = vmatpush1.msra.mxu0 0.0
    %3503 = vmatprep.subr.mxu0 0.0
    %3504 = vmatpush1.msra.mxu0 0.0
    %3505 = vmatprep.subr.mxu0 0.0
    %3506 = vmatpush1.msra.mxu0 0.0
    %3507 = vmatprep.mubr.f32.mxu0 0.0
    %3508 = vmatmul.mubr.f32.gmra.mrb[0].mxu0 %v3441
    %v3509 = vpop.f32.mrb[0].mxu0
    %v3510 = vadd.f32 %v3438, %v3509
    %v3511 = vpop.f32.mrb[0].mxu0
    %3512 = vdwg.mxu0
    %v3513 = vmul.f32 %v3510, %v147
    %v3514 = vxor.u32 %v3513, 2147483648
    %v3515 = vmul.f32 %v3514, 1.442695
    %v3516 = vpow.pop %v3515
    %v3517 = vadd.f32 %v3516, 1.0
    %v3518 = vrcp.pop %v3517
    %v3519 = vmul.f32 1.0, %v3518
    %v3520 = vmul.f32 %v3519, %v147
    %v3521 = vadd.f32 %v3520, %v148
    %v3522 = vmul.f32 %v3521, %v3118
    %3524 = vrot.lane.b32.xlu0 %v3521, 64
    %v3525 = vpop.permute.xlu0 %3524
    %v3527 = vmul.f32 %v3521, %v3525
    %3529 = vrot.lane.b32.xlu0 %v3527, 32
    %v3530 = vpop.permute.xlu0 %3529
    %v3532 = vadd.f32 %v3522, %v3530
    %v3533 = vtanh.pop %v3532
    %3535 = vrot.lane.b32.xlu0 %v3533, 64
    %v3536 = vpop.permute.xlu0 %3535
    %v3538 = vmul.f32 %v3521, %v3536
    %v3539 = vld [vmem:[#allocation14] sm:$0xff]
    %v3540 = vld [vmem:[#allocation14 + $0x8] sm:$0xff]
    %v3541 = vld [vmem:[#allocation14 + $0x10] sm:$0xff]
    %v3542 = vld [vmem:[#allocation14 + $0x18] sm:$0xff]
    %v3543 = vld [vmem:[%s13] sm:$0x1]
    %v3545 = vlaneseq
    %v3546 = vshrl.u32 %v3545, 7
    %v3547 = vsub.s32 0, %v3546
    %v3548 = vrot.slane %v3543, %v3547
    %3551 = vrot.lane.b32.xlu0 %v3538, 32
    %v3552 = vpop.permute.xlu0 %3551
    %v3553 = vsel %vm368, %v3552, 0
    %3555 = vmatprep.subr.mxu0 0.0
    %3556 = vmatpush1.msra.mxu0 %v3539
    %3557 = vmatprep.subr.mxu0 0.0
    %3558 = vmatpush1.msra.mxu0 %v3540
    %3559 = vmatprep.subr.mxu0 0.0
    %3560 = vmatpush1.msra.mxu0 %v3541
    %3561 = vmatprep.subr.mxu0 0.0
    %3562 = vmatpush1.msra.mxu0 %v3542
    %3563 = vmatprep.subr.mxu0 0.0
    %3564 = vmatpush1.msra.mxu0 0.0
    %3565 = vmatprep.subr.mxu0 0.0
    %3566 = vmatpush1.msra.mxu0 0.0
    %3567 = vmatprep.subr.mxu0 0.0
    %3568 = vmatpush1.msra.mxu0 0.0
    %3569 = vmatprep.subr.mxu0 0.0
    %3570 = vmatpush1.msra.mxu0 0.0
    %3571 = vmatprep.subr.mxu0 0.0
    %3572 = vmatpush1.msra.mxu0 0.0
    %3573 = vmatprep.subr.mxu0 0.0
    %3574 = vmatpush1.msra.mxu0 0.0
    %3575 = vmatprep.subr.mxu0 0.0
    %3576 = vmatpush1.msra.mxu0 0.0
    %3577 = vmatprep.subr.mxu0 0.0
    %3578 = vmatpush1.msra.mxu0 0.0
    %3579 = vmatprep.subr.mxu0 0.0
    %3580 = vmatpush1.msra.mxu0 0.0
    %3581 = vmatprep.subr.mxu0 0.0
    %3582 = vmatpush1.msra.mxu0 0.0
    %3583 = vmatprep.subr.mxu0 0.0
    %3584 = vmatpush1.msra.mxu0 0.0
    %3585 = vmatprep.subr.mxu0 0.0
    %3586 = vmatpush1.msra.mxu0 0.0
    %3587 = vmatprep.subr.mxu0 0.0
    %3588 = vmatpush1.msra.mxu0 0.0
    %3589 = vmatprep.subr.mxu0 0.0
    %3590 = vmatpush1.msra.mxu0 0.0
    %3591 = vmatprep.subr.mxu0 0.0
    %3592 = vmatpush1.msra.mxu0 0.0
    %3593 = vmatprep.subr.mxu0 0.0
    %3594 = vmatpush1.msra.mxu0 0.0
    %3595 = vmatprep.subr.mxu0 0.0
    %3596 = vmatpush1.msra.mxu0 0.0
    %3597 = vmatprep.subr.mxu0 0.0
    %3598 = vmatpush1.msra.mxu0 0.0
    %3599 = vmatprep.subr.mxu0 0.0
    %3600 = vmatpush1.msra.mxu0 0.0
    %3601 = vmatprep.subr.mxu0 0.0
    %3602 = vmatpush1.msra.mxu0 0.0
    %3603 = vmatprep.subr.mxu0 0.0
    %3604 = vmatpush1.msra.mxu0 0.0
    %3605 = vmatprep.subr.mxu0 0.0
    %3606 = vmatpush1.msra.mxu0 0.0
    %3607 = vmatprep.subr.mxu0 0.0
    %3608 = vmatpush1.msra.mxu0 0.0
    %3609 = vmatprep.subr.mxu0 0.0
    %3610 = vmatpush1.msra.mxu0 0.0
    %3611 = vmatprep.subr.mxu0 0.0
    %3612 = vmatpush1.msra.mxu0 0.0
    %3613 = vmatprep.subr.mxu0 0.0
    %3614 = vmatpush1.msra.mxu0 0.0
    %3615 = vmatprep.subr.mxu0 0.0
    %3616 = vmatpush1.msra.mxu0 0.0
    %3617 = vmatprep.subr.mxu0 0.0
    %3618 = vmatpush1.msra.mxu0 0.0
    %3619 = vmatprep.mubr.f32.mxu0 0.0
    %3620 = vmatmul.mubr.f32.gmra.mrb[0].mxu0 %v3553
    %v3621 = vpop.f32.mrb[0].mxu0
    %v3622 = vadd.f32 %v3548, %v3621
    %v3623 = vpop.f32.mrb[0].mxu0
    %3624 = vdwg.mxu0
    %s3625 = scalar_lea.vmem %s14, 8
    %3626 = vst [vmem:[%s3625] sm:$0x3] %v3622
    %v3627 = vld [vmem:[%s7] sm:$0xff]
    %v3628 = vld [vmem:[%s7 + $0x8] sm:$0xff]
    %v3629 = vld [vmem:[%s7 + $0x10] sm:$0xff]
    %v3630 = vld [vmem:[%s7 + $0x18] sm:$0xff]
    %v3631 = vld [vmem:[%s7 + $0x20] sm:$0xff]
    %v3632 = vld [vmem:[%s7 + $0x28] sm:$0xff]
    %v3633 = vld [vmem:[%s7 + $0x30] sm:$0xff]
    %v3634 = vld [vmem:[%s7 + $0x38] sm:$0xff]
    %v3635 = vld [vmem:[%s7 + $0x40] sm:$0xff]
    %v3636 = vld [vmem:[%s7 + $0x48] sm:$0xff]
    %v3637 = vld [vmem:[%s7 + $0x50] sm:$0xff]
    %v3638 = vld [vmem:[%s7 + $0x58] sm:$0xff]
    %v3639 = vld [vmem:[%s7 + $0x60] sm:$0xff]
    %v3640 = vld [vmem:[%s7 + $0x68] sm:$0xff]
    %v3641 = vld [vmem:[%s7 + $0x70] sm:$0xff]
    %v3642 = vld [vmem:[%s7 + $0x78] sm:$0xff]
    %3643 = vmatprep.subr.mxu0 0.0
    %3644 = vmatpush1.msra.mxu0 %v3627
    %3645 = vmatprep.subr.mxu0 0.0
    %3646 = vmatpush1.msra.mxu0 %v3628
    %3647 = vmatprep.subr.mxu0 0.0
    %3648 = vmatpush1.msra.mxu0 %v3629
    %3649 = vmatprep.subr.mxu0 0.0
    %3650 = vmatpush1.msra.mxu0 %v3630
    %3651 = vmatprep.subr.mxu0 0.0
    %3652 = vmatpush1.msra.mxu0 %v3631
    %3653 = vmatprep.subr.mxu0 0.0
    %3654 = vmatpush1.msra.mxu0 %v3632
    %3655 = vmatprep.subr.mxu0 0.0
    %3656 = vmatpush1.msra.mxu0 %v3633
    %3657 = vmatprep.subr.mxu0 0.0
    %3658 = vmatpush1.msra.mxu0 %v3634
    %3659 = vmatprep.subr.mxu0 0.0
    %3660 = vmatpush1.msra.mxu0 %v3635
    %3661 = vmatprep.subr.mxu0 0.0
    %3662 = vmatpush1.msra.mxu0 %v3636
    %3663 = vmatprep.subr.mxu0 0.0
    %3664 = vmatpush1.msra.mxu0 %v3637
    %3665 = vmatprep.subr.mxu0 0.0
    %3666 = vmatpush1.msra.mxu0 %v3638
    %3667 = vmatprep.subr.mxu0 0.0
    %3668 = vmatpush1.msra.mxu0 %v3639
    %3669 = vmatprep.subr.mxu0 0.0
    %3670 = vmatpush1.msra.mxu0 %v3640
    %3671 = vmatprep.subr.mxu0 0.0
    %3672 = vmatpush1.msra.mxu0 %v3641
    %3673 = vmatprep.subr.mxu0 0.0
    %3674 = vmatpush1.msra.mxu0 %v3642
    %3675 = vmatprep.subr.mxu0 0.0
    %3676 = vmatpush1.msra.mxu0 0.0
    %3677 = vmatprep.subr.mxu0 0.0
    %3678 = vmatpush1.msra.mxu0 0.0
    %3679 = vmatprep.subr.mxu0 0.0
    %3680 = vmatpush1.msra.mxu0 0.0
    %3681 = vmatprep.subr.mxu0 0.0
    %3682 = vmatpush1.msra.mxu0 0.0
    %3683 = vmatprep.subr.mxu0 0.0
    %3684 = vmatpush1.msra.mxu0 0.0
    %3685 = vmatprep.subr.mxu0 0.0
    %3686 = vmatpush1.msra.mxu0 0.0
    %3687 = vmatprep.subr.mxu0 0.0
    %3688 = vmatpush1.msra.mxu0 0.0
    %3689 = vmatprep.subr.mxu0 0.0
    %3690 = vmatpush1.msra.mxu0 0.0
    %3691 = vmatprep.subr.mxu0 0.0
    %3692 = vmatpush1.msra.mxu0 0.0
    %3693 = vmatprep.subr.mxu0 0.0
    %3694 = vmatpush1.msra.mxu0 0.0
    %3695 = vmatprep.subr.mxu0 0.0
    %3696 = vmatpush1.msra.mxu0 0.0
    %3697 = vmatprep.subr.mxu0 0.0
    %3698 = vmatpush1.msra.mxu0 0.0
    %3699 = vmatprep.subr.mxu0 0.0
    %3700 = vmatpush1.msra.mxu0 0.0
    %3701 = vmatprep.subr.mxu0 0.0
    %3702 = vmatpush1.msra.mxu0 0.0
    %3703 = vmatprep.subr.mxu0 0.0
    %3704 = vmatpush1.msra.mxu0 0.0
    %3705 = vmatprep.subr.mxu0 0.0
    %3706 = vmatpush1.msra.mxu0 0.0
    %3707 = vmatprep.mubr.f32.mxu0 0.0
    %3708 = vmatmul.mubr.f32.gmra.mrb[0].mxu0 %v3622
    %v3709 = vpop.f32.mrb[0].mxu0
    %v3710 = vadd.f32 0.0, %v3709
    %v3711 = vpop.f32.mrb[0].mxu0
    %3712 = vdwg.mxu0
    %s3713 = sld [smem:[#allocation4 + $0x4]]
    %p3714 = scmp.gt.s32.totalorder %s3713, 0
    %v3715 = vld [vmem:[%s349] sm:$0x3]
    %s3716 = scalar_select %p3714, 1, 0
    %v3717 = vstv %s3716
    %vm3718 = vcmp.eq.s32.totalorder %v3717, 1
    %v3719 = vsel %vm3718, %v3715, %v3710
    %v3720 = vld [vmem:[#allocation11] sm:$0xff]
    %v3721 = vld [vmem:[#allocation11 + $0x8] sm:$0xff]
    %v3722 = vld [vmem:[#allocation11 + $0x10] sm:$0xff]
    %v3723 = vld [vmem:[#allocation11 + $0x18] sm:$0xff]
    %v3724 = vsel %vm368, %v3419, 0
    %3726 = vmatprep.subr.mxu0 0.0
    %3727 = vmatpush1.msra.mxu0 %v3720
    %3728 = vmatprep.subr.mxu0 0.0
    %3729 = vmatpush1.msra.mxu0 %v3721
    %3730 = vmatprep.subr.mxu0 0.0
    %3731 = vmatpush1.msra.mxu0 %v3722
    %3732 = vmatprep.subr.mxu0 0.0
    %3733 = vmatpush1.msra.mxu0 %v3723
    %3734 = vmatprep.subr.mxu0 0.0
    %3735 = vmatpush1.msra.mxu0 0.0
    %3736 = vmatprep.subr.mxu0 0.0
    %3737 = vmatpush1.msra.mxu0 0.0
    %3738 = vmatprep.subr.mxu0 0.0
    %3739 = vmatpush1.msra.mxu0 0.0
    %3740 = vmatprep.subr.mxu0 0.0
    %3741 = vmatpush1.msra.mxu0 0.0
    %3742 = vmatprep.subr.mxu0 0.0
    %3743 = vmatpush1.msra.mxu0 0.0
    %3744 = vmatprep.subr.mxu0 0.0
    %3745 = vmatpush1.msra.mxu0 0.0
    %3746 = vmatprep.subr.mxu0 0.0
    %3747 = vmatpush1.msra.mxu0 0.0
    %3748 = vmatprep.subr.mxu0 0.0
    %3749 = vmatpush1.msra.mxu0 0.0
    %3750 = vmatprep.subr.mxu0 0.0
    %3751 = vmatpush1.msra.mxu0 0.0
    %3752 = vmatprep.subr.mxu0 0.0
    %3753 = vmatpush1.msra.mxu0 0.0
    %3754 = vmatprep.subr.mxu0 0.0
    %3755 = vmatpush1.msra.mxu0 0.0
    %3756 = vmatprep.subr.mxu0 0.0
    %3757 = vmatpush1.msra.mxu0 0.0
    %3758 = vmatprep.subr.mxu0 0.0
    %3759 = vmatpush1.msra.mxu0 0.0
    %3760 = vmatprep.subr.mxu0 0.0
    %3761 = vmatpush1.msra.mxu0 0.0
    %3762 = vmatprep.subr.mxu0 0.0
    %3763 = vmatpush1.msra.mxu0 0.0
    %3764 = vmatprep.subr.mxu0 0.0
    %3765 = vmatpush1.msra.mxu0 0.0
    %3766 = vmatprep.subr.mxu0 0.0
    %3767 = vmatpush1.msra.mxu0 0.0
    %3768 = vmatprep.subr.mxu0 0.0
    %3769 = vmatpush1.msra.mxu0 0.0
    %3770 = vmatprep.subr.mxu0 0.0
    %3771 = vmatpush1.msra.mxu0 0.0
    %3772 = vmatprep.subr.mxu0 0.0
    %3773 = vmatpush1.msra.mxu0 0.0
    %3774 = vmatprep.subr.mxu0 0.0
    %3775 = vmatpush1.msra.mxu0 0.0
    %3776 = vmatprep.subr.mxu0 0.0
    %3777 = vmatpush1.msra.mxu0 0.0
    %3778 = vmatprep.subr.mxu0 0.0
    %3779 = vmatpush1.msra.mxu0 0.0
    %3780 = vmatprep.subr.mxu0 0.0
    %3781 = vmatpush1.msra.mxu0 0.0
    %3782 = vmatprep.subr.mxu0 0.0
    %3783 = vmatpush1.msra.mxu0 0.0
    %3784 = vmatprep.subr.mxu0 0.0
    %3785 = vmatpush1.msra.mxu0 0.0
    %3786 = vmatprep.subr.mxu0 0.0
    %3787 = vmatpush1.msra.mxu0 0.0
    %3788 = vmatprep.subr.mxu0 0.0
    %3789 = vmatpush1.msra.mxu0 0.0
    %3790 = vmatprep.mubr.f32.mxu0 0.0
    %3791 = vmatmul.mubr.f32.gmra.mrb[0].mxu0 %v3724
    %v3792 = vpop.f32.mrb[0].mxu0
    %v3793 = vadd.f32 0.0, %v3792
    %v3794 = vpop.f32.mrb[0].mxu0
    %3795 = vdwg.mxu0
    %v3796 = vadd.f32 %v3719, %v3793
    %v3797 = vld [vmem:[%s9] sm:$0x1]
    %v3799 = vlaneseq
    %v3800 = vshrl.u32 %v3799, 7
    %v3801 = vsub.s32 0, %v3800
    %v3802 = vrot.slane %v3797, %v3801
    %v3804 = vadd.f32 %v3796, %v3802
    %v3805 = vmul.f32 %v3804, %v147
    %v3806 = vxor.u32 %v3805, 2147483648
    %v3807 = vmul.f32 %v3806, 1.442695
    %v3808 = vpow.pop %v3807
    %v3809 = vadd.f32 %v3808, 1.0
    %v3810 = vrcp.pop %v3809
    %v3811 = vmul.f32 1.0, %v3810
    %v3812 = vmul.f32 %v3811, %v147
    %v3813 = vadd.f32 %v3812, %v148
    %v3814 = vmul.f32 %v3813, %v3410
    %3816 = vrot.lane.b32.xlu0 %v3813, 64
    %v3817 = vpop.permute.xlu0 %3816
    %v3819 = vmul.f32 %v3813, %v3817
    %3821 = vrot.lane.b32.xlu0 %v3819, 32
    %v3822 = vpop.permute.xlu0 %3821
    %v3824 = vadd.f32 %v3814, %v3822
    %v3825 = vtanh.pop %v3824
    %3827 = vrot.lane.b32.xlu0 %v3825, 64
    %v3828 = vpop.permute.xlu0 %3827
    %v3830 = vmul.f32 %v3813, %v3828
    %3832 = vrot.lane.b32.xlu0 %v3830, 32
    %v3833 = vpop.permute.xlu0 %3832
    %3835 = vrot.lane.b32.xlu0 %v3538, 64
    %v3836 = vpop.permute.xlu0 %3835
    %v3838 = vsel %vm368, %v3833, %v3836
    %v3839 = vld [vmem:[#allocation13] sm:$0xff]
    %v3840 = vld [vmem:[#allocation13 + $0x8] sm:$0xff]
    %v3841 = vld [vmem:[#allocation13 + $0x10] sm:$0xff]
    %v3842 = vld [vmem:[#allocation13 + $0x18] sm:$0xff]
    %v3843 = vld [vmem:[#allocation13 + $0x20] sm:$0xff]
    %v3844 = vld [vmem:[#allocation13 + $0x28] sm:$0xff]
    %v3845 = vld [vmem:[#allocation13 + $0x30] sm:$0xff]
    %v3846 = vld [vmem:[#allocation13 + $0x38] sm:$0xff]
    %v3847 = vld [vmem:[%s11] sm:$0x1]
    %v3849 = vlaneseq
    %v3850 = vshrl.u32 %v3849, 7
    %v3851 = vsub.s32 0, %v3850
    %v3852 = vrot.slane %v3847, %v3851
    %v3855 = vsel %vm497, %v3838, 0
    %3857 = vmatprep.subr.mxu0 0.0
    %3858 = vmatpush1.msra.mxu0 %v3839
    %3859 = vmatprep.subr.mxu0 0.0
    %3860 = vmatpush1.msra.mxu0 %v3840
    %3861 = vmatprep.subr.mxu0 0.0
    %3862 = vmatpush1.msra.mxu0 %v3841
    %3863 = vmatprep.subr.mxu0 0.0
    %3864 = vmatpush1.msra.mxu0 %v3842
    %3865 = vmatprep.subr.mxu0 0.0
    %3866 = vmatpush1.msra.mxu0 %v3843
    %3867 = vmatprep.subr.mxu0 0.0
    %3868 = vmatpush1.msra.mxu0 %v3844
    %3869 = vmatprep.subr.mxu0 0.0
    %3870 = vmatpush1.msra.mxu0 %v3845
    %3871 = vmatprep.subr.mxu0 0.0
    %3872 = vmatpush1.msra.mxu0 %v3846
    %3873 = vmatprep.subr.mxu0 0.0
    %3874 = vmatpush1.msra.mxu0 0.0
    %3875 = vmatprep.subr.mxu0 0.0
    %3876 = vmatpush1.msra.mxu0 0.0
    %3877 = vmatprep.subr.mxu0 0.0
    %3878 = vmatpush1.msra.mxu0 0.0
    %3879 = vmatprep.subr.mxu0 0.0
    %3880 = vmatpush1.msra.mxu0 0.0
    %3881 = vmatprep.subr.mxu0 0.0
    %3882 = vmatpush1.msra.mxu0 0.0
    %3883 = vmatprep.subr.mxu0 0.0
    %3884 = vmatpush1.msra.mxu0 0.0
    %3885 = vmatprep.subr.mxu0 0.0
    %3886 = vmatpush1.msra.mxu0 0.0
    %3887 = vmatprep.subr.mxu0 0.0
    %3888 = vmatpush1.msra.mxu0 0.0
    %3889 = vmatprep.subr.mxu0 0.0
    %3890 = vmatpush1.msra.mxu0 0.0
    %3891 = vmatprep.subr.mxu0 0.0
    %3892 = vmatpush1.msra.mxu0 0.0
    %3893 = vmatprep.subr.mxu0 0.0
    %3894 = vmatpush1.msra.mxu0 0.0
    %3895 = vmatprep.subr.mxu0 0.0
    %3896 = vmatpush1.msra.mxu0 0.0
    %3897 = vmatprep.subr.mxu0 0.0
    %3898 = vmatpush1.msra.mxu0 0.0
    %3899 = vmatprep.subr.mxu0 0.0
    %3900 = vmatpush1.msra.mxu0 0.0
    %3901 = vmatprep.subr.mxu0 0.0
    %3902 = vmatpush1.msra.mxu0 0.0
    %3903 = vmatprep.subr.mxu0 0.0
    %3904 = vmatpush1.msra.mxu0 0.0
    %3905 = vmatprep.subr.mxu0 0.0
    %3906 = vmatpush1.msra.mxu0 0.0
    %3907 = vmatprep.subr.mxu0 0.0
    %3908 = vmatpush1.msra.mxu0 0.0
    %3909 = vmatprep.subr.mxu0 0.0
    %3910 = vmatpush1.msra.mxu0 0.0
    %3911 = vmatprep.subr.mxu0 0.0
    %3912 = vmatpush1.msra.mxu0 0.0
    %3913 = vmatprep.subr.mxu0 0.0
    %3914 = vmatpush1.msra.mxu0 0.0
    %3915 = vmatprep.subr.mxu0 0.0
    %3916 = vmatpush1.msra.mxu0 0.0
    %3917 = vmatprep.subr.mxu0 0.0
    %3918 = vmatpush1.msra.mxu0 0.0
    %3919 = vmatprep.subr.mxu0 0.0
    %3920 = vmatpush1.msra.mxu0 0.0
    %3921 = vmatprep.mubr.f32.mxu0 0.0
    %3922 = vmatmul.mubr.f32.gmra.mrb[0].mxu0 %v3855
    %v3923 = vpop.f32.mrb[0].mxu0
    %v3924 = vadd.f32 %v3852, %v3923
    %v3925 = vpop.f32.mrb[0].mxu0
    %3926 = vdwg.mxu0
    %v3927 = vmul.f32 %v3924, %v147
    %v3928 = vxor.u32 %v3927, 2147483648
    %v3929 = vmul.f32 %v3928, 1.442695
    %v3930 = vpow.pop %v3929
    %v3931 = vadd.f32 %v3930, 1.0
    %v3932 = vrcp.pop %v3931
    %v3933 = vmul.f32 1.0, %v3932
    %v3934 = vmul.f32 %v3933, %v147
    %v3935 = vadd.f32 %v3934, %v148
    %v3936 = vmul.f32 %v3935, %v3532
    %3938 = vrot.lane.b32.xlu0 %v3935, 64
    %v3939 = vpop.permute.xlu0 %3938
    %v3941 = vmul.f32 %v3935, %v3939
    %3943 = vrot.lane.b32.xlu0 %v3941, 32
    %v3944 = vpop.permute.xlu0 %3943
    %v3946 = vadd.f32 %v3936, %v3944
    %v3947 = vtanh.pop %v3946
    %3949 = vrot.lane.b32.xlu0 %v3947, 64
    %v3950 = vpop.permute.xlu0 %3949
    %v3952 = vmul.f32 %v3935, %v3950
    %v3953 = vld [vmem:[#allocation14] sm:$0xff]
    %v3954 = vld [vmem:[#allocation14 + $0x8] sm:$0xff]
    %v3955 = vld [vmem:[#allocation14 + $0x10] sm:$0xff]
    %v3956 = vld [vmem:[#allocation14 + $0x18] sm:$0xff]
    %v3957 = vld [vmem:[%s13] sm:$0x1]
    %v3959 = vlaneseq
    %v3960 = vshrl.u32 %v3959, 7
    %v3961 = vsub.s32 0, %v3960
    %v3962 = vrot.slane %v3957, %v3961
    %3965 = vrot.lane.b32.xlu0 %v3952, 32
    %v3966 = vpop.permute.xlu0 %3965
    %v3967 = vsel %vm368, %v3966, 0
    %3969 = vmatprep.subr.mxu0 0.0
    %3970 = vmatpush1.msra.mxu0 %v3953
    %3971 = vmatprep.subr.mxu0 0.0
    %3972 = vmatpush1.msra.mxu0 %v3954
    %3973 = vmatprep.subr.mxu0 0.0
    %3974 = vmatpush1.msra.mxu0 %v3955
    %3975 = vmatprep.subr.mxu0 0.0
    %3976 = vmatpush1.msra.mxu0 %v3956
    %3977 = vmatprep.subr.mxu0 0.0
    %3978 = vmatpush1.msra.mxu0 0.0
    %3979 = vmatprep.subr.mxu0 0.0
    %3980 = vmatpush1.msra.mxu0 0.0
    %3981 = vmatprep.subr.mxu0 0.0
    %3982 = vmatpush1.msra.mxu0 0.0
    %3983 = vmatprep.subr.mxu0 0.0
    %3984 = vmatpush1.msra.mxu0 0.0
    %3985 = vmatprep.subr.mxu0 0.0
    %3986 = vmatpush1.msra.mxu0 0.0
    %3987 = vmatprep.subr.mxu0 0.0
    %3988 = vmatpush1.msra.mxu0 0.0
    %3989 = vmatprep.subr.mxu0 0.0
    %3990 = vmatpush1.msra.mxu0 0.0
    %3991 = vmatprep.subr.mxu0 0.0
    %3992 = vmatpush1.msra.mxu0 0.0
    %3993 = vmatprep.subr.mxu0 0.0
    %3994 = vmatpush1.msra.mxu0 0.0
    %3995 = vmatprep.subr.mxu0 0.0
    %3996 = vmatpush1.msra.mxu0 0.0
    %3997 = vmatprep.subr.mxu0 0.0
    %3998 = vmatpush1.msra.mxu0 0.0
    %3999 = vmatprep.subr.mxu0 0.0
    %4000 = vmatpush1.msra.mxu0 0.0
    %4001 = vmatprep.subr.mxu0 0.0
    %4002 = vmatpush1.msra.mxu0 0.0
    %4003 = vmatprep.subr.mxu0 0.0
    %4004 = vmatpush1.msra.mxu0 0.0
    %4005 = vmatprep.subr.mxu0 0.0
    %4006 = vmatpush1.msra.mxu0 0.0
    %4007 = vmatprep.subr.mxu0 0.0
    %4008 = vmatpush1.msra.mxu0 0.0
    %4009 = vmatprep.subr.mxu0 0.0
    %4010 = vmatpush1.msra.mxu0 0.0
    %4011 = vmatprep.subr.mxu0 0.0
    %4012 = vmatpush1.msra.mxu0 0.0
    %4013 = vmatprep.subr.mxu0 0.0
    %4014 = vmatpush1.msra.mxu0 0.0
    %4015 = vmatprep.subr.mxu0 0.0
    %4016 = vmatpush1.msra.mxu0 0.0
    %4017 = vmatprep.subr.mxu0 0.0
    %4018 = vmatpush1.msra.mxu0 0.0
    %4019 = vmatprep.subr.mxu0 0.0
    %4020 = vmatpush1.msra.mxu0 0.0
    %4021 = vmatprep.subr.mxu0 0.0
    %4022 = vmatpush1.msra.mxu0 0.0
    %4023 = vmatprep.subr.mxu0 0.0
    %4024 = vmatpush1.msra.mxu0 0.0
    %4025 = vmatprep.subr.mxu0 0.0
    %4026 = vmatpush1.msra.mxu0 0.0
    %4027 = vmatprep.subr.mxu0 0.0
    %4028 = vmatpush1.msra.mxu0 0.0
    %4029 = vmatprep.subr.mxu0 0.0
    %4030 = vmatpush1.msra.mxu0 0.0
    %4031 = vmatprep.subr.mxu0 0.0
    %4032 = vmatpush1.msra.mxu0 0.0
    %4033 = vmatprep.mubr.f32.mxu0 0.0
    %4034 = vmatmul.mubr.f32.gmra.mrb[0].mxu0 %v3967
    %v4035 = vpop.f32.mrb[0].mxu0
    %v4036 = vadd.f32 %v3962, %v4035
    %v4037 = vpop.f32.mrb[0].mxu0
    %4038 = vdwg.mxu0
    %s4039 = scalar_lea.vmem %s14, 10
    %4040 = vst [vmem:[%s4039] sm:$0x3] %v4036
    %v4041 = vld [vmem:[%s7] sm:$0xff]
    %v4042 = vld [vmem:[%s7 + $0x8] sm:$0xff]
    %v4043 = vld [vmem:[%s7 + $0x10] sm:$0xff]
    %v4044 = vld [vmem:[%s7 + $0x18] sm:$0xff]
    %v4045 = vld [vmem:[%s7 + $0x20] sm:$0xff]
    %v4046 = vld [vmem:[%s7 + $0x28] sm:$0xff]
    %v4047 = vld [vmem:[%s7 + $0x30] sm:$0xff]
    %v4048 = vld [vmem:[%s7 + $0x38] sm:$0xff]
    %v4049 = vld [vmem:[%s7 + $0x40] sm:$0xff]
    %v4050 = vld [vmem:[%s7 + $0x48] sm:$0xff]
    %v4051 = vld [vmem:[%s7 + $0x50] sm:$0xff]
    %v4052 = vld [vmem:[%s7 + $0x58] sm:$0xff]
    %v4053 = vld [vmem:[%s7 + $0x60] sm:$0xff]
    %v4054 = vld [vmem:[%s7 + $0x68] sm:$0xff]
    %v4055 = vld [vmem:[%s7 + $0x70] sm:$0xff]
    %v4056 = vld [vmem:[%s7 + $0x78] sm:$0xff]
    %4057 = vmatprep.subr.mxu0 0.0
    %4058 = vmatpush1.msra.mxu0 %v4041
    %4059 = vmatprep.subr.mxu0 0.0
    %4060 = vmatpush1.msra.mxu0 %v4042
    %4061 = vmatprep.subr.mxu0 0.0
    %4062 = vmatpush1.msra.mxu0 %v4043
    %4063 = vmatprep.subr.mxu0 0.0
    %4064 = vmatpush1.msra.mxu0 %v4044
    %4065 = vmatprep.subr.mxu0 0.0
    %4066 = vmatpush1.msra.mxu0 %v4045
    %4067 = vmatprep.subr.mxu0 0.0
    %4068 = vmatpush1.msra.mxu0 %v4046
    %4069 = vmatprep.subr.mxu0 0.0
    %4070 = vmatpush1.msra.mxu0 %v4047
    %4071 = vmatprep.subr.mxu0 0.0
    %4072 = vmatpush1.msra.mxu0 %v4048
    %4073 = vmatprep.subr.mxu0 0.0
    %4074 = vmatpush1.msra.mxu0 %v4049
    %4075 = vmatprep.subr.mxu0 0.0
    %4076 = vmatpush1.msra.mxu0 %v4050
    %4077 = vmatprep.subr.mxu0 0.0
    %4078 = vmatpush1.msra.mxu0 %v4051
    %4079 = vmatprep.subr.mxu0 0.0
    %4080 = vmatpush1.msra.mxu0 %v4052
    %4081 = vmatprep.subr.mxu0 0.0
    %4082 = vmatpush1.msra.mxu0 %v4053
    %4083 = vmatprep.subr.mxu0 0.0
    %4084 = vmatpush1.msra.mxu0 %v4054
    %4085 = vmatprep.subr.mxu0 0.0
    %4086 = vmatpush1.msra.mxu0 %v4055
    %4087 = vmatprep.subr.mxu0 0.0
    %4088 = vmatpush1.msra.mxu0 %v4056
    %4089 = vmatprep.subr.mxu0 0.0
    %4090 = vmatpush1.msra.mxu0 0.0
    %4091 = vmatprep.subr.mxu0 0.0
    %4092 = vmatpush1.msra.mxu0 0.0
    %4093 = vmatprep.subr.mxu0 0.0
    %4094 = vmatpush1.msra.mxu0 0.0
    %4095 = vmatprep.subr.mxu0 0.0
    %4096 = vmatpush1.msra.mxu0 0.0
    %4097 = vmatprep.subr.mxu0 0.0
    %4098 = vmatpush1.msra.mxu0 0.0
    %4099 = vmatprep.subr.mxu0 0.0
    %4100 = vmatpush1.msra.mxu0 0.0
    %4101 = vmatprep.subr.mxu0 0.0
    %4102 = vmatpush1.msra.mxu0 0.0
    %4103 = vmatprep.subr.mxu0 0.0
    %4104 = vmatpush1.msra.mxu0 0.0
    %4105 = vmatprep.subr.mxu0 0.0
    %4106 = vmatpush1.msra.mxu0 0.0
    %4107 = vmatprep.subr.mxu0 0.0
    %4108 = vmatpush1.msra.mxu0 0.0
    %4109 = vmatprep.subr.mxu0 0.0
    %4110 = vmatpush1.msra.mxu0 0.0
    %4111 = vmatprep.subr.mxu0 0.0
    %4112 = vmatpush1.msra.mxu0 0.0
    %4113 = vmatprep.subr.mxu0 0.0
    %4114 = vmatpush1.msra.mxu0 0.0
    %4115 = vmatprep.subr.mxu0 0.0
    %4116 = vmatpush1.msra.mxu0 0.0
    %4117 = vmatprep.subr.mxu0 0.0
    %4118 = vmatpush1.msra.mxu0 0.0
    %4119 = vmatprep.subr.mxu0 0.0
    %4120 = vmatpush1.msra.mxu0 0.0
    %4121 = vmatprep.mubr.f32.mxu0 0.0
    %4122 = vmatmul.mubr.f32.gmra.mrb[0].mxu0 %v4036
    %v4123 = vpop.f32.mrb[0].mxu0
    %v4124 = vadd.f32 0.0, %v4123
    %v4125 = vpop.f32.mrb[0].mxu0
    %4126 = vdwg.mxu0
    %s4127 = sld [smem:[#allocation4 + $0x5]]
    %p4128 = scmp.gt.s32.totalorder %s4127, 0
    %v4129 = vld [vmem:[%s353] sm:$0x3]
    %s4130 = scalar_select %p4128, 1, 0
    %v4131 = vstv %s4130
    %vm4132 = vcmp.eq.s32.totalorder %v4131, 1
    %v4133 = vsel %vm4132, %v4129, %v4124
    %v4134 = vld [vmem:[#allocation11] sm:$0xff]
    %v4135 = vld [vmem:[#allocation11 + $0x8] sm:$0xff]
    %v4136 = vld [vmem:[#allocation11 + $0x10] sm:$0xff]
    %v4137 = vld [vmem:[#allocation11 + $0x18] sm:$0xff]
    %v4138 = vsel %vm368, %v3833, 0
    %4140 = vmatprep.subr.mxu0 0.0
    %4141 = vmatpush1.msra.mxu0 %v4134
    %4142 = vmatprep.subr.mxu0 0.0
    %4143 = vmatpush1.msra.mxu0 %v4135
    %4144 = vmatprep.subr.mxu0 0.0
    %4145 = vmatpush1.msra.mxu0 %v4136
    %4146 = vmatprep.subr.mxu0 0.0
    %4147 = vmatpush1.msra.mxu0 %v4137
    %4148 = vmatprep.subr.mxu0 0.0
    %4149 = vmatpush1.msra.mxu0 0.0
    %4150 = vmatprep.subr.mxu0 0.0
    %4151 = vmatpush1.msra.mxu0 0.0
    %4152 = vmatprep.subr.mxu0 0.0
    %4153 = vmatpush1.msra.mxu0 0.0
    %4154 = vmatprep.subr.mxu0 0.0
    %4155 = vmatpush1.msra.mxu0 0.0
    %4156 = vmatprep.subr.mxu0 0.0
    %4157 = vmatpush1.msra.mxu0 0.0
    %4158 = vmatprep.subr.mxu0 0.0
    %4159 = vmatpush1.msra.mxu0 0.0
    %4160 = vmatprep.subr.mxu0 0.0
    %4161 = vmatpush1.msra.mxu0 0.0
    %4162 = vmatprep.subr.mxu0 0.0
    %4163 = vmatpush1.msra.mxu0 0.0
    %4164 = vmatprep.subr.mxu0 0.0
    %4165 = vmatpush1.msra.mxu0 0.0
    %4166 = vmatprep.subr.mxu0 0.0
    %4167 = vmatpush1.msra.mxu0 0.0
    %4168 = vmatprep.subr.mxu0 0.0
    %4169 = vmatpush1.msra.mxu0 0.0
    %4170 = vmatprep.subr.mxu0 0.0
    %4171 = vmatpush1.msra.mxu0 0.0
    %4172 = vmatprep.subr.mxu0 0.0
    %4173 = vmatpush1.msra.mxu0 0.0
    %4174 = vmatprep.subr.mxu0 0.0
    %4175 = vmatpush1.msra.mxu0 0.0
    %4176 = vmatprep.subr.mxu0 0.0
    %4177 = vmatpush1.msra.mxu0 0.0
    %4178 = vmatprep.subr.mxu0 0.0
    %4179 = vmatpush1.msra.mxu0 0.0
    %4180 = vmatprep.subr.mxu0 0.0
    %4181 = vmatpush1.msra.mxu0 0.0
    %4182 = vmatprep.subr.mxu0 0.0
    %4183 = vmatpush1.msra.mxu0 0.0
    %4184 = vmatprep.subr.mxu0 0.0
    %4185 = vmatpush1.msra.mxu0 0.0
    %4186 = vmatprep.subr.mxu0 0.0
    %4187 = vmatpush1.msra.mxu0 0.0
    %4188 = vmatprep.subr.mxu0 0.0
    %4189 = vmatpush1.msra.mxu0 0.0
    %4190 = vmatprep.subr.mxu0 0.0
    %4191 = vmatpush1.msra.mxu0 0.0
    %4192 = vmatprep.subr.mxu0 0.0
    %4193 = vmatpush1.msra.mxu0 0.0
    %4194 = vmatprep.subr.mxu0 0.0
    %4195 = vmatpush1.msra.mxu0 0.0
    %4196 = vmatprep.subr.mxu0 0.0
    %4197 = vmatpush1.msra.mxu0 0.0
    %4198 = vmatprep.subr.mxu0 0.0
    %4199 = vmatpush1.msra.mxu0 0.0
    %4200 = vmatprep.subr.mxu0 0.0
    %4201 = vmatpush1.msra.mxu0 0.0
    %4202 = vmatprep.subr.mxu0 0.0
    %4203 = vmatpush1.msra.mxu0 0.0
    %4204 = vmatprep.mubr.f32.mxu0 0.0
    %4205 = vmatmul.mubr.f32.gmra.mrb[0].mxu0 %v4138
    %v4206 = vpop.f32.mrb[0].mxu0
    %v4207 = vadd.f32 0.0, %v4206
    %v4208 = vpop.f32.mrb[0].mxu0
    %4209 = vdwg.mxu0
    %v4210 = vadd.f32 %v4133, %v4207
    %v4211 = vld [vmem:[%s9] sm:$0x1]
    %v4213 = vlaneseq
    %v4214 = vshrl.u32 %v4213, 7
    %v4215 = vsub.s32 0, %v4214
    %v4216 = vrot.slane %v4211, %v4215
    %v4218 = vadd.f32 %v4210, %v4216
    %v4219 = vmul.f32 %v4218, %v147
    %v4220 = vxor.u32 %v4219, 2147483648
    %v4221 = vmul.f32 %v4220, 1.442695
    %v4222 = vpow.pop %v4221
    %v4223 = vadd.f32 %v4222, 1.0
    %v4224 = vrcp.pop %v4223
    %v4225 = vmul.f32 1.0, %v4224
    %v4226 = vmul.f32 %v4225, %v147
    %v4227 = vadd.f32 %v4226, %v148
    %v4228 = vmul.f32 %v4227, %v3824
    %4230 = vrot.lane.b32.xlu0 %v4227, 64
    %v4231 = vpop.permute.xlu0 %4230
    %v4233 = vmul.f32 %v4227, %v4231
    %4235 = vrot.lane.b32.xlu0 %v4233, 32
    %v4236 = vpop.permute.xlu0 %4235
    %v4238 = vadd.f32 %v4228, %v4236
    %v4239 = vtanh.pop %v4238
    %4241 = vrot.lane.b32.xlu0 %v4239, 64
    %v4242 = vpop.permute.xlu0 %4241
    %v4244 = vmul.f32 %v4227, %v4242
    %4246 = vrot.lane.b32.xlu0 %v4244, 32
    %v4247 = vpop.permute.xlu0 %4246
    %4249 = vrot.lane.b32.xlu0 %v3952, 64
    %v4250 = vpop.permute.xlu0 %4249
    %v4252 = vsel %vm368, %v4247, %v4250
    %v4253 = vld [vmem:[#allocation13] sm:$0xff]
    %v4254 = vld [vmem:[#allocation13 + $0x8] sm:$0xff]
    %v4255 = vld [vmem:[#allocation13 + $0x10] sm:$0xff]
    %v4256 = vld [vmem:[#allocation13 + $0x18] sm:$0xff]
    %v4257 = vld [vmem:[#allocation13 + $0x20] sm:$0xff]
    %v4258 = vld [vmem:[#allocation13 + $0x28] sm:$0xff]
    %v4259 = vld [vmem:[#allocation13 + $0x30] sm:$0xff]
    %v4260 = vld [vmem:[#allocation13 + $0x38] sm:$0xff]
    %v4261 = vld [vmem:[%s11] sm:$0x1]
    %v4263 = vlaneseq
    %v4264 = vshrl.u32 %v4263, 7
    %v4265 = vsub.s32 0, %v4264
    %v4266 = vrot.slane %v4261, %v4265
    %v4269 = vsel %vm497, %v4252, 0
    %4271 = vmatprep.subr.mxu0 0.0
    %4272 = vmatpush1.msra.mxu0 %v4253
    %4273 = vmatprep.subr.mxu0 0.0
    %4274 = vmatpush1.msra.mxu0 %v4254
    %4275 = vmatprep.subr.mxu0 0.0
    %4276 = vmatpush1.msra.mxu0 %v4255
    %4277 = vmatprep.subr.mxu0 0.0
    %4278 = vmatpush1.msra.mxu0 %v4256
    %4279 = vmatprep.subr.mxu0 0.0
    %4280 = vmatpush1.msra.mxu0 %v4257
    %4281 = vmatprep.subr.mxu0 0.0
    %4282 = vmatpush1.msra.mxu0 %v4258
    %4283 = vmatprep.subr.mxu0 0.0
    %4284 = vmatpush1.msra.mxu0 %v4259
    %4285 = vmatprep.subr.mxu0 0.0
    %4286 = vmatpush1.msra.mxu0 %v4260
    %4287 = vmatprep.subr.mxu0 0.0
    %4288 = vmatpush1.msra.mxu0 0.0
    %4289 = vmatprep.subr.mxu0 0.0
    %4290 = vmatpush1.msra.mxu0 0.0
    %4291 = vmatprep.subr.mxu0 0.0
    %4292 = vmatpush1.msra.mxu0 0.0
    %4293 = vmatprep.subr.mxu0 0.0
    %4294 = vmatpush1.msra.mxu0 0.0
    %4295 = vmatprep.subr.mxu0 0.0
    %4296 = vmatpush1.msra.mxu0 0.0
    %4297 = vmatprep.subr.mxu0 0.0
    %4298 = vmatpush1.msra.mxu0 0.0
    %4299 = vmatprep.subr.mxu0 0.0
    %4300 = vmatpush1.msra.mxu0 0.0
    %4301 = vmatprep.subr.mxu0 0.0
    %4302 = vmatpush1.msra.mxu0 0.0
    %4303 = vmatprep.subr.mxu0 0.0
    %4304 = vmatpush1.msra.mxu0 0.0
    %4305 = vmatprep.subr.mxu0 0.0
    %4306 = vmatpush1.msra.mxu0 0.0
    %4307 = vmatprep.subr.mxu0 0.0
    %4308 = vmatpush1.msra.mxu0 0.0
    %4309 = vmatprep.subr.mxu0 0.0
    %4310 = vmatpush1.msra.mxu0 0.0
    %4311 = vmatprep.subr.mxu0 0.0
    %4312 = vmatpush1.msra.mxu0 0.0
    %4313 = vmatprep.subr.mxu0 0.0
    %4314 = vmatpush1.msra.mxu0 0.0
    %4315 = vmatprep.subr.mxu0 0.0
    %4316 = vmatpush1.msra.mxu0 0.0
    %4317 = vmatprep.subr.mxu0 0.0
    %4318 = vmatpush1.msra.mxu0 0.0
    %4319 = vmatprep.subr.mxu0 0.0
    %4320 = vmatpush1.msra.mxu0 0.0
    %4321 = vmatprep.subr.mxu0 0.0
    %4322 = vmatpush1.msra.mxu0 0.0
    %4323 = vmatprep.subr.mxu0 0.0
    %4324 = vmatpush1.msra.mxu0 0.0
    %4325 = vmatprep.subr.mxu0 0.0
    %4326 = vmatpush1.msra.mxu0 0.0
    %4327 = vmatprep.subr.mxu0 0.0
    %4328 = vmatpush1.msra.mxu0 0.0
    %4329 = vmatprep.subr.mxu0 0.0
    %4330 = vmatpush1.msra.mxu0 0.0
    %4331 = vmatprep.subr.mxu0 0.0
    %4332 = vmatpush1.msra.mxu0 0.0
    %4333 = vmatprep.subr.mxu0 0.0
    %4334 = vmatpush1.msra.mxu0 0.0
    %4335 = vmatprep.mubr.f32.mxu0 0.0
    %4336 = vmatmul.mubr.f32.gmra.mrb[0].mxu0 %v4269
    %v4337 = vpop.f32.mrb[0].mxu0
    %v4338 = vadd.f32 %v4266, %v4337
    %v4339 = vpop.f32.mrb[0].mxu0
    %4340 = vdwg.mxu0
    %v4341 = vmul.f32 %v4338, %v147
    %v4342 = vxor.u32 %v4341, 2147483648
    %v4343 = vmul.f32 %v4342, 1.442695
    %v4344 = vpow.pop %v4343
    %v4345 = vadd.f32 %v4344, 1.0
    %v4346 = vrcp.pop %v4345
    %v4347 = vmul.f32 1.0, %v4346
    %v4348 = vmul.f32 %v4347, %v147
    %v4349 = vadd.f32 %v4348, %v148
    %v4350 = vmul.f32 %v4349, %v3946
    %4352 = vrot.lane.b32.xlu0 %v4349, 64
    %v4353 = vpop.permute.xlu0 %4352
    %v4355 = vmul.f32 %v4349, %v4353
    %4357 = vrot.lane.b32.xlu0 %v4355, 32
    %v4358 = vpop.permute.xlu0 %4357
    %v4360 = vadd.f32 %v4350, %v4358
    %v4361 = vtanh.pop %v4360
    %4363 = vrot.lane.b32.xlu0 %v4361, 64
    %v4364 = vpop.permute.xlu0 %4363
    %v4366 = vmul.f32 %v4349, %v4364
    %v4367 = vld [vmem:[#allocation14] sm:$0xff]
    %v4368 = vld [vmem:[#allocation14 + $0x8] sm:$0xff]
    %v4369 = vld [vmem:[#allocation14 + $0x10] sm:$0xff]
    %v4370 = vld [vmem:[#allocation14 + $0x18] sm:$0xff]
    %v4371 = vld [vmem:[%s13] sm:$0x1]
    %v4373 = vlaneseq
    %v4374 = vshrl.u32 %v4373, 7
    %v4375 = vsub.s32 0, %v4374
    %v4376 = vrot.slane %v4371, %v4375
    %4379 = vrot.lane.b32.xlu0 %v4366, 32
    %v4380 = vpop.permute.xlu0 %4379
    %v4381 = vsel %vm368, %v4380, 0
    %4383 = vmatprep.subr.mxu0 0.0
    %4384 = vmatpush1.msra.mxu0 %v4367
    %4385 = vmatprep.subr.mxu0 0.0
    %4386 = vmatpush1.msra.mxu0 %v4368
    %4387 = vmatprep.subr.mxu0 0.0
    %4388 = vmatpush1.msra.mxu0 %v4369
    %4389 = vmatprep.subr.mxu0 0.0
    %4390 = vmatpush1.msra.mxu0 %v4370
    %4391 = vmatprep.subr.mxu0 0.0
    %4392 = vmatpush1.msra.mxu0 0.0
    %4393 = vmatprep.subr.mxu0 0.0
    %4394 = vmatpush1.msra.mxu0 0.0
    %4395 = vmatprep.subr.mxu0 0.0
    %4396 = vmatpush1.msra.mxu0 0.0
    %4397 = vmatprep.subr.mxu0 0.0
    %4398 = vmatpush1.msra.mxu0 0.0
    %4399 = vmatprep.subr.mxu0 0.0
    %4400 = vmatpush1.msra.mxu0 0.0
    %4401 = vmatprep.subr.mxu0 0.0
    %4402 = vmatpush1.msra.mxu0 0.0
    %4403 = vmatprep.subr.mxu0 0.0
    %4404 = vmatpush1.msra.mxu0 0.0
    %4405 = vmatprep.subr.mxu0 0.0
    %4406 = vmatpush1.msra.mxu0 0.0
    %4407 = vmatprep.subr.mxu0 0.0
    %4408 = vmatpush1.msra.mxu0 0.0
    %4409 = vmatprep.subr.mxu0 0.0
    %4410 = vmatpush1.msra.mxu0 0.0
    %4411 = vmatprep.subr.mxu0 0.0
    %4412 = vmatpush1.msra.mxu0 0.0
    %4413 = vmatprep.subr.mxu0 0.0
    %4414 = vmatpush1.msra.mxu0 0.0
    %4415 = vmatprep.subr.mxu0 0.0
    %4416 = vmatpush1.msra.mxu0 0.0
    %4417 = vmatprep.subr.mxu0 0.0
    %4418 = vmatpush1.msra.mxu0 0.0
    %4419 = vmatprep.subr.mxu0 0.0
    %4420 = vmatpush1.msra.mxu0 0.0
    %4421 = vmatprep.subr.mxu0 0.0
    %4422 = vmatpush1.msra.mxu0 0.0
    %4423 = vmatprep.subr.mxu0 0.0
    %4424 = vmatpush1.msra.mxu0 0.0
    %4425 = vmatprep.subr.mxu0 0.0
    %4426 = vmatpush1.msra.mxu0 0.0
    %4427 = vmatprep.subr.mxu0 0.0
    %4428 = vmatpush1.msra.mxu0 0.0
    %4429 = vmatprep.subr.mxu0 0.0
    %4430 = vmatpush1.msra.mxu0 0.0
    %4431 = vmatprep.subr.mxu0 0.0
    %4432 = vmatpush1.msra.mxu0 0.0
    %4433 = vmatprep.subr.mxu0 0.0
    %4434 = vmatpush1.msra.mxu0 0.0
    %4435 = vmatprep.subr.mxu0 0.0
    %4436 = vmatpush1.msra.mxu0 0.0
    %4437 = vmatprep.subr.mxu0 0.0
    %4438 = vmatpush1.msra.mxu0 0.0
    %4439 = vmatprep.subr.mxu0 0.0
    %4440 = vmatpush1.msra.mxu0 0.0
    %4441 = vmatprep.subr.mxu0 0.0
    %4442 = vmatpush1.msra.mxu0 0.0
    %4443 = vmatprep.subr.mxu0 0.0
    %4444 = vmatpush1.msra.mxu0 0.0
    %4445 = vmatprep.subr.mxu0 0.0
    %4446 = vmatpush1.msra.mxu0 0.0
    %4447 = vmatprep.mubr.f32.mxu0 0.0
    %4448 = vmatmul.mubr.f32.gmra.mrb[0].mxu0 %v4381
    %v4449 = vpop.f32.mrb[0].mxu0
    %v4450 = vadd.f32 %v4376, %v4449
    %v4451 = vpop.f32.mrb[0].mxu0
    %4452 = vdwg.mxu0
    %s4453 = scalar_lea.vmem %s14, 12
    %4454 = vst [vmem:[%s4453] sm:$0x3] %v4450
    %v4455 = vld [vmem:[%s7] sm:$0xff]
    %v4456 = vld [vmem:[%s7 + $0x8] sm:$0xff]
    %v4457 = vld [vmem:[%s7 + $0x10] sm:$0xff]
    %v4458 = vld [vmem:[%s7 + $0x18] sm:$0xff]
    %v4459 = vld [vmem:[%s7 + $0x20] sm:$0xff]
    %v4460 = vld [vmem:[%s7 + $0x28] sm:$0xff]
    %v4461 = vld [vmem:[%s7 + $0x30] sm:$0xff]
    %v4462 = vld [vmem:[%s7 + $0x38] sm:$0xff]
    %v4463 = vld [vmem:[%s7 + $0x40] sm:$0xff]
    %v4464 = vld [vmem:[%s7 + $0x48] sm:$0xff]
    %v4465 = vld [vmem:[%s7 + $0x50] sm:$0xff]
    %v4466 = vld [vmem:[%s7 + $0x58] sm:$0xff]
    %v4467 = vld [vmem:[%s7 + $0x60] sm:$0xff]
    %v4468 = vld [vmem:[%s7 + $0x68] sm:$0xff]
    %v4469 = vld [vmem:[%s7 + $0x70] sm:$0xff]
    %v4470 = vld [vmem:[%s7 + $0x78] sm:$0xff]
    %4471 = vmatprep.subr.mxu0 0.0
    %4472 = vmatpush1.msra.mxu0 %v4455
    %4473 = vmatprep.subr.mxu0 0.0
    %4474 = vmatpush1.msra.mxu0 %v4456
    %4475 = vmatprep.subr.mxu0 0.0
    %4476 = vmatpush1.msra.mxu0 %v4457
    %4477 = vmatprep.subr.mxu0 0.0
    %4478 = vmatpush1.msra.mxu0 %v4458
    %4479 = vmatprep.subr.mxu0 0.0
    %4480 = vmatpush1.msra.mxu0 %v4459
    %4481 = vmatprep.subr.mxu0 0.0
    %4482 = vmatpush1.msra.mxu0 %v4460
    %4483 = vmatprep.subr.mxu0 0.0
    %4484 = vmatpush1.msra.mxu0 %v4461
    %4485 = vmatprep.subr.mxu0 0.0
    %4486 = vmatpush1.msra.mxu0 %v4462
    %4487 = vmatprep.subr.mxu0 0.0
    %4488 = vmatpush1.msra.mxu0 %v4463
    %4489 = vmatprep.subr.mxu0 0.0
    %4490 = vmatpush1.msra.mxu0 %v4464
    %4491 = vmatprep.subr.mxu0 0.0
    %4492 = vmatpush1.msra.mxu0 %v4465
    %4493 = vmatprep.subr.mxu0 0.0
    %4494 = vmatpush1.msra.mxu0 %v4466
    %4495 = vmatprep.subr.mxu0 0.0
    %4496 = vmatpush1.msra.mxu0 %v4467
    %4497 = vmatprep.subr.mxu0 0.0
    %4498 = vmatpush1.msra.mxu0 %v4468
    %4499 = vmatprep.subr.mxu0 0.0
    %4500 = vmatpush1.msra.mxu0 %v4469
    %4501 = vmatprep.subr.mxu0 0.0
    %4502 = vmatpush1.msra.mxu0 %v4470
    %4503 = vmatprep.subr.mxu0 0.0
    %4504 = vmatpush1.msra.mxu0 0.0
    %4505 = vmatprep.subr.mxu0 0.0
    %4506 = vmatpush1.msra.mxu0 0.0
    %4507 = vmatprep.subr.mxu0 0.0
    %4508 = vmatpush1.msra.mxu0 0.0
    %4509 = vmatprep.subr.mxu0 0.0
    %4510 = vmatpush1.msra.mxu0 0.0
    %4511 = vmatprep.subr.mxu0 0.0
    %4512 = vmatpush1.msra.mxu0 0.0
    %4513 = vmatprep.subr.mxu0 0.0
    %4514 = vmatpush1.msra.mxu0 0.0
    %4515 = vmatprep.subr.mxu0 0.0
    %4516 = vmatpush1.msra.mxu0 0.0
    %4517 = vmatprep.subr.mxu0 0.0
    %4518 = vmatpush1.msra.mxu0 0.0
    %4519 = vmatprep.subr.mxu0 0.0
    %4520 = vmatpush1.msra.mxu0 0.0
    %4521 = vmatprep.subr.mxu0 0.0
    %4522 = vmatpush1.msra.mxu0 0.0
    %4523 = vmatprep.subr.mxu0 0.0
    %4524 = vmatpush1.msra.mxu0 0.0
    %4525 = vmatprep.subr.mxu0 0.0
    %4526 = vmatpush1.msra.mxu0 0.0
    %4527 = vmatprep.subr.mxu0 0.0
    %4528 = vmatpush1.msra.mxu0 0.0
    %4529 = vmatprep.subr.mxu0 0.0
    %4530 = vmatpush1.msra.mxu0 0.0
    %4531 = vmatprep.subr.mxu0 0.0
    %4532 = vmatpush1.msra.mxu0 0.0
    %4533 = vmatprep.subr.mxu0 0.0
    %4534 = vmatpush1.msra.mxu0 0.0
    %4535 = vmatprep.mubr.f32.mxu0 0.0
    %4536 = vmatmul.mubr.f32.gmra.mrb[0].mxu0 %v4450
    %v4537 = vpop.f32.mrb[0].mxu0
    %v4538 = vadd.f32 0.0, %v4537
    %v4539 = vpop.f32.mrb[0].mxu0
    %4540 = vdwg.mxu0
    %s4541 = sld [smem:[#allocation4 + $0x6]]
    %p4542 = scmp.gt.s32.totalorder %s4541, 0
    %v4543 = vld [vmem:[%s357] sm:$0x3]
    %s4544 = scalar_select %p4542, 1, 0
    %v4545 = vstv %s4544
    %vm4546 = vcmp.eq.s32.totalorder %v4545, 1
    %v4547 = vsel %vm4546, %v4543, %v4538
    %v4548 = vld [vmem:[#allocation11] sm:$0xff]
    %v4549 = vld [vmem:[#allocation11 + $0x8] sm:$0xff]
    %v4550 = vld [vmem:[#allocation11 + $0x10] sm:$0xff]
    %v4551 = vld [vmem:[#allocation11 + $0x18] sm:$0xff]
    %v4552 = vsel %vm368, %v4247, 0
    %4554 = vmatprep.subr.mxu0 0.0
    %4555 = vmatpush1.msra.mxu0 %v4548
    %4556 = vmatprep.subr.mxu0 0.0
    %4557 = vmatpush1.msra.mxu0 %v4549
    %4558 = vmatprep.subr.mxu0 0.0
    %4559 = vmatpush1.msra.mxu0 %v4550
    %4560 = vmatprep.subr.mxu0 0.0
    %4561 = vmatpush1.msra.mxu0 %v4551
    %4562 = vmatprep.subr.mxu0 0.0
    %4563 = vmatpush1.msra.mxu0 0.0
    %4564 = vmatprep.subr.mxu0 0.0
    %4565 = vmatpush1.msra.mxu0 0.0
    %4566 = vmatprep.subr.mxu0 0.0
    %4567 = vmatpush1.msra.mxu0 0.0
    %4568 = vmatprep.subr.mxu0 0.0
    %4569 = vmatpush1.msra.mxu0 0.0
    %4570 = vmatprep.subr.mxu0 0.0
    %4571 = vmatpush1.msra.mxu0 0.0
    %4572 = vmatprep.subr.mxu0 0.0
    %4573 = vmatpush1.msra.mxu0 0.0
    %4574 = vmatprep.subr.mxu0 0.0
    %4575 = vmatpush1.msra.mxu0 0.0
    %4576 = vmatprep.subr.mxu0 0.0
    %4577 = vmatpush1.msra.mxu0 0.0
    %4578 = vmatprep.subr.mxu0 0.0
    %4579 = vmatpush1.msra.mxu0 0.0
    %4580 = vmatprep.subr.mxu0 0.0
    %4581 = vmatpush1.msra.mxu0 0.0
    %4582 = vmatprep.subr.mxu0 0.0
    %4583 = vmatpush1.msra.mxu0 0.0
    %4584 = vmatprep.subr.mxu0 0.0
    %4585 = vmatpush1.msra.mxu0 0.0
    %4586 = vmatprep.subr.mxu0 0.0
    %4587 = vmatpush1.msra.mxu0 0.0
    %4588 = vmatprep.subr.mxu0 0.0
    %4589 = vmatpush1.msra.mxu0 0.0
    %4590 = vmatprep.subr.mxu0 0.0
    %4591 = vmatpush1.msra.mxu0 0.0
    %4592 = vmatprep.subr.mxu0 0.0
    %4593 = vmatpush1.msra.mxu0 0.0
    %4594 = vmatprep.subr.mxu0 0.0
    %4595 = vmatpush1.msra.mxu0 0.0
    %4596 = vmatprep.subr.mxu0 0.0
    %4597 = vmatpush1.msra.mxu0 0.0
    %4598 = vmatprep.subr.mxu0 0.0
    %4599 = vmatpush1.msra.mxu0 0.0
    %4600 = vmatprep.subr.mxu0 0.0
    %4601 = vmatpush1.msra.mxu0 0.0
    %4602 = vmatprep.subr.mxu0 0.0
    %4603 = vmatpush1.msra.mxu0 0.0
    %4604 = vmatprep.subr.mxu0 0.0
    %4605 = vmatpush1.msra.mxu0 0.0
    %4606 = vmatprep.subr.mxu0 0.0
    %4607 = vmatpush1.msra.mxu0 0.0
    %4608 = vmatprep.subr.mxu0 0.0
    %4609 = vmatpush1.msra.mxu0 0.0
    %4610 = vmatprep.subr.mxu0 0.0
    %4611 = vmatpush1.msra.mxu0 0.0
    %4612 = vmatprep.subr.mxu0 0.0
    %4613 = vmatpush1.msra.mxu0 0.0
    %4614 = vmatprep.subr.mxu0 0.0
    %4615 = vmatpush1.msra.mxu0 0.0
    %4616 = vmatprep.subr.mxu0 0.0
    %4617 = vmatpush1.msra.mxu0 0.0
    %4618 = vmatprep.mubr.f32.mxu0 0.0
    %4619 = vmatmul.mubr.f32.gmra.mrb[0].mxu0 %v4552
    %v4620 = vpop.f32.mrb[0].mxu0
    %v4621 = vadd.f32 0.0, %v4620
    %v4622 = vpop.f32.mrb[0].mxu0
    %4623 = vdwg.mxu0
    %v4624 = vadd.f32 %v4547, %v4621
    %v4625 = vld [vmem:[%s9] sm:$0x1]
    %v4627 = vlaneseq
    %v4628 = vshrl.u32 %v4627, 7
    %v4629 = vsub.s32 0, %v4628
    %v4630 = vrot.slane %v4625, %v4629
    %v4632 = vadd.f32 %v4624, %v4630
    %v4633 = vmul.f32 %v4632, %v147
    %v4634 = vxor.u32 %v4633, 2147483648
    %v4635 = vmul.f32 %v4634, 1.442695
    %v4636 = vpow.pop %v4635
    %v4637 = vadd.f32 %v4636, 1.0
    %v4638 = vrcp.pop %v4637
    %v4639 = vmul.f32 1.0, %v4638
    %v4640 = vmul.f32 %v4639, %v147
    %v4641 = vadd.f32 %v4640, %v148
    %v4642 = vmul.f32 %v4641, %v4238
    %4644 = vrot.lane.b32.xlu0 %v4641, 64
    %v4645 = vpop.permute.xlu0 %4644
    %v4647 = vmul.f32 %v4641, %v4645
    %4649 = vrot.lane.b32.xlu0 %v4647, 32
    %v4650 = vpop.permute.xlu0 %4649
    %v4652 = vadd.f32 %v4642, %v4650
    %v4653 = vtanh.pop %v4652
    %4655 = vrot.lane.b32.xlu0 %v4653, 64
    %v4656 = vpop.permute.xlu0 %4655
    %v4658 = vmul.f32 %v4641, %v4656
    %4660 = vrot.lane.b32.xlu0 %v4658, 32
    %v4661 = vpop.permute.xlu0 %4660
    %4663 = vrot.lane.b32.xlu0 %v4366, 64
    %v4664 = vpop.permute.xlu0 %4663
    %v4666 = vsel %vm368, %v4661, %v4664
    %v4667 = vld [vmem:[#allocation13] sm:$0xff]
    %v4668 = vld [vmem:[#allocation13 + $0x8] sm:$0xff]
    %v4669 = vld [vmem:[#allocation13 + $0x10] sm:$0xff]
    %v4670 = vld [vmem:[#allocation13 + $0x18] sm:$0xff]
    %v4671 = vld [vmem:[#allocation13 + $0x20] sm:$0xff]
    %v4672 = vld [vmem:[#allocation13 + $0x28] sm:$0xff]
    %v4673 = vld [vmem:[#allocation13 + $0x30] sm:$0xff]
    %v4674 = vld [vmem:[#allocation13 + $0x38] sm:$0xff]
    %v4675 = vld [vmem:[%s11] sm:$0x1]
    %v4677 = vlaneseq
    %v4678 = vshrl.u32 %v4677, 7
    %v4679 = vsub.s32 0, %v4678
    %v4680 = vrot.slane %v4675, %v4679
    %v4683 = vsel %vm497, %v4666, 0
    %4685 = vmatprep.subr.mxu0 0.0
    %4686 = vmatpush1.msra.mxu0 %v4667
    %4687 = vmatprep.subr.mxu0 0.0
    %4688 = vmatpush1.msra.mxu0 %v4668
    %4689 = vmatprep.subr.mxu0 0.0
    %4690 = vmatpush1.msra.mxu0 %v4669
    %4691 = vmatprep.subr.mxu0 0.0
    %4692 = vmatpush1.msra.mxu0 %v4670
    %4693 = vmatprep.subr.mxu0 0.0
    %4694 = vmatpush1.msra.mxu0 %v4671
    %4695 = vmatprep.subr.mxu0 0.0
    %4696 = vmatpush1.msra.mxu0 %v4672
    %4697 = vmatprep.subr.mxu0 0.0
    %4698 = vmatpush1.msra.mxu0 %v4673
    %4699 = vmatprep.subr.mxu0 0.0
    %4700 = vmatpush1.msra.mxu0 %v4674
    %4701 = vmatprep.subr.mxu0 0.0
    %4702 = vmatpush1.msra.mxu0 0.0
    %4703 = vmatprep.subr.mxu0 0.0
    %4704 = vmatpush1.msra.mxu0 0.0
    %4705 = vmatprep.subr.mxu0 0.0
    %4706 = vmatpush1.msra.mxu0 0.0
    %4707 = vmatprep.subr.mxu0 0.0
    %4708 = vmatpush1.msra.mxu0 0.0
    %4709 = vmatprep.subr.mxu0 0.0
    %4710 = vmatpush1.msra.mxu0 0.0
    %4711 = vmatprep.subr.mxu0 0.0
    %4712 = vmatpush1.msra.mxu0 0.0
    %4713 = vmatprep.subr.mxu0 0.0
    %4714 = vmatpush1.msra.mxu0 0.0
    %4715 = vmatprep.subr.mxu0 0.0
    %4716 = vmatpush1.msra.mxu0 0.0
    %4717 = vmatprep.subr.mxu0 0.0
    %4718 = vmatpush1.msra.mxu0 0.0
    %4719 = vmatprep.subr.mxu0 0.0
    %4720 = vmatpush1.msra.mxu0 0.0
    %4721 = vmatprep.subr.mxu0 0.0
    %4722 = vmatpush1.msra.mxu0 0.0
    %4723 = vmatprep.subr.mxu0 0.0
    %4724 = vmatpush1.msra.mxu0 0.0
    %4725 = vmatprep.subr.mxu0 0.0
    %4726 = vmatpush1.msra.mxu0 0.0
    %4727 = vmatprep.subr.mxu0 0.0
    %4728 = vmatpush1.msra.mxu0 0.0
    %4729 = vmatprep.subr.mxu0 0.0
    %4730 = vmatpush1.msra.mxu0 0.0
    %4731 = vmatprep.subr.mxu0 0.0
    %4732 = vmatpush1.msra.mxu0 0.0
    %4733 = vmatprep.subr.mxu0 0.0
    %4734 = vmatpush1.msra.mxu0 0.0
    %4735 = vmatprep.subr.mxu0 0.0
    %4736 = vmatpush1.msra.mxu0 0.0
    %4737 = vmatprep.subr.mxu0 0.0
    %4738 = vmatpush1.msra.mxu0 0.0
    %4739 = vmatprep.subr.mxu0 0.0
    %4740 = vmatpush1.msra.mxu0 0.0
    %4741 = vmatprep.subr.mxu0 0.0
    %4742 = vmatpush1.msra.mxu0 0.0
    %4743 = vmatprep.subr.mxu0 0.0
    %4744 = vmatpush1.msra.mxu0 0.0
    %4745 = vmatprep.subr.mxu0 0.0
    %4746 = vmatpush1.msra.mxu0 0.0
    %4747 = vmatprep.subr.mxu0 0.0
    %4748 = vmatpush1.msra.mxu0 0.0
    %4749 = vmatprep.mubr.f32.mxu0 0.0
    %4750 = vmatmul.mubr.f32.gmra.mrb[0].mxu0 %v4683
    %v4751 = vpop.f32.mrb[0].mxu0
    %v4752 = vadd.f32 %v4680, %v4751
    %v4753 = vpop.f32.mrb[0].mxu0
    %4754 = vdwg.mxu0
    %v4755 = vmul.f32 %v4752, %v147
    %v4756 = vxor.u32 %v4755, 2147483648
    %v4757 = vmul.f32 %v4756, 1.442695
    %v4758 = vpow.pop %v4757
    %v4759 = vadd.f32 %v4758, 1.0
    %v4760 = vrcp.pop %v4759
    %v4761 = vmul.f32 1.0, %v4760
    %v4762 = vmul.f32 %v4761, %v147
    %v4763 = vadd.f32 %v4762, %v148
    %v4764 = vmul.f32 %v4763, %v4360
    %4766 = vrot.lane.b32.xlu0 %v4763, 64
    %v4767 = vpop.permute.xlu0 %4766
    %v4769 = vmul.f32 %v4763, %v4767
    %4771 = vrot.lane.b32.xlu0 %v4769, 32
    %v4772 = vpop.permute.xlu0 %4771
    %v4774 = vadd.f32 %v4764, %v4772
    %v4775 = vtanh.pop %v4774
    %4777 = vrot.lane.b32.xlu0 %v4775, 64
    %v4778 = vpop.permute.xlu0 %4777
    %v4780 = vmul.f32 %v4763, %v4778
    %v4781 = vld [vmem:[#allocation14] sm:$0xff]
    %v4782 = vld [vmem:[#allocation14 + $0x8] sm:$0xff]
    %v4783 = vld [vmem:[#allocation14 + $0x10] sm:$0xff]
    %v4784 = vld [vmem:[#allocation14 + $0x18] sm:$0xff]
    %v4785 = vld [vmem:[%s13] sm:$0x1]
    %v4787 = vlaneseq
    %v4788 = vshrl.u32 %v4787, 7
    %v4789 = vsub.s32 0, %v4788
    %v4790 = vrot.slane %v4785, %v4789
    %4793 = vrot.lane.b32.xlu0 %v4780, 32
    %v4794 = vpop.permute.xlu0 %4793
    %v4795 = vsel %vm368, %v4794, 0
    %4797 = vmatprep.subr.mxu0 0.0
    %4798 = vmatpush1.msra.mxu0 %v4781
    %4799 = vmatprep.subr.mxu0 0.0
    %4800 = vmatpush1.msra.mxu0 %v4782
    %4801 = vmatprep.subr.mxu0 0.0
    %4802 = vmatpush1.msra.mxu0 %v4783
    %4803 = vmatprep.subr.mxu0 0.0
    %4804 = vmatpush1.msra.mxu0 %v4784
    %4805 = vmatprep.subr.mxu0 0.0
    %4806 = vmatpush1.msra.mxu0 0.0
    %4807 = vmatprep.subr.mxu0 0.0
    %4808 = vmatpush1.msra.mxu0 0.0
    %4809 = vmatprep.subr.mxu0 0.0
    %4810 = vmatpush1.msra.mxu0 0.0
    %4811 = vmatprep.subr.mxu0 0.0
    %4812 = vmatpush1.msra.mxu0 0.0
    %4813 = vmatprep.subr.mxu0 0.0
    %4814 = vmatpush1.msra.mxu0 0.0
    %4815 = vmatprep.subr.mxu0 0.0
    %4816 = vmatpush1.msra.mxu0 0.0
    %4817 = vmatprep.subr.mxu0 0.0
    %4818 = vmatpush1.msra.mxu0 0.0
    %4819 = vmatprep.subr.mxu0 0.0
    %4820 = vmatpush1.msra.mxu0 0.0
    %4821 = vmatprep.subr.mxu0 0.0
    %4822 = vmatpush1.msra.mxu0 0.0
    %4823 = vmatprep.subr.mxu0 0.0
    %4824 = vmatpush1.msra.mxu0 0.0
    %4825 = vmatprep.subr.mxu0 0.0
    %4826 = vmatpush1.msra.mxu0 0.0
    %4827 = vmatprep.subr.mxu0 0.0
    %4828 = vmatpush1.msra.mxu0 0.0
    %4829 = vmatprep.subr.mxu0 0.0
    %4830 = vmatpush1.msra.mxu0 0.0
    %4831 = vmatprep.subr.mxu0 0.0
    %4832 = vmatpush1.msra.mxu0 0.0
    %4833 = vmatprep.subr.mxu0 0.0
    %4834 = vmatpush1.msra.mxu0 0.0
    %4835 = vmatprep.subr.mxu0 0.0
    %4836 = vmatpush1.msra.mxu0 0.0
    %4837 = vmatprep.subr.mxu0 0.0
    %4838 = vmatpush1.msra.mxu0 0.0
    %4839 = vmatprep.subr.mxu0 0.0
    %4840 = vmatpush1.msra.mxu0 0.0
    %4841 = vmatprep.subr.mxu0 0.0
    %4842 = vmatpush1.msra.mxu0 0.0
    %4843 = vmatprep.subr.mxu0 0.0
    %4844 = vmatpush1.msra.mxu0 0.0
    %4845 = vmatprep.subr.mxu0 0.0
    %4846 = vmatpush1.msra.mxu0 0.0
    %4847 = vmatprep.subr.mxu0 0.0
    %4848 = vmatpush1.msra.mxu0 0.0
    %4849 = vmatprep.subr.mxu0 0.0
    %4850 = vmatpush1.msra.mxu0 0.0
    %4851 = vmatprep.subr.mxu0 0.0
    %4852 = vmatpush1.msra.mxu0 0.0
    %4853 = vmatprep.subr.mxu0 0.0
    %4854 = vmatpush1.msra.mxu0 0.0
    %4855 = vmatprep.subr.mxu0 0.0
    %4856 = vmatpush1.msra.mxu0 0.0
    %4857 = vmatprep.subr.mxu0 0.0
    %4858 = vmatpush1.msra.mxu0 0.0
    %4859 = vmatprep.subr.mxu0 0.0
    %4860 = vmatpush1.msra.mxu0 0.0
    %4861 = vmatprep.mubr.f32.mxu0 0.0
    %4862 = vmatmul.mubr.f32.gmra.mrb[0].mxu0 %v4795
    %v4863 = vpop.f32.mrb[0].mxu0
    %v4864 = vadd.f32 %v4790, %v4863
    %v4865 = vpop.f32.mrb[0].mxu0
    %4866 = vdwg.mxu0
    %s4867 = scalar_lea.vmem %s14, 14
    %4868 = vst [vmem:[%s4867] sm:$0x3] %v4864
    // Predicated region
    $region86: #{seqwatch_forward.1} parent=1 // pred_check
      _
    $region87: #{seqwatch_forward.1} parent=1 // pred_check_branch
      %4870 = sbr.rel (0) target = $region89
    $region88: #{seqwatch_forward.1} parent=1 // pred_region
      _
    $region89: #{seqwatch_forward.1} parent=1 // pred_fallthru
      _
    // Predicated region
    $region90: #{seqwatch_forward.1} parent=1 // pred_check
      _
    $region91: #{seqwatch_forward.1} parent=1 // pred_check_branch
      %4872 = sbr.rel (0) target = $region93
    $region92: #{seqwatch_forward.1} parent=1 // pred_region
      _
    $region93: #{seqwatch_forward.1} parent=1 // pred_fallthru
      _
    %4873 = vsyncpa [#allocation5], 1
    %4874 = vsyncpa [#allocation9], 1
    %4875 = vsyncpa [#allocation12], 1
    %4876 = vsyncpa [#allocation15], 1
    %4877 = vsyncpa [#allocation6], 1

</llo_original>
